<compile_context>
chip_gen: v5e
topology: v5e:2x2
jax: 0.10.0
libtpu: 0.0.40
codegen_flags: <defaults>
</compile_context>

<pallas_src>
import functools
import math

import jax
import jax.numpy as jnp
from jax.experimental import pallas as pl
from jax.experimental.pallas import tpu as pltpu

_NEG_INF = -1e30     # finite mask value (no NaN even for fully-masked rows)
_LANE = 128


def _round_up(x, m):
    return ((x + m - 1) // m) * m


# ----------------------------------------------------------------------------
# In-kernel helpers (operate on loaded VMEM values; everything stays 2-D)
# ----------------------------------------------------------------------------

def _matmul(x_f32, w_bf16, b_f32=None):
    """bf16 MXU matmul with f32 accumulation: x @ w (+ b)."""
    y = jnp.dot(x_f32.astype(jnp.bfloat16), w_bf16,
                preferred_element_type=jnp.float32)
    return y if b_f32 is None else y + b_f32


def _layer_norm(x, g, b, d_real):
    """torch LayerNorm over the first d_real lanes (padded lanes are zero and
    g/b are zero-padded, so padded lanes stay exactly zero)."""
    inv_d = 1.0 / d_real
    mean = jnp.sum(x, axis=-1, keepdims=True) * inv_d
    ex2 = jnp.sum(x * x, axis=-1, keepdims=True) * inv_d
    var = ex2 - mean * mean                       # biased variance (torch)
    return (x - mean) * jax.lax.rsqrt(var + 1e-5) * g + b


def _ffn(x, w1, b1, w2, b2):
    h = jnp.maximum(_matmul(x, w1, b1), 0.0)      # ReLU (torch default)
    return _matmul(h, w2, b2)


def _attend(q, k, v, wo, bo, bias, *, num_heads, d_real):
    """Multi-head attention over ALL batches at once.

    q: (Mq, DP), k/v: (Mk, DP) with real features in lanes [0, d_real);
    bias: f32 (Mq, Mk) additive mask -- includes the block-diagonal batch mask
    (plus causal / key-padding for decoder self-attention).  The 1/sqrt(Dh)
    scale is folded into the Q projection.  wo: (H, Dh, DP) f32 value; each
    head's context is accumulated straight through its slice of the output
    projection (no lane-axis concat)."""
    dh = d_real // num_heads
    acc = None
    for h in range(num_heads):
        sl = slice(h * dh, (h + 1) * dh)
        s = jax.lax.dot_general(                    # q_h @ k_h^T  -> (Mq, Mk)
            q[:, sl].astype(jnp.bfloat16), k[:, sl].astype(jnp.bfloat16),
            (((1,), (1,)), ((), ())), preferred_element_type=jnp.float32)
        s = s + bias
        m = jnp.max(s, axis=-1, keepdims=True)
        e = jnp.exp(s - m)
        p_attn = e * pl.reciprocal(jnp.sum(e, axis=-1, keepdims=True), approx=True)
        ctx = jnp.dot(p_attn.astype(jnp.bfloat16),  # (Mq, Dh)
                      v[:, sl].astype(jnp.bfloat16),
                      preferred_element_type=jnp.float32)
        con = jnp.dot(ctx.astype(jnp.bfloat16),     # (Mq, DP) contribution
                      wo[h].astype(jnp.bfloat16),
                      preferred_element_type=jnp.float32)
        acc = con if acc is None else acc + con
    return acc + bo


# ----------------------------------------------------------------------------
# The single fused-forward Pallas kernel
# ----------------------------------------------------------------------------

def _fused_forward_kernel(*refs, treedef, n_params, num_heads, batch, d_real):
    (patches_ref, yemb_ref, enc_bias_ref, self_bias_ref, cross_bias_ref) = refs[:5]
    param_refs = refs[5:5 + n_params]
    o_ref = refs[5 + n_params]
    p = jax.tree_util.tree_unflatten(treedef, param_refs)

    dp = p["fc_in_w"].shape[1]                     # padded hidden width (128)

    # ---------------- Encoder ----------------
    pos = p["pos_embedding"][...]                  # (L_enc, DP)
    pos = jnp.concatenate([pos] * batch, axis=0) if batch > 1 else pos
    x = _matmul(patches_ref[...], p["fc_in_w"][...], p["fc_in_b"][...]) + pos
    enc_bias = enc_bias_ref[...]                   # block-diagonal batch mask

    for lp in p["enc_layers"]:
        qkv = _matmul(x, lp["wqkv"][...], lp["bqkv"][...])    # fused QKV proj
        sa = _attend(qkv[:, :dp], qkv[:, dp:2 * dp], qkv[:, 2 * dp:],
                     lp["wo"][...], lp["bo"][...], enc_bias,
                     num_heads=num_heads, d_real=d_real)
        x = _layer_norm(x + sa, lp["ln1_g"][...], lp["ln1_b"][...], d_real)
        ff = _ffn(x, lp["w1"][...], lp["b1"][...], lp["w2"][...], lp["b2"][...])
        x = _layer_norm(x + ff, lp["ln2_g"][...], lp["ln2_b"][...], d_real)
    memory = x                                     # (B*L_enc, DP), stays in VMEM

    # ---------------- Decoder ----------------
    y = yemb_ref[...]                              # (B*L_dec, DP)
    self_bias = self_bias_ref[...]                 # causal + key-pad + batch-block
    cross_bias = cross_bias_ref[...]               # batch-block only

    for lp in p["dec_layers"]:
        sp = lp["self_attn"]
        qkv = _matmul(y, sp["wqkv"][...], sp["bqkv"][...])
        sa = _attend(qkv[:, :dp], qkv[:, dp:2 * dp], qkv[:, 2 * dp:],
                     sp["wo"][...], sp["bo"][...], self_bias,
                     num_heads=num_heads, d_real=d_real)
        y = _layer_norm(y + sa, lp["ln1_g"][...], lp["ln1_b"][...], d_real)

        cp = lp["cross_attn"]
        q = _matmul(y, cp["wq"][...], cp["bq"][...])
        kv = _matmul(memory, cp["wkv"][...], cp["bkv"][...])   # fused K/V proj
        ca = _attend(q, kv[:, :dp], kv[:, dp:],
                     cp["wo"][...], cp["bo"][...], cross_bias,
                     num_heads=num_heads, d_real=d_real)
        y = _layer_norm(y + ca, lp["ln2_g"][...], lp["ln2_b"][...], d_real)

        ff = _ffn(y, lp["w1"][...], lp["b1"][...], lp["w2"][...], lp["b2"][...])
        y = _layer_norm(y + ff, lp["ln3_g"][...], lp["ln3_b"][...], d_real)

    # fc_out: (B*L_dec, VP) lane-dense store; real logits sliced outside.
    o_ref[...] = _matmul(y, p["fc_out_w"][...], p["fc_out_b"][...])


# ----------------------------------------------------------------------------
# Plain-JAX glue (data movement only)
# ----------------------------------------------------------------------------

def extract_patches(image, patch_size):
    """torch.nn.Unfold(kernel=p, stride=p): per-patch vector is (C, ph, pw)
    flattened, patches ordered row-major."""
    B, C, H, W = image.shape
    ps = patch_size
    Hp, Wp = H // ps, W // ps
    x = image.reshape(B, C, Hp, ps, Wp, ps)
    x = x.transpose(0, 2, 4, 1, 3, 5)              # (B, Hp, Wp, C, p, p)
    return x.reshape(B, Hp * Wp, C * ps * ps)


def sinusoidal_pos_emb(length, dim):
    half = dim // 2
    freqs = jnp.exp(jnp.arange(half, dtype=jnp.float32)
                    * -(math.log(10000.0) / (half - 1)))
    pe = jnp.arange(length, dtype=jnp.float32)[:, None] * freqs[None, :]
    return jnp.concatenate([jnp.sin(pe), jnp.cos(pe)], axis=-1)   # (L, dim)


# ----------------------------------------------------------------------------
# Full EncoderDecoder forward (one pallas_call)
# ----------------------------------------------------------------------------

def encoder_decoder_forward(params, cfg, input_image, target_seq, attention_mask):
    D = cfg["hidden"]
    H = cfg["num_heads"]
    psz = cfg["patch"]
    V = cfg["num_emb"]
    DP = params["fc_out_w"].shape[0]               # padded hidden
    VP = params["fc_out_w"].shape[1]               # padded vocab

    # -------- encoder inputs --------
    B = input_image.shape[0]
    patches = extract_patches(input_image, psz)    # (B, L_enc, C*p*p)
    L_enc = patches.shape[1]
    Cpp = patches.shape[2]
    CPP = params["fc_in_w"].shape[0]
    patches2d = patches.reshape(B * L_enc, Cpp)
    if CPP > Cpp:
        patches2d = jnp.pad(patches2d, ((0, 0), (0, CPP - Cpp)))

    # -------- decoder inputs (embedding gather + sinusoidal pos, glue) --------
    Bt, L = target_seq.shape
    pos_dec = jnp.pad(sinusoidal_pos_emb(L, D), ((0, 0), (0, DP - D)))
    y_emb = (params["embedding"][target_seq] + pos_dec[None, :, :]).reshape(Bt * L, DP)

    # -------- additive attention biases (finite -1e30) --------
    # Block-diagonal masks let a single (B*Lq) x (B*Lk) score matmul per head
    # replace the per-batch loop without cross-batch attention leakage.
    bq_enc = jnp.repeat(jnp.arange(B), L_enc)
    enc_bias = jnp.where(bq_enc[:, None] != bq_enc[None, :],
                         _NEG_INF, 0.0).astype(jnp.float32)          # (B*Le, B*Le)

    bq_dec = jnp.repeat(jnp.arange(Bt), L)
    block_dec = jnp.where(bq_dec[:, None] != bq_dec[None, :], _NEG_INF, 0.0)
    causal = jnp.where(jnp.arange(L)[None, :] > jnp.arange(L)[:, None],
                       _NEG_INF, 0.0)
    pad_keys = jnp.where(attention_mask == 0, _NEG_INF, 0.0).reshape(Bt * L)
    self_bias = (block_dec + jnp.tile(causal, (Bt, Bt))
                 + pad_keys[None, :]).astype(jnp.float32)            # (B*L, B*L)

    cross_bias = jnp.where(bq_dec[:, None] != bq_enc[None, :],
                           _NEG_INF, 0.0).astype(jnp.float32)        # (B*L, B*Le)

    # -------- flatten all weights into one argument list --------
    kp = {k: v for k, v in params.items() if k != "embedding"}
    flat_kp, treedef = jax.tree_util.tree_flatten(kp)

    kernel = functools.partial(
        _fused_forward_kernel, treedef=treedef, n_params=len(flat_kp),
        num_heads=H, batch=B, d_real=D)

    out_pad = pl.pallas_call(
        kernel,
        out_shape=jax.ShapeDtypeStruct((Bt * L, VP), jnp.float32),
        compiler_params=pltpu.CompilerParams(
            vmem_limit_bytes=32 * 1024 * 1024),
    )(patches2d, y_emb, enc_bias, self_bias, cross_bias, *flat_kp)

    return out_pad[:, :V].reshape(Bt, L, V)


# ----------------------------------------------------------------------------
# Deterministic parameter initialization: weights pre-fused, lane-padded to
# 128, matmul weights stored bf16 (wo kept f32 for clean per-head indexing),
# biases/LN params f32, attention 1/sqrt(Dh) folded into Q weights.
# ----------------------------------------------------------------------------

def _init_linear(key, fan_in, fan_out, scale=0.02):
    kw, kb = jax.random.split(key)
    w = scale * jax.random.normal(kw, (fan_in, fan_out), jnp.float32)
    b = scale * jax.random.normal(kb, (fan_out,), jnp.float32)
    return w, b


def _pad2(a, rows, cols):
    return jnp.pad(a, ((0, rows - a.shape[0]), (0, cols - a.shape[1])))


def _pad_last(a, cols):
    widths = [(0, 0)] * (a.ndim - 1) + [(0, cols - a.shape[-1])]
    return jnp.pad(a, widths)


def _init_self_mha(key, d, dp, num_heads):
    ks = jax.random.split(key, 4)
    wq, bq = _init_linear(ks[0], d, d)
    wk, bk = _init_linear(ks[1], d, d)
    wv, bv = _init_linear(ks[2], d, d)
    wo, bo = _init_linear(ks[3], d, d)
    s = 1.0 / math.sqrt(d // num_heads)                 # fold 1/sqrt(Dh) into Q
    dh = d // num_heads
    wqkv = jnp.concatenate([_pad2(wq * s, dp, dp), _pad2(wk, dp, dp),
                            _pad2(wv, dp, dp)], axis=1)
    bqkv = jnp.concatenate([_pad_last(bq * s, dp), _pad_last(bk, dp),
                            _pad_last(bv, dp)]).reshape(1, 3 * dp)
    return dict(wqkv=wqkv.astype(jnp.bfloat16), bqkv=bqkv,
                wo=_pad_last(wo.reshape(num_heads, dh, d), dp),   # (H, Dh, DP) f32
                bo=_pad_last(bo, dp).reshape(1, dp))


def _init_cross_mha(key, d, dp, num_heads):
    ks = jax.random.split(key, 4)
    wq, bq = _init_linear(ks[0], d, d)
    wk, bk = _init_linear(ks[1], d, d)
    wv, bv = _init_linear(ks[2], d, d)
    wo, bo = _init_linear(ks[3], d, d)
    s = 1.0 / math.sqrt(d // num_heads)
    dh = d // num_heads
    wkv = jnp.concatenate([_pad2(wk, dp, dp), _pad2(wv, dp, dp)], axis=1)
    bkv = jnp.concatenate([_pad_last(bk, dp), _pad_last(bv, dp)]).reshape(1, 2 * dp)
    return dict(wq=_pad2(wq * s, dp, dp).astype(jnp.bfloat16),
                bq=_pad_last(bq * s, dp).reshape(1, dp),
                wkv=wkv.astype(jnp.bfloat16), bkv=bkv,
                wo=_pad_last(wo.reshape(num_heads, dh, d), dp),
                bo=_pad_last(bo, dp).reshape(1, dp))


def _ffn_params(key, d, dp):
    f = 4 * d                                   # torch dim_feedforward = 4*hidden
    fp = _round_up(f, _LANE)
    w1, b1 = _init_linear(jax.random.fold_in(key, 0), d, f)
    w2, b2 = _init_linear(jax.random.fold_in(key, 1), f, d)
    return dict(w1=_pad2(w1, dp, fp).astype(jnp.bfloat16),
                b1=_pad_last(b1, fp).reshape(1, fp),
                w2=_pad2(w2, fp, dp).astype(jnp.bfloat16),
                b2=_pad_last(b2, dp).reshape(1, dp))


def _ln_params(d, dp):
    g = jnp.pad(jnp.ones((d,), jnp.float32), (0, dp - d)).reshape(1, dp)
    return g, jnp.zeros((1, dp), jnp.float32)


def _init_enc_layer(key, d, dp, num_heads):
    ks = jax.random.split(key, 2)
    out = dict(_init_self_mha(ks[0], d, dp, num_heads))
    out.update(_ffn_params(ks[1], d, dp))
    out["ln1_g"], out["ln1_b"] = _ln_params(d, dp)
    out["ln2_g"], out["ln2_b"] = _ln_params(d, dp)
    return out


def _init_dec_layer(key, d, dp, num_heads):
    ks = jax.random.split(key, 3)
    out = dict(self_attn=_init_self_mha(ks[0], d, dp, num_heads),
               cross_attn=_init_cross_mha(ks[1], d, dp, num_heads))
    out.update(_ffn_params(ks[2], d, dp))
    out["ln1_g"], out["ln1_b"] = _ln_params(d, dp)
    out["ln2_g"], out["ln2_b"] = _ln_params(d, dp)
    out["ln3_g"], out["ln3_b"] = _ln_params(d, dp)
    return out


def init_params(key, cfg):
    D = cfg["hidden"]
    DP = _round_up(D, _LANE)
    V = cfg["num_emb"]
    VP = _round_up(V, _LANE)
    C = cfg["channels"]
    psz = cfg["patch"]
    H = cfg["num_heads"]
    Cpp = C * psz * psz
    CPP = _round_up(Cpp, _LANE)
    L_enc = (cfg["image_size"] // psz) ** 2

    keys = jax.random.split(key, 6)
    params = {}
    w, b = _init_linear(keys[0], Cpp, D)
    params["fc_in_w"] = _pad2(w, CPP, DP).astype(jnp.bfloat16)
    params["fc_in_b"] = _pad_last(b, DP).reshape(1, DP)
    pos = 0.02 * jax.random.normal(keys[1], (L_enc, D), jnp.float32)
    params["pos_embedding"] = _pad_last(pos, DP)                   # (L_enc, DP)
    params["enc_layers"] = [_init_enc_layer(jax.random.fold_in(keys[2], i), D, DP, H)
                            for i in range(cfg["enc_layers"])]
    # nn.Embedding weight scaled by 0.001 as in the PyTorch module
    emb = 0.001 * jax.random.normal(keys[3], (V, D), jnp.float32)
    params["embedding"] = _pad_last(emb, DP)                       # (V, DP)
    params["dec_layers"] = [_init_dec_layer(jax.random.fold_in(keys[4], i), D, DP, H)
                            for i in range(cfg["dec_layers"])]
    w, b = _init_linear(keys[5], D, V)
    params["fc_out_w"] = _pad2(w, DP, VP).astype(jnp.bfloat16)
    params["fc_out_b"] = _pad_last(b, VP).reshape(1, VP)
    return params


# ----------------------------------------------------------------------------
# Main
# ----------------------------------------------------------------------------

if __name__ == "__main__":
    cfg = dict(
        image_size=16,
        channels=4,
        patch=8,          # -> encoder seq length (16/8)^2 = 4
        hidden=32,
        num_heads=4,      # head_dim = 8
        enc_layers=2,
        dec_layers=2,
        num_emb=16,
    )
    L_dec = 8
    B = 2

    key = jax.random.PRNGKey(0)
    k_params, k_img, k_seq = jax.random.split(key, 3)

    params = init_params(k_params, cfg)

    input_image = jax.random.normal(
        k_img, (B, cfg["channels"], cfg["image_size"], cfg["image_size"]), jnp.float32)
    target_seq = jax.random.randint(k_seq, (B, L_dec), 0, cfg["num_emb"], jnp.int32)
    # attention_mask == 0 marks padded target positions (last 2 of batch 0)
    attention_mask = jnp.array(
        [[1, 1, 1, 1, 1, 1, 0, 0],
         [1, 1, 1, 1, 1, 1, 1, 1]], dtype=jnp.int32)

    fwd = jax.jit(lambda prm, img, seq, mask:
                  encoder_decoder_forward(prm, cfg, img, seq, mask))
    out = jax.block_until_ready(fwd(params, input_image, target_seq, attention_mask))

    assert out.shape == (B, L_dec, cfg["num_emb"]), out.shape
    assert bool(jnp.all(jnp.isfinite(out)))
    print("KERNEL_OK")
</pallas_src>

<mosaic_0001>
module attributes {stable_mosaic.version = 11 : i64} {
  func.func @_fused_forward_kernel(%arg0: memref<8x256xf32, #tpu.memory_space<vmem>>, %arg1: memref<16x128xf32, #tpu.memory_space<vmem>>, %arg2: memref<8x8xf32, #tpu.memory_space<vmem>>, %arg3: memref<16x16xf32, #tpu.memory_space<vmem>>, %arg4: memref<16x8xf32, #tpu.memory_space<vmem>>, %arg5: memref<1x128xf32, #tpu.memory_space<vmem>>, %arg6: memref<1x128xf32, #tpu.memory_space<vmem>>, %arg7: memref<1x256xf32, #tpu.memory_space<vmem>>, %arg8: memref<1x128xf32, #tpu.memory_space<vmem>>, %arg9: memref<1x128xf32, #tpu.memory_space<vmem>>, %arg10: memref<128x256xbf16, #tpu.memory_space<vmem>>, %arg11: memref<4x8x128xf32, #tpu.memory_space<vmem>>, %arg12: memref<128x128xbf16, #tpu.memory_space<vmem>>, %arg13: memref<1x128xf32, #tpu.memory_space<vmem>>, %arg14: memref<1x128xf32, #tpu.memory_space<vmem>>, %arg15: memref<1x128xf32, #tpu.memory_space<vmem>>, %arg16: memref<1x128xf32, #tpu.memory_space<vmem>>, %arg17: memref<1x128xf32, #tpu.memory_space<vmem>>, %arg18: memref<1x128xf32, #tpu.memory_space<vmem>>, %arg19: memref<1x128xf32, #tpu.memory_space<vmem>>, %arg20: memref<1x384xf32, #tpu.memory_space<vmem>>, %arg21: memref<4x8x128xf32, #tpu.memory_space<vmem>>, %arg22: memref<128x384xbf16, #tpu.memory_space<vmem>>, %arg23: memref<128x128xbf16, #tpu.memory_space<vmem>>, %arg24: memref<128x128xbf16, #tpu.memory_space<vmem>>, %arg25: memref<1x128xf32, #tpu.memory_space<vmem>>, %arg26: memref<1x128xf32, #tpu.memory_space<vmem>>, %arg27: memref<1x256xf32, #tpu.memory_space<vmem>>, %arg28: memref<1x128xf32, #tpu.memory_space<vmem>>, %arg29: memref<1x128xf32, #tpu.memory_space<vmem>>, %arg30: memref<128x256xbf16, #tpu.memory_space<vmem>>, %arg31: memref<4x8x128xf32, #tpu.memory_space<vmem>>, %arg32: memref<128x128xbf16, #tpu.memory_space<vmem>>, %arg33: memref<1x128xf32, #tpu.memory_space<vmem>>, %arg34: memref<1x128xf32, #tpu.memory_space<vmem>>, %arg35: memref<1x128xf32, #tpu.memory_space<vmem>>, %arg36: memref<1x128xf32, #tpu.memory_space<vmem>>, %arg37: memref<1x128xf32, #tpu.memory_space<vmem>>, %arg38: memref<1x128xf32, #tpu.memory_space<vmem>>, %arg39: memref<1x128xf32, #tpu.memory_space<vmem>>, %arg40: memref<1x384xf32, #tpu.memory_space<vmem>>, %arg41: memref<4x8x128xf32, #tpu.memory_space<vmem>>, %arg42: memref<128x384xbf16, #tpu.memory_space<vmem>>, %arg43: memref<128x128xbf16, #tpu.memory_space<vmem>>, %arg44: memref<128x128xbf16, #tpu.memory_space<vmem>>, %arg45: memref<1x128xf32, #tpu.memory_space<vmem>>, %arg46: memref<1x128xf32, #tpu.memory_space<vmem>>, %arg47: memref<1x128xf32, #tpu.memory_space<vmem>>, %arg48: memref<1x384xf32, #tpu.memory_space<vmem>>, %arg49: memref<1x128xf32, #tpu.memory_space<vmem>>, %arg50: memref<1x128xf32, #tpu.memory_space<vmem>>, %arg51: memref<1x128xf32, #tpu.memory_space<vmem>>, %arg52: memref<1x128xf32, #tpu.memory_space<vmem>>, %arg53: memref<128x128xbf16, #tpu.memory_space<vmem>>, %arg54: memref<128x128xbf16, #tpu.memory_space<vmem>>, %arg55: memref<4x8x128xf32, #tpu.memory_space<vmem>>, %arg56: memref<128x384xbf16, #tpu.memory_space<vmem>>, %arg57: memref<1x128xf32, #tpu.memory_space<vmem>>, %arg58: memref<1x128xf32, #tpu.memory_space<vmem>>, %arg59: memref<1x128xf32, #tpu.memory_space<vmem>>, %arg60: memref<1x384xf32, #tpu.memory_space<vmem>>, %arg61: memref<1x128xf32, #tpu.memory_space<vmem>>, %arg62: memref<1x128xf32, #tpu.memory_space<vmem>>, %arg63: memref<1x128xf32, #tpu.memory_space<vmem>>, %arg64: memref<1x128xf32, #tpu.memory_space<vmem>>, %arg65: memref<128x128xbf16, #tpu.memory_space<vmem>>, %arg66: memref<128x128xbf16, #tpu.memory_space<vmem>>, %arg67: memref<4x8x128xf32, #tpu.memory_space<vmem>>, %arg68: memref<128x384xbf16, #tpu.memory_space<vmem>>, %arg69: memref<1x128xf32, #tpu.memory_space<vmem>>, %arg70: memref<256x128xbf16, #tpu.memory_space<vmem>>, %arg71: memref<1x128xf32, #tpu.memory_space<vmem>>, %arg72: memref<128x128xbf16, #tpu.memory_space<vmem>>, %arg73: memref<4x128xf32, #tpu.memory_space<vmem>>, %arg74: memref<16x128xf32, #tpu.memory_space<vmem>>) attributes {dimension_semantics = [], scalar_prefetch = 0 : i64, scratch_operands = 0 : i64, tpu.core_type = #tpu.core_type<tc>} {
    %c0 = arith.constant 0 : index
    %c0_0 = arith.constant 0 : index
    %0 = vector.load %arg73[%c0, %c0_0] : memref<4x128xf32, #tpu.memory_space<vmem>>, vector<4x128xf32>
    %1 = tpu.concatenate %0, %0 in 0 : vector<4x128xf32>, vector<4x128xf32> -> vector<8x128xf32>
    %c0_1 = arith.constant 0 : index
    %c0_2 = arith.constant 0 : index
    %2 = vector.load %arg0[%c0_1, %c0_2] : memref<8x256xf32, #tpu.memory_space<vmem>>, vector<8x256xf32>
    %c0_3 = arith.constant 0 : index
    %c0_4 = arith.constant 0 : index
    %3 = vector.load %arg70[%c0_3, %c0_4] : memref<256x128xbf16, #tpu.memory_space<vmem>>, vector<256x128xbf16>
    %c0_5 = arith.constant 0 : index
    %c0_6 = arith.constant 0 : index
    %4 = vector.load %arg69[%c0_5, %c0_6] : memref<1x128xf32, #tpu.memory_space<vmem>>, vector<1x128xf32>
    %5 = arith.truncf %2 : vector<8x256xf32> to vector<8x256xbf16>
    %cst = arith.constant dense<0.000000e+00> : vector<8x128xf32>
    %6 = tpu.matmul %5, %3, %cst {dimension_numbers = #tpu.dot_dimension_numbers<[1], [0], [0], [1], [0, 0, 1, 1], [], []>} : vector<8x256xbf16>, vector<256x128xbf16>, vector<8x128xf32> -> vector<8x128xf32>
    %7 = vector.broadcast %4 : vector<1x128xf32> to vector<8x128xf32>
    %8 = arith.addf %6, %7 : vector<8x128xf32>
    %9 = arith.addf %8, %1 : vector<8x128xf32>
    %c0_7 = arith.constant 0 : index
    %c0_8 = arith.constant 0 : index
    %10 = vector.load %arg2[%c0_7, %c0_8] : memref<8x8xf32, #tpu.memory_space<vmem>>, vector<8x8xf32>
    %c0_9 = arith.constant 0 : index
    %c0_10 = arith.constant 0 : index
    %11 = vector.load %arg56[%c0_9, %c0_10] : memref<128x384xbf16, #tpu.memory_space<vmem>>, vector<128x384xbf16>
    %c0_11 = arith.constant 0 : index
    %c0_12 = arith.constant 0 : index
    %12 = vector.load %arg48[%c0_11, %c0_12] : memref<1x384xf32, #tpu.memory_space<vmem>>, vector<1x384xf32>
    %13 = arith.truncf %9 : vector<8x128xf32> to vector<8x128xbf16>
    %cst_13 = arith.constant dense<0.000000e+00> : vector<8x384xf32>
    %14 = tpu.matmul %13, %11, %cst_13 {dimension_numbers = #tpu.dot_dimension_numbers<[1], [0], [0], [1], [0, 0, 1, 1], [], []>} : vector<8x128xbf16>, vector<128x384xbf16>, vector<8x384xf32> -> vector<8x384xf32>
    %15 = vector.broadcast %12 : vector<1x384xf32> to vector<8x384xf32>
    %16 = arith.addf %14, %15 : vector<8x384xf32>
    %17 = vector.extract_strided_slice %16 {offsets = [0, 0], sizes = [8, 128], strides = [1, 1]} : vector<8x384xf32> to vector<8x128xf32>
    %18 = vector.extract_strided_slice %16 {offsets = [0, 128], sizes = [8, 128], strides = [1, 1]} : vector<8x384xf32> to vector<8x128xf32>
    %19 = vector.extract_strided_slice %16 {offsets = [0, 256], sizes = [8, 128], strides = [1, 1]} : vector<8x384xf32> to vector<8x128xf32>
    %c0_14 = arith.constant 0 : index
    %c0_15 = arith.constant 0 : index
    %c0_16 = arith.constant 0 : index
    %20 = vector.load %arg55[%c0_14, %c0_15, %c0_16] : memref<4x8x128xf32, #tpu.memory_space<vmem>>, vector<4x8x128xf32>
    %c0_17 = arith.constant 0 : index
    %c0_18 = arith.constant 0 : index
    %21 = vector.load %arg47[%c0_17, %c0_18] : memref<1x128xf32, #tpu.memory_space<vmem>>, vector<1x128xf32>
    %22 = vector.extract_strided_slice %17 {offsets = [0, 0], sizes = [8, 8], strides = [1, 1]} : vector<8x128xf32> to vector<8x8xf32>
    %23 = arith.truncf %22 : vector<8x8xf32> to vector<8x8xbf16>
    %24 = vector.extract_strided_slice %18 {offsets = [0, 0], sizes = [8, 8], strides = [1, 1]} : vector<8x128xf32> to vector<8x8xf32>
    %25 = arith.truncf %24 : vector<8x8xf32> to vector<8x8xbf16>
    %cst_19 = arith.constant dense<0.000000e+00> : vector<8x8xf32>
    %26 = tpu.matmul %23, %25, %cst_19 {dimension_numbers = #tpu.dot_dimension_numbers<[1], [1], [0], [0], [0, 0, 1, 0], [], []>} : vector<8x8xbf16>, vector<8x8xbf16>, vector<8x8xf32> -> vector<8x8xf32>
    %27 = arith.addf %26, %10 : vector<8x8xf32>
    %cst_20 = arith.constant dense<0xFF800000> : vector<8xf32>
    %28 = vector.multi_reduction <maximumf>, %27, %cst_20 [1] : vector<8x8xf32> to vector<8xf32>
    %29 = vector.shape_cast %28 : vector<8xf32> to vector<8x1xf32>
    %30 = vector.broadcast %29 : vector<8x1xf32> to vector<8x8xf32>
    %31 = arith.subf %27, %30 : vector<8x8xf32>
    %32 = math.exp %31 : vector<8x8xf32>
    %cst_21 = arith.constant dense<0.000000e+00> : vector<8xf32>
    %33 = vector.multi_reduction <add>, %32, %cst_21 [1] : vector<8x8xf32> to vector<8xf32>
    %34 = vector.shape_cast %33 : vector<8xf32> to vector<8x1xf32>
    %35 = tpu.reciprocal %34 {approx = true} : vector<8x1xf32> -> vector<8x1xf32>
    %36 = vector.broadcast %35 : vector<8x1xf32> to vector<8x8xf32>
    %37 = arith.mulf %32, %36 : vector<8x8xf32>
    %38 = arith.truncf %37 : vector<8x8xf32> to vector<8x8xbf16>
    %39 = vector.extract_strided_slice %19 {offsets = [0, 0], sizes = [8, 8], strides = [1, 1]} : vector<8x128xf32> to vector<8x8xf32>
    %40 = arith.truncf %39 : vector<8x8xf32> to vector<8x8xbf16>
    %cst_22 = arith.constant dense<0.000000e+00> : vector<8x8xf32>
    %41 = tpu.matmul %38, %40, %cst_22 {dimension_numbers = #tpu.dot_dimension_numbers<[1], [0], [0], [1], [0, 0, 1, 1], [], []>} : vector<8x8xbf16>, vector<8x8xbf16>, vector<8x8xf32> -> vector<8x8xf32>
    %42 = arith.truncf %41 : vector<8x8xf32> to vector<8x8xbf16>
    %43 = vector.extract_strided_slice %20 {offsets = [0, 0, 0], sizes = [1, 8, 128], strides = [1, 1, 1]} : vector<4x8x128xf32> to vector<1x8x128xf32>
    %44 = vector.shape_cast %43 : vector<1x8x128xf32> to vector<8x128xf32>
    %45 = arith.truncf %44 : vector<8x128xf32> to vector<8x128xbf16>
    %cst_23 = arith.constant dense<0.000000e+00> : vector<8x128xf32>
    %46 = tpu.matmul %42, %45, %cst_23 {dimension_numbers = #tpu.dot_dimension_numbers<[1], [0], [0], [1], [0, 0, 1, 1], [], []>} : vector<8x8xbf16>, vector<8x128xbf16>, vector<8x128xf32> -> vector<8x128xf32>
    %47 = vector.extract_strided_slice %17 {offsets = [0, 8], sizes = [8, 8], strides = [1, 1]} : vector<8x128xf32> to vector<8x8xf32>
    %48 = arith.truncf %47 : vector<8x8xf32> to vector<8x8xbf16>
    %49 = vector.extract_strided_slice %18 {offsets = [0, 8], sizes = [8, 8], strides = [1, 1]} : vector<8x128xf32> to vector<8x8xf32>
    %50 = arith.truncf %49 : vector<8x8xf32> to vector<8x8xbf16>
    %cst_24 = arith.constant dense<0.000000e+00> : vector<8x8xf32>
    %51 = tpu.matmul %48, %50, %cst_24 {dimension_numbers = #tpu.dot_dimension_numbers<[1], [1], [0], [0], [0, 0, 1, 0], [], []>} : vector<8x8xbf16>, vector<8x8xbf16>, vector<8x8xf32> -> vector<8x8xf32>
    %52 = arith.addf %51, %10 : vector<8x8xf32>
    %cst_25 = arith.constant dense<0xFF800000> : vector<8xf32>
    %53 = vector.multi_reduction <maximumf>, %52, %cst_25 [1] : vector<8x8xf32> to vector<8xf32>
    %54 = vector.shape_cast %53 : vector<8xf32> to vector<8x1xf32>
    %55 = vector.broadcast %54 : vector<8x1xf32> to vector<8x8xf32>
    %56 = arith.subf %52, %55 : vector<8x8xf32>
    %57 = math.exp %56 : vector<8x8xf32>
    %cst_26 = arith.constant dense<0.000000e+00> : vector<8xf32>
    %58 = vector.multi_reduction <add>, %57, %cst_26 [1] : vector<8x8xf32> to vector<8xf32>
    %59 = vector.shape_cast %58 : vector<8xf32> to vector<8x1xf32>
    %60 = tpu.reciprocal %59 {approx = true} : vector<8x1xf32> -> vector<8x1xf32>
    %61 = vector.broadcast %60 : vector<8x1xf32> to vector<8x8xf32>
    %62 = arith.mulf %57, %61 : vector<8x8xf32>
    %63 = arith.truncf %62 : vector<8x8xf32> to vector<8x8xbf16>
    %64 = vector.extract_strided_slice %19 {offsets = [0, 8], sizes = [8, 8], strides = [1, 1]} : vector<8x128xf32> to vector<8x8xf32>
    %65 = arith.truncf %64 : vector<8x8xf32> to vector<8x8xbf16>
    %cst_27 = arith.constant dense<0.000000e+00> : vector<8x8xf32>
    %66 = tpu.matmul %63, %65, %cst_27 {dimension_numbers = #tpu.dot_dimension_numbers<[1], [0], [0], [1], [0, 0, 1, 1], [], []>} : vector<8x8xbf16>, vector<8x8xbf16>, vector<8x8xf32> -> vector<8x8xf32>
    %67 = arith.truncf %66 : vector<8x8xf32> to vector<8x8xbf16>
    %68 = vector.extract_strided_slice %20 {offsets = [1, 0, 0], sizes = [1, 8, 128], strides = [1, 1, 1]} : vector<4x8x128xf32> to vector<1x8x128xf32>
    %69 = vector.shape_cast %68 : vector<1x8x128xf32> to vector<8x128xf32>
    %70 = arith.truncf %69 : vector<8x128xf32> to vector<8x128xbf16>
    %cst_28 = arith.constant dense<0.000000e+00> : vector<8x128xf32>
    %71 = tpu.matmul %67, %70, %cst_28 {dimension_numbers = #tpu.dot_dimension_numbers<[1], [0], [0], [1], [0, 0, 1, 1], [], []>} : vector<8x8xbf16>, vector<8x128xbf16>, vector<8x128xf32> -> vector<8x128xf32>
    %72 = arith.addf %46, %71 : vector<8x128xf32>
    %73 = vector.extract_strided_slice %17 {offsets = [0, 16], sizes = [8, 8], strides = [1, 1]} : vector<8x128xf32> to vector<8x8xf32>
    %74 = arith.truncf %73 : vector<8x8xf32> to vector<8x8xbf16>
    %75 = vector.extract_strided_slice %18 {offsets = [0, 16], sizes = [8, 8], strides = [1, 1]} : vector<8x128xf32> to vector<8x8xf32>
    %76 = arith.truncf %75 : vector<8x8xf32> to vector<8x8xbf16>
    %cst_29 = arith.constant dense<0.000000e+00> : vector<8x8xf32>
    %77 = tpu.matmul %74, %76, %cst_29 {dimension_numbers = #tpu.dot_dimension_numbers<[1], [1], [0], [0], [0, 0, 1, 0], [], []>} : vector<8x8xbf16>, vector<8x8xbf16>, vector<8x8xf32> -> vector<8x8xf32>
    %78 = arith.addf %77, %10 : vector<8x8xf32>
    %cst_30 = arith.constant dense<0xFF800000> : vector<8xf32>
    %79 = vector.multi_reduction <maximumf>, %78, %cst_30 [1] : vector<8x8xf32> to vector<8xf32>
    %80 = vector.shape_cast %79 : vector<8xf32> to vector<8x1xf32>
    %81 = vector.broadcast %80 : vector<8x1xf32> to vector<8x8xf32>
    %82 = arith.subf %78, %81 : vector<8x8xf32>
    %83 = math.exp %82 : vector<8x8xf32>
    %cst_31 = arith.constant dense<0.000000e+00> : vector<8xf32>
    %84 = vector.multi_reduction <add>, %83, %cst_31 [1] : vector<8x8xf32> to vector<8xf32>
    %85 = vector.shape_cast %84 : vector<8xf32> to vector<8x1xf32>
    %86 = tpu.reciprocal %85 {approx = true} : vector<8x1xf32> -> vector<8x1xf32>
    %87 = vector.broadcast %86 : vector<8x1xf32> to vector<8x8xf32>
    %88 = arith.mulf %83, %87 : vector<8x8xf32>
    %89 = arith.truncf %88 : vector<8x8xf32> to vector<8x8xbf16>
    %90 = vector.extract_strided_slice %19 {offsets = [0, 16], sizes = [8, 8], strides = [1, 1]} : vector<8x128xf32> to vector<8x8xf32>
    %91 = arith.truncf %90 : vector<8x8xf32> to vector<8x8xbf16>
    %cst_32 = arith.constant dense<0.000000e+00> : vector<8x8xf32>
    %92 = tpu.matmul %89, %91, %cst_32 {dimension_numbers = #tpu.dot_dimension_numbers<[1], [0], [0], [1], [0, 0, 1, 1], [], []>} : vector<8x8xbf16>, vector<8x8xbf16>, vector<8x8xf32> -> vector<8x8xf32>
    %93 = arith.truncf %92 : vector<8x8xf32> to vector<8x8xbf16>
    %94 = vector.extract_strided_slice %20 {offsets = [2, 0, 0], sizes = [1, 8, 128], strides = [1, 1, 1]} : vector<4x8x128xf32> to vector<1x8x128xf32>
    %95 = vector.shape_cast %94 : vector<1x8x128xf32> to vector<8x128xf32>
    %96 = arith.truncf %95 : vector<8x128xf32> to vector<8x128xbf16>
    %cst_33 = arith.constant dense<0.000000e+00> : vector<8x128xf32>
    %97 = tpu.matmul %93, %96, %cst_33 {dimension_numbers = #tpu.dot_dimension_numbers<[1], [0], [0], [1], [0, 0, 1, 1], [], []>} : vector<8x8xbf16>, vector<8x128xbf16>, vector<8x128xf32> -> vector<8x128xf32>
    %98 = arith.addf %72, %97 : vector<8x128xf32>
    %99 = vector.extract_strided_slice %17 {offsets = [0, 24], sizes = [8, 8], strides = [1, 1]} : vector<8x128xf32> to vector<8x8xf32>
    %100 = arith.truncf %99 : vector<8x8xf32> to vector<8x8xbf16>
    %101 = vector.extract_strided_slice %18 {offsets = [0, 24], sizes = [8, 8], strides = [1, 1]} : vector<8x128xf32> to vector<8x8xf32>
    %102 = arith.truncf %101 : vector<8x8xf32> to vector<8x8xbf16>
    %cst_34 = arith.constant dense<0.000000e+00> : vector<8x8xf32>
    %103 = tpu.matmul %100, %102, %cst_34 {dimension_numbers = #tpu.dot_dimension_numbers<[1], [1], [0], [0], [0, 0, 1, 0], [], []>} : vector<8x8xbf16>, vector<8x8xbf16>, vector<8x8xf32> -> vector<8x8xf32>
    %104 = arith.addf %103, %10 : vector<8x8xf32>
    %cst_35 = arith.constant dense<0xFF800000> : vector<8xf32>
    %105 = vector.multi_reduction <maximumf>, %104, %cst_35 [1] : vector<8x8xf32> to vector<8xf32>
    %106 = vector.shape_cast %105 : vector<8xf32> to vector<8x1xf32>
    %107 = vector.broadcast %106 : vector<8x1xf32> to vector<8x8xf32>
    %108 = arith.subf %104, %107 : vector<8x8xf32>
    %109 = math.exp %108 : vector<8x8xf32>
    %cst_36 = arith.constant dense<0.000000e+00> : vector<8xf32>
    %110 = vector.multi_reduction <add>, %109, %cst_36 [1] : vector<8x8xf32> to vector<8xf32>
    %111 = vector.shape_cast %110 : vector<8xf32> to vector<8x1xf32>
    %112 = tpu.reciprocal %111 {approx = true} : vector<8x1xf32> -> vector<8x1xf32>
    %113 = vector.broadcast %112 : vector<8x1xf32> to vector<8x8xf32>
    %114 = arith.mulf %109, %113 : vector<8x8xf32>
    %115 = arith.truncf %114 : vector<8x8xf32> to vector<8x8xbf16>
    %116 = vector.extract_strided_slice %19 {offsets = [0, 24], sizes = [8, 8], strides = [1, 1]} : vector<8x128xf32> to vector<8x8xf32>
    %117 = arith.truncf %116 : vector<8x8xf32> to vector<8x8xbf16>
    %cst_37 = arith.constant dense<0.000000e+00> : vector<8x8xf32>
    %118 = tpu.matmul %115, %117, %cst_37 {dimension_numbers = #tpu.dot_dimension_numbers<[1], [0], [0], [1], [0, 0, 1, 1], [], []>} : vector<8x8xbf16>, vector<8x8xbf16>, vector<8x8xf32> -> vector<8x8xf32>
    %119 = arith.truncf %118 : vector<8x8xf32> to vector<8x8xbf16>
    %120 = vector.extract_strided_slice %20 {offsets = [3, 0, 0], sizes = [1, 8, 128], strides = [1, 1, 1]} : vector<4x8x128xf32> to vector<1x8x128xf32>
    %121 = vector.shape_cast %120 : vector<1x8x128xf32> to vector<8x128xf32>
    %122 = arith.truncf %121 : vector<8x128xf32> to vector<8x128xbf16>
    %cst_38 = arith.constant dense<0.000000e+00> : vector<8x128xf32>
    %123 = tpu.matmul %119, %122, %cst_38 {dimension_numbers = #tpu.dot_dimension_numbers<[1], [0], [0], [1], [0, 0, 1, 1], [], []>} : vector<8x8xbf16>, vector<8x128xbf16>, vector<8x128xf32> -> vector<8x128xf32>
    %124 = arith.addf %98, %123 : vector<8x128xf32>
    %125 = vector.broadcast %21 : vector<1x128xf32> to vector<8x128xf32>
    %126 = arith.addf %124, %125 : vector<8x128xf32>
    %127 = arith.addf %9, %126 : vector<8x128xf32>
    %c0_39 = arith.constant 0 : index
    %c0_40 = arith.constant 0 : index
    %128 = vector.load %arg50[%c0_39, %c0_40] : memref<1x128xf32, #tpu.memory_space<vmem>>, vector<1x128xf32>
    %c0_41 = arith.constant 0 : index
    %c0_42 = arith.constant 0 : index
    %129 = vector.load %arg49[%c0_41, %c0_42] : memref<1x128xf32, #tpu.memory_space<vmem>>, vector<1x128xf32>
    %cst_43 = arith.constant dense<0.000000e+00> : vector<8xf32>
    %130 = vector.multi_reduction <add>, %127, %cst_43 [1] : vector<8x128xf32> to vector<8xf32>
    %131 = vector.shape_cast %130 : vector<8xf32> to vector<8x1xf32>
    %cst_44 = arith.constant 3.125000e-02 : f32
    %132 = vector.broadcast %cst_44 : f32 to vector<8x1xf32>
    %133 = arith.mulf %131, %132 : vector<8x1xf32>
    %134 = arith.mulf %127, %127 : vector<8x128xf32>
    %cst_45 = arith.constant dense<0.000000e+00> : vector<8xf32>
    %135 = vector.multi_reduction <add>, %134, %cst_45 [1] : vector<8x128xf32> to vector<8xf32>
    %136 = vector.shape_cast %135 : vector<8xf32> to vector<8x1xf32>
    %cst_46 = arith.constant 3.125000e-02 : f32
    %137 = vector.broadcast %cst_46 : f32 to vector<8x1xf32>
    %138 = arith.mulf %136, %137 : vector<8x1xf32>
    %139 = arith.mulf %133, %133 : vector<8x1xf32>
    %140 = arith.subf %138, %139 : vector<8x1xf32>
    %141 = vector.broadcast %133 : vector<8x1xf32> to vector<8x128xf32>
    %142 = arith.subf %127, %141 : vector<8x128xf32>
    %cst_47 = arith.constant 9.99999974E-6 : f32
    %143 = vector.broadcast %cst_47 : f32 to vector<8x1xf32>
    %144 = arith.addf %140, %143 : vector<8x1xf32>
    %145 = math.rsqrt %144 : vector<8x1xf32>
    %146 = vector.broadcast %145 : vector<8x1xf32> to vector<8x128xf32>
    %147 = arith.mulf %142, %146 : vector<8x128xf32>
    %148 = vector.broadcast %128 : vector<1x128xf32> to vector<8x128xf32>
    %149 = arith.mulf %147, %148 : vector<8x128xf32>
    %150 = vector.broadcast %129 : vector<1x128xf32> to vector<8x128xf32>
    %151 = arith.addf %149, %150 : vector<8x128xf32>
    %c0_48 = arith.constant 0 : index
    %c0_49 = arith.constant 0 : index
    %152 = vector.load %arg53[%c0_48, %c0_49] : memref<128x128xbf16, #tpu.memory_space<vmem>>, vector<128x128xbf16>
    %c0_50 = arith.constant 0 : index
    %c0_51 = arith.constant 0 : index
    %153 = vector.load %arg45[%c0_50, %c0_51] : memref<1x128xf32, #tpu.memory_space<vmem>>, vector<1x128xf32>
    %c0_52 = arith.constant 0 : index
    %c0_53 = arith.constant 0 : index
    %154 = vector.load %arg54[%c0_52, %c0_53] : memref<128x128xbf16, #tpu.memory_space<vmem>>, vector<128x128xbf16>
    %c0_54 = arith.constant 0 : index
    %c0_55 = arith.constant 0 : index
    %155 = vector.load %arg46[%c0_54, %c0_55] : memref<1x128xf32, #tpu.memory_space<vmem>>, vector<1x128xf32>
    %156 = arith.truncf %151 : vector<8x128xf32> to vector<8x128xbf16>
    %cst_56 = arith.constant dense<0.000000e+00> : vector<8x128xf32>
    %157 = tpu.matmul %156, %152, %cst_56 {dimension_numbers = #tpu.dot_dimension_numbers<[1], [0], [0], [1], [0, 0, 1, 1], [], []>} : vector<8x128xbf16>, vector<128x128xbf16>, vector<8x128xf32> -> vector<8x128xf32>
    %158 = vector.broadcast %153 : vector<1x128xf32> to vector<8x128xf32>
    %159 = arith.addf %157, %158 : vector<8x128xf32>
    %cst_57 = arith.constant 0.000000e+00 : f32
    %160 = vector.broadcast %cst_57 : f32 to vector<8x128xf32>
    %161 = arith.maximumf %159, %160 : vector<8x128xf32>
    %162 = arith.truncf %161 : vector<8x128xf32> to vector<8x128xbf16>
    %cst_58 = arith.constant dense<0.000000e+00> : vector<8x128xf32>
    %163 = tpu.matmul %162, %154, %cst_58 {dimension_numbers = #tpu.dot_dimension_numbers<[1], [0], [0], [1], [0, 0, 1, 1], [], []>} : vector<8x128xbf16>, vector<128x128xbf16>, vector<8x128xf32> -> vector<8x128xf32>
    %164 = vector.broadcast %155 : vector<1x128xf32> to vector<8x128xf32>
    %165 = arith.addf %163, %164 : vector<8x128xf32>
    %166 = arith.addf %151, %165 : vector<8x128xf32>
    %c0_59 = arith.constant 0 : index
    %c0_60 = arith.constant 0 : index
    %167 = vector.load %arg52[%c0_59, %c0_60] : memref<1x128xf32, #tpu.memory_space<vmem>>, vector<1x128xf32>
    %c0_61 = arith.constant 0 : index
    %c0_62 = arith.constant 0 : index
    %168 = vector.load %arg51[%c0_61, %c0_62] : memref<1x128xf32, #tpu.memory_space<vmem>>, vector<1x128xf32>
    %cst_63 = arith.constant dense<0.000000e+00> : vector<8xf32>
    %169 = vector.multi_reduction <add>, %166, %cst_63 [1] : vector<8x128xf32> to vector<8xf32>
    %170 = vector.shape_cast %169 : vector<8xf32> to vector<8x1xf32>
    %cst_64 = arith.constant 3.125000e-02 : f32
    %171 = vector.broadcast %cst_64 : f32 to vector<8x1xf32>
    %172 = arith.mulf %170, %171 : vector<8x1xf32>
    %173 = arith.mulf %166, %166 : vector<8x128xf32>
    %cst_65 = arith.constant dense<0.000000e+00> : vector<8xf32>
    %174 = vector.multi_reduction <add>, %173, %cst_65 [1] : vector<8x128xf32> to vector<8xf32>
    %175 = vector.shape_cast %174 : vector<8xf32> to vector<8x1xf32>
    %cst_66 = arith.constant 3.125000e-02 : f32
    %176 = vector.broadcast %cst_66 : f32 to vector<8x1xf32>
    %177 = arith.mulf %175, %176 : vector<8x1xf32>
    %178 = arith.mulf %172, %172 : vector<8x1xf32>
    %179 = arith.subf %177, %178 : vector<8x1xf32>
    %180 = vector.broadcast %172 : vector<8x1xf32> to vector<8x128xf32>
    %181 = arith.subf %166, %180 : vector<8x128xf32>
    %cst_67 = arith.constant 9.99999974E-6 : f32
    %182 = vector.broadcast %cst_67 : f32 to vector<8x1xf32>
    %183 = arith.addf %179, %182 : vector<8x1xf32>
    %184 = math.rsqrt %183 : vector<8x1xf32>
    %185 = vector.broadcast %184 : vector<8x1xf32> to vector<8x128xf32>
    %186 = arith.mulf %181, %185 : vector<8x128xf32>
    %187 = vector.broadcast %167 : vector<1x128xf32> to vector<8x128xf32>
    %188 = arith.mulf %186, %187 : vector<8x128xf32>
    %189 = vector.broadcast %168 : vector<1x128xf32> to vector<8x128xf32>
    %190 = arith.addf %188, %189 : vector<8x128xf32>
    %c0_68 = arith.constant 0 : index
    %c0_69 = arith.constant 0 : index
    %191 = vector.load %arg68[%c0_68, %c0_69] : memref<128x384xbf16, #tpu.memory_space<vmem>>, vector<128x384xbf16>
    %c0_70 = arith.constant 0 : index
    %c0_71 = arith.constant 0 : index
    %192 = vector.load %arg60[%c0_70, %c0_71] : memref<1x384xf32, #tpu.memory_space<vmem>>, vector<1x384xf32>
    %193 = arith.truncf %190 : vector<8x128xf32> to vector<8x128xbf16>
    %cst_72 = arith.constant dense<0.000000e+00> : vector<8x384xf32>
    %194 = tpu.matmul %193, %191, %cst_72 {dimension_numbers = #tpu.dot_dimension_numbers<[1], [0], [0], [1], [0, 0, 1, 1], [], []>} : vector<8x128xbf16>, vector<128x384xbf16>, vector<8x384xf32> -> vector<8x384xf32>
    %195 = vector.broadcast %192 : vector<1x384xf32> to vector<8x384xf32>
    %196 = arith.addf %194, %195 : vector<8x384xf32>
    %197 = vector.extract_strided_slice %196 {offsets = [0, 0], sizes = [8, 128], strides = [1, 1]} : vector<8x384xf32> to vector<8x128xf32>
    %198 = vector.extract_strided_slice %196 {offsets = [0, 128], sizes = [8, 128], strides = [1, 1]} : vector<8x384xf32> to vector<8x128xf32>
    %199 = vector.extract_strided_slice %196 {offsets = [0, 256], sizes = [8, 128], strides = [1, 1]} : vector<8x384xf32> to vector<8x128xf32>
    %c0_73 = arith.constant 0 : index
    %c0_74 = arith.constant 0 : index
    %c0_75 = arith.constant 0 : index
    %200 = vector.load %arg67[%c0_73, %c0_74, %c0_75] : memref<4x8x128xf32, #tpu.memory_space<vmem>>, vector<4x8x128xf32>
    %c0_76 = arith.constant 0 : index
    %c0_77 = arith.constant 0 : index
    %201 = vector.load %arg59[%c0_76, %c0_77] : memref<1x128xf32, #tpu.memory_space<vmem>>, vector<1x128xf32>
    %202 = vector.extract_strided_slice %197 {offsets = [0, 0], sizes = [8, 8], strides = [1, 1]} : vector<8x128xf32> to vector<8x8xf32>
    %203 = arith.truncf %202 : vector<8x8xf32> to vector<8x8xbf16>
    %204 = vector.extract_strided_slice %198 {offsets = [0, 0], sizes = [8, 8], strides = [1, 1]} : vector<8x128xf32> to vector<8x8xf32>
    %205 = arith.truncf %204 : vector<8x8xf32> to vector<8x8xbf16>
    %cst_78 = arith.constant dense<0.000000e+00> : vector<8x8xf32>
    %206 = tpu.matmul %203, %205, %cst_78 {dimension_numbers = #tpu.dot_dimension_numbers<[1], [1], [0], [0], [0, 0, 1, 0], [], []>} : vector<8x8xbf16>, vector<8x8xbf16>, vector<8x8xf32> -> vector<8x8xf32>
    %207 = arith.addf %206, %10 : vector<8x8xf32>
    %cst_79 = arith.constant dense<0xFF800000> : vector<8xf32>
    %208 = vector.multi_reduction <maximumf>, %207, %cst_79 [1] : vector<8x8xf32> to vector<8xf32>
    %209 = vector.shape_cast %208 : vector<8xf32> to vector<8x1xf32>
    %210 = vector.broadcast %209 : vector<8x1xf32> to vector<8x8xf32>
    %211 = arith.subf %207, %210 : vector<8x8xf32>
    %212 = math.exp %211 : vector<8x8xf32>
    %cst_80 = arith.constant dense<0.000000e+00> : vector<8xf32>
    %213 = vector.multi_reduction <add>, %212, %cst_80 [1] : vector<8x8xf32> to vector<8xf32>
    %214 = vector.shape_cast %213 : vector<8xf32> to vector<8x1xf32>
    %215 = tpu.reciprocal %214 {approx = true} : vector<8x1xf32> -> vector<8x1xf32>
    %216 = vector.broadcast %215 : vector<8x1xf32> to vector<8x8xf32>
    %217 = arith.mulf %212, %216 : vector<8x8xf32>
    %218 = arith.truncf %217 : vector<8x8xf32> to vector<8x8xbf16>
    %219 = vector.extract_strided_slice %199 {offsets = [0, 0], sizes = [8, 8], strides = [1, 1]} : vector<8x128xf32> to vector<8x8xf32>
    %220 = arith.truncf %219 : vector<8x8xf32> to vector<8x8xbf16>
    %cst_81 = arith.constant dense<0.000000e+00> : vector<8x8xf32>
    %221 = tpu.matmul %218, %220, %cst_81 {dimension_numbers = #tpu.dot_dimension_numbers<[1], [0], [0], [1], [0, 0, 1, 1], [], []>} : vector<8x8xbf16>, vector<8x8xbf16>, vector<8x8xf32> -> vector<8x8xf32>
    %222 = arith.truncf %221 : vector<8x8xf32> to vector<8x8xbf16>
    %223 = vector.extract_strided_slice %200 {offsets = [0, 0, 0], sizes = [1, 8, 128], strides = [1, 1, 1]} : vector<4x8x128xf32> to vector<1x8x128xf32>
    %224 = vector.shape_cast %223 : vector<1x8x128xf32> to vector<8x128xf32>
    %225 = arith.truncf %224 : vector<8x128xf32> to vector<8x128xbf16>
    %cst_82 = arith.constant dense<0.000000e+00> : vector<8x128xf32>
    %226 = tpu.matmul %222, %225, %cst_82 {dimension_numbers = #tpu.dot_dimension_numbers<[1], [0], [0], [1], [0, 0, 1, 1], [], []>} : vector<8x8xbf16>, vector<8x128xbf16>, vector<8x128xf32> -> vector<8x128xf32>
    %227 = vector.extract_strided_slice %197 {offsets = [0, 8], sizes = [8, 8], strides = [1, 1]} : vector<8x128xf32> to vector<8x8xf32>
    %228 = arith.truncf %227 : vector<8x8xf32> to vector<8x8xbf16>
    %229 = vector.extract_strided_slice %198 {offsets = [0, 8], sizes = [8, 8], strides = [1, 1]} : vector<8x128xf32> to vector<8x8xf32>
    %230 = arith.truncf %229 : vector<8x8xf32> to vector<8x8xbf16>
    %cst_83 = arith.constant dense<0.000000e+00> : vector<8x8xf32>
    %231 = tpu.matmul %228, %230, %cst_83 {dimension_numbers = #tpu.dot_dimension_numbers<[1], [1], [0], [0], [0, 0, 1, 0], [], []>} : vector<8x8xbf16>, vector<8x8xbf16>, vector<8x8xf32> -> vector<8x8xf32>
    %232 = arith.addf %231, %10 : vector<8x8xf32>
    %cst_84 = arith.constant dense<0xFF800000> : vector<8xf32>
    %233 = vector.multi_reduction <maximumf>, %232, %cst_84 [1] : vector<8x8xf32> to vector<8xf32>
    %234 = vector.shape_cast %233 : vector<8xf32> to vector<8x1xf32>
    %235 = vector.broadcast %234 : vector<8x1xf32> to vector<8x8xf32>
    %236 = arith.subf %232, %235 : vector<8x8xf32>
    %237 = math.exp %236 : vector<8x8xf32>
    %cst_85 = arith.constant dense<0.000000e+00> : vector<8xf32>
    %238 = vector.multi_reduction <add>, %237, %cst_85 [1] : vector<8x8xf32> to vector<8xf32>
    %239 = vector.shape_cast %238 : vector<8xf32> to vector<8x1xf32>
    %240 = tpu.reciprocal %239 {approx = true} : vector<8x1xf32> -> vector<8x1xf32>
    %241 = vector.broadcast %240 : vector<8x1xf32> to vector<8x8xf32>
    %242 = arith.mulf %237, %241 : vector<8x8xf32>
    %243 = arith.truncf %242 : vector<8x8xf32> to vector<8x8xbf16>
    %244 = vector.extract_strided_slice %199 {offsets = [0, 8], sizes = [8, 8], strides = [1, 1]} : vector<8x128xf32> to vector<8x8xf32>
    %245 = arith.truncf %244 : vector<8x8xf32> to vector<8x8xbf16>
    %cst_86 = arith.constant dense<0.000000e+00> : vector<8x8xf32>
    %246 = tpu.matmul %243, %245, %cst_86 {dimension_numbers = #tpu.dot_dimension_numbers<[1], [0], [0], [1], [0, 0, 1, 1], [], []>} : vector<8x8xbf16>, vector<8x8xbf16>, vector<8x8xf32> -> vector<8x8xf32>
    %247 = arith.truncf %246 : vector<8x8xf32> to vector<8x8xbf16>
    %248 = vector.extract_strided_slice %200 {offsets = [1, 0, 0], sizes = [1, 8, 128], strides = [1, 1, 1]} : vector<4x8x128xf32> to vector<1x8x128xf32>
    %249 = vector.shape_cast %248 : vector<1x8x128xf32> to vector<8x128xf32>
    %250 = arith.truncf %249 : vector<8x128xf32> to vector<8x128xbf16>
    %cst_87 = arith.constant dense<0.000000e+00> : vector<8x128xf32>
    %251 = tpu.matmul %247, %250, %cst_87 {dimension_numbers = #tpu.dot_dimension_numbers<[1], [0], [0], [1], [0, 0, 1, 1], [], []>} : vector<8x8xbf16>, vector<8x128xbf16>, vector<8x128xf32> -> vector<8x128xf32>
    %252 = arith.addf %226, %251 : vector<8x128xf32>
    %253 = vector.extract_strided_slice %197 {offsets = [0, 16], sizes = [8, 8], strides = [1, 1]} : vector<8x128xf32> to vector<8x8xf32>
    %254 = arith.truncf %253 : vector<8x8xf32> to vector<8x8xbf16>
    %255 = vector.extract_strided_slice %198 {offsets = [0, 16], sizes = [8, 8], strides = [1, 1]} : vector<8x128xf32> to vector<8x8xf32>
    %256 = arith.truncf %255 : vector<8x8xf32> to vector<8x8xbf16>
    %cst_88 = arith.constant dense<0.000000e+00> : vector<8x8xf32>
    %257 = tpu.matmul %254, %256, %cst_88 {dimension_numbers = #tpu.dot_dimension_numbers<[1], [1], [0], [0], [0, 0, 1, 0], [], []>} : vector<8x8xbf16>, vector<8x8xbf16>, vector<8x8xf32> -> vector<8x8xf32>
    %258 = arith.addf %257, %10 : vector<8x8xf32>
    %cst_89 = arith.constant dense<0xFF800000> : vector<8xf32>
    %259 = vector.multi_reduction <maximumf>, %258, %cst_89 [1] : vector<8x8xf32> to vector<8xf32>
    %260 = vector.shape_cast %259 : vector<8xf32> to vector<8x1xf32>
    %261 = vector.broadcast %260 : vector<8x1xf32> to vector<8x8xf32>
    %262 = arith.subf %258, %261 : vector<8x8xf32>
    %263 = math.exp %262 : vector<8x8xf32>
    %cst_90 = arith.constant dense<0.000000e+00> : vector<8xf32>
    %264 = vector.multi_reduction <add>, %263, %cst_90 [1] : vector<8x8xf32> to vector<8xf32>
    %265 = vector.shape_cast %264 : vector<8xf32> to vector<8x1xf32>
    %266 = tpu.reciprocal %265 {approx = true} : vector<8x1xf32> -> vector<8x1xf32>
    %267 = vector.broadcast %266 : vector<8x1xf32> to vector<8x8xf32>
    %268 = arith.mulf %263, %267 : vector<8x8xf32>
    %269 = arith.truncf %268 : vector<8x8xf32> to vector<8x8xbf16>
    %270 = vector.extract_strided_slice %199 {offsets = [0, 16], sizes = [8, 8], strides = [1, 1]} : vector<8x128xf32> to vector<8x8xf32>
    %271 = arith.truncf %270 : vector<8x8xf32> to vector<8x8xbf16>
    %cst_91 = arith.constant dense<0.000000e+00> : vector<8x8xf32>
    %272 = tpu.matmul %269, %271, %cst_91 {dimension_numbers = #tpu.dot_dimension_numbers<[1], [0], [0], [1], [0, 0, 1, 1], [], []>} : vector<8x8xbf16>, vector<8x8xbf16>, vector<8x8xf32> -> vector<8x8xf32>
    %273 = arith.truncf %272 : vector<8x8xf32> to vector<8x8xbf16>
    %274 = vector.extract_strided_slice %200 {offsets = [2, 0, 0], sizes = [1, 8, 128], strides = [1, 1, 1]} : vector<4x8x128xf32> to vector<1x8x128xf32>
    %275 = vector.shape_cast %274 : vector<1x8x128xf32> to vector<8x128xf32>
    %276 = arith.truncf %275 : vector<8x128xf32> to vector<8x128xbf16>
    %cst_92 = arith.constant dense<0.000000e+00> : vector<8x128xf32>
    %277 = tpu.matmul %273, %276, %cst_92 {dimension_numbers = #tpu.dot_dimension_numbers<[1], [0], [0], [1], [0, 0, 1, 1], [], []>} : vector<8x8xbf16>, vector<8x128xbf16>, vector<8x128xf32> -> vector<8x128xf32>
    %278 = arith.addf %252, %277 : vector<8x128xf32>
    %279 = vector.extract_strided_slice %197 {offsets = [0, 24], sizes = [8, 8], strides = [1, 1]} : vector<8x128xf32> to vector<8x8xf32>
    %280 = arith.truncf %279 : vector<8x8xf32> to vector<8x8xbf16>
    %281 = vector.extract_strided_slice %198 {offsets = [0, 24], sizes = [8, 8], strides = [1, 1]} : vector<8x128xf32> to vector<8x8xf32>
    %282 = arith.truncf %281 : vector<8x8xf32> to vector<8x8xbf16>
    %cst_93 = arith.constant dense<0.000000e+00> : vector<8x8xf32>
    %283 = tpu.matmul %280, %282, %cst_93 {dimension_numbers = #tpu.dot_dimension_numbers<[1], [1], [0], [0], [0, 0, 1, 0], [], []>} : vector<8x8xbf16>, vector<8x8xbf16>, vector<8x8xf32> -> vector<8x8xf32>
    %284 = arith.addf %283, %10 : vector<8x8xf32>
    %cst_94 = arith.constant dense<0xFF800000> : vector<8xf32>
    %285 = vector.multi_reduction <maximumf>, %284, %cst_94 [1] : vector<8x8xf32> to vector<8xf32>
    %286 = vector.shape_cast %285 : vector<8xf32> to vector<8x1xf32>
    %287 = vector.broadcast %286 : vector<8x1xf32> to vector<8x8xf32>
    %288 = arith.subf %284, %287 : vector<8x8xf32>
    %289 = math.exp %288 : vector<8x8xf32>
    %cst_95 = arith.constant dense<0.000000e+00> : vector<8xf32>
    %290 = vector.multi_reduction <add>, %289, %cst_95 [1] : vector<8x8xf32> to vector<8xf32>
    %291 = vector.shape_cast %290 : vector<8xf32> to vector<8x1xf32>
    %292 = tpu.reciprocal %291 {approx = true} : vector<8x1xf32> -> vector<8x1xf32>
    %293 = vector.broadcast %292 : vector<8x1xf32> to vector<8x8xf32>
    %294 = arith.mulf %289, %293 : vector<8x8xf32>
    %295 = arith.truncf %294 : vector<8x8xf32> to vector<8x8xbf16>
    %296 = vector.extract_strided_slice %199 {offsets = [0, 24], sizes = [8, 8], strides = [1, 1]} : vector<8x128xf32> to vector<8x8xf32>
    %297 = arith.truncf %296 : vector<8x8xf32> to vector<8x8xbf16>
    %cst_96 = arith.constant dense<0.000000e+00> : vector<8x8xf32>
    %298 = tpu.matmul %295, %297, %cst_96 {dimension_numbers = #tpu.dot_dimension_numbers<[1], [0], [0], [1], [0, 0, 1, 1], [], []>} : vector<8x8xbf16>, vector<8x8xbf16>, vector<8x8xf32> -> vector<8x8xf32>
    %299 = arith.truncf %298 : vector<8x8xf32> to vector<8x8xbf16>
    %300 = vector.extract_strided_slice %200 {offsets = [3, 0, 0], sizes = [1, 8, 128], strides = [1, 1, 1]} : vector<4x8x128xf32> to vector<1x8x128xf32>
    %301 = vector.shape_cast %300 : vector<1x8x128xf32> to vector<8x128xf32>
    %302 = arith.truncf %301 : vector<8x128xf32> to vector<8x128xbf16>
    %cst_97 = arith.constant dense<0.000000e+00> : vector<8x128xf32>
    %303 = tpu.matmul %299, %302, %cst_97 {dimension_numbers = #tpu.dot_dimension_numbers<[1], [0], [0], [1], [0, 0, 1, 1], [], []>} : vector<8x8xbf16>, vector<8x128xbf16>, vector<8x128xf32> -> vector<8x128xf32>
    %304 = arith.addf %278, %303 : vector<8x128xf32>
    %305 = vector.broadcast %201 : vector<1x128xf32> to vector<8x128xf32>
    %306 = arith.addf %304, %305 : vector<8x128xf32>
    %307 = arith.addf %190, %306 : vector<8x128xf32>
    %c0_98 = arith.constant 0 : index
    %c0_99 = arith.constant 0 : index
    %308 = vector.load %arg62[%c0_98, %c0_99] : memref<1x128xf32, #tpu.memory_space<vmem>>, vector<1x128xf32>
    %c0_100 = arith.constant 0 : index
    %c0_101 = arith.constant 0 : index
    %309 = vector.load %arg61[%c0_100, %c0_101] : memref<1x128xf32, #tpu.memory_space<vmem>>, vector<1x128xf32>
    %cst_102 = arith.constant dense<0.000000e+00> : vector<8xf32>
    %310 = vector.multi_reduction <add>, %307, %cst_102 [1] : vector<8x128xf32> to vector<8xf32>
    %311 = vector.shape_cast %310 : vector<8xf32> to vector<8x1xf32>
    %cst_103 = arith.constant 3.125000e-02 : f32
    %312 = vector.broadcast %cst_103 : f32 to vector<8x1xf32>
    %313 = arith.mulf %311, %312 : vector<8x1xf32>
    %314 = arith.mulf %307, %307 : vector<8x128xf32>
    %cst_104 = arith.constant dense<0.000000e+00> : vector<8xf32>
    %315 = vector.multi_reduction <add>, %314, %cst_104 [1] : vector<8x128xf32> to vector<8xf32>
    %316 = vector.shape_cast %315 : vector<8xf32> to vector<8x1xf32>
    %cst_105 = arith.constant 3.125000e-02 : f32
    %317 = vector.broadcast %cst_105 : f32 to vector<8x1xf32>
    %318 = arith.mulf %316, %317 : vector<8x1xf32>
    %319 = arith.mulf %313, %313 : vector<8x1xf32>
    %320 = arith.subf %318, %319 : vector<8x1xf32>
    %321 = vector.broadcast %313 : vector<8x1xf32> to vector<8x128xf32>
    %322 = arith.subf %307, %321 : vector<8x128xf32>
    %cst_106 = arith.constant 9.99999974E-6 : f32
    %323 = vector.broadcast %cst_106 : f32 to vector<8x1xf32>
    %324 = arith.addf %320, %323 : vector<8x1xf32>
    %325 = math.rsqrt %324 : vector<8x1xf32>
    %326 = vector.broadcast %325 : vector<8x1xf32> to vector<8x128xf32>
    %327 = arith.mulf %322, %326 : vector<8x128xf32>
    %328 = vector.broadcast %308 : vector<1x128xf32> to vector<8x128xf32>
    %329 = arith.mulf %327, %328 : vector<8x128xf32>
    %330 = vector.broadcast %309 : vector<1x128xf32> to vector<8x128xf32>
    %331 = arith.addf %329, %330 : vector<8x128xf32>
    %c0_107 = arith.constant 0 : index
    %c0_108 = arith.constant 0 : index
    %332 = vector.load %arg65[%c0_107, %c0_108] : memref<128x128xbf16, #tpu.memory_space<vmem>>, vector<128x128xbf16>
    %c0_109 = arith.constant 0 : index
    %c0_110 = arith.constant 0 : index
    %333 = vector.load %arg57[%c0_109, %c0_110] : memref<1x128xf32, #tpu.memory_space<vmem>>, vector<1x128xf32>
    %c0_111 = arith.constant 0 : index
    %c0_112 = arith.constant 0 : index
    %334 = vector.load %arg66[%c0_111, %c0_112] : memref<128x128xbf16, #tpu.memory_space<vmem>>, vector<128x128xbf16>
    %c0_113 = arith.constant 0 : index
    %c0_114 = arith.constant 0 : index
    %335 = vector.load %arg58[%c0_113, %c0_114] : memref<1x128xf32, #tpu.memory_space<vmem>>, vector<1x128xf32>
    %336 = arith.truncf %331 : vector<8x128xf32> to vector<8x128xbf16>
    %cst_115 = arith.constant dense<0.000000e+00> : vector<8x128xf32>
    %337 = tpu.matmul %336, %332, %cst_115 {dimension_numbers = #tpu.dot_dimension_numbers<[1], [0], [0], [1], [0, 0, 1, 1], [], []>} : vector<8x128xbf16>, vector<128x128xbf16>, vector<8x128xf32> -> vector<8x128xf32>
    %338 = vector.broadcast %333 : vector<1x128xf32> to vector<8x128xf32>
    %339 = arith.addf %337, %338 : vector<8x128xf32>
    %cst_116 = arith.constant 0.000000e+00 : f32
    %340 = vector.broadcast %cst_116 : f32 to vector<8x128xf32>
    %341 = arith.maximumf %339, %340 : vector<8x128xf32>
    %342 = arith.truncf %341 : vector<8x128xf32> to vector<8x128xbf16>
    %cst_117 = arith.constant dense<0.000000e+00> : vector<8x128xf32>
    %343 = tpu.matmul %342, %334, %cst_117 {dimension_numbers = #tpu.dot_dimension_numbers<[1], [0], [0], [1], [0, 0, 1, 1], [], []>} : vector<8x128xbf16>, vector<128x128xbf16>, vector<8x128xf32> -> vector<8x128xf32>
    %344 = vector.broadcast %335 : vector<1x128xf32> to vector<8x128xf32>
    %345 = arith.addf %343, %344 : vector<8x128xf32>
    %346 = arith.addf %331, %345 : vector<8x128xf32>
    %c0_118 = arith.constant 0 : index
    %c0_119 = arith.constant 0 : index
    %347 = vector.load %arg64[%c0_118, %c0_119] : memref<1x128xf32, #tpu.memory_space<vmem>>, vector<1x128xf32>
    %c0_120 = arith.constant 0 : index
    %c0_121 = arith.constant 0 : index
    %348 = vector.load %arg63[%c0_120, %c0_121] : memref<1x128xf32, #tpu.memory_space<vmem>>, vector<1x128xf32>
    %cst_122 = arith.constant dense<0.000000e+00> : vector<8xf32>
    %349 = vector.multi_reduction <add>, %346, %cst_122 [1] : vector<8x128xf32> to vector<8xf32>
    %350 = vector.shape_cast %349 : vector<8xf32> to vector<8x1xf32>
    %cst_123 = arith.constant 3.125000e-02 : f32
    %351 = vector.broadcast %cst_123 : f32 to vector<8x1xf32>
    %352 = arith.mulf %350, %351 : vector<8x1xf32>
    %353 = arith.mulf %346, %346 : vector<8x128xf32>
    %cst_124 = arith.constant dense<0.000000e+00> : vector<8xf32>
    %354 = vector.multi_reduction <add>, %353, %cst_124 [1] : vector<8x128xf32> to vector<8xf32>
    %355 = vector.shape_cast %354 : vector<8xf32> to vector<8x1xf32>
    %cst_125 = arith.constant 3.125000e-02 : f32
    %356 = vector.broadcast %cst_125 : f32 to vector<8x1xf32>
    %357 = arith.mulf %355, %356 : vector<8x1xf32>
    %358 = arith.mulf %352, %352 : vector<8x1xf32>
    %359 = arith.subf %357, %358 : vector<8x1xf32>
    %360 = vector.broadcast %352 : vector<8x1xf32> to vector<8x128xf32>
    %361 = arith.subf %346, %360 : vector<8x128xf32>
    %cst_126 = arith.constant 9.99999974E-6 : f32
    %362 = vector.broadcast %cst_126 : f32 to vector<8x1xf32>
    %363 = arith.addf %359, %362 : vector<8x1xf32>
    %364 = math.rsqrt %363 : vector<8x1xf32>
    %365 = vector.broadcast %364 : vector<8x1xf32> to vector<8x128xf32>
    %366 = arith.mulf %361, %365 : vector<8x128xf32>
    %367 = vector.broadcast %347 : vector<1x128xf32> to vector<8x128xf32>
    %368 = arith.mulf %366, %367 : vector<8x128xf32>
    %369 = vector.broadcast %348 : vector<1x128xf32> to vector<8x128xf32>
    %370 = arith.addf %368, %369 : vector<8x128xf32>
    %c0_127 = arith.constant 0 : index
    %c0_128 = arith.constant 0 : index
    %371 = vector.load %arg1[%c0_127, %c0_128] : memref<16x128xf32, #tpu.memory_space<vmem>>, vector<16x128xf32>
    %c0_129 = arith.constant 0 : index
    %c0_130 = arith.constant 0 : index
    %372 = vector.load %arg3[%c0_129, %c0_130] : memref<16x16xf32, #tpu.memory_space<vmem>>, vector<16x16xf32>
    %c0_131 = arith.constant 0 : index
    %c0_132 = arith.constant 0 : index
    %373 = vector.load %arg4[%c0_131, %c0_132] : memref<16x8xf32, #tpu.memory_space<vmem>>, vector<16x8xf32>
    %c0_133 = arith.constant 0 : index
    %c0_134 = arith.constant 0 : index
    %374 = vector.load %arg22[%c0_133, %c0_134] : memref<128x384xbf16, #tpu.memory_space<vmem>>, vector<128x384xbf16>
    %c0_135 = arith.constant 0 : index
    %c0_136 = arith.constant 0 : index
    %375 = vector.load %arg20[%c0_135, %c0_136] : memref<1x384xf32, #tpu.memory_space<vmem>>, vector<1x384xf32>
    %376 = arith.truncf %371 : vector<16x128xf32> to vector<16x128xbf16>
    %cst_137 = arith.constant dense<0.000000e+00> : vector<16x384xf32>
    %377 = tpu.matmul %376, %374, %cst_137 {dimension_numbers = #tpu.dot_dimension_numbers<[1], [0], [0], [1], [0, 0, 1, 1], [], []>} : vector<16x128xbf16>, vector<128x384xbf16>, vector<16x384xf32> -> vector<16x384xf32>
    %378 = vector.broadcast %375 : vector<1x384xf32> to vector<16x384xf32>
    %379 = arith.addf %377, %378 : vector<16x384xf32>
    %380 = vector.extract_strided_slice %379 {offsets = [0, 0], sizes = [16, 128], strides = [1, 1]} : vector<16x384xf32> to vector<16x128xf32>
    %381 = vector.extract_strided_slice %379 {offsets = [0, 128], sizes = [16, 128], strides = [1, 1]} : vector<16x384xf32> to vector<16x128xf32>
    %382 = vector.extract_strided_slice %379 {offsets = [0, 256], sizes = [16, 128], strides = [1, 1]} : vector<16x384xf32> to vector<16x128xf32>
    %c0_138 = arith.constant 0 : index
    %c0_139 = arith.constant 0 : index
    %c0_140 = arith.constant 0 : index
    %383 = vector.load %arg21[%c0_138, %c0_139, %c0_140] : memref<4x8x128xf32, #tpu.memory_space<vmem>>, vector<4x8x128xf32>
    %c0_141 = arith.constant 0 : index
    %c0_142 = arith.constant 0 : index
    %384 = vector.load %arg19[%c0_141, %c0_142] : memref<1x128xf32, #tpu.memory_space<vmem>>, vector<1x128xf32>
    %385 = vector.extract_strided_slice %380 {offsets = [0, 0], sizes = [16, 8], strides = [1, 1]} : vector<16x128xf32> to vector<16x8xf32>
    %386 = arith.truncf %385 : vector<16x8xf32> to vector<16x8xbf16>
    %387 = vector.extract_strided_slice %381 {offsets = [0, 0], sizes = [16, 8], strides = [1, 1]} : vector<16x128xf32> to vector<16x8xf32>
    %388 = arith.truncf %387 : vector<16x8xf32> to vector<16x8xbf16>
    %cst_143 = arith.constant dense<0.000000e+00> : vector<16x16xf32>
    %389 = tpu.matmul %386, %388, %cst_143 {dimension_numbers = #tpu.dot_dimension_numbers<[1], [1], [0], [0], [0, 0, 1, 0], [], []>} : vector<16x8xbf16>, vector<16x8xbf16>, vector<16x16xf32> -> vector<16x16xf32>
    %390 = arith.addf %389, %372 : vector<16x16xf32>
    %cst_144 = arith.constant dense<0xFF800000> : vector<16xf32>
    %391 = vector.multi_reduction <maximumf>, %390, %cst_144 [1] : vector<16x16xf32> to vector<16xf32>
    %392 = vector.shape_cast %391 : vector<16xf32> to vector<16x1xf32>
    %393 = vector.broadcast %392 : vector<16x1xf32> to vector<16x16xf32>
    %394 = arith.subf %390, %393 : vector<16x16xf32>
    %395 = math.exp %394 : vector<16x16xf32>
    %cst_145 = arith.constant dense<0.000000e+00> : vector<16xf32>
    %396 = vector.multi_reduction <add>, %395, %cst_145 [1] : vector<16x16xf32> to vector<16xf32>
    %397 = vector.shape_cast %396 : vector<16xf32> to vector<16x1xf32>
    %398 = tpu.reciprocal %397 {approx = true} : vector<16x1xf32> -> vector<16x1xf32>
    %399 = vector.broadcast %398 : vector<16x1xf32> to vector<16x16xf32>
    %400 = arith.mulf %395, %399 : vector<16x16xf32>
    %401 = arith.truncf %400 : vector<16x16xf32> to vector<16x16xbf16>
    %402 = vector.extract_strided_slice %382 {offsets = [0, 0], sizes = [16, 8], strides = [1, 1]} : vector<16x128xf32> to vector<16x8xf32>
    %403 = arith.truncf %402 : vector<16x8xf32> to vector<16x8xbf16>
    %cst_146 = arith.constant dense<0.000000e+00> : vector<16x8xf32>
    %404 = tpu.matmul %401, %403, %cst_146 {dimension_numbers = #tpu.dot_dimension_numbers<[1], [0], [0], [1], [0, 0, 1, 1], [], []>} : vector<16x16xbf16>, vector<16x8xbf16>, vector<16x8xf32> -> vector<16x8xf32>
    %405 = arith.truncf %404 : vector<16x8xf32> to vector<16x8xbf16>
    %406 = vector.extract_strided_slice %383 {offsets = [0, 0, 0], sizes = [1, 8, 128], strides = [1, 1, 1]} : vector<4x8x128xf32> to vector<1x8x128xf32>
    %407 = vector.shape_cast %406 : vector<1x8x128xf32> to vector<8x128xf32>
    %408 = arith.truncf %407 : vector<8x128xf32> to vector<8x128xbf16>
    %cst_147 = arith.constant dense<0.000000e+00> : vector<16x128xf32>
    %409 = tpu.matmul %405, %408, %cst_147 {dimension_numbers = #tpu.dot_dimension_numbers<[1], [0], [0], [1], [0, 0, 1, 1], [], []>} : vector<16x8xbf16>, vector<8x128xbf16>, vector<16x128xf32> -> vector<16x128xf32>
    %410 = vector.extract_strided_slice %380 {offsets = [0, 8], sizes = [16, 8], strides = [1, 1]} : vector<16x128xf32> to vector<16x8xf32>
    %411 = arith.truncf %410 : vector<16x8xf32> to vector<16x8xbf16>
    %412 = vector.extract_strided_slice %381 {offsets = [0, 8], sizes = [16, 8], strides = [1, 1]} : vector<16x128xf32> to vector<16x8xf32>
    %413 = arith.truncf %412 : vector<16x8xf32> to vector<16x8xbf16>
    %cst_148 = arith.constant dense<0.000000e+00> : vector<16x16xf32>
    %414 = tpu.matmul %411, %413, %cst_148 {dimension_numbers = #tpu.dot_dimension_numbers<[1], [1], [0], [0], [0, 0, 1, 0], [], []>} : vector<16x8xbf16>, vector<16x8xbf16>, vector<16x16xf32> -> vector<16x16xf32>
    %415 = arith.addf %414, %372 : vector<16x16xf32>
    %cst_149 = arith.constant dense<0xFF800000> : vector<16xf32>
    %416 = vector.multi_reduction <maximumf>, %415, %cst_149 [1] : vector<16x16xf32> to vector<16xf32>
    %417 = vector.shape_cast %416 : vector<16xf32> to vector<16x1xf32>
    %418 = vector.broadcast %417 : vector<16x1xf32> to vector<16x16xf32>
    %419 = arith.subf %415, %418 : vector<16x16xf32>
    %420 = math.exp %419 : vector<16x16xf32>
    %cst_150 = arith.constant dense<0.000000e+00> : vector<16xf32>
    %421 = vector.multi_reduction <add>, %420, %cst_150 [1] : vector<16x16xf32> to vector<16xf32>
    %422 = vector.shape_cast %421 : vector<16xf32> to vector<16x1xf32>
    %423 = tpu.reciprocal %422 {approx = true} : vector<16x1xf32> -> vector<16x1xf32>
    %424 = vector.broadcast %423 : vector<16x1xf32> to vector<16x16xf32>
    %425 = arith.mulf %420, %424 : vector<16x16xf32>
    %426 = arith.truncf %425 : vector<16x16xf32> to vector<16x16xbf16>
    %427 = vector.extract_strided_slice %382 {offsets = [0, 8], sizes = [16, 8], strides = [1, 1]} : vector<16x128xf32> to vector<16x8xf32>
    %428 = arith.truncf %427 : vector<16x8xf32> to vector<16x8xbf16>
    %cst_151 = arith.constant dense<0.000000e+00> : vector<16x8xf32>
    %429 = tpu.matmul %426, %428, %cst_151 {dimension_numbers = #tpu.dot_dimension_numbers<[1], [0], [0], [1], [0, 0, 1, 1], [], []>} : vector<16x16xbf16>, vector<16x8xbf16>, vector<16x8xf32> -> vector<16x8xf32>
    %430 = arith.truncf %429 : vector<16x8xf32> to vector<16x8xbf16>
    %431 = vector.extract_strided_slice %383 {offsets = [1, 0, 0], sizes = [1, 8, 128], strides = [1, 1, 1]} : vector<4x8x128xf32> to vector<1x8x128xf32>
    %432 = vector.shape_cast %431 : vector<1x8x128xf32> to vector<8x128xf32>
    %433 = arith.truncf %432 : vector<8x128xf32> to vector<8x128xbf16>
    %cst_152 = arith.constant dense<0.000000e+00> : vector<16x128xf32>
    %434 = tpu.matmul %430, %433, %cst_152 {dimension_numbers = #tpu.dot_dimension_numbers<[1], [0], [0], [1], [0, 0, 1, 1], [], []>} : vector<16x8xbf16>, vector<8x128xbf16>, vector<16x128xf32> -> vector<16x128xf32>
    %435 = arith.addf %409, %434 : vector<16x128xf32>
    %436 = vector.extract_strided_slice %380 {offsets = [0, 16], sizes = [16, 8], strides = [1, 1]} : vector<16x128xf32> to vector<16x8xf32>
    %437 = arith.truncf %436 : vector<16x8xf32> to vector<16x8xbf16>
    %438 = vector.extract_strided_slice %381 {offsets = [0, 16], sizes = [16, 8], strides = [1, 1]} : vector<16x128xf32> to vector<16x8xf32>
    %439 = arith.truncf %438 : vector<16x8xf32> to vector<16x8xbf16>
    %cst_153 = arith.constant dense<0.000000e+00> : vector<16x16xf32>
    %440 = tpu.matmul %437, %439, %cst_153 {dimension_numbers = #tpu.dot_dimension_numbers<[1], [1], [0], [0], [0, 0, 1, 0], [], []>} : vector<16x8xbf16>, vector<16x8xbf16>, vector<16x16xf32> -> vector<16x16xf32>
    %441 = arith.addf %440, %372 : vector<16x16xf32>
    %cst_154 = arith.constant dense<0xFF800000> : vector<16xf32>
    %442 = vector.multi_reduction <maximumf>, %441, %cst_154 [1] : vector<16x16xf32> to vector<16xf32>
    %443 = vector.shape_cast %442 : vector<16xf32> to vector<16x1xf32>
    %444 = vector.broadcast %443 : vector<16x1xf32> to vector<16x16xf32>
    %445 = arith.subf %441, %444 : vector<16x16xf32>
    %446 = math.exp %445 : vector<16x16xf32>
    %cst_155 = arith.constant dense<0.000000e+00> : vector<16xf32>
    %447 = vector.multi_reduction <add>, %446, %cst_155 [1] : vector<16x16xf32> to vector<16xf32>
    %448 = vector.shape_cast %447 : vector<16xf32> to vector<16x1xf32>
    %449 = tpu.reciprocal %448 {approx = true} : vector<16x1xf32> -> vector<16x1xf32>
    %450 = vector.broadcast %449 : vector<16x1xf32> to vector<16x16xf32>
    %451 = arith.mulf %446, %450 : vector<16x16xf32>
    %452 = arith.truncf %451 : vector<16x16xf32> to vector<16x16xbf16>
    %453 = vector.extract_strided_slice %382 {offsets = [0, 16], sizes = [16, 8], strides = [1, 1]} : vector<16x128xf32> to vector<16x8xf32>
    %454 = arith.truncf %453 : vector<16x8xf32> to vector<16x8xbf16>
    %cst_156 = arith.constant dense<0.000000e+00> : vector<16x8xf32>
    %455 = tpu.matmul %452, %454, %cst_156 {dimension_numbers = #tpu.dot_dimension_numbers<[1], [0], [0], [1], [0, 0, 1, 1], [], []>} : vector<16x16xbf16>, vector<16x8xbf16>, vector<16x8xf32> -> vector<16x8xf32>
    %456 = arith.truncf %455 : vector<16x8xf32> to vector<16x8xbf16>
    %457 = vector.extract_strided_slice %383 {offsets = [2, 0, 0], sizes = [1, 8, 128], strides = [1, 1, 1]} : vector<4x8x128xf32> to vector<1x8x128xf32>
    %458 = vector.shape_cast %457 : vector<1x8x128xf32> to vector<8x128xf32>
    %459 = arith.truncf %458 : vector<8x128xf32> to vector<8x128xbf16>
    %cst_157 = arith.constant dense<0.000000e+00> : vector<16x128xf32>
    %460 = tpu.matmul %456, %459, %cst_157 {dimension_numbers = #tpu.dot_dimension_numbers<[1], [0], [0], [1], [0, 0, 1, 1], [], []>} : vector<16x8xbf16>, vector<8x128xbf16>, vector<16x128xf32> -> vector<16x128xf32>
    %461 = arith.addf %435, %460 : vector<16x128xf32>
    %462 = vector.extract_strided_slice %380 {offsets = [0, 24], sizes = [16, 8], strides = [1, 1]} : vector<16x128xf32> to vector<16x8xf32>
    %463 = arith.truncf %462 : vector<16x8xf32> to vector<16x8xbf16>
    %464 = vector.extract_strided_slice %381 {offsets = [0, 24], sizes = [16, 8], strides = [1, 1]} : vector<16x128xf32> to vector<16x8xf32>
    %465 = arith.truncf %464 : vector<16x8xf32> to vector<16x8xbf16>
    %cst_158 = arith.constant dense<0.000000e+00> : vector<16x16xf32>
    %466 = tpu.matmul %463, %465, %cst_158 {dimension_numbers = #tpu.dot_dimension_numbers<[1], [1], [0], [0], [0, 0, 1, 0], [], []>} : vector<16x8xbf16>, vector<16x8xbf16>, vector<16x16xf32> -> vector<16x16xf32>
    %467 = arith.addf %466, %372 : vector<16x16xf32>
    %cst_159 = arith.constant dense<0xFF800000> : vector<16xf32>
    %468 = vector.multi_reduction <maximumf>, %467, %cst_159 [1] : vector<16x16xf32> to vector<16xf32>
    %469 = vector.shape_cast %468 : vector<16xf32> to vector<16x1xf32>
    %470 = vector.broadcast %469 : vector<16x1xf32> to vector<16x16xf32>
    %471 = arith.subf %467, %470 : vector<16x16xf32>
    %472 = math.exp %471 : vector<16x16xf32>
    %cst_160 = arith.constant dense<0.000000e+00> : vector<16xf32>
    %473 = vector.multi_reduction <add>, %472, %cst_160 [1] : vector<16x16xf32> to vector<16xf32>
    %474 = vector.shape_cast %473 : vector<16xf32> to vector<16x1xf32>
    %475 = tpu.reciprocal %474 {approx = true} : vector<16x1xf32> -> vector<16x1xf32>
    %476 = vector.broadcast %475 : vector<16x1xf32> to vector<16x16xf32>
    %477 = arith.mulf %472, %476 : vector<16x16xf32>
    %478 = arith.truncf %477 : vector<16x16xf32> to vector<16x16xbf16>
    %479 = vector.extract_strided_slice %382 {offsets = [0, 24], sizes = [16, 8], strides = [1, 1]} : vector<16x128xf32> to vector<16x8xf32>
    %480 = arith.truncf %479 : vector<16x8xf32> to vector<16x8xbf16>
    %cst_161 = arith.constant dense<0.000000e+00> : vector<16x8xf32>
    %481 = tpu.matmul %478, %480, %cst_161 {dimension_numbers = #tpu.dot_dimension_numbers<[1], [0], [0], [1], [0, 0, 1, 1], [], []>} : vector<16x16xbf16>, vector<16x8xbf16>, vector<16x8xf32> -> vector<16x8xf32>
    %482 = arith.truncf %481 : vector<16x8xf32> to vector<16x8xbf16>
    %483 = vector.extract_strided_slice %383 {offsets = [3, 0, 0], sizes = [1, 8, 128], strides = [1, 1, 1]} : vector<4x8x128xf32> to vector<1x8x128xf32>
    %484 = vector.shape_cast %483 : vector<1x8x128xf32> to vector<8x128xf32>
    %485 = arith.truncf %484 : vector<8x128xf32> to vector<8x128xbf16>
    %cst_162 = arith.constant dense<0.000000e+00> : vector<16x128xf32>
    %486 = tpu.matmul %482, %485, %cst_162 {dimension_numbers = #tpu.dot_dimension_numbers<[1], [0], [0], [1], [0, 0, 1, 1], [], []>} : vector<16x8xbf16>, vector<8x128xbf16>, vector<16x128xf32> -> vector<16x128xf32>
    %487 = arith.addf %461, %486 : vector<16x128xf32>
    %488 = vector.broadcast %384 : vector<1x128xf32> to vector<16x128xf32>
    %489 = arith.addf %487, %488 : vector<16x128xf32>
    %490 = arith.addf %371, %489 : vector<16x128xf32>
    %c0_163 = arith.constant 0 : index
    %c0_164 = arith.constant 0 : index
    %491 = vector.load %arg14[%c0_163, %c0_164] : memref<1x128xf32, #tpu.memory_space<vmem>>, vector<1x128xf32>
    %c0_165 = arith.constant 0 : index
    %c0_166 = arith.constant 0 : index
    %492 = vector.load %arg13[%c0_165, %c0_166] : memref<1x128xf32, #tpu.memory_space<vmem>>, vector<1x128xf32>
    %cst_167 = arith.constant dense<0.000000e+00> : vector<16xf32>
    %493 = vector.multi_reduction <add>, %490, %cst_167 [1] : vector<16x128xf32> to vector<16xf32>
    %494 = vector.shape_cast %493 : vector<16xf32> to vector<16x1xf32>
    %cst_168 = arith.constant 3.125000e-02 : f32
    %495 = vector.broadcast %cst_168 : f32 to vector<16x1xf32>
    %496 = arith.mulf %494, %495 : vector<16x1xf32>
    %497 = arith.mulf %490, %490 : vector<16x128xf32>
    %cst_169 = arith.constant dense<0.000000e+00> : vector<16xf32>
    %498 = vector.multi_reduction <add>, %497, %cst_169 [1] : vector<16x128xf32> to vector<16xf32>
    %499 = vector.shape_cast %498 : vector<16xf32> to vector<16x1xf32>
    %cst_170 = arith.constant 3.125000e-02 : f32
    %500 = vector.broadcast %cst_170 : f32 to vector<16x1xf32>
    %501 = arith.mulf %499, %500 : vector<16x1xf32>
    %502 = arith.mulf %496, %496 : vector<16x1xf32>
    %503 = arith.subf %501, %502 : vector<16x1xf32>
    %504 = vector.broadcast %496 : vector<16x1xf32> to vector<16x128xf32>
    %505 = arith.subf %490, %504 : vector<16x128xf32>
    %cst_171 = arith.constant 9.99999974E-6 : f32
    %506 = vector.broadcast %cst_171 : f32 to vector<16x1xf32>
    %507 = arith.addf %503, %506 : vector<16x1xf32>
    %508 = math.rsqrt %507 : vector<16x1xf32>
    %509 = vector.broadcast %508 : vector<16x1xf32> to vector<16x128xf32>
    %510 = arith.mulf %505, %509 : vector<16x128xf32>
    %511 = vector.broadcast %491 : vector<1x128xf32> to vector<16x128xf32>
    %512 = arith.mulf %510, %511 : vector<16x128xf32>
    %513 = vector.broadcast %492 : vector<1x128xf32> to vector<16x128xf32>
    %514 = arith.addf %512, %513 : vector<16x128xf32>
    %c0_172 = arith.constant 0 : index
    %c0_173 = arith.constant 0 : index
    %515 = vector.load %arg12[%c0_172, %c0_173] : memref<128x128xbf16, #tpu.memory_space<vmem>>, vector<128x128xbf16>
    %c0_174 = arith.constant 0 : index
    %c0_175 = arith.constant 0 : index
    %516 = vector.load %arg9[%c0_174, %c0_175] : memref<1x128xf32, #tpu.memory_space<vmem>>, vector<1x128xf32>
    %517 = arith.truncf %514 : vector<16x128xf32> to vector<16x128xbf16>
    %cst_176 = arith.constant dense<0.000000e+00> : vector<16x128xf32>
    %518 = tpu.matmul %517, %515, %cst_176 {dimension_numbers = #tpu.dot_dimension_numbers<[1], [0], [0], [1], [0, 0, 1, 1], [], []>} : vector<16x128xbf16>, vector<128x128xbf16>, vector<16x128xf32> -> vector<16x128xf32>
    %519 = vector.broadcast %516 : vector<1x128xf32> to vector<16x128xf32>
    %520 = arith.addf %518, %519 : vector<16x128xf32>
    %c0_177 = arith.constant 0 : index
    %c0_178 = arith.constant 0 : index
    %521 = vector.load %arg10[%c0_177, %c0_178] : memref<128x256xbf16, #tpu.memory_space<vmem>>, vector<128x256xbf16>
    %c0_179 = arith.constant 0 : index
    %c0_180 = arith.constant 0 : index
    %522 = vector.load %arg7[%c0_179, %c0_180] : memref<1x256xf32, #tpu.memory_space<vmem>>, vector<1x256xf32>
    %523 = arith.truncf %370 : vector<8x128xf32> to vector<8x128xbf16>
    %cst_181 = arith.constant dense<0.000000e+00> : vector<8x256xf32>
    %524 = tpu.matmul %523, %521, %cst_181 {dimension_numbers = #tpu.dot_dimension_numbers<[1], [0], [0], [1], [0, 0, 1, 1], [], []>} : vector<8x128xbf16>, vector<128x256xbf16>, vector<8x256xf32> -> vector<8x256xf32>
    %525 = vector.broadcast %522 : vector<1x256xf32> to vector<8x256xf32>
    %526 = arith.addf %524, %525 : vector<8x256xf32>
    %527 = vector.extract_strided_slice %526 {offsets = [0, 0], sizes = [8, 128], strides = [1, 1]} : vector<8x256xf32> to vector<8x128xf32>
    %528 = vector.extract_strided_slice %526 {offsets = [0, 128], sizes = [8, 128], strides = [1, 1]} : vector<8x256xf32> to vector<8x128xf32>
    %c0_182 = arith.constant 0 : index
    %c0_183 = arith.constant 0 : index
    %c0_184 = arith.constant 0 : index
    %529 = vector.load %arg11[%c0_182, %c0_183, %c0_184] : memref<4x8x128xf32, #tpu.memory_space<vmem>>, vector<4x8x128xf32>
    %c0_185 = arith.constant 0 : index
    %c0_186 = arith.constant 0 : index
    %530 = vector.load %arg8[%c0_185, %c0_186] : memref<1x128xf32, #tpu.memory_space<vmem>>, vector<1x128xf32>
    %531 = vector.extract_strided_slice %520 {offsets = [0, 0], sizes = [16, 8], strides = [1, 1]} : vector<16x128xf32> to vector<16x8xf32>
    %532 = arith.truncf %531 : vector<16x8xf32> to vector<16x8xbf16>
    %533 = vector.extract_strided_slice %527 {offsets = [0, 0], sizes = [8, 8], strides = [1, 1]} : vector<8x128xf32> to vector<8x8xf32>
    %534 = arith.truncf %533 : vector<8x8xf32> to vector<8x8xbf16>
    %cst_187 = arith.constant dense<0.000000e+00> : vector<16x8xf32>
    %535 = tpu.matmul %532, %534, %cst_187 {dimension_numbers = #tpu.dot_dimension_numbers<[1], [1], [0], [0], [0, 0, 1, 0], [], []>} : vector<16x8xbf16>, vector<8x8xbf16>, vector<16x8xf32> -> vector<16x8xf32>
    %536 = arith.addf %535, %373 : vector<16x8xf32>
    %cst_188 = arith.constant dense<0xFF800000> : vector<16xf32>
    %537 = vector.multi_reduction <maximumf>, %536, %cst_188 [1] : vector<16x8xf32> to vector<16xf32>
    %538 = vector.shape_cast %537 : vector<16xf32> to vector<16x1xf32>
    %539 = vector.broadcast %538 : vector<16x1xf32> to vector<16x8xf32>
    %540 = arith.subf %536, %539 : vector<16x8xf32>
    %541 = math.exp %540 : vector<16x8xf32>
    %cst_189 = arith.constant dense<0.000000e+00> : vector<16xf32>
    %542 = vector.multi_reduction <add>, %541, %cst_189 [1] : vector<16x8xf32> to vector<16xf32>
    %543 = vector.shape_cast %542 : vector<16xf32> to vector<16x1xf32>
    %544 = tpu.reciprocal %543 {approx = true} : vector<16x1xf32> -> vector<16x1xf32>
    %545 = vector.broadcast %544 : vector<16x1xf32> to vector<16x8xf32>
    %546 = arith.mulf %541, %545 : vector<16x8xf32>
    %547 = arith.truncf %546 : vector<16x8xf32> to vector<16x8xbf16>
    %548 = vector.extract_strided_slice %528 {offsets = [0, 0], sizes = [8, 8], strides = [1, 1]} : vector<8x128xf32> to vector<8x8xf32>
    %549 = arith.truncf %548 : vector<8x8xf32> to vector<8x8xbf16>
    %cst_190 = arith.constant dense<0.000000e+00> : vector<16x8xf32>
    %550 = tpu.matmul %547, %549, %cst_190 {dimension_numbers = #tpu.dot_dimension_numbers<[1], [0], [0], [1], [0, 0, 1, 1], [], []>} : vector<16x8xbf16>, vector<8x8xbf16>, vector<16x8xf32> -> vector<16x8xf32>
    %551 = arith.truncf %550 : vector<16x8xf32> to vector<16x8xbf16>
    %552 = vector.extract_strided_slice %529 {offsets = [0, 0, 0], sizes = [1, 8, 128], strides = [1, 1, 1]} : vector<4x8x128xf32> to vector<1x8x128xf32>
    %553 = vector.shape_cast %552 : vector<1x8x128xf32> to vector<8x128xf32>
    %554 = arith.truncf %553 : vector<8x128xf32> to vector<8x128xbf16>
    %cst_191 = arith.constant dense<0.000000e+00> : vector<16x128xf32>
    %555 = tpu.matmul %551, %554, %cst_191 {dimension_numbers = #tpu.dot_dimension_numbers<[1], [0], [0], [1], [0, 0, 1, 1], [], []>} : vector<16x8xbf16>, vector<8x128xbf16>, vector<16x128xf32> -> vector<16x128xf32>
    %556 = vector.extract_strided_slice %520 {offsets = [0, 8], sizes = [16, 8], strides = [1, 1]} : vector<16x128xf32> to vector<16x8xf32>
    %557 = arith.truncf %556 : vector<16x8xf32> to vector<16x8xbf16>
    %558 = vector.extract_strided_slice %527 {offsets = [0, 8], sizes = [8, 8], strides = [1, 1]} : vector<8x128xf32> to vector<8x8xf32>
    %559 = arith.truncf %558 : vector<8x8xf32> to vector<8x8xbf16>
    %cst_192 = arith.constant dense<0.000000e+00> : vector<16x8xf32>
    %560 = tpu.matmul %557, %559, %cst_192 {dimension_numbers = #tpu.dot_dimension_numbers<[1], [1], [0], [0], [0, 0, 1, 0], [], []>} : vector<16x8xbf16>, vector<8x8xbf16>, vector<16x8xf32> -> vector<16x8xf32>
    %561 = arith.addf %560, %373 : vector<16x8xf32>
    %cst_193 = arith.constant dense<0xFF800000> : vector<16xf32>
    %562 = vector.multi_reduction <maximumf>, %561, %cst_193 [1] : vector<16x8xf32> to vector<16xf32>
    %563 = vector.shape_cast %562 : vector<16xf32> to vector<16x1xf32>
    %564 = vector.broadcast %563 : vector<16x1xf32> to vector<16x8xf32>
    %565 = arith.subf %561, %564 : vector<16x8xf32>
    %566 = math.exp %565 : vector<16x8xf32>
    %cst_194 = arith.constant dense<0.000000e+00> : vector<16xf32>
    %567 = vector.multi_reduction <add>, %566, %cst_194 [1] : vector<16x8xf32> to vector<16xf32>
    %568 = vector.shape_cast %567 : vector<16xf32> to vector<16x1xf32>
    %569 = tpu.reciprocal %568 {approx = true} : vector<16x1xf32> -> vector<16x1xf32>
    %570 = vector.broadcast %569 : vector<16x1xf32> to vector<16x8xf32>
    %571 = arith.mulf %566, %570 : vector<16x8xf32>
    %572 = arith.truncf %571 : vector<16x8xf32> to vector<16x8xbf16>
    %573 = vector.extract_strided_slice %528 {offsets = [0, 8], sizes = [8, 8], strides = [1, 1]} : vector<8x128xf32> to vector<8x8xf32>
    %574 = arith.truncf %573 : vector<8x8xf32> to vector<8x8xbf16>
    %cst_195 = arith.constant dense<0.000000e+00> : vector<16x8xf32>
    %575 = tpu.matmul %572, %574, %cst_195 {dimension_numbers = #tpu.dot_dimension_numbers<[1], [0], [0], [1], [0, 0, 1, 1], [], []>} : vector<16x8xbf16>, vector<8x8xbf16>, vector<16x8xf32> -> vector<16x8xf32>
    %576 = arith.truncf %575 : vector<16x8xf32> to vector<16x8xbf16>
    %577 = vector.extract_strided_slice %529 {offsets = [1, 0, 0], sizes = [1, 8, 128], strides = [1, 1, 1]} : vector<4x8x128xf32> to vector<1x8x128xf32>
    %578 = vector.shape_cast %577 : vector<1x8x128xf32> to vector<8x128xf32>
    %579 = arith.truncf %578 : vector<8x128xf32> to vector<8x128xbf16>
    %cst_196 = arith.constant dense<0.000000e+00> : vector<16x128xf32>
    %580 = tpu.matmul %576, %579, %cst_196 {dimension_numbers = #tpu.dot_dimension_numbers<[1], [0], [0], [1], [0, 0, 1, 1], [], []>} : vector<16x8xbf16>, vector<8x128xbf16>, vector<16x128xf32> -> vector<16x128xf32>
    %581 = arith.addf %555, %580 : vector<16x128xf32>
    %582 = vector.extract_strided_slice %520 {offsets = [0, 16], sizes = [16, 8], strides = [1, 1]} : vector<16x128xf32> to vector<16x8xf32>
    %583 = arith.truncf %582 : vector<16x8xf32> to vector<16x8xbf16>
    %584 = vector.extract_strided_slice %527 {offsets = [0, 16], sizes = [8, 8], strides = [1, 1]} : vector<8x128xf32> to vector<8x8xf32>
    %585 = arith.truncf %584 : vector<8x8xf32> to vector<8x8xbf16>
    %cst_197 = arith.constant dense<0.000000e+00> : vector<16x8xf32>
    %586 = tpu.matmul %583, %585, %cst_197 {dimension_numbers = #tpu.dot_dimension_numbers<[1], [1], [0], [0], [0, 0, 1, 0], [], []>} : vector<16x8xbf16>, vector<8x8xbf16>, vector<16x8xf32> -> vector<16x8xf32>
    %587 = arith.addf %586, %373 : vector<16x8xf32>
    %cst_198 = arith.constant dense<0xFF800000> : vector<16xf32>
    %588 = vector.multi_reduction <maximumf>, %587, %cst_198 [1] : vector<16x8xf32> to vector<16xf32>
    %589 = vector.shape_cast %588 : vector<16xf32> to vector<16x1xf32>
    %590 = vector.broadcast %589 : vector<16x1xf32> to vector<16x8xf32>
    %591 = arith.subf %587, %590 : vector<16x8xf32>
    %592 = math.exp %591 : vector<16x8xf32>
    %cst_199 = arith.constant dense<0.000000e+00> : vector<16xf32>
    %593 = vector.multi_reduction <add>, %592, %cst_199 [1] : vector<16x8xf32> to vector<16xf32>
    %594 = vector.shape_cast %593 : vector<16xf32> to vector<16x1xf32>
    %595 = tpu.reciprocal %594 {approx = true} : vector<16x1xf32> -> vector<16x1xf32>
    %596 = vector.broadcast %595 : vector<16x1xf32> to vector<16x8xf32>
    %597 = arith.mulf %592, %596 : vector<16x8xf32>
    %598 = arith.truncf %597 : vector<16x8xf32> to vector<16x8xbf16>
    %599 = vector.extract_strided_slice %528 {offsets = [0, 16], sizes = [8, 8], strides = [1, 1]} : vector<8x128xf32> to vector<8x8xf32>
    %600 = arith.truncf %599 : vector<8x8xf32> to vector<8x8xbf16>
    %cst_200 = arith.constant dense<0.000000e+00> : vector<16x8xf32>
    %601 = tpu.matmul %598, %600, %cst_200 {dimension_numbers = #tpu.dot_dimension_numbers<[1], [0], [0], [1], [0, 0, 1, 1], [], []>} : vector<16x8xbf16>, vector<8x8xbf16>, vector<16x8xf32> -> vector<16x8xf32>
    %602 = arith.truncf %601 : vector<16x8xf32> to vector<16x8xbf16>
    %603 = vector.extract_strided_slice %529 {offsets = [2, 0, 0], sizes = [1, 8, 128], strides = [1, 1, 1]} : vector<4x8x128xf32> to vector<1x8x128xf32>
    %604 = vector.shape_cast %603 : vector<1x8x128xf32> to vector<8x128xf32>
    %605 = arith.truncf %604 : vector<8x128xf32> to vector<8x128xbf16>
    %cst_201 = arith.constant dense<0.000000e+00> : vector<16x128xf32>
    %606 = tpu.matmul %602, %605, %cst_201 {dimension_numbers = #tpu.dot_dimension_numbers<[1], [0], [0], [1], [0, 0, 1, 1], [], []>} : vector<16x8xbf16>, vector<8x128xbf16>, vector<16x128xf32> -> vector<16x128xf32>
    %607 = arith.addf %581, %606 : vector<16x128xf32>
    %608 = vector.extract_strided_slice %520 {offsets = [0, 24], sizes = [16, 8], strides = [1, 1]} : vector<16x128xf32> to vector<16x8xf32>
    %609 = arith.truncf %608 : vector<16x8xf32> to vector<16x8xbf16>
    %610 = vector.extract_strided_slice %527 {offsets = [0, 24], sizes = [8, 8], strides = [1, 1]} : vector<8x128xf32> to vector<8x8xf32>
    %611 = arith.truncf %610 : vector<8x8xf32> to vector<8x8xbf16>
    %cst_202 = arith.constant dense<0.000000e+00> : vector<16x8xf32>
    %612 = tpu.matmul %609, %611, %cst_202 {dimension_numbers = #tpu.dot_dimension_numbers<[1], [1], [0], [0], [0, 0, 1, 0], [], []>} : vector<16x8xbf16>, vector<8x8xbf16>, vector<16x8xf32> -> vector<16x8xf32>
    %613 = arith.addf %612, %373 : vector<16x8xf32>
    %cst_203 = arith.constant dense<0xFF800000> : vector<16xf32>
    %614 = vector.multi_reduction <maximumf>, %613, %cst_203 [1] : vector<16x8xf32> to vector<16xf32>
    %615 = vector.shape_cast %614 : vector<16xf32> to vector<16x1xf32>
    %616 = vector.broadcast %615 : vector<16x1xf32> to vector<16x8xf32>
    %617 = arith.subf %613, %616 : vector<16x8xf32>
    %618 = math.exp %617 : vector<16x8xf32>
    %cst_204 = arith.constant dense<0.000000e+00> : vector<16xf32>
    %619 = vector.multi_reduction <add>, %618, %cst_204 [1] : vector<16x8xf32> to vector<16xf32>
    %620 = vector.shape_cast %619 : vector<16xf32> to vector<16x1xf32>
    %621 = tpu.reciprocal %620 {approx = true} : vector<16x1xf32> -> vector<16x1xf32>
    %622 = vector.broadcast %621 : vector<16x1xf32> to vector<16x8xf32>
    %623 = arith.mulf %618, %622 : vector<16x8xf32>
    %624 = arith.truncf %623 : vector<16x8xf32> to vector<16x8xbf16>
    %625 = vector.extract_strided_slice %528 {offsets = [0, 24], sizes = [8, 8], strides = [1, 1]} : vector<8x128xf32> to vector<8x8xf32>
    %626 = arith.truncf %625 : vector<8x8xf32> to vector<8x8xbf16>
    %cst_205 = arith.constant dense<0.000000e+00> : vector<16x8xf32>
    %627 = tpu.matmul %624, %626, %cst_205 {dimension_numbers = #tpu.dot_dimension_numbers<[1], [0], [0], [1], [0, 0, 1, 1], [], []>} : vector<16x8xbf16>, vector<8x8xbf16>, vector<16x8xf32> -> vector<16x8xf32>
    %628 = arith.truncf %627 : vector<16x8xf32> to vector<16x8xbf16>
    %629 = vector.extract_strided_slice %529 {offsets = [3, 0, 0], sizes = [1, 8, 128], strides = [1, 1, 1]} : vector<4x8x128xf32> to vector<1x8x128xf32>
    %630 = vector.shape_cast %629 : vector<1x8x128xf32> to vector<8x128xf32>
    %631 = arith.truncf %630 : vector<8x128xf32> to vector<8x128xbf16>
    %cst_206 = arith.constant dense<0.000000e+00> : vector<16x128xf32>
    %632 = tpu.matmul %628, %631, %cst_206 {dimension_numbers = #tpu.dot_dimension_numbers<[1], [0], [0], [1], [0, 0, 1, 1], [], []>} : vector<16x8xbf16>, vector<8x128xbf16>, vector<16x128xf32> -> vector<16x128xf32>
    %633 = arith.addf %607, %632 : vector<16x128xf32>
    %634 = vector.broadcast %530 : vector<1x128xf32> to vector<16x128xf32>
    %635 = arith.addf %633, %634 : vector<16x128xf32>
    %636 = arith.addf %514, %635 : vector<16x128xf32>
    %c0_207 = arith.constant 0 : index
    %c0_208 = arith.constant 0 : index
    %637 = vector.load %arg16[%c0_207, %c0_208] : memref<1x128xf32, #tpu.memory_space<vmem>>, vector<1x128xf32>
    %c0_209 = arith.constant 0 : index
    %c0_210 = arith.constant 0 : index
    %638 = vector.load %arg15[%c0_209, %c0_210] : memref<1x128xf32, #tpu.memory_space<vmem>>, vector<1x128xf32>
    %cst_211 = arith.constant dense<0.000000e+00> : vector<16xf32>
    %639 = vector.multi_reduction <add>, %636, %cst_211 [1] : vector<16x128xf32> to vector<16xf32>
    %640 = vector.shape_cast %639 : vector<16xf32> to vector<16x1xf32>
    %cst_212 = arith.constant 3.125000e-02 : f32
    %641 = vector.broadcast %cst_212 : f32 to vector<16x1xf32>
    %642 = arith.mulf %640, %641 : vector<16x1xf32>
    %643 = arith.mulf %636, %636 : vector<16x128xf32>
    %cst_213 = arith.constant dense<0.000000e+00> : vector<16xf32>
    %644 = vector.multi_reduction <add>, %643, %cst_213 [1] : vector<16x128xf32> to vector<16xf32>
    %645 = vector.shape_cast %644 : vector<16xf32> to vector<16x1xf32>
    %cst_214 = arith.constant 3.125000e-02 : f32
    %646 = vector.broadcast %cst_214 : f32 to vector<16x1xf32>
    %647 = arith.mulf %645, %646 : vector<16x1xf32>
    %648 = arith.mulf %642, %642 : vector<16x1xf32>
    %649 = arith.subf %647, %648 : vector<16x1xf32>
    %650 = vector.broadcast %642 : vector<16x1xf32> to vector<16x128xf32>
    %651 = arith.subf %636, %650 : vector<16x128xf32>
    %cst_215 = arith.constant 9.99999974E-6 : f32
    %652 = vector.broadcast %cst_215 : f32 to vector<16x1xf32>
    %653 = arith.addf %649, %652 : vector<16x1xf32>
    %654 = math.rsqrt %653 : vector<16x1xf32>
    %655 = vector.broadcast %654 : vector<16x1xf32> to vector<16x128xf32>
    %656 = arith.mulf %651, %655 : vector<16x128xf32>
    %657 = vector.broadcast %637 : vector<1x128xf32> to vector<16x128xf32>
    %658 = arith.mulf %656, %657 : vector<16x128xf32>
    %659 = vector.broadcast %638 : vector<1x128xf32> to vector<16x128xf32>
    %660 = arith.addf %658, %659 : vector<16x128xf32>
    %c0_216 = arith.constant 0 : index
    %c0_217 = arith.constant 0 : index
    %661 = vector.load %arg23[%c0_216, %c0_217] : memref<128x128xbf16, #tpu.memory_space<vmem>>, vector<128x128xbf16>
    %c0_218 = arith.constant 0 : index
    %c0_219 = arith.constant 0 : index
    %662 = vector.load %arg5[%c0_218, %c0_219] : memref<1x128xf32, #tpu.memory_space<vmem>>, vector<1x128xf32>
    %c0_220 = arith.constant 0 : index
    %c0_221 = arith.constant 0 : index
    %663 = vector.load %arg24[%c0_220, %c0_221] : memref<128x128xbf16, #tpu.memory_space<vmem>>, vector<128x128xbf16>
    %c0_222 = arith.constant 0 : index
    %c0_223 = arith.constant 0 : index
    %664 = vector.load %arg6[%c0_222, %c0_223] : memref<1x128xf32, #tpu.memory_space<vmem>>, vector<1x128xf32>
    %665 = arith.truncf %660 : vector<16x128xf32> to vector<16x128xbf16>
    %cst_224 = arith.constant dense<0.000000e+00> : vector<16x128xf32>
    %666 = tpu.matmul %665, %661, %cst_224 {dimension_numbers = #tpu.dot_dimension_numbers<[1], [0], [0], [1], [0, 0, 1, 1], [], []>} : vector<16x128xbf16>, vector<128x128xbf16>, vector<16x128xf32> -> vector<16x128xf32>
    %667 = vector.broadcast %662 : vector<1x128xf32> to vector<16x128xf32>
    %668 = arith.addf %666, %667 : vector<16x128xf32>
    %cst_225 = arith.constant 0.000000e+00 : f32
    %669 = vector.broadcast %cst_225 : f32 to vector<16x128xf32>
    %670 = arith.maximumf %668, %669 : vector<16x128xf32>
    %671 = arith.truncf %670 : vector<16x128xf32> to vector<16x128xbf16>
    %cst_226 = arith.constant dense<0.000000e+00> : vector<16x128xf32>
    %672 = tpu.matmul %671, %663, %cst_226 {dimension_numbers = #tpu.dot_dimension_numbers<[1], [0], [0], [1], [0, 0, 1, 1], [], []>} : vector<16x128xbf16>, vector<128x128xbf16>, vector<16x128xf32> -> vector<16x128xf32>
    %673 = vector.broadcast %664 : vector<1x128xf32> to vector<16x128xf32>
    %674 = arith.addf %672, %673 : vector<16x128xf32>
    %675 = arith.addf %660, %674 : vector<16x128xf32>
    %c0_227 = arith.constant 0 : index
    %c0_228 = arith.constant 0 : index
    %676 = vector.load %arg18[%c0_227, %c0_228] : memref<1x128xf32, #tpu.memory_space<vmem>>, vector<1x128xf32>
    %c0_229 = arith.constant 0 : index
    %c0_230 = arith.constant 0 : index
    %677 = vector.load %arg17[%c0_229, %c0_230] : memref<1x128xf32, #tpu.memory_space<vmem>>, vector<1x128xf32>
    %cst_231 = arith.constant dense<0.000000e+00> : vector<16xf32>
    %678 = vector.multi_reduction <add>, %675, %cst_231 [1] : vector<16x128xf32> to vector<16xf32>
    %679 = vector.shape_cast %678 : vector<16xf32> to vector<16x1xf32>
    %cst_232 = arith.constant 3.125000e-02 : f32
    %680 = vector.broadcast %cst_232 : f32 to vector<16x1xf32>
    %681 = arith.mulf %679, %680 : vector<16x1xf32>
    %682 = arith.mulf %675, %675 : vector<16x128xf32>
    %cst_233 = arith.constant dense<0.000000e+00> : vector<16xf32>
    %683 = vector.multi_reduction <add>, %682, %cst_233 [1] : vector<16x128xf32> to vector<16xf32>
    %684 = vector.shape_cast %683 : vector<16xf32> to vector<16x1xf32>
    %cst_234 = arith.constant 3.125000e-02 : f32
    %685 = vector.broadcast %cst_234 : f32 to vector<16x1xf32>
    %686 = arith.mulf %684, %685 : vector<16x1xf32>
    %687 = arith.mulf %681, %681 : vector<16x1xf32>
    %688 = arith.subf %686, %687 : vector<16x1xf32>
    %689 = vector.broadcast %681 : vector<16x1xf32> to vector<16x128xf32>
    %690 = arith.subf %675, %689 : vector<16x128xf32>
    %cst_235 = arith.constant 9.99999974E-6 : f32
    %691 = vector.broadcast %cst_235 : f32 to vector<16x1xf32>
    %692 = arith.addf %688, %691 : vector<16x1xf32>
    %693 = math.rsqrt %692 : vector<16x1xf32>
    %694 = vector.broadcast %693 : vector<16x1xf32> to vector<16x128xf32>
    %695 = arith.mulf %690, %694 : vector<16x128xf32>
    %696 = vector.broadcast %676 : vector<1x128xf32> to vector<16x128xf32>
    %697 = arith.mulf %695, %696 : vector<16x128xf32>
    %698 = vector.broadcast %677 : vector<1x128xf32> to vector<16x128xf32>
    %699 = arith.addf %697, %698 : vector<16x128xf32>
    %c0_236 = arith.constant 0 : index
    %c0_237 = arith.constant 0 : index
    %700 = vector.load %arg42[%c0_236, %c0_237] : memref<128x384xbf16, #tpu.memory_space<vmem>>, vector<128x384xbf16>
    %c0_238 = arith.constant 0 : index
    %c0_239 = arith.constant 0 : index
    %701 = vector.load %arg40[%c0_238, %c0_239] : memref<1x384xf32, #tpu.memory_space<vmem>>, vector<1x384xf32>
    %702 = arith.truncf %699 : vector<16x128xf32> to vector<16x128xbf16>
    %cst_240 = arith.constant dense<0.000000e+00> : vector<16x384xf32>
    %703 = tpu.matmul %702, %700, %cst_240 {dimension_numbers = #tpu.dot_dimension_numbers<[1], [0], [0], [1], [0, 0, 1, 1], [], []>} : vector<16x128xbf16>, vector<128x384xbf16>, vector<16x384xf32> -> vector<16x384xf32>
    %704 = vector.broadcast %701 : vector<1x384xf32> to vector<16x384xf32>
    %705 = arith.addf %703, %704 : vector<16x384xf32>
    %706 = vector.extract_strided_slice %705 {offsets = [0, 0], sizes = [16, 128], strides = [1, 1]} : vector<16x384xf32> to vector<16x128xf32>
    %707 = vector.extract_strided_slice %705 {offsets = [0, 128], sizes = [16, 128], strides = [1, 1]} : vector<16x384xf32> to vector<16x128xf32>
    %708 = vector.extract_strided_slice %705 {offsets = [0, 256], sizes = [16, 128], strides = [1, 1]} : vector<16x384xf32> to vector<16x128xf32>
    %c0_241 = arith.constant 0 : index
    %c0_242 = arith.constant 0 : index
    %c0_243 = arith.constant 0 : index
    %709 = vector.load %arg41[%c0_241, %c0_242, %c0_243] : memref<4x8x128xf32, #tpu.memory_space<vmem>>, vector<4x8x128xf32>
    %c0_244 = arith.constant 0 : index
    %c0_245 = arith.constant 0 : index
    %710 = vector.load %arg39[%c0_244, %c0_245] : memref<1x128xf32, #tpu.memory_space<vmem>>, vector<1x128xf32>
    %711 = vector.extract_strided_slice %706 {offsets = [0, 0], sizes = [16, 8], strides = [1, 1]} : vector<16x128xf32> to vector<16x8xf32>
    %712 = arith.truncf %711 : vector<16x8xf32> to vector<16x8xbf16>
    %713 = vector.extract_strided_slice %707 {offsets = [0, 0], sizes = [16, 8], strides = [1, 1]} : vector<16x128xf32> to vector<16x8xf32>
    %714 = arith.truncf %713 : vector<16x8xf32> to vector<16x8xbf16>
    %cst_246 = arith.constant dense<0.000000e+00> : vector<16x16xf32>
    %715 = tpu.matmul %712, %714, %cst_246 {dimension_numbers = #tpu.dot_dimension_numbers<[1], [1], [0], [0], [0, 0, 1, 0], [], []>} : vector<16x8xbf16>, vector<16x8xbf16>, vector<16x16xf32> -> vector<16x16xf32>
    %716 = arith.addf %715, %372 : vector<16x16xf32>
    %cst_247 = arith.constant dense<0xFF800000> : vector<16xf32>
    %717 = vector.multi_reduction <maximumf>, %716, %cst_247 [1] : vector<16x16xf32> to vector<16xf32>
    %718 = vector.shape_cast %717 : vector<16xf32> to vector<16x1xf32>
    %719 = vector.broadcast %718 : vector<16x1xf32> to vector<16x16xf32>
    %720 = arith.subf %716, %719 : vector<16x16xf32>
    %721 = math.exp %720 : vector<16x16xf32>
    %cst_248 = arith.constant dense<0.000000e+00> : vector<16xf32>
    %722 = vector.multi_reduction <add>, %721, %cst_248 [1] : vector<16x16xf32> to vector<16xf32>
    %723 = vector.shape_cast %722 : vector<16xf32> to vector<16x1xf32>
    %724 = tpu.reciprocal %723 {approx = true} : vector<16x1xf32> -> vector<16x1xf32>
    %725 = vector.broadcast %724 : vector<16x1xf32> to vector<16x16xf32>
    %726 = arith.mulf %721, %725 : vector<16x16xf32>
    %727 = arith.truncf %726 : vector<16x16xf32> to vector<16x16xbf16>
    %728 = vector.extract_strided_slice %708 {offsets = [0, 0], sizes = [16, 8], strides = [1, 1]} : vector<16x128xf32> to vector<16x8xf32>
    %729 = arith.truncf %728 : vector<16x8xf32> to vector<16x8xbf16>
    %cst_249 = arith.constant dense<0.000000e+00> : vector<16x8xf32>
    %730 = tpu.matmul %727, %729, %cst_249 {dimension_numbers = #tpu.dot_dimension_numbers<[1], [0], [0], [1], [0, 0, 1, 1], [], []>} : vector<16x16xbf16>, vector<16x8xbf16>, vector<16x8xf32> -> vector<16x8xf32>
    %731 = arith.truncf %730 : vector<16x8xf32> to vector<16x8xbf16>
    %732 = vector.extract_strided_slice %709 {offsets = [0, 0, 0], sizes = [1, 8, 128], strides = [1, 1, 1]} : vector<4x8x128xf32> to vector<1x8x128xf32>
    %733 = vector.shape_cast %732 : vector<1x8x128xf32> to vector<8x128xf32>
    %734 = arith.truncf %733 : vector<8x128xf32> to vector<8x128xbf16>
    %cst_250 = arith.constant dense<0.000000e+00> : vector<16x128xf32>
    %735 = tpu.matmul %731, %734, %cst_250 {dimension_numbers = #tpu.dot_dimension_numbers<[1], [0], [0], [1], [0, 0, 1, 1], [], []>} : vector<16x8xbf16>, vector<8x128xbf16>, vector<16x128xf32> -> vector<16x128xf32>
    %736 = vector.extract_strided_slice %706 {offsets = [0, 8], sizes = [16, 8], strides = [1, 1]} : vector<16x128xf32> to vector<16x8xf32>
    %737 = arith.truncf %736 : vector<16x8xf32> to vector<16x8xbf16>
    %738 = vector.extract_strided_slice %707 {offsets = [0, 8], sizes = [16, 8], strides = [1, 1]} : vector<16x128xf32> to vector<16x8xf32>
    %739 = arith.truncf %738 : vector<16x8xf32> to vector<16x8xbf16>
    %cst_251 = arith.constant dense<0.000000e+00> : vector<16x16xf32>
    %740 = tpu.matmul %737, %739, %cst_251 {dimension_numbers = #tpu.dot_dimension_numbers<[1], [1], [0], [0], [0, 0, 1, 0], [], []>} : vector<16x8xbf16>, vector<16x8xbf16>, vector<16x16xf32> -> vector<16x16xf32>
    %741 = arith.addf %740, %372 : vector<16x16xf32>
    %cst_252 = arith.constant dense<0xFF800000> : vector<16xf32>
    %742 = vector.multi_reduction <maximumf>, %741, %cst_252 [1] : vector<16x16xf32> to vector<16xf32>
    %743 = vector.shape_cast %742 : vector<16xf32> to vector<16x1xf32>
    %744 = vector.broadcast %743 : vector<16x1xf32> to vector<16x16xf32>
    %745 = arith.subf %741, %744 : vector<16x16xf32>
    %746 = math.exp %745 : vector<16x16xf32>
    %cst_253 = arith.constant dense<0.000000e+00> : vector<16xf32>
    %747 = vector.multi_reduction <add>, %746, %cst_253 [1] : vector<16x16xf32> to vector<16xf32>
    %748 = vector.shape_cast %747 : vector<16xf32> to vector<16x1xf32>
    %749 = tpu.reciprocal %748 {approx = true} : vector<16x1xf32> -> vector<16x1xf32>
    %750 = vector.broadcast %749 : vector<16x1xf32> to vector<16x16xf32>
    %751 = arith.mulf %746, %750 : vector<16x16xf32>
    %752 = arith.truncf %751 : vector<16x16xf32> to vector<16x16xbf16>
    %753 = vector.extract_strided_slice %708 {offsets = [0, 8], sizes = [16, 8], strides = [1, 1]} : vector<16x128xf32> to vector<16x8xf32>
    %754 = arith.truncf %753 : vector<16x8xf32> to vector<16x8xbf16>
    %cst_254 = arith.constant dense<0.000000e+00> : vector<16x8xf32>
    %755 = tpu.matmul %752, %754, %cst_254 {dimension_numbers = #tpu.dot_dimension_numbers<[1], [0], [0], [1], [0, 0, 1, 1], [], []>} : vector<16x16xbf16>, vector<16x8xbf16>, vector<16x8xf32> -> vector<16x8xf32>
    %756 = arith.truncf %755 : vector<16x8xf32> to vector<16x8xbf16>
    %757 = vector.extract_strided_slice %709 {offsets = [1, 0, 0], sizes = [1, 8, 128], strides = [1, 1, 1]} : vector<4x8x128xf32> to vector<1x8x128xf32>
    %758 = vector.shape_cast %757 : vector<1x8x128xf32> to vector<8x128xf32>
    %759 = arith.truncf %758 : vector<8x128xf32> to vector<8x128xbf16>
    %cst_255 = arith.constant dense<0.000000e+00> : vector<16x128xf32>
    %760 = tpu.matmul %756, %759, %cst_255 {dimension_numbers = #tpu.dot_dimension_numbers<[1], [0], [0], [1], [0, 0, 1, 1], [], []>} : vector<16x8xbf16>, vector<8x128xbf16>, vector<16x128xf32> -> vector<16x128xf32>
    %761 = arith.addf %735, %760 : vector<16x128xf32>
    %762 = vector.extract_strided_slice %706 {offsets = [0, 16], sizes = [16, 8], strides = [1, 1]} : vector<16x128xf32> to vector<16x8xf32>
    %763 = arith.truncf %762 : vector<16x8xf32> to vector<16x8xbf16>
    %764 = vector.extract_strided_slice %707 {offsets = [0, 16], sizes = [16, 8], strides = [1, 1]} : vector<16x128xf32> to vector<16x8xf32>
    %765 = arith.truncf %764 : vector<16x8xf32> to vector<16x8xbf16>
    %cst_256 = arith.constant dense<0.000000e+00> : vector<16x16xf32>
    %766 = tpu.matmul %763, %765, %cst_256 {dimension_numbers = #tpu.dot_dimension_numbers<[1], [1], [0], [0], [0, 0, 1, 0], [], []>} : vector<16x8xbf16>, vector<16x8xbf16>, vector<16x16xf32> -> vector<16x16xf32>
    %767 = arith.addf %766, %372 : vector<16x16xf32>
    %cst_257 = arith.constant dense<0xFF800000> : vector<16xf32>
    %768 = vector.multi_reduction <maximumf>, %767, %cst_257 [1] : vector<16x16xf32> to vector<16xf32>
    %769 = vector.shape_cast %768 : vector<16xf32> to vector<16x1xf32>
    %770 = vector.broadcast %769 : vector<16x1xf32> to vector<16x16xf32>
    %771 = arith.subf %767, %770 : vector<16x16xf32>
    %772 = math.exp %771 : vector<16x16xf32>
    %cst_258 = arith.constant dense<0.000000e+00> : vector<16xf32>
    %773 = vector.multi_reduction <add>, %772, %cst_258 [1] : vector<16x16xf32> to vector<16xf32>
    %774 = vector.shape_cast %773 : vector<16xf32> to vector<16x1xf32>
    %775 = tpu.reciprocal %774 {approx = true} : vector<16x1xf32> -> vector<16x1xf32>
    %776 = vector.broadcast %775 : vector<16x1xf32> to vector<16x16xf32>
    %777 = arith.mulf %772, %776 : vector<16x16xf32>
    %778 = arith.truncf %777 : vector<16x16xf32> to vector<16x16xbf16>
    %779 = vector.extract_strided_slice %708 {offsets = [0, 16], sizes = [16, 8], strides = [1, 1]} : vector<16x128xf32> to vector<16x8xf32>
    %780 = arith.truncf %779 : vector<16x8xf32> to vector<16x8xbf16>
    %cst_259 = arith.constant dense<0.000000e+00> : vector<16x8xf32>
    %781 = tpu.matmul %778, %780, %cst_259 {dimension_numbers = #tpu.dot_dimension_numbers<[1], [0], [0], [1], [0, 0, 1, 1], [], []>} : vector<16x16xbf16>, vector<16x8xbf16>, vector<16x8xf32> -> vector<16x8xf32>
    %782 = arith.truncf %781 : vector<16x8xf32> to vector<16x8xbf16>
    %783 = vector.extract_strided_slice %709 {offsets = [2, 0, 0], sizes = [1, 8, 128], strides = [1, 1, 1]} : vector<4x8x128xf32> to vector<1x8x128xf32>
    %784 = vector.shape_cast %783 : vector<1x8x128xf32> to vector<8x128xf32>
    %785 = arith.truncf %784 : vector<8x128xf32> to vector<8x128xbf16>
    %cst_260 = arith.constant dense<0.000000e+00> : vector<16x128xf32>
    %786 = tpu.matmul %782, %785, %cst_260 {dimension_numbers = #tpu.dot_dimension_numbers<[1], [0], [0], [1], [0, 0, 1, 1], [], []>} : vector<16x8xbf16>, vector<8x128xbf16>, vector<16x128xf32> -> vector<16x128xf32>
    %787 = arith.addf %761, %786 : vector<16x128xf32>
    %788 = vector.extract_strided_slice %706 {offsets = [0, 24], sizes = [16, 8], strides = [1, 1]} : vector<16x128xf32> to vector<16x8xf32>
    %789 = arith.truncf %788 : vector<16x8xf32> to vector<16x8xbf16>
    %790 = vector.extract_strided_slice %707 {offsets = [0, 24], sizes = [16, 8], strides = [1, 1]} : vector<16x128xf32> to vector<16x8xf32>
    %791 = arith.truncf %790 : vector<16x8xf32> to vector<16x8xbf16>
    %cst_261 = arith.constant dense<0.000000e+00> : vector<16x16xf32>
    %792 = tpu.matmul %789, %791, %cst_261 {dimension_numbers = #tpu.dot_dimension_numbers<[1], [1], [0], [0], [0, 0, 1, 0], [], []>} : vector<16x8xbf16>, vector<16x8xbf16>, vector<16x16xf32> -> vector<16x16xf32>
    %793 = arith.addf %792, %372 : vector<16x16xf32>
    %cst_262 = arith.constant dense<0xFF800000> : vector<16xf32>
    %794 = vector.multi_reduction <maximumf>, %793, %cst_262 [1] : vector<16x16xf32> to vector<16xf32>
    %795 = vector.shape_cast %794 : vector<16xf32> to vector<16x1xf32>
    %796 = vector.broadcast %795 : vector<16x1xf32> to vector<16x16xf32>
    %797 = arith.subf %793, %796 : vector<16x16xf32>
    %798 = math.exp %797 : vector<16x16xf32>
    %cst_263 = arith.constant dense<0.000000e+00> : vector<16xf32>
    %799 = vector.multi_reduction <add>, %798, %cst_263 [1] : vector<16x16xf32> to vector<16xf32>
    %800 = vector.shape_cast %799 : vector<16xf32> to vector<16x1xf32>
    %801 = tpu.reciprocal %800 {approx = true} : vector<16x1xf32> -> vector<16x1xf32>
    %802 = vector.broadcast %801 : vector<16x1xf32> to vector<16x16xf32>
    %803 = arith.mulf %798, %802 : vector<16x16xf32>
    %804 = arith.truncf %803 : vector<16x16xf32> to vector<16x16xbf16>
    %805 = vector.extract_strided_slice %708 {offsets = [0, 24], sizes = [16, 8], strides = [1, 1]} : vector<16x128xf32> to vector<16x8xf32>
    %806 = arith.truncf %805 : vector<16x8xf32> to vector<16x8xbf16>
    %cst_264 = arith.constant dense<0.000000e+00> : vector<16x8xf32>
    %807 = tpu.matmul %804, %806, %cst_264 {dimension_numbers = #tpu.dot_dimension_numbers<[1], [0], [0], [1], [0, 0, 1, 1], [], []>} : vector<16x16xbf16>, vector<16x8xbf16>, vector<16x8xf32> -> vector<16x8xf32>
    %808 = arith.truncf %807 : vector<16x8xf32> to vector<16x8xbf16>
    %809 = vector.extract_strided_slice %709 {offsets = [3, 0, 0], sizes = [1, 8, 128], strides = [1, 1, 1]} : vector<4x8x128xf32> to vector<1x8x128xf32>
    %810 = vector.shape_cast %809 : vector<1x8x128xf32> to vector<8x128xf32>
    %811 = arith.truncf %810 : vector<8x128xf32> to vector<8x128xbf16>
    %cst_265 = arith.constant dense<0.000000e+00> : vector<16x128xf32>
    %812 = tpu.matmul %808, %811, %cst_265 {dimension_numbers = #tpu.dot_dimension_numbers<[1], [0], [0], [1], [0, 0, 1, 1], [], []>} : vector<16x8xbf16>, vector<8x128xbf16>, vector<16x128xf32> -> vector<16x128xf32>
    %813 = arith.addf %787, %812 : vector<16x128xf32>
    %814 = vector.broadcast %710 : vector<1x128xf32> to vector<16x128xf32>
    %815 = arith.addf %813, %814 : vector<16x128xf32>
    %816 = arith.addf %699, %815 : vector<16x128xf32>
    %c0_266 = arith.constant 0 : index
    %c0_267 = arith.constant 0 : index
    %817 = vector.load %arg34[%c0_266, %c0_267] : memref<1x128xf32, #tpu.memory_space<vmem>>, vector<1x128xf32>
    %c0_268 = arith.constant 0 : index
    %c0_269 = arith.constant 0 : index
    %818 = vector.load %arg33[%c0_268, %c0_269] : memref<1x128xf32, #tpu.memory_space<vmem>>, vector<1x128xf32>
    %cst_270 = arith.constant dense<0.000000e+00> : vector<16xf32>
    %819 = vector.multi_reduction <add>, %816, %cst_270 [1] : vector<16x128xf32> to vector<16xf32>
    %820 = vector.shape_cast %819 : vector<16xf32> to vector<16x1xf32>
    %cst_271 = arith.constant 3.125000e-02 : f32
    %821 = vector.broadcast %cst_271 : f32 to vector<16x1xf32>
    %822 = arith.mulf %820, %821 : vector<16x1xf32>
    %823 = arith.mulf %816, %816 : vector<16x128xf32>
    %cst_272 = arith.constant dense<0.000000e+00> : vector<16xf32>
    %824 = vector.multi_reduction <add>, %823, %cst_272 [1] : vector<16x128xf32> to vector<16xf32>
    %825 = vector.shape_cast %824 : vector<16xf32> to vector<16x1xf32>
    %cst_273 = arith.constant 3.125000e-02 : f32
    %826 = vector.broadcast %cst_273 : f32 to vector<16x1xf32>
    %827 = arith.mulf %825, %826 : vector<16x1xf32>
    %828 = arith.mulf %822, %822 : vector<16x1xf32>
    %829 = arith.subf %827, %828 : vector<16x1xf32>
    %830 = vector.broadcast %822 : vector<16x1xf32> to vector<16x128xf32>
    %831 = arith.subf %816, %830 : vector<16x128xf32>
    %cst_274 = arith.constant 9.99999974E-6 : f32
    %832 = vector.broadcast %cst_274 : f32 to vector<16x1xf32>
    %833 = arith.addf %829, %832 : vector<16x1xf32>
    %834 = math.rsqrt %833 : vector<16x1xf32>
    %835 = vector.broadcast %834 : vector<16x1xf32> to vector<16x128xf32>
    %836 = arith.mulf %831, %835 : vector<16x128xf32>
    %837 = vector.broadcast %817 : vector<1x128xf32> to vector<16x128xf32>
    %838 = arith.mulf %836, %837 : vector<16x128xf32>
    %839 = vector.broadcast %818 : vector<1x128xf32> to vector<16x128xf32>
    %840 = arith.addf %838, %839 : vector<16x128xf32>
    %c0_275 = arith.constant 0 : index
    %c0_276 = arith.constant 0 : index
    %841 = vector.load %arg32[%c0_275, %c0_276] : memref<128x128xbf16, #tpu.memory_space<vmem>>, vector<128x128xbf16>
    %c0_277 = arith.constant 0 : index
    %c0_278 = arith.constant 0 : index
    %842 = vector.load %arg29[%c0_277, %c0_278] : memref<1x128xf32, #tpu.memory_space<vmem>>, vector<1x128xf32>
    %843 = arith.truncf %840 : vector<16x128xf32> to vector<16x128xbf16>
    %cst_279 = arith.constant dense<0.000000e+00> : vector<16x128xf32>
    %844 = tpu.matmul %843, %841, %cst_279 {dimension_numbers = #tpu.dot_dimension_numbers<[1], [0], [0], [1], [0, 0, 1, 1], [], []>} : vector<16x128xbf16>, vector<128x128xbf16>, vector<16x128xf32> -> vector<16x128xf32>
    %845 = vector.broadcast %842 : vector<1x128xf32> to vector<16x128xf32>
    %846 = arith.addf %844, %845 : vector<16x128xf32>
    %c0_280 = arith.constant 0 : index
    %c0_281 = arith.constant 0 : index
    %847 = vector.load %arg30[%c0_280, %c0_281] : memref<128x256xbf16, #tpu.memory_space<vmem>>, vector<128x256xbf16>
    %c0_282 = arith.constant 0 : index
    %c0_283 = arith.constant 0 : index
    %848 = vector.load %arg27[%c0_282, %c0_283] : memref<1x256xf32, #tpu.memory_space<vmem>>, vector<1x256xf32>
    %849 = arith.truncf %370 : vector<8x128xf32> to vector<8x128xbf16>
    %cst_284 = arith.constant dense<0.000000e+00> : vector<8x256xf32>
    %850 = tpu.matmul %849, %847, %cst_284 {dimension_numbers = #tpu.dot_dimension_numbers<[1], [0], [0], [1], [0, 0, 1, 1], [], []>} : vector<8x128xbf16>, vector<128x256xbf16>, vector<8x256xf32> -> vector<8x256xf32>
    %851 = vector.broadcast %848 : vector<1x256xf32> to vector<8x256xf32>
    %852 = arith.addf %850, %851 : vector<8x256xf32>
    %853 = vector.extract_strided_slice %852 {offsets = [0, 0], sizes = [8, 128], strides = [1, 1]} : vector<8x256xf32> to vector<8x128xf32>
    %854 = vector.extract_strided_slice %852 {offsets = [0, 128], sizes = [8, 128], strides = [1, 1]} : vector<8x256xf32> to vector<8x128xf32>
    %c0_285 = arith.constant 0 : index
    %c0_286 = arith.constant 0 : index
    %c0_287 = arith.constant 0 : index
    %855 = vector.load %arg31[%c0_285, %c0_286, %c0_287] : memref<4x8x128xf32, #tpu.memory_space<vmem>>, vector<4x8x128xf32>
    %c0_288 = arith.constant 0 : index
    %c0_289 = arith.constant 0 : index
    %856 = vector.load %arg28[%c0_288, %c0_289] : memref<1x128xf32, #tpu.memory_space<vmem>>, vector<1x128xf32>
    %857 = vector.extract_strided_slice %846 {offsets = [0, 0], sizes = [16, 8], strides = [1, 1]} : vector<16x128xf32> to vector<16x8xf32>
    %858 = arith.truncf %857 : vector<16x8xf32> to vector<16x8xbf16>
    %859 = vector.extract_strided_slice %853 {offsets = [0, 0], sizes = [8, 8], strides = [1, 1]} : vector<8x128xf32> to vector<8x8xf32>
    %860 = arith.truncf %859 : vector<8x8xf32> to vector<8x8xbf16>
    %cst_290 = arith.constant dense<0.000000e+00> : vector<16x8xf32>
    %861 = tpu.matmul %858, %860, %cst_290 {dimension_numbers = #tpu.dot_dimension_numbers<[1], [1], [0], [0], [0, 0, 1, 0], [], []>} : vector<16x8xbf16>, vector<8x8xbf16>, vector<16x8xf32> -> vector<16x8xf32>
    %862 = arith.addf %861, %373 : vector<16x8xf32>
    %cst_291 = arith.constant dense<0xFF800000> : vector<16xf32>
    %863 = vector.multi_reduction <maximumf>, %862, %cst_291 [1] : vector<16x8xf32> to vector<16xf32>
    %864 = vector.shape_cast %863 : vector<16xf32> to vector<16x1xf32>
    %865 = vector.broadcast %864 : vector<16x1xf32> to vector<16x8xf32>
    %866 = arith.subf %862, %865 : vector<16x8xf32>
    %867 = math.exp %866 : vector<16x8xf32>
    %cst_292 = arith.constant dense<0.000000e+00> : vector<16xf32>
    %868 = vector.multi_reduction <add>, %867, %cst_292 [1] : vector<16x8xf32> to vector<16xf32>
    %869 = vector.shape_cast %868 : vector<16xf32> to vector<16x1xf32>
    %870 = tpu.reciprocal %869 {approx = true} : vector<16x1xf32> -> vector<16x1xf32>
    %871 = vector.broadcast %870 : vector<16x1xf32> to vector<16x8xf32>
    %872 = arith.mulf %867, %871 : vector<16x8xf32>
    %873 = arith.truncf %872 : vector<16x8xf32> to vector<16x8xbf16>
    %874 = vector.extract_strided_slice %854 {offsets = [0, 0], sizes = [8, 8], strides = [1, 1]} : vector<8x128xf32> to vector<8x8xf32>
    %875 = arith.truncf %874 : vector<8x8xf32> to vector<8x8xbf16>
    %cst_293 = arith.constant dense<0.000000e+00> : vector<16x8xf32>
    %876 = tpu.matmul %873, %875, %cst_293 {dimension_numbers = #tpu.dot_dimension_numbers<[1], [0], [0], [1], [0, 0, 1, 1], [], []>} : vector<16x8xbf16>, vector<8x8xbf16>, vector<16x8xf32> -> vector<16x8xf32>
    %877 = arith.truncf %876 : vector<16x8xf32> to vector<16x8xbf16>
    %878 = vector.extract_strided_slice %855 {offsets = [0, 0, 0], sizes = [1, 8, 128], strides = [1, 1, 1]} : vector<4x8x128xf32> to vector<1x8x128xf32>
    %879 = vector.shape_cast %878 : vector<1x8x128xf32> to vector<8x128xf32>
    %880 = arith.truncf %879 : vector<8x128xf32> to vector<8x128xbf16>
    %cst_294 = arith.constant dense<0.000000e+00> : vector<16x128xf32>
    %881 = tpu.matmul %877, %880, %cst_294 {dimension_numbers = #tpu.dot_dimension_numbers<[1], [0], [0], [1], [0, 0, 1, 1], [], []>} : vector<16x8xbf16>, vector<8x128xbf16>, vector<16x128xf32> -> vector<16x128xf32>
    %882 = vector.extract_strided_slice %846 {offsets = [0, 8], sizes = [16, 8], strides = [1, 1]} : vector<16x128xf32> to vector<16x8xf32>
    %883 = arith.truncf %882 : vector<16x8xf32> to vector<16x8xbf16>
    %884 = vector.extract_strided_slice %853 {offsets = [0, 8], sizes = [8, 8], strides = [1, 1]} : vector<8x128xf32> to vector<8x8xf32>
    %885 = arith.truncf %884 : vector<8x8xf32> to vector<8x8xbf16>
    %cst_295 = arith.constant dense<0.000000e+00> : vector<16x8xf32>
    %886 = tpu.matmul %883, %885, %cst_295 {dimension_numbers = #tpu.dot_dimension_numbers<[1], [1], [0], [0], [0, 0, 1, 0], [], []>} : vector<16x8xbf16>, vector<8x8xbf16>, vector<16x8xf32> -> vector<16x8xf32>
    %887 = arith.addf %886, %373 : vector<16x8xf32>
    %cst_296 = arith.constant dense<0xFF800000> : vector<16xf32>
    %888 = vector.multi_reduction <maximumf>, %887, %cst_296 [1] : vector<16x8xf32> to vector<16xf32>
    %889 = vector.shape_cast %888 : vector<16xf32> to vector<16x1xf32>
    %890 = vector.broadcast %889 : vector<16x1xf32> to vector<16x8xf32>
    %891 = arith.subf %887, %890 : vector<16x8xf32>
    %892 = math.exp %891 : vector<16x8xf32>
    %cst_297 = arith.constant dense<0.000000e+00> : vector<16xf32>
    %893 = vector.multi_reduction <add>, %892, %cst_297 [1] : vector<16x8xf32> to vector<16xf32>
    %894 = vector.shape_cast %893 : vector<16xf32> to vector<16x1xf32>
    %895 = tpu.reciprocal %894 {approx = true} : vector<16x1xf32> -> vector<16x1xf32>
    %896 = vector.broadcast %895 : vector<16x1xf32> to vector<16x8xf32>
    %897 = arith.mulf %892, %896 : vector<16x8xf32>
    %898 = arith.truncf %897 : vector<16x8xf32> to vector<16x8xbf16>
    %899 = vector.extract_strided_slice %854 {offsets = [0, 8], sizes = [8, 8], strides = [1, 1]} : vector<8x128xf32> to vector<8x8xf32>
    %900 = arith.truncf %899 : vector<8x8xf32> to vector<8x8xbf16>
    %cst_298 = arith.constant dense<0.000000e+00> : vector<16x8xf32>
    %901 = tpu.matmul %898, %900, %cst_298 {dimension_numbers = #tpu.dot_dimension_numbers<[1], [0], [0], [1], [0, 0, 1, 1], [], []>} : vector<16x8xbf16>, vector<8x8xbf16>, vector<16x8xf32> -> vector<16x8xf32>
    %902 = arith.truncf %901 : vector<16x8xf32> to vector<16x8xbf16>
    %903 = vector.extract_strided_slice %855 {offsets = [1, 0, 0], sizes = [1, 8, 128], strides = [1, 1, 1]} : vector<4x8x128xf32> to vector<1x8x128xf32>
    %904 = vector.shape_cast %903 : vector<1x8x128xf32> to vector<8x128xf32>
    %905 = arith.truncf %904 : vector<8x128xf32> to vector<8x128xbf16>
    %cst_299 = arith.constant dense<0.000000e+00> : vector<16x128xf32>
    %906 = tpu.matmul %902, %905, %cst_299 {dimension_numbers = #tpu.dot_dimension_numbers<[1], [0], [0], [1], [0, 0, 1, 1], [], []>} : vector<16x8xbf16>, vector<8x128xbf16>, vector<16x128xf32> -> vector<16x128xf32>
    %907 = arith.addf %881, %906 : vector<16x128xf32>
    %908 = vector.extract_strided_slice %846 {offsets = [0, 16], sizes = [16, 8], strides = [1, 1]} : vector<16x128xf32> to vector<16x8xf32>
    %909 = arith.truncf %908 : vector<16x8xf32> to vector<16x8xbf16>
    %910 = vector.extract_strided_slice %853 {offsets = [0, 16], sizes = [8, 8], strides = [1, 1]} : vector<8x128xf32> to vector<8x8xf32>
    %911 = arith.truncf %910 : vector<8x8xf32> to vector<8x8xbf16>
    %cst_300 = arith.constant dense<0.000000e+00> : vector<16x8xf32>
    %912 = tpu.matmul %909, %911, %cst_300 {dimension_numbers = #tpu.dot_dimension_numbers<[1], [1], [0], [0], [0, 0, 1, 0], [], []>} : vector<16x8xbf16>, vector<8x8xbf16>, vector<16x8xf32> -> vector<16x8xf32>
    %913 = arith.addf %912, %373 : vector<16x8xf32>
    %cst_301 = arith.constant dense<0xFF800000> : vector<16xf32>
    %914 = vector.multi_reduction <maximumf>, %913, %cst_301 [1] : vector<16x8xf32> to vector<16xf32>
    %915 = vector.shape_cast %914 : vector<16xf32> to vector<16x1xf32>
    %916 = vector.broadcast %915 : vector<16x1xf32> to vector<16x8xf32>
    %917 = arith.subf %913, %916 : vector<16x8xf32>
    %918 = math.exp %917 : vector<16x8xf32>
    %cst_302 = arith.constant dense<0.000000e+00> : vector<16xf32>
    %919 = vector.multi_reduction <add>, %918, %cst_302 [1] : vector<16x8xf32> to vector<16xf32>
    %920 = vector.shape_cast %919 : vector<16xf32> to vector<16x1xf32>
    %921 = tpu.reciprocal %920 {approx = true} : vector<16x1xf32> -> vector<16x1xf32>
    %922 = vector.broadcast %921 : vector<16x1xf32> to vector<16x8xf32>
    %923 = arith.mulf %918, %922 : vector<16x8xf32>
    %924 = arith.truncf %923 : vector<16x8xf32> to vector<16x8xbf16>
    %925 = vector.extract_strided_slice %854 {offsets = [0, 16], sizes = [8, 8], strides = [1, 1]} : vector<8x128xf32> to vector<8x8xf32>
    %926 = arith.truncf %925 : vector<8x8xf32> to vector<8x8xbf16>
    %cst_303 = arith.constant dense<0.000000e+00> : vector<16x8xf32>
    %927 = tpu.matmul %924, %926, %cst_303 {dimension_numbers = #tpu.dot_dimension_numbers<[1], [0], [0], [1], [0, 0, 1, 1], [], []>} : vector<16x8xbf16>, vector<8x8xbf16>, vector<16x8xf32> -> vector<16x8xf32>
    %928 = arith.truncf %927 : vector<16x8xf32> to vector<16x8xbf16>
    %929 = vector.extract_strided_slice %855 {offsets = [2, 0, 0], sizes = [1, 8, 128], strides = [1, 1, 1]} : vector<4x8x128xf32> to vector<1x8x128xf32>
    %930 = vector.shape_cast %929 : vector<1x8x128xf32> to vector<8x128xf32>
    %931 = arith.truncf %930 : vector<8x128xf32> to vector<8x128xbf16>
    %cst_304 = arith.constant dense<0.000000e+00> : vector<16x128xf32>
    %932 = tpu.matmul %928, %931, %cst_304 {dimension_numbers = #tpu.dot_dimension_numbers<[1], [0], [0], [1], [0, 0, 1, 1], [], []>} : vector<16x8xbf16>, vector<8x128xbf16>, vector<16x128xf32> -> vector<16x128xf32>
    %933 = arith.addf %907, %932 : vector<16x128xf32>
    %934 = vector.extract_strided_slice %846 {offsets = [0, 24], sizes = [16, 8], strides = [1, 1]} : vector<16x128xf32> to vector<16x8xf32>
    %935 = arith.truncf %934 : vector<16x8xf32> to vector<16x8xbf16>
    %936 = vector.extract_strided_slice %853 {offsets = [0, 24], sizes = [8, 8], strides = [1, 1]} : vector<8x128xf32> to vector<8x8xf32>
    %937 = arith.truncf %936 : vector<8x8xf32> to vector<8x8xbf16>
    %cst_305 = arith.constant dense<0.000000e+00> : vector<16x8xf32>
    %938 = tpu.matmul %935, %937, %cst_305 {dimension_numbers = #tpu.dot_dimension_numbers<[1], [1], [0], [0], [0, 0, 1, 0], [], []>} : vector<16x8xbf16>, vector<8x8xbf16>, vector<16x8xf32> -> vector<16x8xf32>
    %939 = arith.addf %938, %373 : vector<16x8xf32>
    %cst_306 = arith.constant dense<0xFF800000> : vector<16xf32>
    %940 = vector.multi_reduction <maximumf>, %939, %cst_306 [1] : vector<16x8xf32> to vector<16xf32>
    %941 = vector.shape_cast %940 : vector<16xf32> to vector<16x1xf32>
    %942 = vector.broadcast %941 : vector<16x1xf32> to vector<16x8xf32>
    %943 = arith.subf %939, %942 : vector<16x8xf32>
    %944 = math.exp %943 : vector<16x8xf32>
    %cst_307 = arith.constant dense<0.000000e+00> : vector<16xf32>
    %945 = vector.multi_reduction <add>, %944, %cst_307 [1] : vector<16x8xf32> to vector<16xf32>
    %946 = vector.shape_cast %945 : vector<16xf32> to vector<16x1xf32>
    %947 = tpu.reciprocal %946 {approx = true} : vector<16x1xf32> -> vector<16x1xf32>
    %948 = vector.broadcast %947 : vector<16x1xf32> to vector<16x8xf32>
    %949 = arith.mulf %944, %948 : vector<16x8xf32>
    %950 = arith.truncf %949 : vector<16x8xf32> to vector<16x8xbf16>
    %951 = vector.extract_strided_slice %854 {offsets = [0, 24], sizes = [8, 8], strides = [1, 1]} : vector<8x128xf32> to vector<8x8xf32>
    %952 = arith.truncf %951 : vector<8x8xf32> to vector<8x8xbf16>
    %cst_308 = arith.constant dense<0.000000e+00> : vector<16x8xf32>
    %953 = tpu.matmul %950, %952, %cst_308 {dimension_numbers = #tpu.dot_dimension_numbers<[1], [0], [0], [1], [0, 0, 1, 1], [], []>} : vector<16x8xbf16>, vector<8x8xbf16>, vector<16x8xf32> -> vector<16x8xf32>
    %954 = arith.truncf %953 : vector<16x8xf32> to vector<16x8xbf16>
    %955 = vector.extract_strided_slice %855 {offsets = [3, 0, 0], sizes = [1, 8, 128], strides = [1, 1, 1]} : vector<4x8x128xf32> to vector<1x8x128xf32>
    %956 = vector.shape_cast %955 : vector<1x8x128xf32> to vector<8x128xf32>
    %957 = arith.truncf %956 : vector<8x128xf32> to vector<8x128xbf16>
    %cst_309 = arith.constant dense<0.000000e+00> : vector<16x128xf32>
    %958 = tpu.matmul %954, %957, %cst_309 {dimension_numbers = #tpu.dot_dimension_numbers<[1], [0], [0], [1], [0, 0, 1, 1], [], []>} : vector<16x8xbf16>, vector<8x128xbf16>, vector<16x128xf32> -> vector<16x128xf32>
    %959 = arith.addf %933, %958 : vector<16x128xf32>
    %960 = vector.broadcast %856 : vector<1x128xf32> to vector<16x128xf32>
    %961 = arith.addf %959, %960 : vector<16x128xf32>
    %962 = arith.addf %840, %961 : vector<16x128xf32>
    %c0_310 = arith.constant 0 : index
    %c0_311 = arith.constant 0 : index
    %963 = vector.load %arg36[%c0_310, %c0_311] : memref<1x128xf32, #tpu.memory_space<vmem>>, vector<1x128xf32>
    %c0_312 = arith.constant 0 : index
    %c0_313 = arith.constant 0 : index
    %964 = vector.load %arg35[%c0_312, %c0_313] : memref<1x128xf32, #tpu.memory_space<vmem>>, vector<1x128xf32>
    %cst_314 = arith.constant dense<0.000000e+00> : vector<16xf32>
    %965 = vector.multi_reduction <add>, %962, %cst_314 [1] : vector<16x128xf32> to vector<16xf32>
    %966 = vector.shape_cast %965 : vector<16xf32> to vector<16x1xf32>
    %cst_315 = arith.constant 3.125000e-02 : f32
    %967 = vector.broadcast %cst_315 : f32 to vector<16x1xf32>
    %968 = arith.mulf %966, %967 : vector<16x1xf32>
    %969 = arith.mulf %962, %962 : vector<16x128xf32>
    %cst_316 = arith.constant dense<0.000000e+00> : vector<16xf32>
    %970 = vector.multi_reduction <add>, %969, %cst_316 [1] : vector<16x128xf32> to vector<16xf32>
    %971 = vector.shape_cast %970 : vector<16xf32> to vector<16x1xf32>
    %cst_317 = arith.constant 3.125000e-02 : f32
    %972 = vector.broadcast %cst_317 : f32 to vector<16x1xf32>
    %973 = arith.mulf %971, %972 : vector<16x1xf32>
    %974 = arith.mulf %968, %968 : vector<16x1xf32>
    %975 = arith.subf %973, %974 : vector<16x1xf32>
    %976 = vector.broadcast %968 : vector<16x1xf32> to vector<16x128xf32>
    %977 = arith.subf %962, %976 : vector<16x128xf32>
    %cst_318 = arith.constant 9.99999974E-6 : f32
    %978 = vector.broadcast %cst_318 : f32 to vector<16x1xf32>
    %979 = arith.addf %975, %978 : vector<16x1xf32>
    %980 = math.rsqrt %979 : vector<16x1xf32>
    %981 = vector.broadcast %980 : vector<16x1xf32> to vector<16x128xf32>
    %982 = arith.mulf %977, %981 : vector<16x128xf32>
    %983 = vector.broadcast %963 : vector<1x128xf32> to vector<16x128xf32>
    %984 = arith.mulf %982, %983 : vector<16x128xf32>
    %985 = vector.broadcast %964 : vector<1x128xf32> to vector<16x128xf32>
    %986 = arith.addf %984, %985 : vector<16x128xf32>
    %c0_319 = arith.constant 0 : index
    %c0_320 = arith.constant 0 : index
    %987 = vector.load %arg43[%c0_319, %c0_320] : memref<128x128xbf16, #tpu.memory_space<vmem>>, vector<128x128xbf16>
    %c0_321 = arith.constant 0 : index
    %c0_322 = arith.constant 0 : index
    %988 = vector.load %arg25[%c0_321, %c0_322] : memref<1x128xf32, #tpu.memory_space<vmem>>, vector<1x128xf32>
    %c0_323 = arith.constant 0 : index
    %c0_324 = arith.constant 0 : index
    %989 = vector.load %arg44[%c0_323, %c0_324] : memref<128x128xbf16, #tpu.memory_space<vmem>>, vector<128x128xbf16>
    %c0_325 = arith.constant 0 : index
    %c0_326 = arith.constant 0 : index
    %990 = vector.load %arg26[%c0_325, %c0_326] : memref<1x128xf32, #tpu.memory_space<vmem>>, vector<1x128xf32>
    %991 = arith.truncf %986 : vector<16x128xf32> to vector<16x128xbf16>
    %cst_327 = arith.constant dense<0.000000e+00> : vector<16x128xf32>
    %992 = tpu.matmul %991, %987, %cst_327 {dimension_numbers = #tpu.dot_dimension_numbers<[1], [0], [0], [1], [0, 0, 1, 1], [], []>} : vector<16x128xbf16>, vector<128x128xbf16>, vector<16x128xf32> -> vector<16x128xf32>
    %993 = vector.broadcast %988 : vector<1x128xf32> to vector<16x128xf32>
    %994 = arith.addf %992, %993 : vector<16x128xf32>
    %cst_328 = arith.constant 0.000000e+00 : f32
    %995 = vector.broadcast %cst_328 : f32 to vector<16x128xf32>
    %996 = arith.maximumf %994, %995 : vector<16x128xf32>
    %997 = arith.truncf %996 : vector<16x128xf32> to vector<16x128xbf16>
    %cst_329 = arith.constant dense<0.000000e+00> : vector<16x128xf32>
    %998 = tpu.matmul %997, %989, %cst_329 {dimension_numbers = #tpu.dot_dimension_numbers<[1], [0], [0], [1], [0, 0, 1, 1], [], []>} : vector<16x128xbf16>, vector<128x128xbf16>, vector<16x128xf32> -> vector<16x128xf32>
    %999 = vector.broadcast %990 : vector<1x128xf32> to vector<16x128xf32>
    %1000 = arith.addf %998, %999 : vector<16x128xf32>
    %1001 = arith.addf %986, %1000 : vector<16x128xf32>
    %c0_330 = arith.constant 0 : index
    %c0_331 = arith.constant 0 : index
    %1002 = vector.load %arg38[%c0_330, %c0_331] : memref<1x128xf32, #tpu.memory_space<vmem>>, vector<1x128xf32>
    %c0_332 = arith.constant 0 : index
    %c0_333 = arith.constant 0 : index
    %1003 = vector.load %arg37[%c0_332, %c0_333] : memref<1x128xf32, #tpu.memory_space<vmem>>, vector<1x128xf32>
    %cst_334 = arith.constant dense<0.000000e+00> : vector<16xf32>
    %1004 = vector.multi_reduction <add>, %1001, %cst_334 [1] : vector<16x128xf32> to vector<16xf32>
    %1005 = vector.shape_cast %1004 : vector<16xf32> to vector<16x1xf32>
    %cst_335 = arith.constant 3.125000e-02 : f32
    %1006 = vector.broadcast %cst_335 : f32 to vector<16x1xf32>
    %1007 = arith.mulf %1005, %1006 : vector<16x1xf32>
    %1008 = arith.mulf %1001, %1001 : vector<16x128xf32>
    %cst_336 = arith.constant dense<0.000000e+00> : vector<16xf32>
    %1009 = vector.multi_reduction <add>, %1008, %cst_336 [1] : vector<16x128xf32> to vector<16xf32>
    %1010 = vector.shape_cast %1009 : vector<16xf32> to vector<16x1xf32>
    %cst_337 = arith.constant 3.125000e-02 : f32
    %1011 = vector.broadcast %cst_337 : f32 to vector<16x1xf32>
    %1012 = arith.mulf %1010, %1011 : vector<16x1xf32>
    %1013 = arith.mulf %1007, %1007 : vector<16x1xf32>
    %1014 = arith.subf %1012, %1013 : vector<16x1xf32>
    %1015 = vector.broadcast %1007 : vector<16x1xf32> to vector<16x128xf32>
    %1016 = arith.subf %1001, %1015 : vector<16x128xf32>
    %cst_338 = arith.constant 9.99999974E-6 : f32
    %1017 = vector.broadcast %cst_338 : f32 to vector<16x1xf32>
    %1018 = arith.addf %1014, %1017 : vector<16x1xf32>
    %1019 = math.rsqrt %1018 : vector<16x1xf32>
    %1020 = vector.broadcast %1019 : vector<16x1xf32> to vector<16x128xf32>
    %1021 = arith.mulf %1016, %1020 : vector<16x128xf32>
    %1022 = vector.broadcast %1002 : vector<1x128xf32> to vector<16x128xf32>
    %1023 = arith.mulf %1021, %1022 : vector<16x128xf32>
    %1024 = vector.broadcast %1003 : vector<1x128xf32> to vector<16x128xf32>
    %1025 = arith.addf %1023, %1024 : vector<16x128xf32>
    %c0_339 = arith.constant 0 : index
    %c0_340 = arith.constant 0 : index
    %1026 = vector.load %arg72[%c0_339, %c0_340] : memref<128x128xbf16, #tpu.memory_space<vmem>>, vector<128x128xbf16>
    %c0_341 = arith.constant 0 : index
    %c0_342 = arith.constant 0 : index
    %1027 = vector.load %arg71[%c0_341, %c0_342] : memref<1x128xf32, #tpu.memory_space<vmem>>, vector<1x128xf32>
    %1028 = arith.truncf %1025 : vector<16x128xf32> to vector<16x128xbf16>
    %cst_343 = arith.constant dense<0.000000e+00> : vector<16x128xf32>
    %1029 = tpu.matmul %1028, %1026, %cst_343 {dimension_numbers = #tpu.dot_dimension_numbers<[1], [0], [0], [1], [0, 0, 1, 1], [], []>} : vector<16x128xbf16>, vector<128x128xbf16>, vector<16x128xf32> -> vector<16x128xf32>
    %1030 = vector.broadcast %1027 : vector<1x128xf32> to vector<16x128xf32>
    %1031 = arith.addf %1029, %1030 : vector<16x128xf32>
    %c0_344 = arith.constant 0 : index
    %c0_345 = arith.constant 0 : index
    %1032 = vector.load %arg74[%c0_344, %c0_345] : memref<16x128xf32, #tpu.memory_space<vmem>>, vector<16x128xf32>
    tpu.vector_store %arg74[%c0_344, %c0_345], %1031 {strides = array<i32>} : memref<16x128xf32, #tpu.memory_space<vmem>>, vector<16x128xf32>,
    return
  }
}

</mosaic_0001>

<llo_original>
// kernel: ne.22
$region0: #{ne.22}
  %s0 = inlined_call_operand.vmem [shape: s32[2,4], index: 0, kind: input, shape index: {}]
  %s1 = inlined_call_operand.vmem [shape: s32[8], index: 1, kind: output, shape index: {}]
  $region1: #{ne.22} parent=0
    #allocation0 [shape = 'u8[4096]{0}', space=vmem, size = 0x1000, scoped, tag = 'scoped mem for output reshape']
    #allocation1 [shape = 'u8[4096]{0}', space=vmem, size = 0x1000, scoped, tag = 'scoped mem for input reshape']
    %s3 = ssub.s32 4, 1
    %v4 = vld [vmem:[%s0] sm:%s3]
    %5 = vst [vmem:[#allocation1] sm:%s3] %v4
    %v6 = vld [vmem:[#allocation1] sm:$0x1]
    %vm7 = vcmask 31744
    %8 = vst.msk [vmem:[#allocation0] sm:$0x1] %vm7, %v6
    %s9 = scalar_lea.vmem [#allocation1], 1
    %v10 = vld [vmem:[%s9] sm:$0x1]
    %11 = vrot.lane.b32.xlu0 %v10, 4
    %v12 = vpop.permute.xlu0 %11
    %vm13 = vcmask 64544
    %14 = vst.msk [vmem:[#allocation0] sm:$0x1] %vm13, %v12
    %s16 = ssub.s32 2, 1
    %v17 = vld [vmem:[#allocation0] sm:%s16]
    %s19 = ssub.s32 2, 1
    %20 = vst [vmem:[%s1] sm:%s19] %v17

// kernel: tile.8
$region0: #{tile.8}
  #allocation0 [shape = 's32[1]{0}', space=sflag, size = 0x4, scoped, tag = 'scoped memory for tile.8']
  %s0 = inlined_call_operand.vmem [shape: f32[8,8], index: 0, kind: input, shape index: {}]
  %s1 = inlined_call_operand.vmem [shape: f32[2,8,2,8], index: 1, kind: output, shape index: {}]
  // Predicated region
  $region2: #{tile.8} parent=0 // pred_check
    _
  $region3: #{tile.8} parent=0 // pred_check_branch
    %3 = sbr.rel (0) target = $region5
  $region4: #{tile.8} parent=0 // pred_region
    _
  $region5: #{tile.8} parent=0 // pred_fallthru
    _
  %v4 = vld [vmem:[%s0] ss:$0 sm:$0xff]
  %5 = vst [vmem:[%s1] sm:$0x3] %v4
  %s6 = scalar_lea.vmem %s1, 16
  %7 = vst [vmem:[%s6] sm:$0x3] %v4
  %s8 = scalar_lea.vmem %s0, 1
  %v9 = vld [vmem:[%s8] ss:$0 sm:$0xff]
  %s10 = scalar_lea.vmem %s1, 2
  %11 = vst [vmem:[%s10] sm:$0x3] %v9
  %s12 = scalar_lea.vmem %s1, 18
  %13 = vst [vmem:[%s12] sm:$0x3] %v9
  %s14 = scalar_lea.vmem %s0, 2
  %v15 = vld [vmem:[%s14] ss:$0 sm:$0xff]
  %s16 = scalar_lea.vmem %s1, 4
  %17 = vst [vmem:[%s16] sm:$0x3] %v15
  %s18 = scalar_lea.vmem %s1, 20
  %19 = vst [vmem:[%s18] sm:$0x3] %v15
  %s20 = scalar_lea.vmem %s0, 3
  %v21 = vld [vmem:[%s20] ss:$0 sm:$0xff]
  %s22 = scalar_lea.vmem %s1, 6
  %23 = vst [vmem:[%s22] sm:$0x3] %v21
  %s24 = scalar_lea.vmem %s1, 22
  %25 = vst [vmem:[%s24] sm:$0x3] %v21
  %s26 = scalar_lea.vmem %s0, 4
  %v27 = vld [vmem:[%s26] ss:$0 sm:$0xff]
  %s28 = scalar_lea.vmem %s1, 8
  %29 = vst [vmem:[%s28] sm:$0x3] %v27
  %s30 = scalar_lea.vmem %s1, 24
  %31 = vst [vmem:[%s30] sm:$0x3] %v27
  %s32 = scalar_lea.vmem %s0, 5
  %v33 = vld [vmem:[%s32] ss:$0 sm:$0xff]
  %s34 = scalar_lea.vmem %s1, 10
  %35 = vst [vmem:[%s34] sm:$0x3] %v33
  %s36 = scalar_lea.vmem %s1, 26
  %37 = vst [vmem:[%s36] sm:$0x3] %v33
  %s38 = scalar_lea.vmem %s0, 6
  %v39 = vld [vmem:[%s38] ss:$0 sm:$0xff]
  %s40 = scalar_lea.vmem %s1, 12
  %41 = vst [vmem:[%s40] sm:$0x3] %v39
  %s42 = scalar_lea.vmem %s1, 28
  %43 = vst [vmem:[%s42] sm:$0x3] %v39
  %s44 = scalar_lea.vmem %s0, 7
  %v45 = vld [vmem:[%s44] ss:$0 sm:$0xff]
  %s46 = scalar_lea.vmem %s1, 14
  %47 = vst [vmem:[%s46] sm:$0x3] %v45
  %s48 = scalar_lea.vmem %s1, 30
  %49 = vst [vmem:[%s48] sm:$0x3] %v45

// kernel: tile.9
$region0: #{tile.9}
  %s0 = inlined_call_operand.vmem [shape: f32[2,8,2,8], index: 0, kind: input, shape index: {}]
  %s1 = inlined_call_operand.vmem [shape: f32[16,16], index: 1, kind: output, shape index: {}]
  $region1: #{tile.9} parent=0
    #allocation0 [shape = 'u8[65536]{0}', space=vmem, size = 0x10000, scoped, tag = 'scoped mem for input reshape']
    %s3 = ssub.s32 4, 1
    %s4 = scalar_lea.vmem %s0, 30
    %v5 = vld [vmem:[%s4] sm:%s3]
    %s6 = scalar_lea.vmem [#allocation0], 120
    %7 = vst [vmem:[%s6] sm:%s3] %v5
    %s8 = scalar_lea.vmem %s0, 28
    %v9 = vld [vmem:[%s8] sm:%s3]
    %s10 = scalar_lea.vmem [#allocation0], 112
    %11 = vst [vmem:[%s10] sm:%s3] %v9
    %s12 = scalar_lea.vmem %s0, 26
    %v13 = vld [vmem:[%s12] sm:%s3]
    %s14 = scalar_lea.vmem [#allocation0], 104
    %15 = vst [vmem:[%s14] sm:%s3] %v13
    %s16 = scalar_lea.vmem %s0, 24
    %v17 = vld [vmem:[%s16] sm:%s3]
    %s18 = scalar_lea.vmem [#allocation0], 96
    %19 = vst [vmem:[%s18] sm:%s3] %v17
    %s20 = scalar_lea.vmem %s0, 22
    %v21 = vld [vmem:[%s20] sm:%s3]
    %s22 = scalar_lea.vmem [#allocation0], 88
    %23 = vst [vmem:[%s22] sm:%s3] %v21
    %s24 = scalar_lea.vmem %s0, 20
    %v25 = vld [vmem:[%s24] sm:%s3]
    %s26 = scalar_lea.vmem [#allocation0], 80
    %27 = vst [vmem:[%s26] sm:%s3] %v25
    %s28 = scalar_lea.vmem %s0, 18
    %v29 = vld [vmem:[%s28] sm:%s3]
    %s30 = scalar_lea.vmem [#allocation0], 72
    %31 = vst [vmem:[%s30] sm:%s3] %v29
    %s32 = scalar_lea.vmem %s0, 16
    %v33 = vld [vmem:[%s32] sm:%s3]
    %s34 = scalar_lea.vmem [#allocation0], 64
    %35 = vst [vmem:[%s34] sm:%s3] %v33
    %s36 = scalar_lea.vmem %s0, 14
    %v37 = vld [vmem:[%s36] sm:%s3]
    %s38 = scalar_lea.vmem [#allocation0], 56
    %39 = vst [vmem:[%s38] sm:%s3] %v37
    %s40 = scalar_lea.vmem %s0, 12
    %v41 = vld [vmem:[%s40] sm:%s3]
    %s42 = scalar_lea.vmem [#allocation0], 48
    %43 = vst [vmem:[%s42] sm:%s3] %v41
    %s44 = scalar_lea.vmem %s0, 10
    %v45 = vld [vmem:[%s44] sm:%s3]
    %s46 = scalar_lea.vmem [#allocation0], 40
    %47 = vst [vmem:[%s46] sm:%s3] %v45
    %s48 = scalar_lea.vmem %s0, 8
    %v49 = vld [vmem:[%s48] sm:%s3]
    %s50 = scalar_lea.vmem [#allocation0], 32
    %51 = vst [vmem:[%s50] sm:%s3] %v49
    %s52 = scalar_lea.vmem %s0, 6
    %v53 = vld [vmem:[%s52] sm:%s3]
    %s54 = scalar_lea.vmem [#allocation0], 24
    %55 = vst [vmem:[%s54] sm:%s3] %v53
    %s56 = scalar_lea.vmem %s0, 4
    %v57 = vld [vmem:[%s56] sm:%s3]
    %s58 = scalar_lea.vmem [#allocation0], 16
    %59 = vst [vmem:[%s58] sm:%s3] %v57
    %s60 = scalar_lea.vmem %s0, 2
    %v61 = vld [vmem:[%s60] sm:%s3]
    %s62 = scalar_lea.vmem [#allocation0], 8
    %63 = vst [vmem:[%s62] sm:%s3] %v61
    %v64 = vld [vmem:[%s0] sm:%s3]
    %65 = vst [vmem:[#allocation0] sm:%s3] %v64
    %v66 = vld [vmem:[#allocation0] ss:$8 sm:$0xf]
    %v67 = vld [vmem:[#allocation0] ss:$8 sm:$0xf0]
    %vm68 = vcmask 1047556
    %v69 = vsel %vm68, %v67, %v66
    %vm70 = vcmask 64512
    %71 = vst.msk [vmem:[%s1] sm:$0xff] %vm70, %v69
    %s72 = scalar_lea.vmem [#allocation0], 64
    %v73 = vld [vmem:[%s72] ss:$8 sm:$0xf]
    %s74 = scalar_lea.vmem [#allocation0], 64
    %v75 = vld [vmem:[%s74] ss:$8 sm:$0xf0]
    %vm76 = vcmask 1047556
    %v77 = vsel %vm76, %v75, %v73
    %vm78 = vcmask 64512
    %s79 = scalar_lea.vmem %s1, 8
    %80 = vst.msk [vmem:[%s79] sm:$0xff] %vm78, %v77
    %s81 = scalar_lea.vmem [#allocation0], 1
    %v82 = vld [vmem:[%s81] ss:$8 sm:$0xf]
    %s83 = scalar_lea.vmem [#allocation0], 1
    %v84 = vld [vmem:[%s83] ss:$8 sm:$0xf0]
    %vm85 = vcmask 1047556
    %v86 = vsel %vm85, %v84, %v82
    %87 = vrot.lane.b32.xlu0 %v86, 8
    %v88 = vpop.permute.xlu0 %87
    %vm89 = vcmask 130112
    %90 = vst.msk [vmem:[%s1] sm:$0xff] %vm89, %v88
    %s91 = scalar_lea.vmem [#allocation0], 65
    %v92 = vld [vmem:[%s91] ss:$8 sm:$0xf]
    %s93 = scalar_lea.vmem [#allocation0], 65
    %v94 = vld [vmem:[%s93] ss:$8 sm:$0xf0]
    %vm95 = vcmask 1047556
    %v96 = vsel %vm95, %v94, %v92
    %97 = vrot.lane.b32.xlu0 %v96, 8
    %v98 = vpop.permute.xlu0 %97
    %vm99 = vcmask 130112
    %s100 = scalar_lea.vmem %s1, 8
    %101 = vst.msk [vmem:[%s100] sm:$0xff] %vm99, %v98

// kernel: _lambda_.1
$region0: #{_lambda_.1}
  #allocation0 [shape = 'u32[]', space=smem, size = 0x4, offset = 0x4, fixed_abs, tag = 'smem constant byte address 0x4 - core index']
  #allocation1 [shape = 'u32[72,128]{1,0:T(1,128)}', space=vmem, size = 0x9000, scoped, tag = 'internal scratch']
  %s0 = inlined_call_operand.smem [shape: u32[75], index: -1, kind: input, shape index: {}]
  %s1 = sld [smem:[%s0]]
  %s2 = scalar_lea.smem %s0, 1
  %s3 = sld [smem:[%s2]]
  %s4 = scalar_lea.smem %s0, 2
  %s5 = sld [smem:[%s4]]
  %s6 = scalar_lea.smem %s0, 3
  %s7 = sld [smem:[%s6]]
  %s8 = scalar_lea.smem %s0, 4
  %s9 = sld [smem:[%s8]]
  %s10 = scalar_lea.smem %s0, 5
  %s11 = sld [smem:[%s10]]
  %s12 = scalar_lea.smem %s0, 6
  %s13 = sld [smem:[%s12]]
  %s14 = scalar_lea.smem %s0, 7
  %s15 = sld [smem:[%s14]]
  %s16 = scalar_lea.smem %s0, 8
  %s17 = sld [smem:[%s16]]
  %s18 = scalar_lea.smem %s0, 9
  %s19 = sld [smem:[%s18]]
  %s20 = scalar_lea.smem %s0, 10
  %s21 = sld [smem:[%s20]]
  %s22 = scalar_lea.smem %s0, 11
  %s23 = sld [smem:[%s22]]
  %s24 = scalar_lea.smem %s0, 12
  %s25 = sld [smem:[%s24]]
  %s26 = scalar_lea.smem %s0, 13
  %s27 = sld [smem:[%s26]]
  %s28 = scalar_lea.smem %s0, 14
  %s29 = sld [smem:[%s28]]
  %s30 = scalar_lea.smem %s0, 15
  %s31 = sld [smem:[%s30]]
  %s32 = scalar_lea.smem %s0, 16
  %s33 = sld [smem:[%s32]]
  %s34 = scalar_lea.smem %s0, 17
  %s35 = sld [smem:[%s34]]
  %s36 = scalar_lea.smem %s0, 18
  %s37 = sld [smem:[%s36]]
  %s38 = scalar_lea.smem %s0, 19
  %s39 = sld [smem:[%s38]]
  %s40 = scalar_lea.smem %s0, 20
  %s41 = sld [smem:[%s40]]
  %s42 = scalar_lea.smem %s0, 21
  %s43 = sld [smem:[%s42]]
  %s44 = scalar_lea.smem %s0, 22
  %s45 = sld [smem:[%s44]]
  %s46 = scalar_lea.smem %s0, 23
  %s47 = sld [smem:[%s46]]
  %s48 = scalar_lea.smem %s0, 24
  %s49 = sld [smem:[%s48]]
  %s50 = scalar_lea.smem %s0, 25
  %s51 = sld [smem:[%s50]]
  %s52 = scalar_lea.smem %s0, 26
  %s53 = sld [smem:[%s52]]
  %s54 = scalar_lea.smem %s0, 27
  %s55 = sld [smem:[%s54]]
  %s56 = scalar_lea.smem %s0, 28
  %s57 = sld [smem:[%s56]]
  %s58 = scalar_lea.smem %s0, 29
  %s59 = sld [smem:[%s58]]
  %s60 = scalar_lea.smem %s0, 30
  %s61 = sld [smem:[%s60]]
  %s62 = scalar_lea.smem %s0, 31
  %s63 = sld [smem:[%s62]]
  %s64 = scalar_lea.smem %s0, 32
  %s65 = sld [smem:[%s64]]
  %s66 = scalar_lea.smem %s0, 33
  %s67 = sld [smem:[%s66]]
  %s68 = scalar_lea.smem %s0, 34
  %s69 = sld [smem:[%s68]]
  %s70 = scalar_lea.smem %s0, 35
  %s71 = sld [smem:[%s70]]
  %s72 = scalar_lea.smem %s0, 36
  %s73 = sld [smem:[%s72]]
  %s74 = scalar_lea.smem %s0, 37
  %s75 = sld [smem:[%s74]]
  %s76 = scalar_lea.smem %s0, 38
  %s77 = sld [smem:[%s76]]
  %s78 = scalar_lea.smem %s0, 39
  %s79 = sld [smem:[%s78]]
  %s80 = scalar_lea.smem %s0, 40
  %s81 = sld [smem:[%s80]]
  %s82 = scalar_lea.smem %s0, 41
  %s83 = sld [smem:[%s82]]
  %s84 = scalar_lea.smem %s0, 42
  %s85 = sld [smem:[%s84]]
  %s86 = scalar_lea.smem %s0, 43
  %s87 = sld [smem:[%s86]]
  %s88 = scalar_lea.smem %s0, 44
  %s89 = sld [smem:[%s88]]
  %s90 = scalar_lea.smem %s0, 45
  %s91 = sld [smem:[%s90]]
  %s92 = scalar_lea.smem %s0, 46
  %s93 = sld [smem:[%s92]]
  %s94 = scalar_lea.smem %s0, 47
  %s95 = sld [smem:[%s94]]
  %s96 = scalar_lea.smem %s0, 48
  %s97 = sld [smem:[%s96]]
  %s98 = scalar_lea.smem %s0, 49
  %s99 = sld [smem:[%s98]]
  %s100 = scalar_lea.smem %s0, 50
  %s101 = sld [smem:[%s100]]
  %s102 = scalar_lea.smem %s0, 51
  %s103 = sld [smem:[%s102]]
  %s104 = scalar_lea.smem %s0, 52
  %s105 = sld [smem:[%s104]]
  %s106 = scalar_lea.smem %s0, 53
  %s107 = sld [smem:[%s106]]
  %s108 = scalar_lea.smem %s0, 54
  %s109 = sld [smem:[%s108]]
  %s110 = scalar_lea.smem %s0, 55
  %s111 = sld [smem:[%s110]]
  %s112 = scalar_lea.smem %s0, 56
  %s113 = sld [smem:[%s112]]
  %s114 = scalar_lea.smem %s0, 57
  %s115 = sld [smem:[%s114]]
  %s116 = scalar_lea.smem %s0, 58
  %s117 = sld [smem:[%s116]]
  %s118 = scalar_lea.smem %s0, 59
  %s119 = sld [smem:[%s118]]
  %s120 = scalar_lea.smem %s0, 60
  %s121 = sld [smem:[%s120]]
  %s122 = scalar_lea.smem %s0, 61
  %s123 = sld [smem:[%s122]]
  %s124 = scalar_lea.smem %s0, 62
  %s125 = sld [smem:[%s124]]
  %s126 = scalar_lea.smem %s0, 63
  %s127 = sld [smem:[%s126]]
  %s128 = scalar_lea.smem %s0, 64
  %s129 = sld [smem:[%s128]]
  %s130 = scalar_lea.smem %s0, 65
  %s131 = sld [smem:[%s130]]
  %s132 = scalar_lea.smem %s0, 66
  %s133 = sld [smem:[%s132]]
  %s134 = scalar_lea.smem %s0, 67
  %s135 = sld [smem:[%s134]]
  %s136 = scalar_lea.smem %s0, 68
  %s137 = sld [smem:[%s136]]
  %s138 = scalar_lea.smem %s0, 69
  %s139 = sld [smem:[%s138]]
  %s140 = scalar_lea.smem %s0, 70
  %s141 = sld [smem:[%s140]]
  %s142 = scalar_lea.smem %s0, 71
  %s143 = sld [smem:[%s142]]
  %s144 = scalar_lea.smem %s0, 72
  %s145 = sld [smem:[%s144]]
  %s146 = scalar_lea.smem %s0, 73
  %s147 = sld [smem:[%s146]]
  %s148 = scalar_lea.smem %s0, 74
  %s149 = sld [smem:[%s148]]
  %s150 = sld [smem:[#allocation0]]
  $region514: #{_lambda_.1} parent=0
    _
  %s152 = ssub.s32 1, %s150
  %s153 = scalar_select 0, %s152, %s150
  $region1: #{_lambda_.1} parent=0
    #allocation2 [shape = 'u8[512]{0}', space=vmem, size = 0x400, scoped, tag = 'input window, operand 5, single buffered']
    #allocation3 [shape = 's32[1]{0}', space=sflag, size = 0x4, scoped, tag = 'scoped memory for _lambda_.1']
    #allocation4 [shape = 'u8[512]{0}', space=vmem, size = 0x400, scoped, tag = 'input window, operand 6, single buffered']
    #allocation5 [shape = 's32[1]{0}', space=sflag, size = 0x4, scoped, tag = 'scoped memory for _lambda_.1']
    #allocation6 [shape = 'u8[512]{0}', space=vmem, size = 0x400, scoped, tag = 'input window, operand 8, single buffered']
    #allocation7 [shape = 'u8[512]{0}', space=vmem, size = 0x400, scoped, tag = 'input window, operand 9, single buffered']
    #allocation8 [shape = 's32[1]{0}', space=sflag, size = 0x4, scoped, tag = 'scoped memory for _lambda_.1']
    #allocation9 [shape = 'u8[512]{0}', space=vmem, size = 0x400, scoped, tag = 'input window, operand 13, single buffered']
    #allocation10 [shape = 'u8[512]{0}', space=vmem, size = 0x400, scoped, tag = 'input window, operand 14, single buffered']
    #allocation11 [shape = 's32[1]{0}', space=sflag, size = 0x4, scoped, tag = 'scoped memory for _lambda_.1']
    #allocation12 [shape = 'u8[512]{0}', space=vmem, size = 0x400, scoped, tag = 'input window, operand 15, single buffered']
    #allocation13 [shape = 'u8[512]{0}', space=vmem, size = 0x400, scoped, tag = 'input window, operand 16, single buffered']
    #allocation14 [shape = 's32[1]{0}', space=sflag, size = 0x4, scoped, tag = 'scoped memory for _lambda_.1']
    #allocation15 [shape = 'u8[512]{0}', space=vmem, size = 0x400, scoped, tag = 'input window, operand 17, single buffered']
    #allocation16 [shape = 'u8[512]{0}', space=vmem, size = 0x400, scoped, tag = 'input window, operand 18, single buffered']
    #allocation17 [shape = 's32[1]{0}', space=sflag, size = 0x4, scoped, tag = 'scoped memory for _lambda_.1']
    #allocation18 [shape = 'u8[512]{0}', space=vmem, size = 0x400, scoped, tag = 'input window, operand 19, single buffered']
    #allocation19 [shape = 'u8[16384]{0}', space=vmem, size = 0x4000, scoped, tag = 'input window, operand 21, single buffered']
    #allocation20 [shape = 's32[1]{0}', space=sflag, size = 0x4, scoped, tag = 'scoped memory for _lambda_.1']
    #allocation21 [shape = 'u8[512]{0}', space=vmem, size = 0x400, scoped, tag = 'input window, operand 25, single buffered']
    #allocation22 [shape = 'u8[512]{0}', space=vmem, size = 0x400, scoped, tag = 'input window, operand 26, single buffered']
    #allocation23 [shape = 's32[1]{0}', space=sflag, size = 0x4, scoped, tag = 'scoped memory for _lambda_.1']
    #allocation24 [shape = 'u8[1024]{0}', space=vmem, size = 0x400, scoped, tag = 'input window, operand 27, single buffered']
    #allocation25 [shape = 'u8[512]{0}', space=vmem, size = 0x400, scoped, tag = 'input window, operand 28, single buffered']
    #allocation26 [shape = 's32[1]{0}', space=sflag, size = 0x4, scoped, tag = 'scoped memory for _lambda_.1']
    #allocation27 [shape = 'u8[512]{0}', space=vmem, size = 0x400, scoped, tag = 'input window, operand 29, single buffered']
    #allocation28 [shape = 'u8[16384]{0}', space=vmem, size = 0x4000, scoped, tag = 'input window, operand 31, single buffered']
    #allocation29 [shape = 's32[1]{0}', space=sflag, size = 0x4, scoped, tag = 'scoped memory for _lambda_.1']
    #allocation30 [shape = 'u8[512]{0}', space=vmem, size = 0x400, scoped, tag = 'input window, operand 33, single buffered']
    #allocation31 [shape = 'u8[512]{0}', space=vmem, size = 0x400, scoped, tag = 'input window, operand 34, single buffered']
    #allocation32 [shape = 's32[1]{0}', space=sflag, size = 0x4, scoped, tag = 'scoped memory for _lambda_.1']
    #allocation33 [shape = 'u8[512]{0}', space=vmem, size = 0x400, scoped, tag = 'input window, operand 35, single buffered']
    #allocation34 [shape = 'u8[512]{0}', space=vmem, size = 0x400, scoped, tag = 'input window, operand 36, single buffered']
    #allocation35 [shape = 's32[1]{0}', space=sflag, size = 0x4, scoped, tag = 'scoped memory for _lambda_.1']
    #allocation36 [shape = 'u8[512]{0}', space=vmem, size = 0x400, scoped, tag = 'input window, operand 37, single buffered']
    #allocation37 [shape = 'u8[512]{0}', space=vmem, size = 0x400, scoped, tag = 'input window, operand 38, single buffered']
    #allocation38 [shape = 's32[1]{0}', space=sflag, size = 0x4, scoped, tag = 'scoped memory for _lambda_.1']
    #allocation39 [shape = 'u8[512]{0}', space=vmem, size = 0x400, scoped, tag = 'input window, operand 39, single buffered']
    #allocation40 [shape = 'u8[1536]{0}', space=vmem, size = 0x800, scoped, tag = 'input window, operand 40, single buffered']
    #allocation41 [shape = 's32[1]{0}', space=sflag, size = 0x4, scoped, tag = 'scoped memory for _lambda_.1']
    #allocation42 [shape = 'u8[16384]{0}', space=vmem, size = 0x4000, scoped, tag = 'input window, operand 41, single buffered']
    #allocation43 [shape = 'u8[512]{0}', space=vmem, size = 0x400, scoped, tag = 'input window, operand 45, single buffered']
    #allocation44 [shape = 's32[1]{0}', space=sflag, size = 0x4, scoped, tag = 'scoped memory for _lambda_.1']
    #allocation45 [shape = 'u8[512]{0}', space=vmem, size = 0x400, scoped, tag = 'input window, operand 46, single buffered']
    #allocation46 [shape = 'u8[512]{0}', space=vmem, size = 0x400, scoped, tag = 'input window, operand 47, single buffered']
    #allocation47 [shape = 's32[1]{0}', space=sflag, size = 0x4, scoped, tag = 'scoped memory for _lambda_.1']
    #allocation48 [shape = 'u8[1536]{0}', space=vmem, size = 0x800, scoped, tag = 'input window, operand 48, single buffered']
    #allocation49 [shape = 'u8[512]{0}', space=vmem, size = 0x400, scoped, tag = 'input window, operand 49, single buffered']
    #allocation50 [shape = 's32[1]{0}', space=sflag, size = 0x4, scoped, tag = 'scoped memory for _lambda_.1']
    #allocation51 [shape = 'u8[512]{0}', space=vmem, size = 0x400, scoped, tag = 'input window, operand 50, single buffered']
    #allocation52 [shape = 'u8[512]{0}', space=vmem, size = 0x400, scoped, tag = 'input window, operand 51, single buffered']
    #allocation53 [shape = 's32[1]{0}', space=sflag, size = 0x4, scoped, tag = 'scoped memory for _lambda_.1']
    #allocation54 [shape = 'u8[512]{0}', space=vmem, size = 0x400, scoped, tag = 'input window, operand 52, single buffered']
    #allocation55 [shape = 'u8[32768]{0}', space=vmem, size = 0x8000, scoped, tag = 'input window, operand 54, single buffered']
    #allocation56 [shape = 's32[1]{0}', space=sflag, size = 0x4, scoped, tag = 'scoped memory for _lambda_.1']
    #allocation57 [shape = 'u8[16384]{0}', space=vmem, size = 0x4000, scoped, tag = 'input window, operand 55, single buffered']
    #allocation58 [shape = 'u8[512]{0}', space=vmem, size = 0x400, scoped, tag = 'input window, operand 57, single buffered']
    #allocation59 [shape = 's32[1]{0}', space=sflag, size = 0x4, scoped, tag = 'scoped memory for _lambda_.1']
    #allocation60 [shape = 'u8[512]{0}', space=vmem, size = 0x400, scoped, tag = 'input window, operand 58, single buffered']
    #allocation61 [shape = 'u8[512]{0}', space=vmem, size = 0x400, scoped, tag = 'input window, operand 59, single buffered']
    #allocation62 [shape = 's32[1]{0}', space=sflag, size = 0x4, scoped, tag = 'scoped memory for _lambda_.1']
    #allocation63 [shape = 'u8[1536]{0}', space=vmem, size = 0x800, scoped, tag = 'input window, operand 60, single buffered']
    #allocation64 [shape = 'u8[512]{0}', space=vmem, size = 0x400, scoped, tag = 'input window, operand 61, single buffered']
    #allocation65 [shape = 's32[1]{0}', space=sflag, size = 0x4, scoped, tag = 'scoped memory for _lambda_.1']
    #allocation66 [shape = 'u8[512]{0}', space=vmem, size = 0x400, scoped, tag = 'input window, operand 62, single buffered']
    #allocation67 [shape = 'u8[512]{0}', space=vmem, size = 0x400, scoped, tag = 'input window, operand 63, single buffered']
    #allocation68 [shape = 's32[1]{0}', space=sflag, size = 0x4, scoped, tag = 'scoped memory for _lambda_.1']
    #allocation69 [shape = 'u8[512]{0}', space=vmem, size = 0x400, scoped, tag = 'input window, operand 64, single buffered']
    #allocation70 [shape = 'u8[32768]{0}', space=vmem, size = 0x8000, scoped, tag = 'input window, operand 65, single buffered']
    #allocation71 [shape = 's32[1]{0}', space=sflag, size = 0x4, scoped, tag = 'scoped memory for _lambda_.1']
    #allocation72 [shape = 'u8[32768]{0}', space=vmem, size = 0x8000, scoped, tag = 'input window, operand 66, single buffered']
    #allocation73 [shape = 'u8[16384]{0}', space=vmem, size = 0x4000, scoped, tag = 'input window, operand 67, single buffered']
    #allocation74 [shape = 's32[1]{0}', space=sflag, size = 0x4, scoped, tag = 'scoped memory for _lambda_.1']
    #allocation75 [shape = 'u8[512]{0}', space=vmem, size = 0x400, scoped, tag = 'input window, operand 69, single buffered']
    #allocation76 [shape = 'u8[512]{0}', space=vmem, size = 0x400, scoped, tag = 'input window, operand 71, single buffered']
    #allocation77 [shape = 's32[1]{0}', space=sflag, size = 0x4, scoped, tag = 'scoped memory for _lambda_.1']
    #allocation78 [shape = 'u8[32768]{0}', space=vmem, size = 0x8000, scoped, tag = 'input window, operand 72, single buffered']
    #allocation79 [shape = 'u8[2048]{0}', space=vmem, size = 0x800, scoped, tag = 'input window, operand 73, single buffered']
    #allocation80 [shape = 's32[1]{0}', space=sflag, size = 0x4, scoped, tag = 'scoped memory for _lambda_.1']
    %154 = vsyncpa [#allocation3], 0
    %155 = vsyncpa [#allocation5], 0
    %156 = vsyncpa [#allocation8], 0
    %157 = vsyncpa [#allocation11], 0
    %158 = vsyncpa [#allocation14], 0
    %159 = vsyncpa [#allocation17], 0
    %160 = vsyncpa [#allocation20], 0
    %161 = vsyncpa [#allocation23], 0
    %162 = vsyncpa [#allocation26], 0
    %163 = vsyncpa [#allocation29], 0
    %164 = vsyncpa [#allocation32], 0
    %165 = vsyncpa [#allocation35], 0
    %166 = vsyncpa [#allocation38], 0
    %167 = vsyncpa [#allocation41], 0
    %168 = vsyncpa [#allocation44], 0
    %169 = vsyncpa [#allocation47], 0
    %170 = vsyncpa [#allocation50], 0
    %171 = vsyncpa [#allocation53], 0
    %172 = vsyncpa [#allocation56], 0
    %173 = vsyncpa [#allocation59], 0
    %174 = vsyncpa [#allocation62], 0
    %175 = vsyncpa [#allocation65], 0
    %176 = vsyncpa [#allocation68], 0
    %177 = vsyncpa [#allocation71], 0
    %178 = vsyncpa [#allocation74], 0
    %179 = vsyncpa [#allocation77], 0
    %180 = vsyncpa [#allocation80], 0
    // Predicated region
    $region2: #{_lambda_.1} parent=1 // pred_check
      _
    $region3: #{_lambda_.1} parent=1 // pred_check_branch
      %182 = sbr.rel (0) target = $region5
    $region4: #{_lambda_.1} parent=1 // pred_region
      _
    $region5: #{_lambda_.1} parent=1 // pred_fallthru
      _
    // Predicated region
    $region6: #{_lambda_.1} parent=1 // pred_check
      _
    $region7: #{_lambda_.1} parent=1 // pred_check_branch
      %184 = sbr.rel (0) target = $region9
    $region8: #{_lambda_.1} parent=1 // pred_region
      _
    $region9: #{_lambda_.1} parent=1 // pred_fallthru
      _
    // Predicated region
    $region10: #{_lambda_.1} parent=1 // pred_check
      _
    $region11: #{_lambda_.1} parent=1 // pred_check_branch
      %186 = sbr.rel (0) target = $region13
    $region12: #{_lambda_.1} parent=1 // pred_region
      _
    $region13: #{_lambda_.1} parent=1 // pred_fallthru
      _
    // Predicated region
    $region14: #{_lambda_.1} parent=1 // pred_check
      _
    $region15: #{_lambda_.1} parent=1 // pred_check_branch
      %188 = sbr.rel (0) target = $region17
    $region16: #{_lambda_.1} parent=1 // pred_region
      _
    $region17: #{_lambda_.1} parent=1 // pred_fallthru
      _
    // Predicated region
    $region18: #{_lambda_.1} parent=1 // pred_check
      _
    $region19: #{_lambda_.1} parent=1 // pred_check_branch
      %190 = sbr.rel (0) target = $region21
    $region20: #{_lambda_.1} parent=1 // pred_region
      _
    $region21: #{_lambda_.1} parent=1 // pred_fallthru
      _
    // Predicated region
    $region22: #{_lambda_.1} parent=1 // pred_check
      _
    $region23: #{_lambda_.1} parent=1 // pred_check_branch
      %192 = sbr.rel (0) target = $region25
    $region24: #{_lambda_.1} parent=1 // pred_region
      %194 = vsyncadd [#allocation3], 0
      %s196 = sshll.u32 %s11, 4
      %s197 = int_to_ptr.hbm [resolvable:$true] %s196
      %s198 = sshll.u32 [#allocation2], 4
      %s199 = int_to_ptr.vmem [resolvable:$true] %s198
      %201 = dma.hbm_to_vmem [thread:$0]  %s197, 16, %s199, [#allocation3]
    $region25: #{_lambda_.1} parent=1 // pred_fallthru
      _
    // Predicated region
    $region26: #{_lambda_.1} parent=1 // pred_check
      _
    $region27: #{_lambda_.1} parent=1 // pred_check_branch
      %203 = sbr.rel (0) target = $region29
    $region28: #{_lambda_.1} parent=1 // pred_region
      %205 = vsyncadd [#allocation5], 0
      %s207 = sshll.u32 %s13, 4
      %s208 = int_to_ptr.hbm [resolvable:$true] %s207
      %s209 = sshll.u32 [#allocation4], 4
      %s210 = int_to_ptr.vmem [resolvable:$true] %s209
      %212 = dma.hbm_to_vmem [thread:$0]  %s208, 16, %s210, [#allocation5]
    $region29: #{_lambda_.1} parent=1 // pred_fallthru
      _
    // Predicated region
    $region30: #{_lambda_.1} parent=1 // pred_check
      _
    $region31: #{_lambda_.1} parent=1 // pred_check_branch
      %214 = sbr.rel (0) target = $region33
    $region32: #{_lambda_.1} parent=1 // pred_region
      _
    $region33: #{_lambda_.1} parent=1 // pred_fallthru
      _
    // Predicated region
    $region34: #{_lambda_.1} parent=1 // pred_check
      _
    $region35: #{_lambda_.1} parent=1 // pred_check_branch
      %216 = sbr.rel (0) target = $region37
    $region36: #{_lambda_.1} parent=1 // pred_region
      %218 = vsyncadd [#allocation5], 0
      %s220 = sshll.u32 %s17, 4
      %s221 = int_to_ptr.hbm [resolvable:$true] %s220
      %s222 = sshll.u32 [#allocation6], 4
      %s223 = int_to_ptr.vmem [resolvable:$true] %s222
      %225 = dma.hbm_to_vmem [thread:$0]  %s221, 16, %s223, [#allocation5]
    $region37: #{_lambda_.1} parent=1 // pred_fallthru
      _
    // Predicated region
    $region38: #{_lambda_.1} parent=1 // pred_check
      _
    $region39: #{_lambda_.1} parent=1 // pred_check_branch
      %227 = sbr.rel (0) target = $region41
    $region40: #{_lambda_.1} parent=1 // pred_region
      %229 = vsyncadd [#allocation8], 0
      %s231 = sshll.u32 %s19, 4
      %s232 = int_to_ptr.hbm [resolvable:$true] %s231
      %s233 = sshll.u32 [#allocation7], 4
      %s234 = int_to_ptr.vmem [resolvable:$true] %s233
      %236 = dma.hbm_to_vmem [thread:$0]  %s232, 16, %s234, [#allocation8]
    $region41: #{_lambda_.1} parent=1 // pred_fallthru
      _
    // Predicated region
    $region42: #{_lambda_.1} parent=1 // pred_check
      _
    $region43: #{_lambda_.1} parent=1 // pred_check_branch
      %238 = sbr.rel (0) target = $region45
    $region44: #{_lambda_.1} parent=1 // pred_region
      _
    $region45: #{_lambda_.1} parent=1 // pred_fallthru
      _
    // Predicated region
    $region46: #{_lambda_.1} parent=1 // pred_check
      _
    $region47: #{_lambda_.1} parent=1 // pred_check_branch
      %240 = sbr.rel (0) target = $region49
    $region48: #{_lambda_.1} parent=1 // pred_region
      _
    $region49: #{_lambda_.1} parent=1 // pred_fallthru
      _
    // Predicated region
    $region50: #{_lambda_.1} parent=1 // pred_check
      _
    $region51: #{_lambda_.1} parent=1 // pred_check_branch
      %242 = sbr.rel (0) target = $region53
    $region52: #{_lambda_.1} parent=1 // pred_region
      _
    $region53: #{_lambda_.1} parent=1 // pred_fallthru
      _
    // Predicated region
    $region54: #{_lambda_.1} parent=1 // pred_check
      _
    $region55: #{_lambda_.1} parent=1 // pred_check_branch
      %244 = sbr.rel (0) target = $region57
    $region56: #{_lambda_.1} parent=1 // pred_region
      %246 = vsyncadd [#allocation8], 0
      %s248 = sshll.u32 %s27, 4
      %s249 = int_to_ptr.hbm [resolvable:$true] %s248
      %s250 = sshll.u32 [#allocation9], 4
      %s251 = int_to_ptr.vmem [resolvable:$true] %s250
      %253 = dma.hbm_to_vmem [thread:$0]  %s249, 16, %s251, [#allocation8]
    $region57: #{_lambda_.1} parent=1 // pred_fallthru
      _
    // Predicated region
    $region58: #{_lambda_.1} parent=1 // pred_check
      _
    $region59: #{_lambda_.1} parent=1 // pred_check_branch
      %255 = sbr.rel (0) target = $region61
    $region60: #{_lambda_.1} parent=1 // pred_region
      %257 = vsyncadd [#allocation11], 0
      %s259 = sshll.u32 %s29, 4
      %s260 = int_to_ptr.hbm [resolvable:$true] %s259
      %s261 = sshll.u32 [#allocation10], 4
      %s262 = int_to_ptr.vmem [resolvable:$true] %s261
      %264 = dma.hbm_to_vmem [thread:$0]  %s260, 16, %s262, [#allocation11]
    $region61: #{_lambda_.1} parent=1 // pred_fallthru
      _
    // Predicated region
    $region62: #{_lambda_.1} parent=1 // pred_check
      _
    $region63: #{_lambda_.1} parent=1 // pred_check_branch
      %266 = sbr.rel (0) target = $region65
    $region64: #{_lambda_.1} parent=1 // pred_region
      %268 = vsyncadd [#allocation11], 0
      %s270 = sshll.u32 %s31, 4
      %s271 = int_to_ptr.hbm [resolvable:$true] %s270
      %s272 = sshll.u32 [#allocation12], 4
      %s273 = int_to_ptr.vmem [resolvable:$true] %s272
      %275 = dma.hbm_to_vmem [thread:$0]  %s271, 16, %s273, [#allocation11]
    $region65: #{_lambda_.1} parent=1 // pred_fallthru
      _
    // Predicated region
    $region66: #{_lambda_.1} parent=1 // pred_check
      _
    $region67: #{_lambda_.1} parent=1 // pred_check_branch
      %277 = sbr.rel (0) target = $region69
    $region68: #{_lambda_.1} parent=1 // pred_region
      %279 = vsyncadd [#allocation14], 0
      %s281 = sshll.u32 %s33, 4
      %s282 = int_to_ptr.hbm [resolvable:$true] %s281
      %s283 = sshll.u32 [#allocation13], 4
      %s284 = int_to_ptr.vmem [resolvable:$true] %s283
      %286 = dma.hbm_to_vmem [thread:$0]  %s282, 16, %s284, [#allocation14]
    $region69: #{_lambda_.1} parent=1 // pred_fallthru
      _
    // Predicated region
    $region70: #{_lambda_.1} parent=1 // pred_check
      _
    $region71: #{_lambda_.1} parent=1 // pred_check_branch
      %288 = sbr.rel (0) target = $region73
    $region72: #{_lambda_.1} parent=1 // pred_region
      %290 = vsyncadd [#allocation14], 0
      %s292 = sshll.u32 %s35, 4
      %s293 = int_to_ptr.hbm [resolvable:$true] %s292
      %s294 = sshll.u32 [#allocation15], 4
      %s295 = int_to_ptr.vmem [resolvable:$true] %s294
      %297 = dma.hbm_to_vmem [thread:$0]  %s293, 16, %s295, [#allocation14]
    $region73: #{_lambda_.1} parent=1 // pred_fallthru
      _
    // Predicated region
    $region74: #{_lambda_.1} parent=1 // pred_check
      _
    $region75: #{_lambda_.1} parent=1 // pred_check_branch
      %299 = sbr.rel (0) target = $region77
    $region76: #{_lambda_.1} parent=1 // pred_region
      %301 = vsyncadd [#allocation17], 0
      %s303 = sshll.u32 %s37, 4
      %s304 = int_to_ptr.hbm [resolvable:$true] %s303
      %s305 = sshll.u32 [#allocation16], 4
      %s306 = int_to_ptr.vmem [resolvable:$true] %s305
      %308 = dma.hbm_to_vmem [thread:$0]  %s304, 16, %s306, [#allocation17]
    $region77: #{_lambda_.1} parent=1 // pred_fallthru
      _
    // Predicated region
    $region78: #{_lambda_.1} parent=1 // pred_check
      _
    $region79: #{_lambda_.1} parent=1 // pred_check_branch
      %310 = sbr.rel (0) target = $region81
    $region80: #{_lambda_.1} parent=1 // pred_region
      %312 = vsyncadd [#allocation17], 0
      %s314 = sshll.u32 %s39, 4
      %s315 = int_to_ptr.hbm [resolvable:$true] %s314
      %s316 = sshll.u32 [#allocation18], 4
      %s317 = int_to_ptr.vmem [resolvable:$true] %s316
      %319 = dma.hbm_to_vmem [thread:$0]  %s315, 16, %s317, [#allocation17]
    $region81: #{_lambda_.1} parent=1 // pred_fallthru
      _
    // Predicated region
    $region82: #{_lambda_.1} parent=1 // pred_check
      _
    $region83: #{_lambda_.1} parent=1 // pred_check_branch
      %321 = sbr.rel (0) target = $region85
    $region84: #{_lambda_.1} parent=1 // pred_region
      _
    $region85: #{_lambda_.1} parent=1 // pred_fallthru
      _
    // Predicated region
    $region86: #{_lambda_.1} parent=1 // pred_check
      _
    $region87: #{_lambda_.1} parent=1 // pred_check_branch
      %323 = sbr.rel (0) target = $region89
    $region88: #{_lambda_.1} parent=1 // pred_region
      %325 = vsyncadd [#allocation20], 0
      %s326 = sshll.u32 %s43, 4
      %s327 = int_to_ptr.hbm [resolvable:$true] %s326
      %s328 = sshll.u32 [#allocation19], 4
      %s329 = int_to_ptr.vmem [resolvable:$true] %s328
      %334 = dma.hbm_to_vmem [thread:$0]  %s327, 512, %s329, [#allocation20], 128, 128, 8
    $region89: #{_lambda_.1} parent=1 // pred_fallthru
      _
    // Predicated region
    $region90: #{_lambda_.1} parent=1 // pred_check
      _
    $region91: #{_lambda_.1} parent=1 // pred_check_branch
      %336 = sbr.rel (0) target = $region93
    $region92: #{_lambda_.1} parent=1 // pred_region
      _
    $region93: #{_lambda_.1} parent=1 // pred_fallthru
      _
    // Predicated region
    $region94: #{_lambda_.1} parent=1 // pred_check
      _
    $region95: #{_lambda_.1} parent=1 // pred_check_branch
      %338 = sbr.rel (0) target = $region97
    $region96: #{_lambda_.1} parent=1 // pred_region
      _
    $region97: #{_lambda_.1} parent=1 // pred_fallthru
      _
    // Predicated region
    $region98: #{_lambda_.1} parent=1 // pred_check
      _
    $region99: #{_lambda_.1} parent=1 // pred_check_branch
      %340 = sbr.rel (0) target = $region101
    $region100: #{_lambda_.1} parent=1 // pred_region
      _
    $region101: #{_lambda_.1} parent=1 // pred_fallthru
      _
    // Predicated region
    $region102: #{_lambda_.1} parent=1 // pred_check
      _
    $region103: #{_lambda_.1} parent=1 // pred_check_branch
      %342 = sbr.rel (0) target = $region105
    $region104: #{_lambda_.1} parent=1 // pred_region
      %344 = vsyncadd [#allocation20], 0
      %s346 = sshll.u32 %s51, 4
      %s347 = int_to_ptr.hbm [resolvable:$true] %s346
      %s348 = sshll.u32 [#allocation21], 4
      %s349 = int_to_ptr.vmem [resolvable:$true] %s348
      %351 = dma.hbm_to_vmem [thread:$0]  %s347, 16, %s349, [#allocation20]
    $region105: #{_lambda_.1} parent=1 // pred_fallthru
      _
    // Predicated region
    $region106: #{_lambda_.1} parent=1 // pred_check
      _
    $region107: #{_lambda_.1} parent=1 // pred_check_branch
      %353 = sbr.rel (0) target = $region109
    $region108: #{_lambda_.1} parent=1 // pred_region
      %355 = vsyncadd [#allocation23], 0
      %s357 = sshll.u32 %s53, 4
      %s358 = int_to_ptr.hbm [resolvable:$true] %s357
      %s359 = sshll.u32 [#allocation22], 4
      %s360 = int_to_ptr.vmem [resolvable:$true] %s359
      %362 = dma.hbm_to_vmem [thread:$0]  %s358, 16, %s360, [#allocation23]
    $region109: #{_lambda_.1} parent=1 // pred_fallthru
      _
    // Predicated region
    $region110: #{_lambda_.1} parent=1 // pred_check
      _
    $region111: #{_lambda_.1} parent=1 // pred_check_branch
      %364 = sbr.rel (0) target = $region113
    $region112: #{_lambda_.1} parent=1 // pred_region
      %366 = vsyncadd [#allocation23], 0
      %s368 = sshll.u32 %s55, 4
      %s369 = int_to_ptr.hbm [resolvable:$true] %s368
      %s370 = sshll.u32 [#allocation24], 4
      %s371 = int_to_ptr.vmem [resolvable:$true] %s370
      %373 = dma.hbm_to_vmem [thread:$0]  %s369, 32, %s371, [#allocation23]
    $region113: #{_lambda_.1} parent=1 // pred_fallthru
      _
    // Predicated region
    $region114: #{_lambda_.1} parent=1 // pred_check
      _
    $region115: #{_lambda_.1} parent=1 // pred_check_branch
      %375 = sbr.rel (0) target = $region117
    $region116: #{_lambda_.1} parent=1 // pred_region
      %377 = vsyncadd [#allocation26], 0
      %s379 = sshll.u32 %s57, 4
      %s380 = int_to_ptr.hbm [resolvable:$true] %s379
      %s381 = sshll.u32 [#allocation25], 4
      %s382 = int_to_ptr.vmem [resolvable:$true] %s381
      %384 = dma.hbm_to_vmem [thread:$0]  %s380, 16, %s382, [#allocation26]
    $region117: #{_lambda_.1} parent=1 // pred_fallthru
      _
    // Predicated region
    $region118: #{_lambda_.1} parent=1 // pred_check
      _
    $region119: #{_lambda_.1} parent=1 // pred_check_branch
      %386 = sbr.rel (0) target = $region121
    $region120: #{_lambda_.1} parent=1 // pred_region
      %388 = vsyncadd [#allocation26], 0
      %s390 = sshll.u32 %s59, 4
      %s391 = int_to_ptr.hbm [resolvable:$true] %s390
      %s392 = sshll.u32 [#allocation27], 4
      %s393 = int_to_ptr.vmem [resolvable:$true] %s392
      %395 = dma.hbm_to_vmem [thread:$0]  %s391, 16, %s393, [#allocation26]
    $region121: #{_lambda_.1} parent=1 // pred_fallthru
      _
    // Predicated region
    $region122: #{_lambda_.1} parent=1 // pred_check
      _
    $region123: #{_lambda_.1} parent=1 // pred_check_branch
      %397 = sbr.rel (0) target = $region125
    $region124: #{_lambda_.1} parent=1 // pred_region
      _
    $region125: #{_lambda_.1} parent=1 // pred_fallthru
      _
    // Predicated region
    $region126: #{_lambda_.1} parent=1 // pred_check
      _
    $region127: #{_lambda_.1} parent=1 // pred_check_branch
      %399 = sbr.rel (0) target = $region129
    $region128: #{_lambda_.1} parent=1 // pred_region
      %401 = vsyncadd [#allocation29], 0
      %s402 = sshll.u32 %s63, 4
      %s403 = int_to_ptr.hbm [resolvable:$true] %s402
      %s404 = sshll.u32 [#allocation28], 4
      %s405 = int_to_ptr.vmem [resolvable:$true] %s404
      %410 = dma.hbm_to_vmem [thread:$0]  %s403, 512, %s405, [#allocation29], 128, 128, 8
    $region129: #{_lambda_.1} parent=1 // pred_fallthru
      _
    // Predicated region
    $region130: #{_lambda_.1} parent=1 // pred_check
      _
    $region131: #{_lambda_.1} parent=1 // pred_check_branch
      %412 = sbr.rel (0) target = $region133
    $region132: #{_lambda_.1} parent=1 // pred_region
      _
    $region133: #{_lambda_.1} parent=1 // pred_fallthru
      _
    // Predicated region
    $region134: #{_lambda_.1} parent=1 // pred_check
      _
    $region135: #{_lambda_.1} parent=1 // pred_check_branch
      %414 = sbr.rel (0) target = $region137
    $region136: #{_lambda_.1} parent=1 // pred_region
      %416 = vsyncadd [#allocation29], 0
      %s418 = sshll.u32 %s67, 4
      %s419 = int_to_ptr.hbm [resolvable:$true] %s418
      %s420 = sshll.u32 [#allocation30], 4
      %s421 = int_to_ptr.vmem [resolvable:$true] %s420
      %423 = dma.hbm_to_vmem [thread:$0]  %s419, 16, %s421, [#allocation29]
    $region137: #{_lambda_.1} parent=1 // pred_fallthru
      _
    // Predicated region
    $region138: #{_lambda_.1} parent=1 // pred_check
      _
    $region139: #{_lambda_.1} parent=1 // pred_check_branch
      %425 = sbr.rel (0) target = $region141
    $region140: #{_lambda_.1} parent=1 // pred_region
      %427 = vsyncadd [#allocation32], 0
      %s429 = sshll.u32 %s69, 4
      %s430 = int_to_ptr.hbm [resolvable:$true] %s429
      %s431 = sshll.u32 [#allocation31], 4
      %s432 = int_to_ptr.vmem [resolvable:$true] %s431
      %434 = dma.hbm_to_vmem [thread:$0]  %s430, 16, %s432, [#allocation32]
    $region141: #{_lambda_.1} parent=1 // pred_fallthru
      _
    // Predicated region
    $region142: #{_lambda_.1} parent=1 // pred_check
      _
    $region143: #{_lambda_.1} parent=1 // pred_check_branch
      %436 = sbr.rel (0) target = $region145
    $region144: #{_lambda_.1} parent=1 // pred_region
      %438 = vsyncadd [#allocation32], 0
      %s440 = sshll.u32 %s71, 4
      %s441 = int_to_ptr.hbm [resolvable:$true] %s440
      %s442 = sshll.u32 [#allocation33], 4
      %s443 = int_to_ptr.vmem [resolvable:$true] %s442
      %445 = dma.hbm_to_vmem [thread:$0]  %s441, 16, %s443, [#allocation32]
    $region145: #{_lambda_.1} parent=1 // pred_fallthru
      _
    // Predicated region
    $region146: #{_lambda_.1} parent=1 // pred_check
      _
    $region147: #{_lambda_.1} parent=1 // pred_check_branch
      %447 = sbr.rel (0) target = $region149
    $region148: #{_lambda_.1} parent=1 // pred_region
      %449 = vsyncadd [#allocation35], 0
      %s451 = sshll.u32 %s73, 4
      %s452 = int_to_ptr.hbm [resolvable:$true] %s451
      %s453 = sshll.u32 [#allocation34], 4
      %s454 = int_to_ptr.vmem [resolvable:$true] %s453
      %456 = dma.hbm_to_vmem [thread:$0]  %s452, 16, %s454, [#allocation35]
    $region149: #{_lambda_.1} parent=1 // pred_fallthru
      _
    // Predicated region
    $region150: #{_lambda_.1} parent=1 // pred_check
      _
    $region151: #{_lambda_.1} parent=1 // pred_check_branch
      %458 = sbr.rel (0) target = $region153
    $region152: #{_lambda_.1} parent=1 // pred_region
      %460 = vsyncadd [#allocation35], 0
      %s462 = sshll.u32 %s75, 4
      %s463 = int_to_ptr.hbm [resolvable:$true] %s462
      %s464 = sshll.u32 [#allocation36], 4
      %s465 = int_to_ptr.vmem [resolvable:$true] %s464
      %467 = dma.hbm_to_vmem [thread:$0]  %s463, 16, %s465, [#allocation35]
    $region153: #{_lambda_.1} parent=1 // pred_fallthru
      _
    // Predicated region
    $region154: #{_lambda_.1} parent=1 // pred_check
      _
    $region155: #{_lambda_.1} parent=1 // pred_check_branch
      %469 = sbr.rel (0) target = $region157
    $region156: #{_lambda_.1} parent=1 // pred_region
      %471 = vsyncadd [#allocation38], 0
      %s473 = sshll.u32 %s77, 4
      %s474 = int_to_ptr.hbm [resolvable:$true] %s473
      %s475 = sshll.u32 [#allocation37], 4
      %s476 = int_to_ptr.vmem [resolvable:$true] %s475
      %478 = dma.hbm_to_vmem [thread:$0]  %s474, 16, %s476, [#allocation38]
    $region157: #{_lambda_.1} parent=1 // pred_fallthru
      _
    // Predicated region
    $region158: #{_lambda_.1} parent=1 // pred_check
      _
    $region159: #{_lambda_.1} parent=1 // pred_check_branch
      %480 = sbr.rel (0) target = $region161
    $region160: #{_lambda_.1} parent=1 // pred_region
      %482 = vsyncadd [#allocation38], 0
      %s484 = sshll.u32 %s79, 4
      %s485 = int_to_ptr.hbm [resolvable:$true] %s484
      %s486 = sshll.u32 [#allocation39], 4
      %s487 = int_to_ptr.vmem [resolvable:$true] %s486
      %489 = dma.hbm_to_vmem [thread:$0]  %s485, 16, %s487, [#allocation38]
    $region161: #{_lambda_.1} parent=1 // pred_fallthru
      _
    // Predicated region
    $region162: #{_lambda_.1} parent=1 // pred_check
      _
    $region163: #{_lambda_.1} parent=1 // pred_check_branch
      %491 = sbr.rel (0) target = $region165
    $region164: #{_lambda_.1} parent=1 // pred_region
      %493 = vsyncadd [#allocation41], 0
      %s495 = sshll.u32 %s81, 4
      %s496 = int_to_ptr.hbm [resolvable:$true] %s495
      %s497 = sshll.u32 [#allocation40], 4
      %s498 = int_to_ptr.vmem [resolvable:$true] %s497
      %500 = dma.hbm_to_vmem [thread:$0]  %s496, 48, %s498, [#allocation41]
    $region165: #{_lambda_.1} parent=1 // pred_fallthru
      _
    // Predicated region
    $region166: #{_lambda_.1} parent=1 // pred_check
      _
    $region167: #{_lambda_.1} parent=1 // pred_check_branch
      %502 = sbr.rel (0) target = $region169
    $region168: #{_lambda_.1} parent=1 // pred_region
      %504 = vsyncadd [#allocation41], 0
      %s505 = sshll.u32 %s83, 4
      %s506 = int_to_ptr.hbm [resolvable:$true] %s505
      %s507 = sshll.u32 [#allocation42], 4
      %s508 = int_to_ptr.vmem [resolvable:$true] %s507
      %513 = dma.hbm_to_vmem [thread:$0]  %s506, 512, %s508, [#allocation41], 128, 128, 8
    $region169: #{_lambda_.1} parent=1 // pred_fallthru
      _
    // Predicated region
    $region170: #{_lambda_.1} parent=1 // pred_check
      _
    $region171: #{_lambda_.1} parent=1 // pred_check_branch
      %515 = sbr.rel (0) target = $region173
    $region172: #{_lambda_.1} parent=1 // pred_region
      _
    $region173: #{_lambda_.1} parent=1 // pred_fallthru
      _
    // Predicated region
    $region174: #{_lambda_.1} parent=1 // pred_check
      _
    $region175: #{_lambda_.1} parent=1 // pred_check_branch
      %517 = sbr.rel (0) target = $region177
    $region176: #{_lambda_.1} parent=1 // pred_region
      _
    $region177: #{_lambda_.1} parent=1 // pred_fallthru
      _
    // Predicated region
    $region178: #{_lambda_.1} parent=1 // pred_check
      _
    $region179: #{_lambda_.1} parent=1 // pred_check_branch
      %519 = sbr.rel (0) target = $region181
    $region180: #{_lambda_.1} parent=1 // pred_region
      _
    $region181: #{_lambda_.1} parent=1 // pred_fallthru
      _
    // Predicated region
    $region182: #{_lambda_.1} parent=1 // pred_check
      _
    $region183: #{_lambda_.1} parent=1 // pred_check_branch
      %521 = sbr.rel (0) target = $region185
    $region184: #{_lambda_.1} parent=1 // pred_region
      %523 = vsyncadd [#allocation44], 0
      %s525 = sshll.u32 %s91, 4
      %s526 = int_to_ptr.hbm [resolvable:$true] %s525
      %s527 = sshll.u32 [#allocation43], 4
      %s528 = int_to_ptr.vmem [resolvable:$true] %s527
      %530 = dma.hbm_to_vmem [thread:$0]  %s526, 16, %s528, [#allocation44]
    $region185: #{_lambda_.1} parent=1 // pred_fallthru
      _
    // Predicated region
    $region186: #{_lambda_.1} parent=1 // pred_check
      _
    $region187: #{_lambda_.1} parent=1 // pred_check_branch
      %532 = sbr.rel (0) target = $region189
    $region188: #{_lambda_.1} parent=1 // pred_region
      %534 = vsyncadd [#allocation44], 0
      %s536 = sshll.u32 %s93, 4
      %s537 = int_to_ptr.hbm [resolvable:$true] %s536
      %s538 = sshll.u32 [#allocation45], 4
      %s539 = int_to_ptr.vmem [resolvable:$true] %s538
      %541 = dma.hbm_to_vmem [thread:$0]  %s537, 16, %s539, [#allocation44]
    $region189: #{_lambda_.1} parent=1 // pred_fallthru
      _
    // Predicated region
    $region190: #{_lambda_.1} parent=1 // pred_check
      _
    $region191: #{_lambda_.1} parent=1 // pred_check_branch
      %543 = sbr.rel (0) target = $region193
    $region192: #{_lambda_.1} parent=1 // pred_region
      %545 = vsyncadd [#allocation47], 0
      %s547 = sshll.u32 %s95, 4
      %s548 = int_to_ptr.hbm [resolvable:$true] %s547
      %s549 = sshll.u32 [#allocation46], 4
      %s550 = int_to_ptr.vmem [resolvable:$true] %s549
      %552 = dma.hbm_to_vmem [thread:$0]  %s548, 16, %s550, [#allocation47]
    $region193: #{_lambda_.1} parent=1 // pred_fallthru
      _
    // Predicated region
    $region194: #{_lambda_.1} parent=1 // pred_check
      _
    $region195: #{_lambda_.1} parent=1 // pred_check_branch
      %554 = sbr.rel (0) target = $region197
    $region196: #{_lambda_.1} parent=1 // pred_region
      %556 = vsyncadd [#allocation47], 0
      %s558 = sshll.u32 %s97, 4
      %s559 = int_to_ptr.hbm [resolvable:$true] %s558
      %s560 = sshll.u32 [#allocation48], 4
      %s561 = int_to_ptr.vmem [resolvable:$true] %s560
      %563 = dma.hbm_to_vmem [thread:$0]  %s559, 48, %s561, [#allocation47]
    $region197: #{_lambda_.1} parent=1 // pred_fallthru
      _
    // Predicated region
    $region198: #{_lambda_.1} parent=1 // pred_check
      _
    $region199: #{_lambda_.1} parent=1 // pred_check_branch
      %565 = sbr.rel (0) target = $region201
    $region200: #{_lambda_.1} parent=1 // pred_region
      %567 = vsyncadd [#allocation50], 0
      %s569 = sshll.u32 %s99, 4
      %s570 = int_to_ptr.hbm [resolvable:$true] %s569
      %s571 = sshll.u32 [#allocation49], 4
      %s572 = int_to_ptr.vmem [resolvable:$true] %s571
      %574 = dma.hbm_to_vmem [thread:$0]  %s570, 16, %s572, [#allocation50]
    $region201: #{_lambda_.1} parent=1 // pred_fallthru
      _
    // Predicated region
    $region202: #{_lambda_.1} parent=1 // pred_check
      _
    $region203: #{_lambda_.1} parent=1 // pred_check_branch
      %576 = sbr.rel (0) target = $region205
    $region204: #{_lambda_.1} parent=1 // pred_region
      %578 = vsyncadd [#allocation50], 0
      %s580 = sshll.u32 %s101, 4
      %s581 = int_to_ptr.hbm [resolvable:$true] %s580
      %s582 = sshll.u32 [#allocation51], 4
      %s583 = int_to_ptr.vmem [resolvable:$true] %s582
      %585 = dma.hbm_to_vmem [thread:$0]  %s581, 16, %s583, [#allocation50]
    $region205: #{_lambda_.1} parent=1 // pred_fallthru
      _
    // Predicated region
    $region206: #{_lambda_.1} parent=1 // pred_check
      _
    $region207: #{_lambda_.1} parent=1 // pred_check_branch
      %587 = sbr.rel (0) target = $region209
    $region208: #{_lambda_.1} parent=1 // pred_region
      %589 = vsyncadd [#allocation53], 0
      %s591 = sshll.u32 %s103, 4
      %s592 = int_to_ptr.hbm [resolvable:$true] %s591
      %s593 = sshll.u32 [#allocation52], 4
      %s594 = int_to_ptr.vmem [resolvable:$true] %s593
      %596 = dma.hbm_to_vmem [thread:$0]  %s592, 16, %s594, [#allocation53]
    $region209: #{_lambda_.1} parent=1 // pred_fallthru
      _
    // Predicated region
    $region210: #{_lambda_.1} parent=1 // pred_check
      _
    $region211: #{_lambda_.1} parent=1 // pred_check_branch
      %598 = sbr.rel (0) target = $region213
    $region212: #{_lambda_.1} parent=1 // pred_region
      %600 = vsyncadd [#allocation53], 0
      %s602 = sshll.u32 %s105, 4
      %s603 = int_to_ptr.hbm [resolvable:$true] %s602
      %s604 = sshll.u32 [#allocation54], 4
      %s605 = int_to_ptr.vmem [resolvable:$true] %s604
      %607 = dma.hbm_to_vmem [thread:$0]  %s603, 16, %s605, [#allocation53]
    $region213: #{_lambda_.1} parent=1 // pred_fallthru
      _
    // Predicated region
    $region214: #{_lambda_.1} parent=1 // pred_check
      _
    $region215: #{_lambda_.1} parent=1 // pred_check_branch
      %609 = sbr.rel (0) target = $region217
    $region216: #{_lambda_.1} parent=1 // pred_region
      _
    $region217: #{_lambda_.1} parent=1 // pred_fallthru
      _
    // Predicated region
    $region218: #{_lambda_.1} parent=1 // pred_check
      _
    $region219: #{_lambda_.1} parent=1 // pred_check_branch
      %611 = sbr.rel (0) target = $region221
    $region220: #{_lambda_.1} parent=1 // pred_region
      %613 = vsyncadd [#allocation56], 0
      %s614 = sshll.u32 %s109, 4
      %s615 = int_to_ptr.hbm [resolvable:$true] %s614
      %s616 = sshll.u32 [#allocation55], 4
      %s617 = int_to_ptr.vmem [resolvable:$true] %s616
      %622 = dma.hbm_to_vmem [thread:$0]  %s615, 1024, %s617, [#allocation56], 64, 64, 4
    $region221: #{_lambda_.1} parent=1 // pred_fallthru
      _
    // Predicated region
    $region222: #{_lambda_.1} parent=1 // pred_check
      _
    $region223: #{_lambda_.1} parent=1 // pred_check_branch
      %624 = sbr.rel (0) target = $region225
    $region224: #{_lambda_.1} parent=1 // pred_region
      %626 = vsyncadd [#allocation56], 0
      %s627 = sshll.u32 %s111, 4
      %s628 = int_to_ptr.hbm [resolvable:$true] %s627
      %s629 = sshll.u32 [#allocation57], 4
      %s630 = int_to_ptr.vmem [resolvable:$true] %s629
      %635 = dma.hbm_to_vmem [thread:$0]  %s628, 512, %s630, [#allocation56], 128, 128, 8
    $region225: #{_lambda_.1} parent=1 // pred_fallthru
      _
    // Predicated region
    $region226: #{_lambda_.1} parent=1 // pred_check
      _
    $region227: #{_lambda_.1} parent=1 // pred_check_branch
      %637 = sbr.rel (0) target = $region229
    $region228: #{_lambda_.1} parent=1 // pred_region
      _
    $region229: #{_lambda_.1} parent=1 // pred_fallthru
      _
    // Predicated region
    $region230: #{_lambda_.1} parent=1 // pred_check
      _
    $region231: #{_lambda_.1} parent=1 // pred_check_branch
      %639 = sbr.rel (0) target = $region233
    $region232: #{_lambda_.1} parent=1 // pred_region
      %641 = vsyncadd [#allocation59], 0
      %s643 = sshll.u32 %s115, 4
      %s644 = int_to_ptr.hbm [resolvable:$true] %s643
      %s645 = sshll.u32 [#allocation58], 4
      %s646 = int_to_ptr.vmem [resolvable:$true] %s645
      %648 = dma.hbm_to_vmem [thread:$0]  %s644, 16, %s646, [#allocation59]
    $region233: #{_lambda_.1} parent=1 // pred_fallthru
      _
    // Predicated region
    $region234: #{_lambda_.1} parent=1 // pred_check
      _
    $region235: #{_lambda_.1} parent=1 // pred_check_branch
      %650 = sbr.rel (0) target = $region237
    $region236: #{_lambda_.1} parent=1 // pred_region
      %652 = vsyncadd [#allocation59], 0
      %s654 = sshll.u32 %s117, 4
      %s655 = int_to_ptr.hbm [resolvable:$true] %s654
      %s656 = sshll.u32 [#allocation60], 4
      %s657 = int_to_ptr.vmem [resolvable:$true] %s656
      %659 = dma.hbm_to_vmem [thread:$0]  %s655, 16, %s657, [#allocation59]
    $region237: #{_lambda_.1} parent=1 // pred_fallthru
      _
    // Predicated region
    $region238: #{_lambda_.1} parent=1 // pred_check
      _
    $region239: #{_lambda_.1} parent=1 // pred_check_branch
      %661 = sbr.rel (0) target = $region241
    $region240: #{_lambda_.1} parent=1 // pred_region
      %663 = vsyncadd [#allocation62], 0
      %s665 = sshll.u32 %s119, 4
      %s666 = int_to_ptr.hbm [resolvable:$true] %s665
      %s667 = sshll.u32 [#allocation61], 4
      %s668 = int_to_ptr.vmem [resolvable:$true] %s667
      %670 = dma.hbm_to_vmem [thread:$0]  %s666, 16, %s668, [#allocation62]
    $region241: #{_lambda_.1} parent=1 // pred_fallthru
      _
    // Predicated region
    $region242: #{_lambda_.1} parent=1 // pred_check
      _
    $region243: #{_lambda_.1} parent=1 // pred_check_branch
      %672 = sbr.rel (0) target = $region245
    $region244: #{_lambda_.1} parent=1 // pred_region
      %674 = vsyncadd [#allocation62], 0
      %s676 = sshll.u32 %s121, 4
      %s677 = int_to_ptr.hbm [resolvable:$true] %s676
      %s678 = sshll.u32 [#allocation63], 4
      %s679 = int_to_ptr.vmem [resolvable:$true] %s678
      %681 = dma.hbm_to_vmem [thread:$0]  %s677, 48, %s679, [#allocation62]
    $region245: #{_lambda_.1} parent=1 // pred_fallthru
      _
    // Predicated region
    $region246: #{_lambda_.1} parent=1 // pred_check
      _
    $region247: #{_lambda_.1} parent=1 // pred_check_branch
      %683 = sbr.rel (0) target = $region249
    $region248: #{_lambda_.1} parent=1 // pred_region
      %685 = vsyncadd [#allocation65], 0
      %s687 = sshll.u32 %s123, 4
      %s688 = int_to_ptr.hbm [resolvable:$true] %s687
      %s689 = sshll.u32 [#allocation64], 4
      %s690 = int_to_ptr.vmem [resolvable:$true] %s689
      %692 = dma.hbm_to_vmem [thread:$0]  %s688, 16, %s690, [#allocation65]
    $region249: #{_lambda_.1} parent=1 // pred_fallthru
      _
    // Predicated region
    $region250: #{_lambda_.1} parent=1 // pred_check
      _
    $region251: #{_lambda_.1} parent=1 // pred_check_branch
      %694 = sbr.rel (0) target = $region253
    $region252: #{_lambda_.1} parent=1 // pred_region
      %696 = vsyncadd [#allocation65], 0
      %s698 = sshll.u32 %s125, 4
      %s699 = int_to_ptr.hbm [resolvable:$true] %s698
      %s700 = sshll.u32 [#allocation66], 4
      %s701 = int_to_ptr.vmem [resolvable:$true] %s700
      %703 = dma.hbm_to_vmem [thread:$0]  %s699, 16, %s701, [#allocation65]
    $region253: #{_lambda_.1} parent=1 // pred_fallthru
      _
    // Predicated region
    $region254: #{_lambda_.1} parent=1 // pred_check
      _
    $region255: #{_lambda_.1} parent=1 // pred_check_branch
      %705 = sbr.rel (0) target = $region257
    $region256: #{_lambda_.1} parent=1 // pred_region
      %707 = vsyncadd [#allocation68], 0
      %s709 = sshll.u32 %s127, 4
      %s710 = int_to_ptr.hbm [resolvable:$true] %s709
      %s711 = sshll.u32 [#allocation67], 4
      %s712 = int_to_ptr.vmem [resolvable:$true] %s711
      %714 = dma.hbm_to_vmem [thread:$0]  %s710, 16, %s712, [#allocation68]
    $region257: #{_lambda_.1} parent=1 // pred_fallthru
      _
    // Predicated region
    $region258: #{_lambda_.1} parent=1 // pred_check
      _
    $region259: #{_lambda_.1} parent=1 // pred_check_branch
      %716 = sbr.rel (0) target = $region261
    $region260: #{_lambda_.1} parent=1 // pred_region
      %718 = vsyncadd [#allocation68], 0
      %s720 = sshll.u32 %s129, 4
      %s721 = int_to_ptr.hbm [resolvable:$true] %s720
      %s722 = sshll.u32 [#allocation69], 4
      %s723 = int_to_ptr.vmem [resolvable:$true] %s722
      %725 = dma.hbm_to_vmem [thread:$0]  %s721, 16, %s723, [#allocation68]
    $region261: #{_lambda_.1} parent=1 // pred_fallthru
      _
    // Predicated region
    $region262: #{_lambda_.1} parent=1 // pred_check
      _
    $region263: #{_lambda_.1} parent=1 // pred_check_branch
      %727 = sbr.rel (0) target = $region265
    $region264: #{_lambda_.1} parent=1 // pred_region
      %729 = vsyncadd [#allocation71], 0
      %s730 = sshll.u32 %s131, 4
      %s731 = int_to_ptr.hbm [resolvable:$true] %s730
      %s732 = sshll.u32 [#allocation70], 4
      %s733 = int_to_ptr.vmem [resolvable:$true] %s732
      %738 = dma.hbm_to_vmem [thread:$0]  %s731, 1024, %s733, [#allocation71], 64, 64, 4
    $region265: #{_lambda_.1} parent=1 // pred_fallthru
      _
    // Predicated region
    $region266: #{_lambda_.1} parent=1 // pred_check
      _
    $region267: #{_lambda_.1} parent=1 // pred_check_branch
      %740 = sbr.rel (0) target = $region269
    $region268: #{_lambda_.1} parent=1 // pred_region
      %742 = vsyncadd [#allocation71], 0
      %s743 = sshll.u32 %s133, 4
      %s744 = int_to_ptr.hbm [resolvable:$true] %s743
      %s745 = sshll.u32 [#allocation72], 4
      %s746 = int_to_ptr.vmem [resolvable:$true] %s745
      %751 = dma.hbm_to_vmem [thread:$0]  %s744, 1024, %s746, [#allocation71], 64, 64, 4
    $region269: #{_lambda_.1} parent=1 // pred_fallthru
      _
    // Predicated region
    $region270: #{_lambda_.1} parent=1 // pred_check
      _
    $region271: #{_lambda_.1} parent=1 // pred_check_branch
      %753 = sbr.rel (0) target = $region273
    $region272: #{_lambda_.1} parent=1 // pred_region
      %755 = vsyncadd [#allocation74], 0
      %s756 = sshll.u32 %s135, 4
      %s757 = int_to_ptr.hbm [resolvable:$true] %s756
      %s758 = sshll.u32 [#allocation73], 4
      %s759 = int_to_ptr.vmem [resolvable:$true] %s758
      %764 = dma.hbm_to_vmem [thread:$0]  %s757, 512, %s759, [#allocation74], 128, 128, 8
    $region273: #{_lambda_.1} parent=1 // pred_fallthru
      _
    // Predicated region
    $region274: #{_lambda_.1} parent=1 // pred_check
      _
    $region275: #{_lambda_.1} parent=1 // pred_check_branch
      %766 = sbr.rel (0) target = $region277
    $region276: #{_lambda_.1} parent=1 // pred_region
      _
    $region277: #{_lambda_.1} parent=1 // pred_fallthru
      _
    // Predicated region
    $region278: #{_lambda_.1} parent=1 // pred_check
      _
    $region279: #{_lambda_.1} parent=1 // pred_check_branch
      %768 = sbr.rel (0) target = $region281
    $region280: #{_lambda_.1} parent=1 // pred_region
      %770 = vsyncadd [#allocation74], 0
      %s772 = sshll.u32 %s139, 4
      %s773 = int_to_ptr.hbm [resolvable:$true] %s772
      %s774 = sshll.u32 [#allocation75], 4
      %s775 = int_to_ptr.vmem [resolvable:$true] %s774
      %777 = dma.hbm_to_vmem [thread:$0]  %s773, 16, %s775, [#allocation74]
    $region281: #{_lambda_.1} parent=1 // pred_fallthru
      _
    // Predicated region
    $region282: #{_lambda_.1} parent=1 // pred_check
      _
    $region283: #{_lambda_.1} parent=1 // pred_check_branch
      %779 = sbr.rel (0) target = $region285
    $region284: #{_lambda_.1} parent=1 // pred_region
      _
    $region285: #{_lambda_.1} parent=1 // pred_fallthru
      _
    // Predicated region
    $region286: #{_lambda_.1} parent=1 // pred_check
      _
    $region287: #{_lambda_.1} parent=1 // pred_check_branch
      %781 = sbr.rel (0) target = $region289
    $region288: #{_lambda_.1} parent=1 // pred_region
      %783 = vsyncadd [#allocation77], 0
      %s785 = sshll.u32 %s143, 4
      %s786 = int_to_ptr.hbm [resolvable:$true] %s785
      %s787 = sshll.u32 [#allocation76], 4
      %s788 = int_to_ptr.vmem [resolvable:$true] %s787
      %790 = dma.hbm_to_vmem [thread:$0]  %s786, 16, %s788, [#allocation77]
    $region289: #{_lambda_.1} parent=1 // pred_fallthru
      _
    // Predicated region
    $region290: #{_lambda_.1} parent=1 // pred_check
      _
    $region291: #{_lambda_.1} parent=1 // pred_check_branch
      %792 = sbr.rel (0) target = $region293
    $region292: #{_lambda_.1} parent=1 // pred_region
      %794 = vsyncadd [#allocation77], 0
      %s795 = sshll.u32 %s145, 4
      %s796 = int_to_ptr.hbm [resolvable:$true] %s795
      %s797 = sshll.u32 [#allocation78], 4
      %s798 = int_to_ptr.vmem [resolvable:$true] %s797
      %803 = dma.hbm_to_vmem [thread:$0]  %s796, 1024, %s798, [#allocation77], 64, 64, 4
    $region293: #{_lambda_.1} parent=1 // pred_fallthru
      _
    // Predicated region
    $region294: #{_lambda_.1} parent=1 // pred_check
      _
    $region295: #{_lambda_.1} parent=1 // pred_check_branch
      %805 = sbr.rel (0) target = $region297
    $region296: #{_lambda_.1} parent=1 // pred_region
      %807 = vsyncadd [#allocation80], 0
      %s809 = sshll.u32 %s147, 4
      %s810 = int_to_ptr.hbm [resolvable:$true] %s809
      %s811 = sshll.u32 [#allocation79], 4
      %s812 = int_to_ptr.vmem [resolvable:$true] %s811
      %814 = dma.hbm_to_vmem [thread:$0]  %s810, 64, %s812, [#allocation80]
    $region297: #{_lambda_.1} parent=1 // pred_fallthru
      _
    // Predicated region
    $region298: #{_lambda_.1} parent=1 // pred_check
      _
    $region299: #{_lambda_.1} parent=1 // pred_check_branch
      %816 = sbr.rel (0) target = $region301
    $region300: #{_lambda_.1} parent=1 // pred_region
      %818 = dma.done [#allocation3], 16
    $region301: #{_lambda_.1} parent=1 // pred_fallthru
      _
    // Predicated region
    $region302: #{_lambda_.1} parent=1 // pred_check
      _
    $region303: #{_lambda_.1} parent=1 // pred_check_branch
      %820 = sbr.rel (0) target = $region305
    $region304: #{_lambda_.1} parent=1 // pred_region
      %822 = dma.done [#allocation5], 16
    $region305: #{_lambda_.1} parent=1 // pred_fallthru
      _
    // Predicated region
    $region306: #{_lambda_.1} parent=1 // pred_check
      _
    $region307: #{_lambda_.1} parent=1 // pred_check_branch
      %824 = sbr.rel (0) target = $region309
    $region308: #{_lambda_.1} parent=1 // pred_region
      %826 = dma.done [#allocation5], 16
    $region309: #{_lambda_.1} parent=1 // pred_fallthru
      _
    // Predicated region
    $region310: #{_lambda_.1} parent=1 // pred_check
      _
    $region311: #{_lambda_.1} parent=1 // pred_check_branch
      %828 = sbr.rel (0) target = $region313
    $region312: #{_lambda_.1} parent=1 // pred_region
      %830 = dma.done [#allocation8], 16
    $region313: #{_lambda_.1} parent=1 // pred_fallthru
      _
    // Predicated region
    $region314: #{_lambda_.1} parent=1 // pred_check
      _
    $region315: #{_lambda_.1} parent=1 // pred_check_branch
      %832 = sbr.rel (0) target = $region317
    $region316: #{_lambda_.1} parent=1 // pred_region
      %834 = dma.done [#allocation8], 16
    $region317: #{_lambda_.1} parent=1 // pred_fallthru
      _
    // Predicated region
    $region318: #{_lambda_.1} parent=1 // pred_check
      _
    $region319: #{_lambda_.1} parent=1 // pred_check_branch
      %836 = sbr.rel (0) target = $region321
    $region320: #{_lambda_.1} parent=1 // pred_region
      %838 = dma.done [#allocation11], 16
    $region321: #{_lambda_.1} parent=1 // pred_fallthru
      _
    // Predicated region
    $region322: #{_lambda_.1} parent=1 // pred_check
      _
    $region323: #{_lambda_.1} parent=1 // pred_check_branch
      %840 = sbr.rel (0) target = $region325
    $region324: #{_lambda_.1} parent=1 // pred_region
      %842 = dma.done [#allocation11], 16
    $region325: #{_lambda_.1} parent=1 // pred_fallthru
      _
    // Predicated region
    $region326: #{_lambda_.1} parent=1 // pred_check
      _
    $region327: #{_lambda_.1} parent=1 // pred_check_branch
      %844 = sbr.rel (0) target = $region329
    $region328: #{_lambda_.1} parent=1 // pred_region
      %846 = dma.done [#allocation14], 16
    $region329: #{_lambda_.1} parent=1 // pred_fallthru
      _
    // Predicated region
    $region330: #{_lambda_.1} parent=1 // pred_check
      _
    $region331: #{_lambda_.1} parent=1 // pred_check_branch
      %848 = sbr.rel (0) target = $region333
    $region332: #{_lambda_.1} parent=1 // pred_region
      %850 = dma.done [#allocation14], 16
    $region333: #{_lambda_.1} parent=1 // pred_fallthru
      _
    // Predicated region
    $region334: #{_lambda_.1} parent=1 // pred_check
      _
    $region335: #{_lambda_.1} parent=1 // pred_check_branch
      %852 = sbr.rel (0) target = $region337
    $region336: #{_lambda_.1} parent=1 // pred_region
      %854 = dma.done [#allocation17], 16
    $region337: #{_lambda_.1} parent=1 // pred_fallthru
      _
    // Predicated region
    $region338: #{_lambda_.1} parent=1 // pred_check
      _
    $region339: #{_lambda_.1} parent=1 // pred_check_branch
      %856 = sbr.rel (0) target = $region341
    $region340: #{_lambda_.1} parent=1 // pred_region
      %858 = dma.done [#allocation17], 16
    $region341: #{_lambda_.1} parent=1 // pred_fallthru
      _
    // Predicated region
    $region342: #{_lambda_.1} parent=1 // pred_check
      _
    $region343: #{_lambda_.1} parent=1 // pred_check_branch
      %860 = sbr.rel (0) target = $region345
    $region344: #{_lambda_.1} parent=1 // pred_region
      %862 = dma.done [#allocation20], 512
    $region345: #{_lambda_.1} parent=1 // pred_fallthru
      _
    // Predicated region
    $region346: #{_lambda_.1} parent=1 // pred_check
      _
    $region347: #{_lambda_.1} parent=1 // pred_check_branch
      %864 = sbr.rel (0) target = $region349
    $region348: #{_lambda_.1} parent=1 // pred_region
      %866 = dma.done [#allocation20], 16
    $region349: #{_lambda_.1} parent=1 // pred_fallthru
      _
    // Predicated region
    $region350: #{_lambda_.1} parent=1 // pred_check
      _
    $region351: #{_lambda_.1} parent=1 // pred_check_branch
      %868 = sbr.rel (0) target = $region353
    $region352: #{_lambda_.1} parent=1 // pred_region
      %870 = dma.done [#allocation23], 16
    $region353: #{_lambda_.1} parent=1 // pred_fallthru
      _
    // Predicated region
    $region354: #{_lambda_.1} parent=1 // pred_check
      _
    $region355: #{_lambda_.1} parent=1 // pred_check_branch
      %872 = sbr.rel (0) target = $region357
    $region356: #{_lambda_.1} parent=1 // pred_region
      %874 = dma.done [#allocation23], 32
    $region357: #{_lambda_.1} parent=1 // pred_fallthru
      _
    // Predicated region
    $region358: #{_lambda_.1} parent=1 // pred_check
      _
    $region359: #{_lambda_.1} parent=1 // pred_check_branch
      %876 = sbr.rel (0) target = $region361
    $region360: #{_lambda_.1} parent=1 // pred_region
      %878 = dma.done [#allocation26], 16
    $region361: #{_lambda_.1} parent=1 // pred_fallthru
      _
    // Predicated region
    $region362: #{_lambda_.1} parent=1 // pred_check
      _
    $region363: #{_lambda_.1} parent=1 // pred_check_branch
      %880 = sbr.rel (0) target = $region365
    $region364: #{_lambda_.1} parent=1 // pred_region
      %882 = dma.done [#allocation26], 16
    $region365: #{_lambda_.1} parent=1 // pred_fallthru
      _
    // Predicated region
    $region366: #{_lambda_.1} parent=1 // pred_check
      _
    $region367: #{_lambda_.1} parent=1 // pred_check_branch
      %884 = sbr.rel (0) target = $region369
    $region368: #{_lambda_.1} parent=1 // pred_region
      %886 = dma.done [#allocation29], 512
    $region369: #{_lambda_.1} parent=1 // pred_fallthru
      _
    // Predicated region
    $region370: #{_lambda_.1} parent=1 // pred_check
      _
    $region371: #{_lambda_.1} parent=1 // pred_check_branch
      %888 = sbr.rel (0) target = $region373
    $region372: #{_lambda_.1} parent=1 // pred_region
      %890 = dma.done [#allocation29], 16
    $region373: #{_lambda_.1} parent=1 // pred_fallthru
      _
    // Predicated region
    $region374: #{_lambda_.1} parent=1 // pred_check
      _
    $region375: #{_lambda_.1} parent=1 // pred_check_branch
      %892 = sbr.rel (0) target = $region377
    $region376: #{_lambda_.1} parent=1 // pred_region
      %894 = dma.done [#allocation32], 16
    $region377: #{_lambda_.1} parent=1 // pred_fallthru
      _
    // Predicated region
    $region378: #{_lambda_.1} parent=1 // pred_check
      _
    $region379: #{_lambda_.1} parent=1 // pred_check_branch
      %896 = sbr.rel (0) target = $region381
    $region380: #{_lambda_.1} parent=1 // pred_region
      %898 = dma.done [#allocation32], 16
    $region381: #{_lambda_.1} parent=1 // pred_fallthru
      _
    // Predicated region
    $region382: #{_lambda_.1} parent=1 // pred_check
      _
    $region383: #{_lambda_.1} parent=1 // pred_check_branch
      %900 = sbr.rel (0) target = $region385
    $region384: #{_lambda_.1} parent=1 // pred_region
      %902 = dma.done [#allocation35], 16
    $region385: #{_lambda_.1} parent=1 // pred_fallthru
      _
    // Predicated region
    $region386: #{_lambda_.1} parent=1 // pred_check
      _
    $region387: #{_lambda_.1} parent=1 // pred_check_branch
      %904 = sbr.rel (0) target = $region389
    $region388: #{_lambda_.1} parent=1 // pred_region
      %906 = dma.done [#allocation35], 16
    $region389: #{_lambda_.1} parent=1 // pred_fallthru
      _
    // Predicated region
    $region390: #{_lambda_.1} parent=1 // pred_check
      _
    $region391: #{_lambda_.1} parent=1 // pred_check_branch
      %908 = sbr.rel (0) target = $region393
    $region392: #{_lambda_.1} parent=1 // pred_region
      %910 = dma.done [#allocation38], 16
    $region393: #{_lambda_.1} parent=1 // pred_fallthru
      _
    // Predicated region
    $region394: #{_lambda_.1} parent=1 // pred_check
      _
    $region395: #{_lambda_.1} parent=1 // pred_check_branch
      %912 = sbr.rel (0) target = $region397
    $region396: #{_lambda_.1} parent=1 // pred_region
      %914 = dma.done [#allocation38], 16
    $region397: #{_lambda_.1} parent=1 // pred_fallthru
      _
    // Predicated region
    $region398: #{_lambda_.1} parent=1 // pred_check
      _
    $region399: #{_lambda_.1} parent=1 // pred_check_branch
      %916 = sbr.rel (0) target = $region401
    $region400: #{_lambda_.1} parent=1 // pred_region
      %918 = dma.done [#allocation41], 48
    $region401: #{_lambda_.1} parent=1 // pred_fallthru
      _
    // Predicated region
    $region402: #{_lambda_.1} parent=1 // pred_check
      _
    $region403: #{_lambda_.1} parent=1 // pred_check_branch
      %920 = sbr.rel (0) target = $region405
    $region404: #{_lambda_.1} parent=1 // pred_region
      %922 = dma.done [#allocation41], 512
    $region405: #{_lambda_.1} parent=1 // pred_fallthru
      _
    // Predicated region
    $region406: #{_lambda_.1} parent=1 // pred_check
      _
    $region407: #{_lambda_.1} parent=1 // pred_check_branch
      %924 = sbr.rel (0) target = $region409
    $region408: #{_lambda_.1} parent=1 // pred_region
      %926 = dma.done [#allocation44], 16
    $region409: #{_lambda_.1} parent=1 // pred_fallthru
      _
    // Predicated region
    $region410: #{_lambda_.1} parent=1 // pred_check
      _
    $region411: #{_lambda_.1} parent=1 // pred_check_branch
      %928 = sbr.rel (0) target = $region413
    $region412: #{_lambda_.1} parent=1 // pred_region
      %930 = dma.done [#allocation44], 16
    $region413: #{_lambda_.1} parent=1 // pred_fallthru
      _
    // Predicated region
    $region414: #{_lambda_.1} parent=1 // pred_check
      _
    $region415: #{_lambda_.1} parent=1 // pred_check_branch
      %932 = sbr.rel (0) target = $region417
    $region416: #{_lambda_.1} parent=1 // pred_region
      %934 = dma.done [#allocation47], 16
    $region417: #{_lambda_.1} parent=1 // pred_fallthru
      _
    // Predicated region
    $region418: #{_lambda_.1} parent=1 // pred_check
      _
    $region419: #{_lambda_.1} parent=1 // pred_check_branch
      %936 = sbr.rel (0) target = $region421
    $region420: #{_lambda_.1} parent=1 // pred_region
      %938 = dma.done [#allocation47], 48
    $region421: #{_lambda_.1} parent=1 // pred_fallthru
      _
    // Predicated region
    $region422: #{_lambda_.1} parent=1 // pred_check
      _
    $region423: #{_lambda_.1} parent=1 // pred_check_branch
      %940 = sbr.rel (0) target = $region425
    $region424: #{_lambda_.1} parent=1 // pred_region
      %942 = dma.done [#allocation50], 16
    $region425: #{_lambda_.1} parent=1 // pred_fallthru
      _
    // Predicated region
    $region426: #{_lambda_.1} parent=1 // pred_check
      _
    $region427: #{_lambda_.1} parent=1 // pred_check_branch
      %944 = sbr.rel (0) target = $region429
    $region428: #{_lambda_.1} parent=1 // pred_region
      %946 = dma.done [#allocation50], 16
    $region429: #{_lambda_.1} parent=1 // pred_fallthru
      _
    // Predicated region
    $region430: #{_lambda_.1} parent=1 // pred_check
      _
    $region431: #{_lambda_.1} parent=1 // pred_check_branch
      %948 = sbr.rel (0) target = $region433
    $region432: #{_lambda_.1} parent=1 // pred_region
      %950 = dma.done [#allocation53], 16
    $region433: #{_lambda_.1} parent=1 // pred_fallthru
      _
    // Predicated region
    $region434: #{_lambda_.1} parent=1 // pred_check
      _
    $region435: #{_lambda_.1} parent=1 // pred_check_branch
      %952 = sbr.rel (0) target = $region437
    $region436: #{_lambda_.1} parent=1 // pred_region
      %954 = dma.done [#allocation53], 16
    $region437: #{_lambda_.1} parent=1 // pred_fallthru
      _
    // Predicated region
    $region438: #{_lambda_.1} parent=1 // pred_check
      _
    $region439: #{_lambda_.1} parent=1 // pred_check_branch
      %956 = sbr.rel (0) target = $region441
    $region440: #{_lambda_.1} parent=1 // pred_region
      %958 = dma.done [#allocation56], 1024
    $region441: #{_lambda_.1} parent=1 // pred_fallthru
      _
    // Predicated region
    $region442: #{_lambda_.1} parent=1 // pred_check
      _
    $region443: #{_lambda_.1} parent=1 // pred_check_branch
      %960 = sbr.rel (0) target = $region445
    $region444: #{_lambda_.1} parent=1 // pred_region
      %962 = dma.done [#allocation56], 512
    $region445: #{_lambda_.1} parent=1 // pred_fallthru
      _
    // Predicated region
    $region446: #{_lambda_.1} parent=1 // pred_check
      _
    $region447: #{_lambda_.1} parent=1 // pred_check_branch
      %964 = sbr.rel (0) target = $region449
    $region448: #{_lambda_.1} parent=1 // pred_region
      %966 = dma.done [#allocation59], 16
    $region449: #{_lambda_.1} parent=1 // pred_fallthru
      _
    // Predicated region
    $region450: #{_lambda_.1} parent=1 // pred_check
      _
    $region451: #{_lambda_.1} parent=1 // pred_check_branch
      %968 = sbr.rel (0) target = $region453
    $region452: #{_lambda_.1} parent=1 // pred_region
      %970 = dma.done [#allocation59], 16
    $region453: #{_lambda_.1} parent=1 // pred_fallthru
      _
    // Predicated region
    $region454: #{_lambda_.1} parent=1 // pred_check
      _
    $region455: #{_lambda_.1} parent=1 // pred_check_branch
      %972 = sbr.rel (0) target = $region457
    $region456: #{_lambda_.1} parent=1 // pred_region
      %974 = dma.done [#allocation62], 16
    $region457: #{_lambda_.1} parent=1 // pred_fallthru
      _
    // Predicated region
    $region458: #{_lambda_.1} parent=1 // pred_check
      _
    $region459: #{_lambda_.1} parent=1 // pred_check_branch
      %976 = sbr.rel (0) target = $region461
    $region460: #{_lambda_.1} parent=1 // pred_region
      %978 = dma.done [#allocation62], 48
    $region461: #{_lambda_.1} parent=1 // pred_fallthru
      _
    // Predicated region
    $region462: #{_lambda_.1} parent=1 // pred_check
      _
    $region463: #{_lambda_.1} parent=1 // pred_check_branch
      %980 = sbr.rel (0) target = $region465
    $region464: #{_lambda_.1} parent=1 // pred_region
      %982 = dma.done [#allocation65], 16
    $region465: #{_lambda_.1} parent=1 // pred_fallthru
      _
    // Predicated region
    $region466: #{_lambda_.1} parent=1 // pred_check
      _
    $region467: #{_lambda_.1} parent=1 // pred_check_branch
      %984 = sbr.rel (0) target = $region469
    $region468: #{_lambda_.1} parent=1 // pred_region
      %986 = dma.done [#allocation65], 16
    $region469: #{_lambda_.1} parent=1 // pred_fallthru
      _
    // Predicated region
    $region470: #{_lambda_.1} parent=1 // pred_check
      _
    $region471: #{_lambda_.1} parent=1 // pred_check_branch
      %988 = sbr.rel (0) target = $region473
    $region472: #{_lambda_.1} parent=1 // pred_region
      %990 = dma.done [#allocation68], 16
    $region473: #{_lambda_.1} parent=1 // pred_fallthru
      _
    // Predicated region
    $region474: #{_lambda_.1} parent=1 // pred_check
      _
    $region475: #{_lambda_.1} parent=1 // pred_check_branch
      %992 = sbr.rel (0) target = $region477
    $region476: #{_lambda_.1} parent=1 // pred_region
      %994 = dma.done [#allocation68], 16
    $region477: #{_lambda_.1} parent=1 // pred_fallthru
      _
    // Predicated region
    $region478: #{_lambda_.1} parent=1 // pred_check
      _
    $region479: #{_lambda_.1} parent=1 // pred_check_branch
      %996 = sbr.rel (0) target = $region481
    $region480: #{_lambda_.1} parent=1 // pred_region
      %998 = dma.done [#allocation71], 1024
    $region481: #{_lambda_.1} parent=1 // pred_fallthru
      _
    // Predicated region
    $region482: #{_lambda_.1} parent=1 // pred_check
      _
    $region483: #{_lambda_.1} parent=1 // pred_check_branch
      %1000 = sbr.rel (0) target = $region485
    $region484: #{_lambda_.1} parent=1 // pred_region
      %1002 = dma.done [#allocation71], 1024
    $region485: #{_lambda_.1} parent=1 // pred_fallthru
      _
    // Predicated region
    $region486: #{_lambda_.1} parent=1 // pred_check
      _
    $region487: #{_lambda_.1} parent=1 // pred_check_branch
      %1004 = sbr.rel (0) target = $region489
    $region488: #{_lambda_.1} parent=1 // pred_region
      %1006 = dma.done [#allocation74], 512
    $region489: #{_lambda_.1} parent=1 // pred_fallthru
      _
    // Predicated region
    $region490: #{_lambda_.1} parent=1 // pred_check
      _
    $region491: #{_lambda_.1} parent=1 // pred_check_branch
      %1008 = sbr.rel (0) target = $region493
    $region492: #{_lambda_.1} parent=1 // pred_region
      %1010 = dma.done [#allocation74], 16
    $region493: #{_lambda_.1} parent=1 // pred_fallthru
      _
    // Predicated region
    $region494: #{_lambda_.1} parent=1 // pred_check
      _
    $region495: #{_lambda_.1} parent=1 // pred_check_branch
      %1012 = sbr.rel (0) target = $region497
    $region496: #{_lambda_.1} parent=1 // pred_region
      %1014 = dma.done [#allocation77], 16
    $region497: #{_lambda_.1} parent=1 // pred_fallthru
      _
    // Predicated region
    $region498: #{_lambda_.1} parent=1 // pred_check
      _
    $region499: #{_lambda_.1} parent=1 // pred_check_branch
      %1016 = sbr.rel (0) target = $region501
    $region500: #{_lambda_.1} parent=1 // pred_region
      %1018 = dma.done [#allocation77], 1024
    $region501: #{_lambda_.1} parent=1 // pred_fallthru
      _
    // Predicated region
    $region502: #{_lambda_.1} parent=1 // pred_check
      _
    $region503: #{_lambda_.1} parent=1 // pred_check_branch
      %1020 = sbr.rel (0) target = $region505
    $region504: #{_lambda_.1} parent=1 // pred_region
      %1022 = dma.done [#allocation80], 64
    $region505: #{_lambda_.1} parent=1 // pred_fallthru
      _
    %v1024 = vld [vmem:[#allocation79] sm:$0xf]
    %v1026 = vrot.slane %v1024, 4
    %vm1028 = vcmask 1043456
    %v1029 = vsel %vm1028, %v1024, %v1026
    %v1030 = vld [vmem:[%s1] sm:$0xff]
    %v1031 = vld [vmem:[%s1 + $0x8] sm:$0xff]
    %v1032 = vld [vmem:[%s141] sm:$0xf]
    %v1033 = vld [vmem:[%s141 + $0x4] sm:$0xf]
    %v1034 = vld [vmem:[%s141 + $0x8] sm:$0xf]
    %v1035 = vld [vmem:[%s141 + $0xc] sm:$0xf]
    %v1036 = vld [vmem:[%s141 + $0x10] sm:$0xf]
    %v1037 = vld [vmem:[%s141 + $0x14] sm:$0xf]
    %v1038 = vld [vmem:[%s141 + $0x18] sm:$0xf]
    %v1039 = vld [vmem:[%s141 + $0x1c] sm:$0xf]
    %v1040 = vld [vmem:[%s141 + $0x20] sm:$0xf]
    %v1041 = vld [vmem:[%s141 + $0x24] sm:$0xf]
    %v1042 = vld [vmem:[%s141 + $0x28] sm:$0xf]
    %v1043 = vld [vmem:[%s141 + $0x2c] sm:$0xf]
    %v1044 = vld [vmem:[%s141 + $0x30] sm:$0xf]
    %v1045 = vld [vmem:[%s141 + $0x34] sm:$0xf]
    %v1046 = vld [vmem:[%s141 + $0x38] sm:$0xf]
    %v1047 = vld [vmem:[%s141 + $0x3c] sm:$0xf]
    %v1048 = vld [vmem:[%s141 + $0x40] sm:$0xf]
    %v1049 = vld [vmem:[%s141 + $0x44] sm:$0xf]
    %v1050 = vld [vmem:[%s141 + $0x48] sm:$0xf]
    %v1051 = vld [vmem:[%s141 + $0x4c] sm:$0xf]
    %v1052 = vld [vmem:[%s141 + $0x50] sm:$0xf]
    %v1053 = vld [vmem:[%s141 + $0x54] sm:$0xf]
    %v1054 = vld [vmem:[%s141 + $0x58] sm:$0xf]
    %v1055 = vld [vmem:[%s141 + $0x5c] sm:$0xf]
    %v1056 = vld [vmem:[%s141 + $0x60] sm:$0xf]
    %v1057 = vld [vmem:[%s141 + $0x64] sm:$0xf]
    %v1058 = vld [vmem:[%s141 + $0x68] sm:$0xf]
    %v1059 = vld [vmem:[%s141 + $0x6c] sm:$0xf]
    %v1060 = vld [vmem:[%s141 + $0x70] sm:$0xf]
    %v1061 = vld [vmem:[%s141 + $0x74] sm:$0xf]
    %v1062 = vld [vmem:[%s141 + $0x78] sm:$0xf]
    %v1063 = vld [vmem:[%s141 + $0x7c] sm:$0xf]
    %v1064 = vld [vmem:[#allocation75] sm:$0x1]
    %v1065 = vpack.c.bf16 %v1030, %v1030
    %v1066 = vpack.c.bf16 %v1031, %v1031
    %v1068 = vperm.slane %v1064, 0
    %v1102 = vunpack.c.l.b16 %v1032
    %v1103 = vunpack.c.l.b16 %v1033
    %v1104 = vunpack.c.l.b16 %v1034
    %v1105 = vunpack.c.l.b16 %v1035
    %v1106 = vunpack.c.l.b16 %v1036
    %v1107 = vunpack.c.l.b16 %v1037
    %v1108 = vunpack.c.l.b16 %v1038
    %v1109 = vunpack.c.l.b16 %v1039
    %v1110 = vunpack.c.l.b16 %v1040
    %v1111 = vunpack.c.l.b16 %v1041
    %v1112 = vunpack.c.l.b16 %v1042
    %v1113 = vunpack.c.l.b16 %v1043
    %v1114 = vunpack.c.l.b16 %v1044
    %v1115 = vunpack.c.l.b16 %v1045
    %v1116 = vunpack.c.l.b16 %v1046
    %v1117 = vunpack.c.l.b16 %v1047
    %v1118 = vunpack.c.l.b16 %v1048
    %v1119 = vunpack.c.l.b16 %v1049
    %v1120 = vunpack.c.l.b16 %v1050
    %v1121 = vunpack.c.l.b16 %v1051
    %v1122 = vunpack.c.l.b16 %v1052
    %v1123 = vunpack.c.l.b16 %v1053
    %v1124 = vunpack.c.l.b16 %v1054
    %v1125 = vunpack.c.l.b16 %v1055
    %v1126 = vunpack.c.l.b16 %v1056
    %v1127 = vunpack.c.l.b16 %v1057
    %v1128 = vunpack.c.l.b16 %v1058
    %v1129 = vunpack.c.l.b16 %v1059
    %v1130 = vunpack.c.l.b16 %v1060
    %v1131 = vunpack.c.l.b16 %v1061
    %v1132 = vunpack.c.l.b16 %v1062
    %v1133 = vunpack.c.l.b16 %v1063
    %v1134 = vpack.c.b16 %v1103, %v1102
    %v1135 = vpack.c.b16 %v1105, %v1104
    %v1136 = vpack.c.b16 %v1107, %v1106
    %v1137 = vpack.c.b16 %v1109, %v1108
    %v1138 = vpack.c.b16 %v1111, %v1110
    %v1139 = vpack.c.b16 %v1113, %v1112
    %v1140 = vpack.c.b16 %v1115, %v1114
    %v1141 = vpack.c.b16 %v1117, %v1116
    %v1142 = vpack.c.b16 %v1119, %v1118
    %v1143 = vpack.c.b16 %v1121, %v1120
    %v1144 = vpack.c.b16 %v1123, %v1122
    %v1145 = vpack.c.b16 %v1125, %v1124
    %v1146 = vpack.c.b16 %v1127, %v1126
    %v1147 = vpack.c.b16 %v1129, %v1128
    %v1148 = vpack.c.b16 %v1131, %v1130
    %v1149 = vpack.c.b16 %v1133, %v1132
    %1166 = vmatpush.bf16.msra.mxu0 %v1141
    %1167 = vmatpush.bf16.msra.mxu0 %v1140
    %1168 = vmatpush.bf16.msra.mxu0 %v1139
    %1169 = vmatpush.bf16.msra.mxu0 %v1138
    %1170 = vmatpush.bf16.msra.mxu0 %v1137
    %1171 = vmatpush.bf16.msra.mxu0 %v1136
    %1172 = vmatpush.bf16.msra.mxu0 %v1135
    %1173 = vmatpush.bf16.msra.mxu0 %v1134
    %1174 = vmatmul.bf16.gmra.mxu0 %v1065
    %v1175 = vpop.f32.mrf.mxu0
    %v1176 = vadd.f32 %v1068, %v1175
    %v1177 = vpop.f32.mrf.mxu0
    %1178 = vdwg.mxu0
    %1179 = vmatpush.bf16.msra.mxu0 %v1149
    %1180 = vmatpush.bf16.msra.mxu0 %v1148
    %1181 = vmatpush.bf16.msra.mxu0 %v1147
    %1182 = vmatpush.bf16.msra.mxu0 %v1146
    %1183 = vmatpush.bf16.msra.mxu0 %v1145
    %1184 = vmatpush.bf16.msra.mxu0 %v1144
    %1185 = vmatpush.bf16.msra.mxu0 %v1143
    %1186 = vmatpush.bf16.msra.mxu0 %v1142
    %1187 = vmatmul.bf16.gmra.mxu0 %v1066
    %v1188 = vpop.f32.mrf.mxu0
    %v1189 = vadd.f32 %v1176, %v1188
    %v1190 = vpop.f32.mrf.mxu0
    %1191 = vdwg.mxu0
    %v1192 = vadd.f32 %v1189, %v1029
    %v1193 = vld [vmem:[%s5] sm:$0xff]
    %v1194 = vld [vmem:[%s113] sm:$0xff]
    %v1195 = vld [vmem:[%s113 + $0x8] sm:$0xf]
    %v1196 = vld [vmem:[%s113 + $0xc] sm:$0xff]
    %v1197 = vld [vmem:[%s113 + $0x14] sm:$0xf]
    %v1198 = vld [vmem:[%s113 + $0x18] sm:$0xff]
    %v1199 = vld [vmem:[%s113 + $0x20] sm:$0xf]
    %v1200 = vld [vmem:[%s113 + $0x24] sm:$0xff]
    %v1201 = vld [vmem:[%s113 + $0x2c] sm:$0xf]
    %v1202 = vld [vmem:[%s113 + $0x30] sm:$0xff]
    %v1203 = vld [vmem:[%s113 + $0x38] sm:$0xf]
    %v1204 = vld [vmem:[%s113 + $0x3c] sm:$0xff]
    %v1205 = vld [vmem:[%s113 + $0x44] sm:$0xf]
    %v1206 = vld [vmem:[%s113 + $0x48] sm:$0xff]
    %v1207 = vld [vmem:[%s113 + $0x50] sm:$0xf]
    %v1208 = vld [vmem:[%s113 + $0x54] sm:$0xff]
    %v1209 = vld [vmem:[%s113 + $0x5c] sm:$0xf]
    %v1210 = vld [vmem:[%s113 + $0x60] sm:$0xff]
    %v1211 = vld [vmem:[%s113 + $0x68] sm:$0xf]
    %v1212 = vld [vmem:[%s113 + $0x6c] sm:$0xff]
    %v1213 = vld [vmem:[%s113 + $0x74] sm:$0xf]
    %v1214 = vld [vmem:[%s113 + $0x78] sm:$0xff]
    %v1215 = vld [vmem:[%s113 + $0x80] sm:$0xf]
    %v1216 = vld [vmem:[%s113 + $0x84] sm:$0xff]
    %v1217 = vld [vmem:[%s113 + $0x8c] sm:$0xf]
    %v1218 = vld [vmem:[%s113 + $0x90] sm:$0xff]
    %v1219 = vld [vmem:[%s113 + $0x98] sm:$0xf]
    %v1220 = vld [vmem:[%s113 + $0x9c] sm:$0xff]
    %v1221 = vld [vmem:[%s113 + $0xa4] sm:$0xf]
    %v1222 = vld [vmem:[%s113 + $0xa8] sm:$0xff]
    %v1223 = vld [vmem:[%s113 + $0xb0] sm:$0xf]
    %v1224 = vld [vmem:[%s113 + $0xb4] sm:$0xff]
    %v1225 = vld [vmem:[%s113 + $0xbc] sm:$0xf]
    %v1226 = vld [vmem:[#allocation48] sm:$0x7]
    %v1227 = vpack.c.bf16 %v1192, %v1192
    %v1229 = vperm.slane %v1226, 0
    %v1230 = vperm.slane %v1226, 1
    %v1231 = vperm.slane %v1226, 2
    %v1267 = vunpack.c.l.b16 %v1194
    %v1268 = vunpack.c.h.b16 %v1194
    %v1269 = vunpack.c.l.b16 %v1195
    %v1270 = vunpack.c.l.b16 %v1196
    %v1271 = vunpack.c.h.b16 %v1196
    %v1272 = vunpack.c.l.b16 %v1197
    %v1273 = vunpack.c.l.b16 %v1198
    %v1274 = vunpack.c.h.b16 %v1198
    %v1275 = vunpack.c.l.b16 %v1199
    %v1276 = vunpack.c.l.b16 %v1200
    %v1277 = vunpack.c.h.b16 %v1200
    %v1278 = vunpack.c.l.b16 %v1201
    %v1279 = vunpack.c.l.b16 %v1202
    %v1280 = vunpack.c.h.b16 %v1202
    %v1281 = vunpack.c.l.b16 %v1203
    %v1282 = vunpack.c.l.b16 %v1204
    %v1283 = vunpack.c.h.b16 %v1204
    %v1284 = vunpack.c.l.b16 %v1205
    %v1285 = vunpack.c.l.b16 %v1206
    %v1286 = vunpack.c.h.b16 %v1206
    %v1287 = vunpack.c.l.b16 %v1207
    %v1288 = vunpack.c.l.b16 %v1208
    %v1289 = vunpack.c.h.b16 %v1208
    %v1290 = vunpack.c.l.b16 %v1209
    %v1291 = vunpack.c.l.b16 %v1210
    %v1292 = vunpack.c.h.b16 %v1210
    %v1293 = vunpack.c.l.b16 %v1211
    %v1294 = vunpack.c.l.b16 %v1212
    %v1295 = vunpack.c.h.b16 %v1212
    %v1296 = vunpack.c.l.b16 %v1213
    %v1297 = vunpack.c.l.b16 %v1214
    %v1298 = vunpack.c.h.b16 %v1214
    %v1299 = vunpack.c.l.b16 %v1215
    %v1300 = vunpack.c.l.b16 %v1216
    %v1301 = vunpack.c.h.b16 %v1216
    %v1302 = vunpack.c.l.b16 %v1217
    %v1303 = vunpack.c.l.b16 %v1218
    %v1304 = vunpack.c.h.b16 %v1218
    %v1305 = vunpack.c.l.b16 %v1219
    %v1306 = vunpack.c.l.b16 %v1220
    %v1307 = vunpack.c.h.b16 %v1220
    %v1308 = vunpack.c.l.b16 %v1221
    %v1309 = vunpack.c.l.b16 %v1222
    %v1310 = vunpack.c.h.b16 %v1222
    %v1311 = vunpack.c.l.b16 %v1223
    %v1312 = vunpack.c.l.b16 %v1224
    %v1313 = vunpack.c.h.b16 %v1224
    %v1314 = vunpack.c.l.b16 %v1225
    %v1315 = vpack.c.b16 %v1270, %v1267
    %v1316 = vpack.c.b16 %v1271, %v1268
    %v1317 = vpack.c.b16 %v1272, %v1269
    %v1318 = vpack.c.b16 %v1276, %v1273
    %v1319 = vpack.c.b16 %v1277, %v1274
    %v1320 = vpack.c.b16 %v1278, %v1275
    %v1321 = vpack.c.b16 %v1282, %v1279
    %v1322 = vpack.c.b16 %v1283, %v1280
    %v1323 = vpack.c.b16 %v1284, %v1281
    %v1324 = vpack.c.b16 %v1288, %v1285
    %v1325 = vpack.c.b16 %v1289, %v1286
    %v1326 = vpack.c.b16 %v1290, %v1287
    %v1327 = vpack.c.b16 %v1294, %v1291
    %v1328 = vpack.c.b16 %v1295, %v1292
    %v1329 = vpack.c.b16 %v1296, %v1293
    %v1330 = vpack.c.b16 %v1300, %v1297
    %v1331 = vpack.c.b16 %v1301, %v1298
    %v1332 = vpack.c.b16 %v1302, %v1299
    %v1333 = vpack.c.b16 %v1306, %v1303
    %v1334 = vpack.c.b16 %v1307, %v1304
    %v1335 = vpack.c.b16 %v1308, %v1305
    %v1336 = vpack.c.b16 %v1312, %v1309
    %v1337 = vpack.c.b16 %v1313, %v1310
    %v1338 = vpack.c.b16 %v1314, %v1311
    %1363 = vmatpush.bf16.msra.mxu0 %v1336
    %1364 = vmatpush.bf16.msra.mxu0 %v1333
    %1365 = vmatpush.bf16.msra.mxu0 %v1330
    %1366 = vmatpush.bf16.msra.mxu0 %v1327
    %1367 = vmatpush.bf16.msra.mxu0 %v1324
    %1368 = vmatpush.bf16.msra.mxu0 %v1321
    %1369 = vmatpush.bf16.msra.mxu0 %v1318
    %1370 = vmatpush.bf16.msra.mxu0 %v1315
    %1371 = vmatmul.bf16.gmra.mxu0 %v1227
    %v1372 = vpop.f32.mrf.mxu0
    %v1373 = vadd.f32 %v1229, %v1372
    %v1374 = vpop.f32.mrf.mxu0
    %1375 = vdwg.mxu0
    %1376 = vmatpush.bf16.msra.mxu0 %v1337
    %1377 = vmatpush.bf16.msra.mxu0 %v1334
    %1378 = vmatpush.bf16.msra.mxu0 %v1331
    %1379 = vmatpush.bf16.msra.mxu0 %v1328
    %1380 = vmatpush.bf16.msra.mxu0 %v1325
    %1381 = vmatpush.bf16.msra.mxu0 %v1322
    %1382 = vmatpush.bf16.msra.mxu0 %v1319
    %1383 = vmatpush.bf16.msra.mxu0 %v1316
    %1384 = vmatmul.bf16.gmra.mxu0 %v1227
    %v1385 = vpop.f32.mrf.mxu0
    %v1386 = vadd.f32 %v1230, %v1385
    %v1387 = vpop.f32.mrf.mxu0
    %1388 = vdwg.mxu0
    %1389 = vmatpush.bf16.msra.mxu0 %v1338
    %1390 = vmatpush.bf16.msra.mxu0 %v1335
    %1391 = vmatpush.bf16.msra.mxu0 %v1332
    %1392 = vmatpush.bf16.msra.mxu0 %v1329
    %1393 = vmatpush.bf16.msra.mxu0 %v1326
    %1394 = vmatpush.bf16.msra.mxu0 %v1323
    %1395 = vmatpush.bf16.msra.mxu0 %v1320
    %1396 = vmatpush.bf16.msra.mxu0 %v1317
    %1397 = vmatmul.bf16.gmra.mxu0 %v1227
    %v1398 = vpop.f32.mrf.mxu0
    %v1399 = vadd.f32 %v1231, %v1398
    %v1400 = vpop.f32.mrf.mxu0
    %1401 = vdwg.mxu0
    %v1402 = vld [vmem:[#allocation57] sm:$0xff]
    %v1403 = vld [vmem:[#allocation57 + $0x8] sm:$0xff]
    %v1404 = vld [vmem:[#allocation57 + $0x10] sm:$0xff]
    %v1405 = vld [vmem:[#allocation57 + $0x18] sm:$0xff]
    %v1406 = vld [vmem:[#allocation46] sm:$0x1]
    %v1407 = vpack.c.bf16 %v1373, %v1373
    %v1408 = vpack.c.bf16 %v1386, %v1386
    %vm1409 = vcmask 64512
    %v1411 = vsel %vm1409, %v1407, 0
    %v1414 = vsel %vm1409, %v1408, 0
    %1416 = vmatpush.bf16.xpose.msra.mxu0 0
    %1417 = vmatpush.bf16.xpose.msra.mxu0 0
    %1418 = vmatpush.bf16.xpose.msra.mxu0 0
    %1419 = vmatpush.bf16.xpose.msra.mxu0 0
    %1420 = vmatpush.bf16.xpose.msra.mxu0 0
    %1421 = vmatpush.bf16.xpose.msra.mxu0 0
    %1422 = vmatpush.bf16.xpose.msra.mxu0 0
    %1423 = vmatpush.bf16.xpose.msra.mxu0 %v1414
    %1424 = vmatmul.bf16.gmra.mxu0 %v1411
    %v1425 = vpop.f32.mrf.mxu0
    %v1426 = vadd.f32 %v1193, %v1425
    %v1427 = vpop.f32.mrf.mxu0
    %1428 = vdwg.mxu0
    %v1429 = vsel %vm1409, %v1426, -inf
    %1430 = vmax.xlane.f32.xlu0 %v1429
    %v1431 = vpop.xlane.xlu0 %1430
    %v1432 = vsub.f32 %v1426, %v1431
    %v1433 = vmul.f32 %v1432, 1.442695
    %v1434 = vpow.pop %v1433
    %v1435 = vsel %vm1409, %v1434, 0.0
    %1436 = vadd.xlane.f32.xlu0 %v1435
    %v1437 = vpop.xlane.xlu0 %1436
    %v1438 = vrcp.pop %v1437
    %v1439 = vmul.f32 %v1434, %v1438
    %v1440 = vpack.c.bf16 %v1439, %v1439
    %v1441 = vpack.c.bf16 %v1399, %v1399
    %v1443 = vsel %vm1409, %v1440, 0
    %v1446 = vsel %vm1028, %v1441, 0
    %1448 = vmatpush.bf16.msra.mxu0 0
    %1449 = vmatpush.bf16.msra.mxu0 0
    %1450 = vmatpush.bf16.msra.mxu0 0
    %1451 = vmatpush.bf16.msra.mxu0 0
    %1452 = vmatpush.bf16.msra.mxu0 0
    %1453 = vmatpush.bf16.msra.mxu0 0
    %1454 = vmatpush.bf16.msra.mxu0 0
    %1455 = vmatpush.bf16.msra.mxu0 %v1446
    %1456 = vmatmul.bf16.gmra.mxu0 %v1443
    %v1457 = vpop.f32.mrf.mxu0
    %v1458 = vadd.f32 0.0, %v1457
    %v1459 = vpop.f32.mrf.mxu0
    %1460 = vdwg.mxu0
    %v1461 = vpack.c.bf16 %v1458, %v1458
    %v1462 = vpack.c.bf16 %v1402, %v1402
    %1464 = vrot.lane.b32.xlu0 %v1407, 120
    %v1465 = vpop.permute.xlu0 %1464
    %1467 = vrot.lane.b32.xlu0 %v1408, 120
    %v1468 = vpop.permute.xlu0 %1467
    %v1470 = vsel %vm1409, %v1465, 0
    %v1473 = vsel %vm1409, %v1468, 0
    %1475 = vmatpush.bf16.xpose.msra.mxu0 0
    %1476 = vmatpush.bf16.xpose.msra.mxu0 0
    %1477 = vmatpush.bf16.xpose.msra.mxu0 0
    %1478 = vmatpush.bf16.xpose.msra.mxu0 0
    %1479 = vmatpush.bf16.xpose.msra.mxu0 0
    %1480 = vmatpush.bf16.xpose.msra.mxu0 0
    %1481 = vmatpush.bf16.xpose.msra.mxu0 0
    %1482 = vmatpush.bf16.xpose.msra.mxu0 %v1473
    %1483 = vmatmul.bf16.gmra.mxu0 %v1470
    %v1484 = vpop.f32.mrf.mxu0
    %v1485 = vadd.f32 %v1193, %v1484
    %v1486 = vpop.f32.mrf.mxu0
    %1487 = vdwg.mxu0
    %v1488 = vsel %vm1409, %v1485, -inf
    %1489 = vmax.xlane.f32.xlu0 %v1488
    %v1490 = vpop.xlane.xlu0 %1489
    %v1491 = vsub.f32 %v1485, %v1490
    %v1492 = vmul.f32 %v1491, 1.442695
    %v1493 = vpow.pop %v1492
    %v1494 = vsel %vm1409, %v1493, 0.0
    %1495 = vadd.xlane.f32.xlu0 %v1494
    %v1496 = vpop.xlane.xlu0 %1495
    %v1497 = vrcp.pop %v1496
    %v1498 = vmul.f32 %v1493, %v1497
    %v1499 = vpack.c.bf16 %v1498, %v1498
    %1501 = vrot.lane.b32.xlu0 %v1441, 120
    %v1502 = vpop.permute.xlu0 %1501
    %v1504 = vsel %vm1409, %v1499, 0
    %v1507 = vsel %vm1028, %v1502, 0
    %1509 = vmatpush.bf16.msra.mxu0 0
    %1510 = vmatpush.bf16.msra.mxu0 0
    %1511 = vmatpush.bf16.msra.mxu0 0
    %1512 = vmatpush.bf16.msra.mxu0 0
    %1513 = vmatpush.bf16.msra.mxu0 0
    %1514 = vmatpush.bf16.msra.mxu0 0
    %1515 = vmatpush.bf16.msra.mxu0 0
    %1516 = vmatpush.bf16.msra.mxu0 %v1507
    %1517 = vmatmul.bf16.gmra.mxu0 %v1504
    %v1518 = vpop.f32.mrf.mxu0
    %v1519 = vadd.f32 0.0, %v1518
    %v1520 = vpop.f32.mrf.mxu0
    %1521 = vdwg.mxu0
    %v1522 = vpack.c.bf16 %v1519, %v1519
    %v1523 = vpack.c.bf16 %v1403, %v1403
    %v1525 = vsel %vm1409, %v1522, 0
    %v1528 = vsel %vm1028, %v1523, 0
    %1530 = vmatpush.bf16.msra.mxu0 0
    %1531 = vmatpush.bf16.msra.mxu0 0
    %1532 = vmatpush.bf16.msra.mxu0 0
    %1533 = vmatpush.bf16.msra.mxu0 0
    %1534 = vmatpush.bf16.msra.mxu0 0
    %1535 = vmatpush.bf16.msra.mxu0 0
    %1536 = vmatpush.bf16.msra.mxu0 0
    %1537 = vmatpush.bf16.msra.mxu0 %v1528
    %1538 = vmatmul.bf16.gmra.mxu0 %v1525
    %v1539 = vpop.f32.mrf.mxu0
    %v1540 = vadd.f32 0.0, %v1539
    %v1541 = vpop.f32.mrf.mxu0
    %1542 = vdwg.mxu0
    %v1544 = vsel %vm1409, %v1461, 0
    %v1547 = vsel %vm1028, %v1462, 0
    %1549 = vmatpush.bf16.msra.mxu0 0
    %1550 = vmatpush.bf16.msra.mxu0 0
    %1551 = vmatpush.bf16.msra.mxu0 0
    %1552 = vmatpush.bf16.msra.mxu0 0
    %1553 = vmatpush.bf16.msra.mxu0 0
    %1554 = vmatpush.bf16.msra.mxu0 0
    %1555 = vmatpush.bf16.msra.mxu0 0
    %1556 = vmatpush.bf16.msra.mxu0 %v1547
    %1557 = vmatmul.bf16.gmra.mxu0 %v1544
    %v1558 = vpop.f32.mrf.mxu0
    %v1559 = vadd.f32 %v1540, %v1558
    %v1560 = vpop.f32.mrf.mxu0
    %1561 = vdwg.mxu0
    %1562 = vrot.lane.b32.xlu0 %v1407, 112
    %v1563 = vpop.permute.xlu0 %1562
    %1564 = vrot.lane.b32.xlu0 %v1408, 112
    %v1565 = vpop.permute.xlu0 %1564
    %v1567 = vsel %vm1409, %v1563, 0
    %v1570 = vsel %vm1409, %v1565, 0
    %1572 = vmatpush.bf16.xpose.msra.mxu0 0
    %1573 = vmatpush.bf16.xpose.msra.mxu0 0
    %1574 = vmatpush.bf16.xpose.msra.mxu0 0
    %1575 = vmatpush.bf16.xpose.msra.mxu0 0
    %1576 = vmatpush.bf16.xpose.msra.mxu0 0
    %1577 = vmatpush.bf16.xpose.msra.mxu0 0
    %1578 = vmatpush.bf16.xpose.msra.mxu0 0
    %1579 = vmatpush.bf16.xpose.msra.mxu0 %v1570
    %1580 = vmatmul.bf16.gmra.mxu0 %v1567
    %v1581 = vpop.f32.mrf.mxu0
    %v1582 = vadd.f32 %v1193, %v1581
    %v1583 = vpop.f32.mrf.mxu0
    %1584 = vdwg.mxu0
    %v1585 = vsel %vm1409, %v1582, -inf
    %1586 = vmax.xlane.f32.xlu0 %v1585
    %v1587 = vpop.xlane.xlu0 %1586
    %v1588 = vsub.f32 %v1582, %v1587
    %v1589 = vmul.f32 %v1588, 1.442695
    %v1590 = vpow.pop %v1589
    %v1591 = vsel %vm1409, %v1590, 0.0
    %1592 = vadd.xlane.f32.xlu0 %v1591
    %v1593 = vpop.xlane.xlu0 %1592
    %v1594 = vrcp.pop %v1593
    %v1595 = vmul.f32 %v1590, %v1594
    %v1596 = vpack.c.bf16 %v1595, %v1595
    %1597 = vrot.lane.b32.xlu0 %v1441, 112
    %v1598 = vpop.permute.xlu0 %1597
    %v1600 = vsel %vm1409, %v1596, 0
    %v1603 = vsel %vm1028, %v1598, 0
    %1605 = vmatpush.bf16.msra.mxu0 0
    %1606 = vmatpush.bf16.msra.mxu0 0
    %1607 = vmatpush.bf16.msra.mxu0 0
    %1608 = vmatpush.bf16.msra.mxu0 0
    %1609 = vmatpush.bf16.msra.mxu0 0
    %1610 = vmatpush.bf16.msra.mxu0 0
    %1611 = vmatpush.bf16.msra.mxu0 0
    %1612 = vmatpush.bf16.msra.mxu0 %v1603
    %1613 = vmatmul.bf16.gmra.mxu0 %v1600
    %v1614 = vpop.f32.mrf.mxu0
    %v1615 = vadd.f32 0.0, %v1614
    %v1616 = vpop.f32.mrf.mxu0
    %1617 = vdwg.mxu0
    %v1618 = vpack.c.bf16 %v1615, %v1615
    %v1619 = vpack.c.bf16 %v1404, %v1404
    %v1621 = vsel %vm1409, %v1618, 0
    %v1624 = vsel %vm1028, %v1619, 0
    %1626 = vmatpush.bf16.msra.mxu0 0
    %1627 = vmatpush.bf16.msra.mxu0 0
    %1628 = vmatpush.bf16.msra.mxu0 0
    %1629 = vmatpush.bf16.msra.mxu0 0
    %1630 = vmatpush.bf16.msra.mxu0 0
    %1631 = vmatpush.bf16.msra.mxu0 0
    %1632 = vmatpush.bf16.msra.mxu0 0
    %1633 = vmatpush.bf16.msra.mxu0 %v1624
    %1634 = vmatmul.bf16.gmra.mxu0 %v1621
    %v1635 = vpop.f32.mrf.mxu0
    %v1636 = vadd.f32 0.0, %v1635
    %v1637 = vpop.f32.mrf.mxu0
    %1638 = vdwg.mxu0
    %v1639 = vadd.f32 %v1559, %v1636
    %1640 = vrot.lane.b32.xlu0 %v1407, 104
    %v1641 = vpop.permute.xlu0 %1640
    %1642 = vrot.lane.b32.xlu0 %v1408, 104
    %v1643 = vpop.permute.xlu0 %1642
    %v1645 = vsel %vm1409, %v1641, 0
    %v1648 = vsel %vm1409, %v1643, 0
    %1650 = vmatpush.bf16.xpose.msra.mxu0 0
    %1651 = vmatpush.bf16.xpose.msra.mxu0 0
    %1652 = vmatpush.bf16.xpose.msra.mxu0 0
    %1653 = vmatpush.bf16.xpose.msra.mxu0 0
    %1654 = vmatpush.bf16.xpose.msra.mxu0 0
    %1655 = vmatpush.bf16.xpose.msra.mxu0 0
    %1656 = vmatpush.bf16.xpose.msra.mxu0 0
    %1657 = vmatpush.bf16.xpose.msra.mxu0 %v1648
    %1658 = vmatmul.bf16.gmra.mxu0 %v1645
    %v1659 = vpop.f32.mrf.mxu0
    %v1660 = vadd.f32 %v1193, %v1659
    %v1661 = vpop.f32.mrf.mxu0
    %1662 = vdwg.mxu0
    %v1663 = vsel %vm1409, %v1660, -inf
    %1664 = vmax.xlane.f32.xlu0 %v1663
    %v1665 = vpop.xlane.xlu0 %1664
    %v1666 = vsub.f32 %v1660, %v1665
    %v1667 = vmul.f32 %v1666, 1.442695
    %v1668 = vpow.pop %v1667
    %v1669 = vsel %vm1409, %v1668, 0.0
    %1670 = vadd.xlane.f32.xlu0 %v1669
    %v1671 = vpop.xlane.xlu0 %1670
    %v1672 = vrcp.pop %v1671
    %v1673 = vmul.f32 %v1668, %v1672
    %v1674 = vpack.c.bf16 %v1673, %v1673
    %1675 = vrot.lane.b32.xlu0 %v1441, 104
    %v1676 = vpop.permute.xlu0 %1675
    %v1678 = vsel %vm1409, %v1674, 0
    %v1681 = vsel %vm1028, %v1676, 0
    %1683 = vmatpush.bf16.msra.mxu0 0
    %1684 = vmatpush.bf16.msra.mxu0 0
    %1685 = vmatpush.bf16.msra.mxu0 0
    %1686 = vmatpush.bf16.msra.mxu0 0
    %1687 = vmatpush.bf16.msra.mxu0 0
    %1688 = vmatpush.bf16.msra.mxu0 0
    %1689 = vmatpush.bf16.msra.mxu0 0
    %1690 = vmatpush.bf16.msra.mxu0 %v1681
    %1691 = vmatmul.bf16.gmra.mxu0 %v1678
    %v1692 = vpop.f32.mrf.mxu0
    %v1693 = vadd.f32 0.0, %v1692
    %v1694 = vpop.f32.mrf.mxu0
    %1695 = vdwg.mxu0
    %v1696 = vpack.c.bf16 %v1693, %v1693
    %v1697 = vpack.c.bf16 %v1405, %v1405
    %v1699 = vsel %vm1409, %v1696, 0
    %v1702 = vsel %vm1028, %v1697, 0
    %1704 = vmatpush.bf16.msra.mxu0 0
    %1705 = vmatpush.bf16.msra.mxu0 0
    %1706 = vmatpush.bf16.msra.mxu0 0
    %1707 = vmatpush.bf16.msra.mxu0 0
    %1708 = vmatpush.bf16.msra.mxu0 0
    %1709 = vmatpush.bf16.msra.mxu0 0
    %1710 = vmatpush.bf16.msra.mxu0 0
    %1711 = vmatpush.bf16.msra.mxu0 %v1702
    %1712 = vmatmul.bf16.gmra.mxu0 %v1699
    %v1713 = vpop.f32.mrf.mxu0
    %v1714 = vadd.f32 0.0, %v1713
    %v1715 = vpop.f32.mrf.mxu0
    %1716 = vdwg.mxu0
    %v1717 = vadd.f32 %v1639, %v1714
    %v1719 = vperm.slane %v1406, 0
    %v1721 = vadd.f32 %v1717, %v1719
    %v1722 = vadd.f32 %v1192, %v1721
    %v1723 = vld [vmem:[#allocation51] sm:$0x1]
    %v1724 = vld [vmem:[#allocation49] sm:$0x1]
    %1725 = vadd.xlane.f32.xlu0 %v1722
    %v1726 = vpop.xlane.xlu0 %1725
    %v1727 = vmul.f32 %v1726, 0.03125
    %v1728 = vmul.f32 %v1722, %v1722
    %1729 = vadd.xlane.f32.xlu0 %v1728
    %v1730 = vpop.xlane.xlu0 %1729
    %v1731 = vmul.f32 %v1730, 0.03125
    %v1732 = vmul.f32 %v1727, %v1727
    %v1733 = vsub.f32 %v1731, %v1732
    %v1734 = vsub.f32 %v1722, %v1727
    %v1735 = vadd.f32 %v1733, 1e-05
    %v1736 = vrsqrt.pop %v1735
    %v1737 = vmul.f32 %v1736, %v1735
    %v1738 = vmul.f32 %v1737, %v1736
    %v1739 = vmul.f32 0.5, %v1738
    %v1740 = vsub.f32 1.5, %v1739
    %v1741 = vmul.f32 %v1736, %v1740
    %vm1742 = vweird.f32 %v1735
    %vm1743 = vweird.f32 %v1736
    %vm1744 = vmor %vm1742, %vm1743
    %v1745 = vsel %vm1744, %v1736, %v1741
    %v1746 = vmul.f32 %v1734, %v1745
    %v1748 = vperm.slane %v1723, 0
    %v1750 = vmul.f32 %v1746, %v1748
    %v1752 = vperm.slane %v1724, 0
    %v1754 = vadd.f32 %v1750, %v1752
    %v1755 = vld [vmem:[%s107] sm:$0xf]
    %v1756 = vld [vmem:[%s107 + $0x4] sm:$0xf]
    %v1757 = vld [vmem:[%s107 + $0x8] sm:$0xf]
    %v1758 = vld [vmem:[%s107 + $0xc] sm:$0xf]
    %v1759 = vld [vmem:[%s107 + $0x10] sm:$0xf]
    %v1760 = vld [vmem:[%s107 + $0x14] sm:$0xf]
    %v1761 = vld [vmem:[%s107 + $0x18] sm:$0xf]
    %v1762 = vld [vmem:[%s107 + $0x1c] sm:$0xf]
    %v1763 = vld [vmem:[%s107 + $0x20] sm:$0xf]
    %v1764 = vld [vmem:[%s107 + $0x24] sm:$0xf]
    %v1765 = vld [vmem:[%s107 + $0x28] sm:$0xf]
    %v1766 = vld [vmem:[%s107 + $0x2c] sm:$0xf]
    %v1767 = vld [vmem:[%s107 + $0x30] sm:$0xf]
    %v1768 = vld [vmem:[%s107 + $0x34] sm:$0xf]
    %v1769 = vld [vmem:[%s107 + $0x38] sm:$0xf]
    %v1770 = vld [vmem:[%s107 + $0x3c] sm:$0xf]
    %v1771 = vld [vmem:[#allocation43] sm:$0x1]
    %v1772 = vld [vmem:[#allocation55] sm:$0xf]
    %v1773 = vld [vmem:[#allocation55 + $0x4] sm:$0xf]
    %v1774 = vld [vmem:[#allocation55 + $0x8] sm:$0xf]
    %v1775 = vld [vmem:[#allocation55 + $0xc] sm:$0xf]
    %v1776 = vld [vmem:[#allocation55 + $0x10] sm:$0xf]
    %v1777 = vld [vmem:[#allocation55 + $0x14] sm:$0xf]
    %v1778 = vld [vmem:[#allocation55 + $0x18] sm:$0xf]
    %v1779 = vld [vmem:[#allocation55 + $0x1c] sm:$0xf]
    %v1780 = vld [vmem:[#allocation55 + $0x20] sm:$0xf]
    %v1781 = vld [vmem:[#allocation55 + $0x24] sm:$0xf]
    %v1782 = vld [vmem:[#allocation55 + $0x28] sm:$0xf]
    %v1783 = vld [vmem:[#allocation55 + $0x2c] sm:$0xf]
    %v1784 = vld [vmem:[#allocation55 + $0x30] sm:$0xf]
    %v1785 = vld [vmem:[#allocation55 + $0x34] sm:$0xf]
    %v1786 = vld [vmem:[#allocation55 + $0x38] sm:$0xf]
    %v1787 = vld [vmem:[#allocation55 + $0x3c] sm:$0xf]
    %v1788 = vld [vmem:[#allocation45] sm:$0x1]
    %v1789 = vpack.c.bf16 %v1754, %v1754
    %v1791 = vperm.slane %v1771, 0
    %v1809 = vunpack.c.l.b16 %v1755
    %v1810 = vunpack.c.l.b16 %v1756
    %v1811 = vunpack.c.l.b16 %v1757
    %v1812 = vunpack.c.l.b16 %v1758
    %v1813 = vunpack.c.l.b16 %v1759
    %v1814 = vunpack.c.l.b16 %v1760
    %v1815 = vunpack.c.l.b16 %v1761
    %v1816 = vunpack.c.l.b16 %v1762
    %v1817 = vunpack.c.l.b16 %v1763
    %v1818 = vunpack.c.l.b16 %v1764
    %v1819 = vunpack.c.l.b16 %v1765
    %v1820 = vunpack.c.l.b16 %v1766
    %v1821 = vunpack.c.l.b16 %v1767
    %v1822 = vunpack.c.l.b16 %v1768
    %v1823 = vunpack.c.l.b16 %v1769
    %v1824 = vunpack.c.l.b16 %v1770
    %v1825 = vpack.c.b16 %v1810, %v1809
    %v1826 = vpack.c.b16 %v1812, %v1811
    %v1827 = vpack.c.b16 %v1814, %v1813
    %v1828 = vpack.c.b16 %v1816, %v1815
    %v1829 = vpack.c.b16 %v1818, %v1817
    %v1830 = vpack.c.b16 %v1820, %v1819
    %v1831 = vpack.c.b16 %v1822, %v1821
    %v1832 = vpack.c.b16 %v1824, %v1823
    %1841 = vmatpush.bf16.msra.mxu0 %v1832
    %1842 = vmatpush.bf16.msra.mxu0 %v1831
    %1843 = vmatpush.bf16.msra.mxu0 %v1830
    %1844 = vmatpush.bf16.msra.mxu0 %v1829
    %1845 = vmatpush.bf16.msra.mxu0 %v1828
    %1846 = vmatpush.bf16.msra.mxu0 %v1827
    %1847 = vmatpush.bf16.msra.mxu0 %v1826
    %1848 = vmatpush.bf16.msra.mxu0 %v1825
    %1849 = vmatmul.bf16.gmra.mxu0 %v1789
    %v1850 = vpop.f32.mrf.mxu0
    %v1851 = vadd.f32 %v1791, %v1850
    %v1852 = vpop.f32.mrf.mxu0
    %1853 = vdwg.mxu0
    %v1854 = vmax.f32 %v1851, 0.0
    %v1855 = vpack.c.bf16 %v1854, %v1854
    %v1857 = vperm.slane %v1788, 0
    %v1875 = vunpack.c.l.b16 %v1772
    %v1876 = vunpack.c.l.b16 %v1773
    %v1877 = vunpack.c.l.b16 %v1774
    %v1878 = vunpack.c.l.b16 %v1775
    %v1879 = vunpack.c.l.b16 %v1776
    %v1880 = vunpack.c.l.b16 %v1777
    %v1881 = vunpack.c.l.b16 %v1778
    %v1882 = vunpack.c.l.b16 %v1779
    %v1883 = vunpack.c.l.b16 %v1780
    %v1884 = vunpack.c.l.b16 %v1781
    %v1885 = vunpack.c.l.b16 %v1782
    %v1886 = vunpack.c.l.b16 %v1783
    %v1887 = vunpack.c.l.b16 %v1784
    %v1888 = vunpack.c.l.b16 %v1785
    %v1889 = vunpack.c.l.b16 %v1786
    %v1890 = vunpack.c.l.b16 %v1787
    %v1891 = vpack.c.b16 %v1876, %v1875
    %v1892 = vpack.c.b16 %v1878, %v1877
    %v1893 = vpack.c.b16 %v1880, %v1879
    %v1894 = vpack.c.b16 %v1882, %v1881
    %v1895 = vpack.c.b16 %v1884, %v1883
    %v1896 = vpack.c.b16 %v1886, %v1885
    %v1897 = vpack.c.b16 %v1888, %v1887
    %v1898 = vpack.c.b16 %v1890, %v1889
    %1907 = vmatpush.bf16.msra.mxu0 %v1898
    %1908 = vmatpush.bf16.msra.mxu0 %v1897
    %1909 = vmatpush.bf16.msra.mxu0 %v1896
    %1910 = vmatpush.bf16.msra.mxu0 %v1895
    %1911 = vmatpush.bf16.msra.mxu0 %v1894
    %1912 = vmatpush.bf16.msra.mxu0 %v1893
    %1913 = vmatpush.bf16.msra.mxu0 %v1892
    %1914 = vmatpush.bf16.msra.mxu0 %v1891
    %1915 = vmatmul.bf16.gmra.mxu0 %v1855
    %v1916 = vpop.f32.mrf.mxu0
    %v1917 = vadd.f32 %v1857, %v1916
    %v1918 = vpop.f32.mrf.mxu0
    %1919 = vdwg.mxu0
    %v1920 = vadd.f32 %v1754, %v1917
    %v1921 = vld [vmem:[#allocation54] sm:$0x1]
    %v1922 = vld [vmem:[#allocation52] sm:$0x1]
    %1923 = vadd.xlane.f32.xlu0 %v1920
    %v1924 = vpop.xlane.xlu0 %1923
    %v1925 = vmul.f32 %v1924, 0.03125
    %v1926 = vmul.f32 %v1920, %v1920
    %1927 = vadd.xlane.f32.xlu0 %v1926
    %v1928 = vpop.xlane.xlu0 %1927
    %v1929 = vmul.f32 %v1928, 0.03125
    %v1930 = vmul.f32 %v1925, %v1925
    %v1931 = vsub.f32 %v1929, %v1930
    %v1932 = vsub.f32 %v1920, %v1925
    %v1933 = vadd.f32 %v1931, 1e-05
    %v1934 = vrsqrt.pop %v1933
    %v1935 = vmul.f32 %v1934, %v1933
    %v1936 = vmul.f32 %v1935, %v1934
    %v1937 = vmul.f32 0.5, %v1936
    %v1938 = vsub.f32 1.5, %v1937
    %v1939 = vmul.f32 %v1934, %v1938
    %vm1940 = vweird.f32 %v1933
    %vm1941 = vweird.f32 %v1934
    %vm1942 = vmor %vm1940, %vm1941
    %v1943 = vsel %vm1942, %v1934, %v1939
    %v1944 = vmul.f32 %v1932, %v1943
    %v1946 = vperm.slane %v1921, 0
    %v1948 = vmul.f32 %v1944, %v1946
    %v1950 = vperm.slane %v1922, 0
    %v1952 = vadd.f32 %v1948, %v1950
    %v1953 = vld [vmem:[%s137] sm:$0xff]
    %v1954 = vld [vmem:[%s137 + $0x8] sm:$0xf]
    %v1955 = vld [vmem:[%s137 + $0xc] sm:$0xff]
    %v1956 = vld [vmem:[%s137 + $0x14] sm:$0xf]
    %v1957 = vld [vmem:[%s137 + $0x18] sm:$0xff]
    %v1958 = vld [vmem:[%s137 + $0x20] sm:$0xf]
    %v1959 = vld [vmem:[%s137 + $0x24] sm:$0xff]
    %v1960 = vld [vmem:[%s137 + $0x2c] sm:$0xf]
    %v1961 = vld [vmem:[%s137 + $0x30] sm:$0xff]
    %v1962 = vld [vmem:[%s137 + $0x38] sm:$0xf]
    %v1963 = vld [vmem:[%s137 + $0x3c] sm:$0xff]
    %v1964 = vld [vmem:[%s137 + $0x44] sm:$0xf]
    %v1965 = vld [vmem:[%s137 + $0x48] sm:$0xff]
    %v1966 = vld [vmem:[%s137 + $0x50] sm:$0xf]
    %v1967 = vld [vmem:[%s137 + $0x54] sm:$0xff]
    %v1968 = vld [vmem:[%s137 + $0x5c] sm:$0xf]
    %v1969 = vld [vmem:[%s137 + $0x60] sm:$0xff]
    %v1970 = vld [vmem:[%s137 + $0x68] sm:$0xf]
    %v1971 = vld [vmem:[%s137 + $0x6c] sm:$0xff]
    %v1972 = vld [vmem:[%s137 + $0x74] sm:$0xf]
    %v1973 = vld [vmem:[%s137 + $0x78] sm:$0xff]
    %v1974 = vld [vmem:[%s137 + $0x80] sm:$0xf]
    %v1975 = vld [vmem:[%s137 + $0x84] sm:$0xff]
    %v1976 = vld [vmem:[%s137 + $0x8c] sm:$0xf]
    %v1977 = vld [vmem:[%s137 + $0x90] sm:$0xff]
    %v1978 = vld [vmem:[%s137 + $0x98] sm:$0xf]
    %v1979 = vld [vmem:[%s137 + $0x9c] sm:$0xff]
    %v1980 = vld [vmem:[%s137 + $0xa4] sm:$0xf]
    %v1981 = vld [vmem:[%s137 + $0xa8] sm:$0xff]
    %v1982 = vld [vmem:[%s137 + $0xb0] sm:$0xf]
    %v1983 = vld [vmem:[%s137 + $0xb4] sm:$0xff]
    %v1984 = vld [vmem:[%s137 + $0xbc] sm:$0xf]
    %v1985 = vld [vmem:[#allocation63] sm:$0x7]
    %v1986 = vpack.c.bf16 %v1952, %v1952
    %v1988 = vperm.slane %v1985, 0
    %v1989 = vperm.slane %v1985, 1
    %v1990 = vperm.slane %v1985, 2
    %v2026 = vunpack.c.l.b16 %v1953
    %v2027 = vunpack.c.h.b16 %v1953
    %v2028 = vunpack.c.l.b16 %v1954
    %v2029 = vunpack.c.l.b16 %v1955
    %v2030 = vunpack.c.h.b16 %v1955
    %v2031 = vunpack.c.l.b16 %v1956
    %v2032 = vunpack.c.l.b16 %v1957
    %v2033 = vunpack.c.h.b16 %v1957
    %v2034 = vunpack.c.l.b16 %v1958
    %v2035 = vunpack.c.l.b16 %v1959
    %v2036 = vunpack.c.h.b16 %v1959
    %v2037 = vunpack.c.l.b16 %v1960
    %v2038 = vunpack.c.l.b16 %v1961
    %v2039 = vunpack.c.h.b16 %v1961
    %v2040 = vunpack.c.l.b16 %v1962
    %v2041 = vunpack.c.l.b16 %v1963
    %v2042 = vunpack.c.h.b16 %v1963
    %v2043 = vunpack.c.l.b16 %v1964
    %v2044 = vunpack.c.l.b16 %v1965
    %v2045 = vunpack.c.h.b16 %v1965
    %v2046 = vunpack.c.l.b16 %v1966
    %v2047 = vunpack.c.l.b16 %v1967
    %v2048 = vunpack.c.h.b16 %v1967
    %v2049 = vunpack.c.l.b16 %v1968
    %v2050 = vunpack.c.l.b16 %v1969
    %v2051 = vunpack.c.h.b16 %v1969
    %v2052 = vunpack.c.l.b16 %v1970
    %v2053 = vunpack.c.l.b16 %v1971
    %v2054 = vunpack.c.h.b16 %v1971
    %v2055 = vunpack.c.l.b16 %v1972
    %v2056 = vunpack.c.l.b16 %v1973
    %v2057 = vunpack.c.h.b16 %v1973
    %v2058 = vunpack.c.l.b16 %v1974
    %v2059 = vunpack.c.l.b16 %v1975
    %v2060 = vunpack.c.h.b16 %v1975
    %v2061 = vunpack.c.l.b16 %v1976
    %v2062 = vunpack.c.l.b16 %v1977
    %v2063 = vunpack.c.h.b16 %v1977
    %v2064 = vunpack.c.l.b16 %v1978
    %v2065 = vunpack.c.l.b16 %v1979
    %v2066 = vunpack.c.h.b16 %v1979
    %v2067 = vunpack.c.l.b16 %v1980
    %v2068 = vunpack.c.l.b16 %v1981
    %v2069 = vunpack.c.h.b16 %v1981
    %v2070 = vunpack.c.l.b16 %v1982
    %v2071 = vunpack.c.l.b16 %v1983
    %v2072 = vunpack.c.h.b16 %v1983
    %v2073 = vunpack.c.l.b16 %v1984
    %v2074 = vpack.c.b16 %v2029, %v2026
    %v2075 = vpack.c.b16 %v2030, %v2027
    %v2076 = vpack.c.b16 %v2031, %v2028
    %v2077 = vpack.c.b16 %v2035, %v2032
    %v2078 = vpack.c.b16 %v2036, %v2033
    %v2079 = vpack.c.b16 %v2037, %v2034
    %v2080 = vpack.c.b16 %v2041, %v2038
    %v2081 = vpack.c.b16 %v2042, %v2039
    %v2082 = vpack.c.b16 %v2043, %v2040
    %v2083 = vpack.c.b16 %v2047, %v2044
    %v2084 = vpack.c.b16 %v2048, %v2045
    %v2085 = vpack.c.b16 %v2049, %v2046
    %v2086 = vpack.c.b16 %v2053, %v2050
    %v2087 = vpack.c.b16 %v2054, %v2051
    %v2088 = vpack.c.b16 %v2055, %v2052
    %v2089 = vpack.c.b16 %v2059, %v2056
    %v2090 = vpack.c.b16 %v2060, %v2057
    %v2091 = vpack.c.b16 %v2061, %v2058
    %v2092 = vpack.c.b16 %v2065, %v2062
    %v2093 = vpack.c.b16 %v2066, %v2063
    %v2094 = vpack.c.b16 %v2067, %v2064
    %v2095 = vpack.c.b16 %v2071, %v2068
    %v2096 = vpack.c.b16 %v2072, %v2069
    %v2097 = vpack.c.b16 %v2073, %v2070
    %2122 = vmatpush.bf16.msra.mxu0 %v2095
    %2123 = vmatpush.bf16.msra.mxu0 %v2092
    %2124 = vmatpush.bf16.msra.mxu0 %v2089
    %2125 = vmatpush.bf16.msra.mxu0 %v2086
    %2126 = vmatpush.bf16.msra.mxu0 %v2083
    %2127 = vmatpush.bf16.msra.mxu0 %v2080
    %2128 = vmatpush.bf16.msra.mxu0 %v2077
    %2129 = vmatpush.bf16.msra.mxu0 %v2074
    %2130 = vmatmul.bf16.gmra.mxu0 %v1986
    %v2131 = vpop.f32.mrf.mxu0
    %v2132 = vadd.f32 %v1988, %v2131
    %v2133 = vpop.f32.mrf.mxu0
    %2134 = vdwg.mxu0
    %2135 = vmatpush.bf16.msra.mxu0 %v2096
    %2136 = vmatpush.bf16.msra.mxu0 %v2093
    %2137 = vmatpush.bf16.msra.mxu0 %v2090
    %2138 = vmatpush.bf16.msra.mxu0 %v2087
    %2139 = vmatpush.bf16.msra.mxu0 %v2084
    %2140 = vmatpush.bf16.msra.mxu0 %v2081
    %2141 = vmatpush.bf16.msra.mxu0 %v2078
    %2142 = vmatpush.bf16.msra.mxu0 %v2075
    %2143 = vmatmul.bf16.gmra.mxu0 %v1986
    %v2144 = vpop.f32.mrf.mxu0
    %v2145 = vadd.f32 %v1989, %v2144
    %v2146 = vpop.f32.mrf.mxu0
    %2147 = vdwg.mxu0
    %2148 = vmatpush.bf16.msra.mxu0 %v2097
    %2149 = vmatpush.bf16.msra.mxu0 %v2094
    %2150 = vmatpush.bf16.msra.mxu0 %v2091
    %2151 = vmatpush.bf16.msra.mxu0 %v2088
    %2152 = vmatpush.bf16.msra.mxu0 %v2085
    %2153 = vmatpush.bf16.msra.mxu0 %v2082
    %2154 = vmatpush.bf16.msra.mxu0 %v2079
    %2155 = vmatpush.bf16.msra.mxu0 %v2076
    %2156 = vmatmul.bf16.gmra.mxu0 %v1986
    %v2157 = vpop.f32.mrf.mxu0
    %v2158 = vadd.f32 %v1990, %v2157
    %v2159 = vpop.f32.mrf.mxu0
    %2160 = vdwg.mxu0
    %v2161 = vld [vmem:[#allocation73] sm:$0xff]
    %v2162 = vld [vmem:[#allocation73 + $0x8] sm:$0xff]
    %v2163 = vld [vmem:[#allocation73 + $0x10] sm:$0xff]
    %v2164 = vld [vmem:[#allocation73 + $0x18] sm:$0xff]
    %v2165 = vld [vmem:[#allocation61] sm:$0x1]
    %v2166 = vpack.c.bf16 %v2132, %v2132
    %v2167 = vpack.c.bf16 %v2145, %v2145
    %v2169 = vsel %vm1409, %v2166, 0
    %v2172 = vsel %vm1409, %v2167, 0
    %2174 = vmatpush.bf16.xpose.msra.mxu0 0
    %2175 = vmatpush.bf16.xpose.msra.mxu0 0
    %2176 = vmatpush.bf16.xpose.msra.mxu0 0
    %2177 = vmatpush.bf16.xpose.msra.mxu0 0
    %2178 = vmatpush.bf16.xpose.msra.mxu0 0
    %2179 = vmatpush.bf16.xpose.msra.mxu0 0
    %2180 = vmatpush.bf16.xpose.msra.mxu0 0
    %2181 = vmatpush.bf16.xpose.msra.mxu0 %v2172
    %2182 = vmatmul.bf16.gmra.mxu0 %v2169
    %v2183 = vpop.f32.mrf.mxu0
    %v2184 = vadd.f32 %v1193, %v2183
    %v2185 = vpop.f32.mrf.mxu0
    %2186 = vdwg.mxu0
    %v2187 = vsel %vm1409, %v2184, -inf
    %2188 = vmax.xlane.f32.xlu0 %v2187
    %v2189 = vpop.xlane.xlu0 %2188
    %v2190 = vsub.f32 %v2184, %v2189
    %v2191 = vmul.f32 %v2190, 1.442695
    %v2192 = vpow.pop %v2191
    %v2193 = vsel %vm1409, %v2192, 0.0
    %2194 = vadd.xlane.f32.xlu0 %v2193
    %v2195 = vpop.xlane.xlu0 %2194
    %v2196 = vrcp.pop %v2195
    %v2197 = vmul.f32 %v2192, %v2196
    %v2198 = vpack.c.bf16 %v2197, %v2197
    %v2199 = vpack.c.bf16 %v2158, %v2158
    %v2201 = vsel %vm1409, %v2198, 0
    %v2204 = vsel %vm1028, %v2199, 0
    %2206 = vmatpush.bf16.msra.mxu0 0
    %2207 = vmatpush.bf16.msra.mxu0 0
    %2208 = vmatpush.bf16.msra.mxu0 0
    %2209 = vmatpush.bf16.msra.mxu0 0
    %2210 = vmatpush.bf16.msra.mxu0 0
    %2211 = vmatpush.bf16.msra.mxu0 0
    %2212 = vmatpush.bf16.msra.mxu0 0
    %2213 = vmatpush.bf16.msra.mxu0 %v2204
    %2214 = vmatmul.bf16.gmra.mxu0 %v2201
    %v2215 = vpop.f32.mrf.mxu0
    %v2216 = vadd.f32 0.0, %v2215
    %v2217 = vpop.f32.mrf.mxu0
    %2218 = vdwg.mxu0
    %v2219 = vpack.c.bf16 %v2216, %v2216
    %v2220 = vpack.c.bf16 %v2161, %v2161
    %2222 = vrot.lane.b32.xlu0 %v2166, 120
    %v2223 = vpop.permute.xlu0 %2222
    %2225 = vrot.lane.b32.xlu0 %v2167, 120
    %v2226 = vpop.permute.xlu0 %2225
    %v2228 = vsel %vm1409, %v2223, 0
    %v2231 = vsel %vm1409, %v2226, 0
    %2233 = vmatpush.bf16.xpose.msra.mxu0 0
    %2234 = vmatpush.bf16.xpose.msra.mxu0 0
    %2235 = vmatpush.bf16.xpose.msra.mxu0 0
    %2236 = vmatpush.bf16.xpose.msra.mxu0 0
    %2237 = vmatpush.bf16.xpose.msra.mxu0 0
    %2238 = vmatpush.bf16.xpose.msra.mxu0 0
    %2239 = vmatpush.bf16.xpose.msra.mxu0 0
    %2240 = vmatpush.bf16.xpose.msra.mxu0 %v2231
    %2241 = vmatmul.bf16.gmra.mxu0 %v2228
    %v2242 = vpop.f32.mrf.mxu0
    %v2243 = vadd.f32 %v1193, %v2242
    %v2244 = vpop.f32.mrf.mxu0
    %2245 = vdwg.mxu0
    %v2246 = vsel %vm1409, %v2243, -inf
    %2247 = vmax.xlane.f32.xlu0 %v2246
    %v2248 = vpop.xlane.xlu0 %2247
    %v2249 = vsub.f32 %v2243, %v2248
    %v2250 = vmul.f32 %v2249, 1.442695
    %v2251 = vpow.pop %v2250
    %v2252 = vsel %vm1409, %v2251, 0.0
    %2253 = vadd.xlane.f32.xlu0 %v2252
    %v2254 = vpop.xlane.xlu0 %2253
    %v2255 = vrcp.pop %v2254
    %v2256 = vmul.f32 %v2251, %v2255
    %v2257 = vpack.c.bf16 %v2256, %v2256
    %2259 = vrot.lane.b32.xlu0 %v2199, 120
    %v2260 = vpop.permute.xlu0 %2259
    %v2262 = vsel %vm1409, %v2257, 0
    %v2265 = vsel %vm1028, %v2260, 0
    %2267 = vmatpush.bf16.msra.mxu0 0
    %2268 = vmatpush.bf16.msra.mxu0 0
    %2269 = vmatpush.bf16.msra.mxu0 0
    %2270 = vmatpush.bf16.msra.mxu0 0
    %2271 = vmatpush.bf16.msra.mxu0 0
    %2272 = vmatpush.bf16.msra.mxu0 0
    %2273 = vmatpush.bf16.msra.mxu0 0
    %2274 = vmatpush.bf16.msra.mxu0 %v2265
    %2275 = vmatmul.bf16.gmra.mxu0 %v2262
    %v2276 = vpop.f32.mrf.mxu0
    %v2277 = vadd.f32 0.0, %v2276
    %v2278 = vpop.f32.mrf.mxu0
    %2279 = vdwg.mxu0
    %v2280 = vpack.c.bf16 %v2277, %v2277
    %v2281 = vpack.c.bf16 %v2162, %v2162
    %v2283 = vsel %vm1409, %v2280, 0
    %v2286 = vsel %vm1028, %v2281, 0
    %2288 = vmatpush.bf16.msra.mxu0 0
    %2289 = vmatpush.bf16.msra.mxu0 0
    %2290 = vmatpush.bf16.msra.mxu0 0
    %2291 = vmatpush.bf16.msra.mxu0 0
    %2292 = vmatpush.bf16.msra.mxu0 0
    %2293 = vmatpush.bf16.msra.mxu0 0
    %2294 = vmatpush.bf16.msra.mxu0 0
    %2295 = vmatpush.bf16.msra.mxu0 %v2286
    %2296 = vmatmul.bf16.gmra.mxu0 %v2283
    %v2297 = vpop.f32.mrf.mxu0
    %v2298 = vadd.f32 0.0, %v2297
    %v2299 = vpop.f32.mrf.mxu0
    %2300 = vdwg.mxu0
    %v2302 = vsel %vm1409, %v2219, 0
    %v2305 = vsel %vm1028, %v2220, 0
    %2307 = vmatpush.bf16.msra.mxu0 0
    %2308 = vmatpush.bf16.msra.mxu0 0
    %2309 = vmatpush.bf16.msra.mxu0 0
    %2310 = vmatpush.bf16.msra.mxu0 0
    %2311 = vmatpush.bf16.msra.mxu0 0
    %2312 = vmatpush.bf16.msra.mxu0 0
    %2313 = vmatpush.bf16.msra.mxu0 0
    %2314 = vmatpush.bf16.msra.mxu0 %v2305
    %2315 = vmatmul.bf16.gmra.mxu0 %v2302
    %v2316 = vpop.f32.mrf.mxu0
    %v2317 = vadd.f32 %v2298, %v2316
    %v2318 = vpop.f32.mrf.mxu0
    %2319 = vdwg.mxu0
    %2320 = vrot.lane.b32.xlu0 %v2166, 112
    %v2321 = vpop.permute.xlu0 %2320
    %2322 = vrot.lane.b32.xlu0 %v2167, 112
    %v2323 = vpop.permute.xlu0 %2322
    %v2325 = vsel %vm1409, %v2321, 0
    %v2328 = vsel %vm1409, %v2323, 0
    %2330 = vmatpush.bf16.xpose.msra.mxu0 0
    %2331 = vmatpush.bf16.xpose.msra.mxu0 0
    %2332 = vmatpush.bf16.xpose.msra.mxu0 0
    %2333 = vmatpush.bf16.xpose.msra.mxu0 0
    %2334 = vmatpush.bf16.xpose.msra.mxu0 0
    %2335 = vmatpush.bf16.xpose.msra.mxu0 0
    %2336 = vmatpush.bf16.xpose.msra.mxu0 0
    %2337 = vmatpush.bf16.xpose.msra.mxu0 %v2328
    %2338 = vmatmul.bf16.gmra.mxu0 %v2325
    %v2339 = vpop.f32.mrf.mxu0
    %v2340 = vadd.f32 %v1193, %v2339
    %v2341 = vpop.f32.mrf.mxu0
    %2342 = vdwg.mxu0
    %v2343 = vsel %vm1409, %v2340, -inf
    %2344 = vmax.xlane.f32.xlu0 %v2343
    %v2345 = vpop.xlane.xlu0 %2344
    %v2346 = vsub.f32 %v2340, %v2345
    %v2347 = vmul.f32 %v2346, 1.442695
    %v2348 = vpow.pop %v2347
    %v2349 = vsel %vm1409, %v2348, 0.0
    %2350 = vadd.xlane.f32.xlu0 %v2349
    %v2351 = vpop.xlane.xlu0 %2350
    %v2352 = vrcp.pop %v2351
    %v2353 = vmul.f32 %v2348, %v2352
    %v2354 = vpack.c.bf16 %v2353, %v2353
    %2355 = vrot.lane.b32.xlu0 %v2199, 112
    %v2356 = vpop.permute.xlu0 %2355
    %v2358 = vsel %vm1409, %v2354, 0
    %v2361 = vsel %vm1028, %v2356, 0
    %2363 = vmatpush.bf16.msra.mxu0 0
    %2364 = vmatpush.bf16.msra.mxu0 0
    %2365 = vmatpush.bf16.msra.mxu0 0
    %2366 = vmatpush.bf16.msra.mxu0 0
    %2367 = vmatpush.bf16.msra.mxu0 0
    %2368 = vmatpush.bf16.msra.mxu0 0
    %2369 = vmatpush.bf16.msra.mxu0 0
    %2370 = vmatpush.bf16.msra.mxu0 %v2361
    %2371 = vmatmul.bf16.gmra.mxu0 %v2358
    %v2372 = vpop.f32.mrf.mxu0
    %v2373 = vadd.f32 0.0, %v2372
    %v2374 = vpop.f32.mrf.mxu0
    %2375 = vdwg.mxu0
    %v2376 = vpack.c.bf16 %v2373, %v2373
    %v2377 = vpack.c.bf16 %v2163, %v2163
    %v2379 = vsel %vm1409, %v2376, 0
    %v2382 = vsel %vm1028, %v2377, 0
    %2384 = vmatpush.bf16.msra.mxu0 0
    %2385 = vmatpush.bf16.msra.mxu0 0
    %2386 = vmatpush.bf16.msra.mxu0 0
    %2387 = vmatpush.bf16.msra.mxu0 0
    %2388 = vmatpush.bf16.msra.mxu0 0
    %2389 = vmatpush.bf16.msra.mxu0 0
    %2390 = vmatpush.bf16.msra.mxu0 0
    %2391 = vmatpush.bf16.msra.mxu0 %v2382
    %2392 = vmatmul.bf16.gmra.mxu0 %v2379
    %v2393 = vpop.f32.mrf.mxu0
    %v2394 = vadd.f32 0.0, %v2393
    %v2395 = vpop.f32.mrf.mxu0
    %2396 = vdwg.mxu0
    %v2397 = vadd.f32 %v2317, %v2394
    %2398 = vrot.lane.b32.xlu0 %v2166, 104
    %v2399 = vpop.permute.xlu0 %2398
    %2400 = vrot.lane.b32.xlu0 %v2167, 104
    %v2401 = vpop.permute.xlu0 %2400
    %v2403 = vsel %vm1409, %v2399, 0
    %v2406 = vsel %vm1409, %v2401, 0
    %2408 = vmatpush.bf16.xpose.msra.mxu0 0
    %2409 = vmatpush.bf16.xpose.msra.mxu0 0
    %2410 = vmatpush.bf16.xpose.msra.mxu0 0
    %2411 = vmatpush.bf16.xpose.msra.mxu0 0
    %2412 = vmatpush.bf16.xpose.msra.mxu0 0
    %2413 = vmatpush.bf16.xpose.msra.mxu0 0
    %2414 = vmatpush.bf16.xpose.msra.mxu0 0
    %2415 = vmatpush.bf16.xpose.msra.mxu0 %v2406
    %2416 = vmatmul.bf16.gmra.mxu0 %v2403
    %v2417 = vpop.f32.mrf.mxu0
    %v2418 = vadd.f32 %v1193, %v2417
    %v2419 = vpop.f32.mrf.mxu0
    %2420 = vdwg.mxu0
    %v2421 = vsel %vm1409, %v2418, -inf
    %2422 = vmax.xlane.f32.xlu0 %v2421
    %v2423 = vpop.xlane.xlu0 %2422
    %v2424 = vsub.f32 %v2418, %v2423
    %v2425 = vmul.f32 %v2424, 1.442695
    %v2426 = vpow.pop %v2425
    %v2427 = vsel %vm1409, %v2426, 0.0
    %2428 = vadd.xlane.f32.xlu0 %v2427
    %v2429 = vpop.xlane.xlu0 %2428
    %v2430 = vrcp.pop %v2429
    %v2431 = vmul.f32 %v2426, %v2430
    %v2432 = vpack.c.bf16 %v2431, %v2431
    %2433 = vrot.lane.b32.xlu0 %v2199, 104
    %v2434 = vpop.permute.xlu0 %2433
    %v2436 = vsel %vm1409, %v2432, 0
    %v2439 = vsel %vm1028, %v2434, 0
    %2441 = vmatpush.bf16.msra.mxu0 0
    %2442 = vmatpush.bf16.msra.mxu0 0
    %2443 = vmatpush.bf16.msra.mxu0 0
    %2444 = vmatpush.bf16.msra.mxu0 0
    %2445 = vmatpush.bf16.msra.mxu0 0
    %2446 = vmatpush.bf16.msra.mxu0 0
    %2447 = vmatpush.bf16.msra.mxu0 0
    %2448 = vmatpush.bf16.msra.mxu0 %v2439
    %2449 = vmatmul.bf16.gmra.mxu0 %v2436
    %v2450 = vpop.f32.mrf.mxu0
    %v2451 = vadd.f32 0.0, %v2450
    %v2452 = vpop.f32.mrf.mxu0
    %2453 = vdwg.mxu0
    %v2454 = vpack.c.bf16 %v2451, %v2451
    %v2455 = vpack.c.bf16 %v2164, %v2164
    %v2457 = vsel %vm1409, %v2454, 0
    %v2460 = vsel %vm1028, %v2455, 0
    %2462 = vmatpush.bf16.msra.mxu0 0
    %2463 = vmatpush.bf16.msra.mxu0 0
    %2464 = vmatpush.bf16.msra.mxu0 0
    %2465 = vmatpush.bf16.msra.mxu0 0
    %2466 = vmatpush.bf16.msra.mxu0 0
    %2467 = vmatpush.bf16.msra.mxu0 0
    %2468 = vmatpush.bf16.msra.mxu0 0
    %2469 = vmatpush.bf16.msra.mxu0 %v2460
    %2470 = vmatmul.bf16.gmra.mxu0 %v2457
    %v2471 = vpop.f32.mrf.mxu0
    %v2472 = vadd.f32 0.0, %v2471
    %v2473 = vpop.f32.mrf.mxu0
    %2474 = vdwg.mxu0
    %v2475 = vadd.f32 %v2397, %v2472
    %v2477 = vperm.slane %v2165, 0
    %v2479 = vadd.f32 %v2475, %v2477
    %v2480 = vadd.f32 %v1952, %v2479
    %v2481 = vld [vmem:[#allocation66] sm:$0x1]
    %v2482 = vld [vmem:[#allocation64] sm:$0x1]
    %2483 = vadd.xlane.f32.xlu0 %v2480
    %v2484 = vpop.xlane.xlu0 %2483
    %v2485 = vmul.f32 %v2484, 0.03125
    %v2486 = vmul.f32 %v2480, %v2480
    %2487 = vadd.xlane.f32.xlu0 %v2486
    %v2488 = vpop.xlane.xlu0 %2487
    %v2489 = vmul.f32 %v2488, 0.03125
    %v2490 = vmul.f32 %v2485, %v2485
    %v2491 = vsub.f32 %v2489, %v2490
    %v2492 = vsub.f32 %v2480, %v2485
    %v2493 = vadd.f32 %v2491, 1e-05
    %v2494 = vrsqrt.pop %v2493
    %v2495 = vmul.f32 %v2494, %v2493
    %v2496 = vmul.f32 %v2495, %v2494
    %v2497 = vmul.f32 0.5, %v2496
    %v2498 = vsub.f32 1.5, %v2497
    %v2499 = vmul.f32 %v2494, %v2498
    %vm2500 = vweird.f32 %v2493
    %vm2501 = vweird.f32 %v2494
    %vm2502 = vmor %vm2500, %vm2501
    %v2503 = vsel %vm2502, %v2494, %v2499
    %v2504 = vmul.f32 %v2492, %v2503
    %v2506 = vperm.slane %v2481, 0
    %v2508 = vmul.f32 %v2504, %v2506
    %v2510 = vperm.slane %v2482, 0
    %v2512 = vadd.f32 %v2508, %v2510
    %v2513 = vld [vmem:[#allocation70] sm:$0xf]
    %v2514 = vld [vmem:[#allocation70 + $0x4] sm:$0xf]
    %v2515 = vld [vmem:[#allocation70 + $0x8] sm:$0xf]
    %v2516 = vld [vmem:[#allocation70 + $0xc] sm:$0xf]
    %v2517 = vld [vmem:[#allocation70 + $0x10] sm:$0xf]
    %v2518 = vld [vmem:[#allocation70 + $0x14] sm:$0xf]
    %v2519 = vld [vmem:[#allocation70 + $0x18] sm:$0xf]
    %v2520 = vld [vmem:[#allocation70 + $0x1c] sm:$0xf]
    %v2521 = vld [vmem:[#allocation70 + $0x20] sm:$0xf]
    %v2522 = vld [vmem:[#allocation70 + $0x24] sm:$0xf]
    %v2523 = vld [vmem:[#allocation70 + $0x28] sm:$0xf]
    %v2524 = vld [vmem:[#allocation70 + $0x2c] sm:$0xf]
    %v2525 = vld [vmem:[#allocation70 + $0x30] sm:$0xf]
    %v2526 = vld [vmem:[#allocation70 + $0x34] sm:$0xf]
    %v2527 = vld [vmem:[#allocation70 + $0x38] sm:$0xf]
    %v2528 = vld [vmem:[#allocation70 + $0x3c] sm:$0xf]
    %v2529 = vld [vmem:[#allocation58] sm:$0x1]
    %v2530 = vld [vmem:[#allocation72] sm:$0xf]
    %v2531 = vld [vmem:[#allocation72 + $0x4] sm:$0xf]
    %v2532 = vld [vmem:[#allocation72 + $0x8] sm:$0xf]
    %v2533 = vld [vmem:[#allocation72 + $0xc] sm:$0xf]
    %v2534 = vld [vmem:[#allocation72 + $0x10] sm:$0xf]
    %v2535 = vld [vmem:[#allocation72 + $0x14] sm:$0xf]
    %v2536 = vld [vmem:[#allocation72 + $0x18] sm:$0xf]
    %v2537 = vld [vmem:[#allocation72 + $0x1c] sm:$0xf]
    %v2538 = vld [vmem:[#allocation72 + $0x20] sm:$0xf]
    %v2539 = vld [vmem:[#allocation72 + $0x24] sm:$0xf]
    %v2540 = vld [vmem:[#allocation72 + $0x28] sm:$0xf]
    %v2541 = vld [vmem:[#allocation72 + $0x2c] sm:$0xf]
    %v2542 = vld [vmem:[#allocation72 + $0x30] sm:$0xf]
    %v2543 = vld [vmem:[#allocation72 + $0x34] sm:$0xf]
    %v2544 = vld [vmem:[#allocation72 + $0x38] sm:$0xf]
    %v2545 = vld [vmem:[#allocation72 + $0x3c] sm:$0xf]
    %v2546 = vld [vmem:[#allocation60] sm:$0x1]
    %v2547 = vpack.c.bf16 %v2512, %v2512
    %v2549 = vperm.slane %v2529, 0
    %v2567 = vunpack.c.l.b16 %v2513
    %v2568 = vunpack.c.l.b16 %v2514
    %v2569 = vunpack.c.l.b16 %v2515
    %v2570 = vunpack.c.l.b16 %v2516
    %v2571 = vunpack.c.l.b16 %v2517
    %v2572 = vunpack.c.l.b16 %v2518
    %v2573 = vunpack.c.l.b16 %v2519
    %v2574 = vunpack.c.l.b16 %v2520
    %v2575 = vunpack.c.l.b16 %v2521
    %v2576 = vunpack.c.l.b16 %v2522
    %v2577 = vunpack.c.l.b16 %v2523
    %v2578 = vunpack.c.l.b16 %v2524
    %v2579 = vunpack.c.l.b16 %v2525
    %v2580 = vunpack.c.l.b16 %v2526
    %v2581 = vunpack.c.l.b16 %v2527
    %v2582 = vunpack.c.l.b16 %v2528
    %v2583 = vpack.c.b16 %v2568, %v2567
    %v2584 = vpack.c.b16 %v2570, %v2569
    %v2585 = vpack.c.b16 %v2572, %v2571
    %v2586 = vpack.c.b16 %v2574, %v2573
    %v2587 = vpack.c.b16 %v2576, %v2575
    %v2588 = vpack.c.b16 %v2578, %v2577
    %v2589 = vpack.c.b16 %v2580, %v2579
    %v2590 = vpack.c.b16 %v2582, %v2581
    %2599 = vmatpush.bf16.msra.mxu0 %v2590
    %2600 = vmatpush.bf16.msra.mxu0 %v2589
    %2601 = vmatpush.bf16.msra.mxu0 %v2588
    %2602 = vmatpush.bf16.msra.mxu0 %v2587
    %2603 = vmatpush.bf16.msra.mxu0 %v2586
    %2604 = vmatpush.bf16.msra.mxu0 %v2585
    %2605 = vmatpush.bf16.msra.mxu0 %v2584
    %2606 = vmatpush.bf16.msra.mxu0 %v2583
    %2607 = vmatmul.bf16.gmra.mxu0 %v2547
    %v2608 = vpop.f32.mrf.mxu0
    %v2609 = vadd.f32 %v2549, %v2608
    %v2610 = vpop.f32.mrf.mxu0
    %2611 = vdwg.mxu0
    %v2612 = vmax.f32 %v2609, 0.0
    %v2613 = vpack.c.bf16 %v2612, %v2612
    %v2615 = vperm.slane %v2546, 0
    %v2633 = vunpack.c.l.b16 %v2530
    %v2634 = vunpack.c.l.b16 %v2531
    %v2635 = vunpack.c.l.b16 %v2532
    %v2636 = vunpack.c.l.b16 %v2533
    %v2637 = vunpack.c.l.b16 %v2534
    %v2638 = vunpack.c.l.b16 %v2535
    %v2639 = vunpack.c.l.b16 %v2536
    %v2640 = vunpack.c.l.b16 %v2537
    %v2641 = vunpack.c.l.b16 %v2538
    %v2642 = vunpack.c.l.b16 %v2539
    %v2643 = vunpack.c.l.b16 %v2540
    %v2644 = vunpack.c.l.b16 %v2541
    %v2645 = vunpack.c.l.b16 %v2542
    %v2646 = vunpack.c.l.b16 %v2543
    %v2647 = vunpack.c.l.b16 %v2544
    %v2648 = vunpack.c.l.b16 %v2545
    %v2649 = vpack.c.b16 %v2634, %v2633
    %v2650 = vpack.c.b16 %v2636, %v2635
    %v2651 = vpack.c.b16 %v2638, %v2637
    %v2652 = vpack.c.b16 %v2640, %v2639
    %v2653 = vpack.c.b16 %v2642, %v2641
    %v2654 = vpack.c.b16 %v2644, %v2643
    %v2655 = vpack.c.b16 %v2646, %v2645
    %v2656 = vpack.c.b16 %v2648, %v2647
    %2665 = vmatpush.bf16.msra.mxu0 %v2656
    %2666 = vmatpush.bf16.msra.mxu0 %v2655
    %2667 = vmatpush.bf16.msra.mxu0 %v2654
    %2668 = vmatpush.bf16.msra.mxu0 %v2653
    %2669 = vmatpush.bf16.msra.mxu0 %v2652
    %2670 = vmatpush.bf16.msra.mxu0 %v2651
    %2671 = vmatpush.bf16.msra.mxu0 %v2650
    %2672 = vmatpush.bf16.msra.mxu0 %v2649
    %2673 = vmatmul.bf16.gmra.mxu0 %v2613
    %v2674 = vpop.f32.mrf.mxu0
    %v2675 = vadd.f32 %v2615, %v2674
    %v2676 = vpop.f32.mrf.mxu0
    %2677 = vdwg.mxu0
    %v2678 = vadd.f32 %v2512, %v2675
    %v2679 = vld [vmem:[#allocation69] sm:$0x1]
    %v2680 = vld [vmem:[#allocation67] sm:$0x1]
    %2681 = vadd.xlane.f32.xlu0 %v2678
    %v2682 = vpop.xlane.xlu0 %2681
    %v2683 = vmul.f32 %v2682, 0.03125
    %v2684 = vmul.f32 %v2678, %v2678
    %2685 = vadd.xlane.f32.xlu0 %v2684
    %v2686 = vpop.xlane.xlu0 %2685
    %v2687 = vmul.f32 %v2686, 0.03125
    %v2688 = vmul.f32 %v2683, %v2683
    %v2689 = vsub.f32 %v2687, %v2688
    %v2690 = vsub.f32 %v2678, %v2683
    %v2691 = vadd.f32 %v2689, 1e-05
    %v2692 = vrsqrt.pop %v2691
    %v2693 = vmul.f32 %v2692, %v2691
    %v2694 = vmul.f32 %v2693, %v2692
    %v2695 = vmul.f32 0.5, %v2694
    %v2696 = vsub.f32 1.5, %v2695
    %v2697 = vmul.f32 %v2692, %v2696
    %vm2698 = vweird.f32 %v2691
    %vm2699 = vweird.f32 %v2692
    %vm2700 = vmor %vm2698, %vm2699
    %v2701 = vsel %vm2700, %v2692, %v2697
    %v2702 = vmul.f32 %v2690, %v2701
    %v2704 = vperm.slane %v2679, 0
    %v2706 = vmul.f32 %v2702, %v2704
    %v2708 = vperm.slane %v2680, 0
    %v2710 = vadd.f32 %v2706, %v2708
    %v2711 = vld [vmem:[%s3] sm:$0xff]
    %v2712 = vld [vmem:[%s3 + $0x8] sm:$0xff]
    %v2713 = vld [vmem:[%s7] sm:$0xff]
    %v2714 = vld [vmem:[%s7 + $0x8] sm:$0xff]
    %v2715 = vld [vmem:[%s9] sm:$0xff]
    %v2716 = vld [vmem:[%s9 + $0x8] sm:$0xff]
    %v2717 = vld [vmem:[%s45] sm:$0xff]
    %v2718 = vld [vmem:[%s45 + $0x8] sm:$0xf]
    %v2719 = vld [vmem:[%s45 + $0xc] sm:$0xff]
    %v2720 = vld [vmem:[%s45 + $0x14] sm:$0xf]
    %v2721 = vld [vmem:[%s45 + $0x18] sm:$0xff]
    %v2722 = vld [vmem:[%s45 + $0x20] sm:$0xf]
    %v2723 = vld [vmem:[%s45 + $0x24] sm:$0xff]
    %v2724 = vld [vmem:[%s45 + $0x2c] sm:$0xf]
    %v2725 = vld [vmem:[%s45 + $0x30] sm:$0xff]
    %v2726 = vld [vmem:[%s45 + $0x38] sm:$0xf]
    %v2727 = vld [vmem:[%s45 + $0x3c] sm:$0xff]
    %v2728 = vld [vmem:[%s45 + $0x44] sm:$0xf]
    %v2729 = vld [vmem:[%s45 + $0x48] sm:$0xff]
    %v2730 = vld [vmem:[%s45 + $0x50] sm:$0xf]
    %v2731 = vld [vmem:[%s45 + $0x54] sm:$0xff]
    %v2732 = vld [vmem:[%s45 + $0x5c] sm:$0xf]
    %v2733 = vld [vmem:[%s45 + $0x60] sm:$0xff]
    %v2734 = vld [vmem:[%s45 + $0x68] sm:$0xf]
    %v2735 = vld [vmem:[%s45 + $0x6c] sm:$0xff]
    %v2736 = vld [vmem:[%s45 + $0x74] sm:$0xf]
    %v2737 = vld [vmem:[%s45 + $0x78] sm:$0xff]
    %v2738 = vld [vmem:[%s45 + $0x80] sm:$0xf]
    %v2739 = vld [vmem:[%s45 + $0x84] sm:$0xff]
    %v2740 = vld [vmem:[%s45 + $0x8c] sm:$0xf]
    %v2741 = vld [vmem:[%s45 + $0x90] sm:$0xff]
    %v2742 = vld [vmem:[%s45 + $0x98] sm:$0xf]
    %v2743 = vld [vmem:[%s45 + $0x9c] sm:$0xff]
    %v2744 = vld [vmem:[%s45 + $0xa4] sm:$0xf]
    %v2745 = vld [vmem:[%s45 + $0xa8] sm:$0xff]
    %v2746 = vld [vmem:[%s45 + $0xb0] sm:$0xf]
    %v2747 = vld [vmem:[%s45 + $0xb4] sm:$0xff]
    %v2748 = vld [vmem:[%s45 + $0xbc] sm:$0xf]
    %v2749 = vld [vmem:[%s41] sm:$0x7]
    %v2750 = vpack.c.bf16 %v2712, %v2711
    %v2752 = vperm.slane %v2749, 0
    %v2753 = vperm.slane %v2749, 1
    %v2754 = vperm.slane %v2749, 2
    %v2790 = vunpack.c.l.b16 %v2717
    %v2791 = vunpack.c.h.b16 %v2717
    %v2792 = vunpack.c.l.b16 %v2718
    %v2793 = vunpack.c.l.b16 %v2719
    %v2794 = vunpack.c.h.b16 %v2719
    %v2795 = vunpack.c.l.b16 %v2720
    %v2796 = vunpack.c.l.b16 %v2721
    %v2797 = vunpack.c.h.b16 %v2721
    %v2798 = vunpack.c.l.b16 %v2722
    %v2799 = vunpack.c.l.b16 %v2723
    %v2800 = vunpack.c.h.b16 %v2723
    %v2801 = vunpack.c.l.b16 %v2724
    %v2802 = vunpack.c.l.b16 %v2725
    %v2803 = vunpack.c.h.b16 %v2725
    %v2804 = vunpack.c.l.b16 %v2726
    %v2805 = vunpack.c.l.b16 %v2727
    %v2806 = vunpack.c.h.b16 %v2727
    %v2807 = vunpack.c.l.b16 %v2728
    %v2808 = vunpack.c.l.b16 %v2729
    %v2809 = vunpack.c.h.b16 %v2729
    %v2810 = vunpack.c.l.b16 %v2730
    %v2811 = vunpack.c.l.b16 %v2731
    %v2812 = vunpack.c.h.b16 %v2731
    %v2813 = vunpack.c.l.b16 %v2732
    %v2814 = vunpack.c.l.b16 %v2733
    %v2815 = vunpack.c.h.b16 %v2733
    %v2816 = vunpack.c.l.b16 %v2734
    %v2817 = vunpack.c.l.b16 %v2735
    %v2818 = vunpack.c.h.b16 %v2735
    %v2819 = vunpack.c.l.b16 %v2736
    %v2820 = vunpack.c.l.b16 %v2737
    %v2821 = vunpack.c.h.b16 %v2737
    %v2822 = vunpack.c.l.b16 %v2738
    %v2823 = vunpack.c.l.b16 %v2739
    %v2824 = vunpack.c.h.b16 %v2739
    %v2825 = vunpack.c.l.b16 %v2740
    %v2826 = vunpack.c.l.b16 %v2741
    %v2827 = vunpack.c.h.b16 %v2741
    %v2828 = vunpack.c.l.b16 %v2742
    %v2829 = vunpack.c.l.b16 %v2743
    %v2830 = vunpack.c.h.b16 %v2743
    %v2831 = vunpack.c.l.b16 %v2744
    %v2832 = vunpack.c.l.b16 %v2745
    %v2833 = vunpack.c.h.b16 %v2745
    %v2834 = vunpack.c.l.b16 %v2746
    %v2835 = vunpack.c.l.b16 %v2747
    %v2836 = vunpack.c.h.b16 %v2747
    %v2837 = vunpack.c.l.b16 %v2748
    %v2838 = vpack.c.b16 %v2793, %v2790
    %v2839 = vpack.c.b16 %v2794, %v2791
    %v2840 = vpack.c.b16 %v2795, %v2792
    %v2841 = vpack.c.b16 %v2799, %v2796
    %v2842 = vpack.c.b16 %v2800, %v2797
    %v2843 = vpack.c.b16 %v2801, %v2798
    %v2844 = vpack.c.b16 %v2805, %v2802
    %v2845 = vpack.c.b16 %v2806, %v2803
    %v2846 = vpack.c.b16 %v2807, %v2804
    %v2847 = vpack.c.b16 %v2811, %v2808
    %v2848 = vpack.c.b16 %v2812, %v2809
    %v2849 = vpack.c.b16 %v2813, %v2810
    %v2850 = vpack.c.b16 %v2817, %v2814
    %v2851 = vpack.c.b16 %v2818, %v2815
    %v2852 = vpack.c.b16 %v2819, %v2816
    %v2853 = vpack.c.b16 %v2823, %v2820
    %v2854 = vpack.c.b16 %v2824, %v2821
    %v2855 = vpack.c.b16 %v2825, %v2822
    %v2856 = vpack.c.b16 %v2829, %v2826
    %v2857 = vpack.c.b16 %v2830, %v2827
    %v2858 = vpack.c.b16 %v2831, %v2828
    %v2859 = vpack.c.b16 %v2835, %v2832
    %v2860 = vpack.c.b16 %v2836, %v2833
    %v2861 = vpack.c.b16 %v2837, %v2834
    %2886 = vmatpush.bf16.msra.mxu0 %v2859
    %2887 = vmatpush.bf16.msra.mxu0 %v2856
    %2888 = vmatpush.bf16.msra.mxu0 %v2853
    %2889 = vmatpush.bf16.msra.mxu0 %v2850
    %2890 = vmatpush.bf16.msra.mxu0 %v2847
    %2891 = vmatpush.bf16.msra.mxu0 %v2844
    %2892 = vmatpush.bf16.msra.mxu0 %v2841
    %2893 = vmatpush.bf16.msra.mxu0 %v2838
    %2894 = vmatmul.bf16.gmra.mxu0 %v2750
    %v2895 = vpop.f32.mrf.mxu0
    %v2896 = vadd.f32 %v2752, %v2895
    %v2897 = vpop.f32.mrf.mxu0
    %v2898 = vadd.f32 %v2752, %v2897
    %2899 = vdwg.mxu0
    %2900 = vmatpush.bf16.msra.mxu0 %v2860
    %2901 = vmatpush.bf16.msra.mxu0 %v2857
    %2902 = vmatpush.bf16.msra.mxu0 %v2854
    %2903 = vmatpush.bf16.msra.mxu0 %v2851
    %2904 = vmatpush.bf16.msra.mxu0 %v2848
    %2905 = vmatpush.bf16.msra.mxu0 %v2845
    %2906 = vmatpush.bf16.msra.mxu0 %v2842
    %2907 = vmatpush.bf16.msra.mxu0 %v2839
    %2908 = vmatmul.bf16.gmra.mxu0 %v2750
    %v2909 = vpop.f32.mrf.mxu0
    %v2910 = vadd.f32 %v2753, %v2909
    %v2911 = vpop.f32.mrf.mxu0
    %v2912 = vadd.f32 %v2753, %v2911
    %2913 = vdwg.mxu0
    %2914 = vmatpush.bf16.msra.mxu0 %v2861
    %2915 = vmatpush.bf16.msra.mxu0 %v2858
    %2916 = vmatpush.bf16.msra.mxu0 %v2855
    %2917 = vmatpush.bf16.msra.mxu0 %v2852
    %2918 = vmatpush.bf16.msra.mxu0 %v2849
    %2919 = vmatpush.bf16.msra.mxu0 %v2846
    %2920 = vmatpush.bf16.msra.mxu0 %v2843
    %2921 = vmatpush.bf16.msra.mxu0 %v2840
    %2922 = vmatmul.bf16.gmra.mxu0 %v2750
    %v2923 = vpop.f32.mrf.mxu0
    %v2924 = vadd.f32 %v2754, %v2923
    %v2925 = vpop.f32.mrf.mxu0
    %v2926 = vadd.f32 %v2754, %v2925
    %2927 = vdwg.mxu0
    %v2928 = vld [vmem:[#allocation19] sm:$0xff]
    %v2929 = vld [vmem:[#allocation19 + $0x8] sm:$0xff]
    %v2930 = vld [vmem:[#allocation19 + $0x10] sm:$0xff]
    %v2931 = vld [vmem:[#allocation19 + $0x18] sm:$0xff]
    %v2932 = vld [vmem:[#allocation18] sm:$0x1]
    %v2933 = vpack.c.bf16 %v2898, %v2896
    %v2934 = vpack.c.bf16 %v2912, %v2910
    %v2936 = vsel %vm1409, %v2933, 0
    %v2939 = vsel %vm1409, %v2934, 0
    %2941 = vmatpush.bf16.xpose.msra.mxu0 0
    %2942 = vmatpush.bf16.xpose.msra.mxu0 0
    %2943 = vmatpush.bf16.xpose.msra.mxu0 0
    %2944 = vmatpush.bf16.xpose.msra.mxu0 0
    %2945 = vmatpush.bf16.xpose.msra.mxu0 0
    %2946 = vmatpush.bf16.xpose.msra.mxu0 0
    %2947 = vmatpush.bf16.xpose.msra.mxu0 0
    %2948 = vmatpush.bf16.xpose.msra.mxu0 %v2939
    %2949 = vmatmul.bf16.gmra.mxu0 %v2936
    %v2950 = vpop.f32.mrf.mxu0
    %v2951 = vadd.f32 %v2713, %v2950
    %v2952 = vpop.f32.mrf.mxu0
    %v2953 = vadd.f32 %v2714, %v2952
    %2954 = vdwg.mxu0
    %vm2955 = vcmask 130048
    %v2956 = vsel %vm2955, %v2951, -inf
    %2957 = vmax.xlane.f32.xlu0 %v2956
    %v2958 = vpop.xlane.xlu0 %2957
    %v2959 = vsel %vm2955, %v2953, -inf
    %2960 = vmax.xlane.f32.xlu0 %v2959
    %v2961 = vpop.xlane.xlu0 %2960
    %v2962 = vsub.f32 %v2951, %v2958
    %v2963 = vsub.f32 %v2953, %v2961
    %v2964 = vmul.f32 %v2962, 1.442695
    %v2965 = vpow.pop %v2964
    %v2966 = vmul.f32 %v2963, 1.442695
    %v2967 = vpow.pop %v2966
    %v2968 = vsel %vm2955, %v2965, 0.0
    %2969 = vadd.xlane.f32.xlu0 %v2968
    %v2970 = vpop.xlane.xlu0 %2969
    %v2971 = vsel %vm2955, %v2967, 0.0
    %2972 = vadd.xlane.f32.xlu0 %v2971
    %v2973 = vpop.xlane.xlu0 %2972
    %v2974 = vrcp.pop %v2970
    %v2975 = vrcp.pop %v2973
    %v2976 = vmul.f32 %v2965, %v2974
    %v2977 = vmul.f32 %v2967, %v2975
    %v2978 = vpack.c.bf16 %v2977, %v2976
    %v2979 = vpack.c.bf16 %v2926, %v2924
    %v2981 = vsel %vm2955, %v2978, 0
    %2983 = vmatpush.bf16.msra.mxu0 0
    %2984 = vmatpush.bf16.msra.mxu0 0
    %2985 = vmatpush.bf16.msra.mxu0 0
    %2986 = vmatpush.bf16.msra.mxu0 0
    %2987 = vmatpush.bf16.msra.mxu0 0
    %2988 = vmatpush.bf16.msra.mxu0 0
    %2989 = vmatpush.bf16.msra.mxu0 0
    %2990 = vmatpush.bf16.msra.mxu0 %v2979
    %2991 = vmatmul.bf16.gmra.mxu0 %v2981
    %v2992 = vpop.f32.mrf.mxu0
    %v2993 = vadd.f32 0.0, %v2992
    %v2994 = vpop.f32.mrf.mxu0
    %v2995 = vadd.f32 0.0, %v2994
    %2996 = vdwg.mxu0
    %v2997 = vpack.c.bf16 %v2995, %v2993
    %v2998 = vpack.c.bf16 %v2928, %v2928
    %3000 = vrot.lane.b32.xlu0 %v2933, 120
    %v3001 = vpop.permute.xlu0 %3000
    %3003 = vrot.lane.b32.xlu0 %v2934, 120
    %v3004 = vpop.permute.xlu0 %3003
    %v3006 = vsel %vm1409, %v3001, 0
    %v3009 = vsel %vm1409, %v3004, 0
    %3011 = vmatpush.bf16.xpose.msra.mxu0 0
    %3012 = vmatpush.bf16.xpose.msra.mxu0 0
    %3013 = vmatpush.bf16.xpose.msra.mxu0 0
    %3014 = vmatpush.bf16.xpose.msra.mxu0 0
    %3015 = vmatpush.bf16.xpose.msra.mxu0 0
    %3016 = vmatpush.bf16.xpose.msra.mxu0 0
    %3017 = vmatpush.bf16.xpose.msra.mxu0 0
    %3018 = vmatpush.bf16.xpose.msra.mxu0 %v3009
    %3019 = vmatmul.bf16.gmra.mxu0 %v3006
    %v3020 = vpop.f32.mrf.mxu0
    %v3021 = vadd.f32 %v2713, %v3020
    %v3022 = vpop.f32.mrf.mxu0
    %v3023 = vadd.f32 %v2714, %v3022
    %3024 = vdwg.mxu0
    %v3025 = vsel %vm2955, %v3021, -inf
    %3026 = vmax.xlane.f32.xlu0 %v3025
    %v3027 = vpop.xlane.xlu0 %3026
    %v3028 = vsel %vm2955, %v3023, -inf
    %3029 = vmax.xlane.f32.xlu0 %v3028
    %v3030 = vpop.xlane.xlu0 %3029
    %v3031 = vsub.f32 %v3021, %v3027
    %v3032 = vsub.f32 %v3023, %v3030
    %v3033 = vmul.f32 %v3031, 1.442695
    %v3034 = vpow.pop %v3033
    %v3035 = vmul.f32 %v3032, 1.442695
    %v3036 = vpow.pop %v3035
    %v3037 = vsel %vm2955, %v3034, 0.0
    %3038 = vadd.xlane.f32.xlu0 %v3037
    %v3039 = vpop.xlane.xlu0 %3038
    %v3040 = vsel %vm2955, %v3036, 0.0
    %3041 = vadd.xlane.f32.xlu0 %v3040
    %v3042 = vpop.xlane.xlu0 %3041
    %v3043 = vrcp.pop %v3039
    %v3044 = vrcp.pop %v3042
    %v3045 = vmul.f32 %v3034, %v3043
    %v3046 = vmul.f32 %v3036, %v3044
    %v3047 = vpack.c.bf16 %v3046, %v3045
    %3049 = vrot.lane.b32.xlu0 %v2979, 120
    %v3050 = vpop.permute.xlu0 %3049
    %v3053 = vsel %vm2955, %v3047, 0
    %3055 = vmatpush.bf16.msra.mxu0 0
    %3056 = vmatpush.bf16.msra.mxu0 0
    %3057 = vmatpush.bf16.msra.mxu0 0
    %3058 = vmatpush.bf16.msra.mxu0 0
    %3059 = vmatpush.bf16.msra.mxu0 0
    %3060 = vmatpush.bf16.msra.mxu0 0
    %3061 = vmatpush.bf16.msra.mxu0 0
    %3062 = vmatpush.bf16.msra.mxu0 %v3050
    %3063 = vmatmul.bf16.gmra.mxu0 %v3053
    %v3064 = vpop.f32.mrf.mxu0
    %v3065 = vadd.f32 0.0, %v3064
    %v3066 = vpop.f32.mrf.mxu0
    %v3067 = vadd.f32 0.0, %v3066
    %3068 = vdwg.mxu0
    %v3069 = vpack.c.bf16 %v3067, %v3065
    %v3070 = vpack.c.bf16 %v2929, %v2929
    %v3072 = vsel %vm1409, %v3069, 0
    %v3075 = vsel %vm1028, %v3070, 0
    %3077 = vmatpush.bf16.msra.mxu0 0
    %3078 = vmatpush.bf16.msra.mxu0 0
    %3079 = vmatpush.bf16.msra.mxu0 0
    %3080 = vmatpush.bf16.msra.mxu0 0
    %3081 = vmatpush.bf16.msra.mxu0 0
    %3082 = vmatpush.bf16.msra.mxu0 0
    %3083 = vmatpush.bf16.msra.mxu0 0
    %3084 = vmatpush.bf16.msra.mxu0 %v3075
    %3085 = vmatmul.bf16.gmra.mxu0 %v3072
    %v3086 = vpop.f32.mrf.mxu0
    %v3087 = vadd.f32 0.0, %v3086
    %v3088 = vpop.f32.mrf.mxu0
    %v3089 = vadd.f32 0.0, %v3088
    %3090 = vdwg.mxu0
    %v3092 = vsel %vm1409, %v2997, 0
    %v3095 = vsel %vm1028, %v2998, 0
    %3097 = vmatpush.bf16.msra.mxu0 0
    %3098 = vmatpush.bf16.msra.mxu0 0
    %3099 = vmatpush.bf16.msra.mxu0 0
    %3100 = vmatpush.bf16.msra.mxu0 0
    %3101 = vmatpush.bf16.msra.mxu0 0
    %3102 = vmatpush.bf16.msra.mxu0 0
    %3103 = vmatpush.bf16.msra.mxu0 0
    %3104 = vmatpush.bf16.msra.mxu0 %v3095
    %3105 = vmatmul.bf16.gmra.mxu0 %v3092
    %v3106 = vpop.f32.mrf.mxu0
    %v3107 = vadd.f32 %v3087, %v3106
    %v3108 = vpop.f32.mrf.mxu0
    %v3109 = vadd.f32 %v3089, %v3108
    %3110 = vdwg.mxu0
    %3111 = vrot.lane.b32.xlu0 %v2933, 112
    %v3112 = vpop.permute.xlu0 %3111
    %3113 = vrot.lane.b32.xlu0 %v2934, 112
    %v3114 = vpop.permute.xlu0 %3113
    %v3116 = vsel %vm1409, %v3112, 0
    %v3119 = vsel %vm1409, %v3114, 0
    %3121 = vmatpush.bf16.xpose.msra.mxu0 0
    %3122 = vmatpush.bf16.xpose.msra.mxu0 0
    %3123 = vmatpush.bf16.xpose.msra.mxu0 0
    %3124 = vmatpush.bf16.xpose.msra.mxu0 0
    %3125 = vmatpush.bf16.xpose.msra.mxu0 0
    %3126 = vmatpush.bf16.xpose.msra.mxu0 0
    %3127 = vmatpush.bf16.xpose.msra.mxu0 0
    %3128 = vmatpush.bf16.xpose.msra.mxu0 %v3119
    %3129 = vmatmul.bf16.gmra.mxu0 %v3116
    %v3130 = vpop.f32.mrf.mxu0
    %v3131 = vadd.f32 %v2713, %v3130
    %v3132 = vpop.f32.mrf.mxu0
    %v3133 = vadd.f32 %v2714, %v3132
    %3134 = vdwg.mxu0
    %v3135 = vsel %vm2955, %v3131, -inf
    %3136 = vmax.xlane.f32.xlu0 %v3135
    %v3137 = vpop.xlane.xlu0 %3136
    %v3138 = vsel %vm2955, %v3133, -inf
    %3139 = vmax.xlane.f32.xlu0 %v3138
    %v3140 = vpop.xlane.xlu0 %3139
    %v3141 = vsub.f32 %v3131, %v3137
    %v3142 = vsub.f32 %v3133, %v3140
    %v3143 = vmul.f32 %v3141, 1.442695
    %v3144 = vpow.pop %v3143
    %v3145 = vmul.f32 %v3142, 1.442695
    %v3146 = vpow.pop %v3145
    %v3147 = vsel %vm2955, %v3144, 0.0
    %3148 = vadd.xlane.f32.xlu0 %v3147
    %v3149 = vpop.xlane.xlu0 %3148
    %v3150 = vsel %vm2955, %v3146, 0.0
    %3151 = vadd.xlane.f32.xlu0 %v3150
    %v3152 = vpop.xlane.xlu0 %3151
    %v3153 = vrcp.pop %v3149
    %v3154 = vrcp.pop %v3152
    %v3155 = vmul.f32 %v3144, %v3153
    %v3156 = vmul.f32 %v3146, %v3154
    %v3157 = vpack.c.bf16 %v3156, %v3155
    %3158 = vrot.lane.b32.xlu0 %v2979, 112
    %v3159 = vpop.permute.xlu0 %3158
    %v3162 = vsel %vm2955, %v3157, 0
    %3164 = vmatpush.bf16.msra.mxu0 0
    %3165 = vmatpush.bf16.msra.mxu0 0
    %3166 = vmatpush.bf16.msra.mxu0 0
    %3167 = vmatpush.bf16.msra.mxu0 0
    %3168 = vmatpush.bf16.msra.mxu0 0
    %3169 = vmatpush.bf16.msra.mxu0 0
    %3170 = vmatpush.bf16.msra.mxu0 0
    %3171 = vmatpush.bf16.msra.mxu0 %v3159
    %3172 = vmatmul.bf16.gmra.mxu0 %v3162
    %v3173 = vpop.f32.mrf.mxu0
    %v3174 = vadd.f32 0.0, %v3173
    %v3175 = vpop.f32.mrf.mxu0
    %v3176 = vadd.f32 0.0, %v3175
    %3177 = vdwg.mxu0
    %v3178 = vpack.c.bf16 %v3176, %v3174
    %v3179 = vpack.c.bf16 %v2930, %v2930
    %v3181 = vsel %vm1409, %v3178, 0
    %v3184 = vsel %vm1028, %v3179, 0
    %3186 = vmatpush.bf16.msra.mxu0 0
    %3187 = vmatpush.bf16.msra.mxu0 0
    %3188 = vmatpush.bf16.msra.mxu0 0
    %3189 = vmatpush.bf16.msra.mxu0 0
    %3190 = vmatpush.bf16.msra.mxu0 0
    %3191 = vmatpush.bf16.msra.mxu0 0
    %3192 = vmatpush.bf16.msra.mxu0 0
    %3193 = vmatpush.bf16.msra.mxu0 %v3184
    %3194 = vmatmul.bf16.gmra.mxu0 %v3181
    %v3195 = vpop.f32.mrf.mxu0
    %v3196 = vadd.f32 0.0, %v3195
    %v3197 = vpop.f32.mrf.mxu0
    %v3198 = vadd.f32 0.0, %v3197
    %3199 = vdwg.mxu0
    %v3200 = vadd.f32 %v3107, %v3196
    %v3201 = vadd.f32 %v3109, %v3198
    %3202 = vrot.lane.b32.xlu0 %v2933, 104
    %v3203 = vpop.permute.xlu0 %3202
    %3204 = vrot.lane.b32.xlu0 %v2934, 104
    %v3205 = vpop.permute.xlu0 %3204
    %v3207 = vsel %vm1409, %v3203, 0
    %v3210 = vsel %vm1409, %v3205, 0
    %3212 = vmatpush.bf16.xpose.msra.mxu0 0
    %3213 = vmatpush.bf16.xpose.msra.mxu0 0
    %3214 = vmatpush.bf16.xpose.msra.mxu0 0
    %3215 = vmatpush.bf16.xpose.msra.mxu0 0
    %3216 = vmatpush.bf16.xpose.msra.mxu0 0
    %3217 = vmatpush.bf16.xpose.msra.mxu0 0
    %3218 = vmatpush.bf16.xpose.msra.mxu0 0
    %3219 = vmatpush.bf16.xpose.msra.mxu0 %v3210
    %3220 = vmatmul.bf16.gmra.mxu0 %v3207
    %v3221 = vpop.f32.mrf.mxu0
    %v3222 = vadd.f32 %v2713, %v3221
    %v3223 = vpop.f32.mrf.mxu0
    %v3224 = vadd.f32 %v2714, %v3223
    %3225 = vdwg.mxu0
    %v3226 = vsel %vm2955, %v3222, -inf
    %3227 = vmax.xlane.f32.xlu0 %v3226
    %v3228 = vpop.xlane.xlu0 %3227
    %v3229 = vsel %vm2955, %v3224, -inf
    %3230 = vmax.xlane.f32.xlu0 %v3229
    %v3231 = vpop.xlane.xlu0 %3230
    %v3232 = vsub.f32 %v3222, %v3228
    %v3233 = vsub.f32 %v3224, %v3231
    %v3234 = vmul.f32 %v3232, 1.442695
    %v3235 = vpow.pop %v3234
    %v3236 = vmul.f32 %v3233, 1.442695
    %v3237 = vpow.pop %v3236
    %v3238 = vsel %vm2955, %v3235, 0.0
    %3239 = vadd.xlane.f32.xlu0 %v3238
    %v3240 = vpop.xlane.xlu0 %3239
    %v3241 = vsel %vm2955, %v3237, 0.0
    %3242 = vadd.xlane.f32.xlu0 %v3241
    %v3243 = vpop.xlane.xlu0 %3242
    %v3244 = vrcp.pop %v3240
    %v3245 = vrcp.pop %v3243
    %v3246 = vmul.f32 %v3235, %v3244
    %v3247 = vmul.f32 %v3237, %v3245
    %v3248 = vpack.c.bf16 %v3247, %v3246
    %3249 = vrot.lane.b32.xlu0 %v2979, 104
    %v3250 = vpop.permute.xlu0 %3249
    %v3253 = vsel %vm2955, %v3248, 0
    %3255 = vmatpush.bf16.msra.mxu0 0
    %3256 = vmatpush.bf16.msra.mxu0 0
    %3257 = vmatpush.bf16.msra.mxu0 0
    %3258 = vmatpush.bf16.msra.mxu0 0
    %3259 = vmatpush.bf16.msra.mxu0 0
    %3260 = vmatpush.bf16.msra.mxu0 0
    %3261 = vmatpush.bf16.msra.mxu0 0
    %3262 = vmatpush.bf16.msra.mxu0 %v3250
    %3263 = vmatmul.bf16.gmra.mxu0 %v3253
    %v3264 = vpop.f32.mrf.mxu0
    %v3265 = vadd.f32 0.0, %v3264
    %v3266 = vpop.f32.mrf.mxu0
    %v3267 = vadd.f32 0.0, %v3266
    %3268 = vdwg.mxu0
    %v3269 = vpack.c.bf16 %v3267, %v3265
    %v3270 = vpack.c.bf16 %v2931, %v2931
    %v3272 = vsel %vm1409, %v3269, 0
    %v3275 = vsel %vm1028, %v3270, 0
    %3277 = vmatpush.bf16.msra.mxu0 0
    %3278 = vmatpush.bf16.msra.mxu0 0
    %3279 = vmatpush.bf16.msra.mxu0 0
    %3280 = vmatpush.bf16.msra.mxu0 0
    %3281 = vmatpush.bf16.msra.mxu0 0
    %3282 = vmatpush.bf16.msra.mxu0 0
    %3283 = vmatpush.bf16.msra.mxu0 0
    %3284 = vmatpush.bf16.msra.mxu0 %v3275
    %3285 = vmatmul.bf16.gmra.mxu0 %v3272
    %v3286 = vpop.f32.mrf.mxu0
    %v3287 = vadd.f32 0.0, %v3286
    %v3288 = vpop.f32.mrf.mxu0
    %v3289 = vadd.f32 0.0, %v3288
    %3290 = vdwg.mxu0
    %v3291 = vadd.f32 %v3200, %v3287
    %v3292 = vadd.f32 %v3201, %v3289
    %v3294 = vperm.slane %v2932, 0
    %v3296 = vadd.f32 %v3291, %v3294
    %v3297 = vadd.f32 %v3292, %v3294
    %v3298 = vadd.f32 %v2711, %v3296
    %v3299 = vadd.f32 %v2712, %v3297
    %v3300 = vld [vmem:[#allocation10] sm:$0x1]
    %v3301 = vld [vmem:[#allocation9] sm:$0x1]
    %3302 = vadd.xlane.f32.xlu0 %v3298
    %v3303 = vpop.xlane.xlu0 %3302
    %3304 = vadd.xlane.f32.xlu0 %v3299
    %v3305 = vpop.xlane.xlu0 %3304
    %v3306 = vmul.f32 %v3303, 0.03125
    %v3307 = vmul.f32 %v3305, 0.03125
    %v3308 = vmul.f32 %v3298, %v3298
    %v3309 = vmul.f32 %v3299, %v3299
    %3310 = vadd.xlane.f32.xlu0 %v3308
    %v3311 = vpop.xlane.xlu0 %3310
    %3312 = vadd.xlane.f32.xlu0 %v3309
    %v3313 = vpop.xlane.xlu0 %3312
    %v3314 = vmul.f32 %v3311, 0.03125
    %v3315 = vmul.f32 %v3313, 0.03125
    %v3316 = vmul.f32 %v3306, %v3306
    %v3317 = vmul.f32 %v3307, %v3307
    %v3318 = vsub.f32 %v3314, %v3316
    %v3319 = vsub.f32 %v3315, %v3317
    %v3320 = vsub.f32 %v3298, %v3306
    %v3321 = vsub.f32 %v3299, %v3307
    %v3322 = vadd.f32 %v3318, 1e-05
    %v3323 = vadd.f32 %v3319, 1e-05
    %v3324 = vrsqrt.pop %v3322
    %v3325 = vmul.f32 %v3324, %v3322
    %v3326 = vmul.f32 %v3325, %v3324
    %v3327 = vmul.f32 0.5, %v3326
    %v3328 = vsub.f32 1.5, %v3327
    %v3329 = vmul.f32 %v3324, %v3328
    %vm3330 = vweird.f32 %v3322
    %vm3331 = vweird.f32 %v3324
    %vm3332 = vmor %vm3330, %vm3331
    %v3333 = vsel %vm3332, %v3324, %v3329
    %v3334 = vrsqrt.pop %v3323
    %v3335 = vmul.f32 %v3334, %v3323
    %v3336 = vmul.f32 %v3335, %v3334
    %v3337 = vmul.f32 0.5, %v3336
    %v3338 = vsub.f32 1.5, %v3337
    %v3339 = vmul.f32 %v3334, %v3338
    %vm3340 = vweird.f32 %v3323
    %vm3341 = vweird.f32 %v3334
    %vm3342 = vmor %vm3340, %vm3341
    %v3343 = vsel %vm3342, %v3334, %v3339
    %v3344 = vmul.f32 %v3320, %v3333
    %v3345 = vmul.f32 %v3321, %v3343
    %v3347 = vperm.slane %v3300, 0
    %v3349 = vmul.f32 %v3344, %v3347
    %v3350 = vmul.f32 %v3345, %v3347
    %v3352 = vperm.slane %v3301, 0
    %v3354 = vadd.f32 %v3349, %v3352
    %v3355 = vadd.f32 %v3350, %v3352
    %v3356 = vld [vmem:[%s25] sm:$0xf]
    %v3357 = vld [vmem:[%s25 + $0x4] sm:$0xf]
    %v3358 = vld [vmem:[%s25 + $0x8] sm:$0xf]
    %v3359 = vld [vmem:[%s25 + $0xc] sm:$0xf]
    %v3360 = vld [vmem:[%s25 + $0x10] sm:$0xf]
    %v3361 = vld [vmem:[%s25 + $0x14] sm:$0xf]
    %v3362 = vld [vmem:[%s25 + $0x18] sm:$0xf]
    %v3363 = vld [vmem:[%s25 + $0x1c] sm:$0xf]
    %v3364 = vld [vmem:[%s25 + $0x20] sm:$0xf]
    %v3365 = vld [vmem:[%s25 + $0x24] sm:$0xf]
    %v3366 = vld [vmem:[%s25 + $0x28] sm:$0xf]
    %v3367 = vld [vmem:[%s25 + $0x2c] sm:$0xf]
    %v3368 = vld [vmem:[%s25 + $0x30] sm:$0xf]
    %v3369 = vld [vmem:[%s25 + $0x34] sm:$0xf]
    %v3370 = vld [vmem:[%s25 + $0x38] sm:$0xf]
    %v3371 = vld [vmem:[%s25 + $0x3c] sm:$0xf]
    %v3372 = vld [vmem:[#allocation7] sm:$0x1]
    %v3373 = vpack.c.bf16 %v3355, %v3354
    %v3375 = vperm.slane %v3372, 0
    %v3393 = vunpack.c.l.b16 %v3356
    %v3394 = vunpack.c.l.b16 %v3357
    %v3395 = vunpack.c.l.b16 %v3358
    %v3396 = vunpack.c.l.b16 %v3359
    %v3397 = vunpack.c.l.b16 %v3360
    %v3398 = vunpack.c.l.b16 %v3361
    %v3399 = vunpack.c.l.b16 %v3362
    %v3400 = vunpack.c.l.b16 %v3363
    %v3401 = vunpack.c.l.b16 %v3364
    %v3402 = vunpack.c.l.b16 %v3365
    %v3403 = vunpack.c.l.b16 %v3366
    %v3404 = vunpack.c.l.b16 %v3367
    %v3405 = vunpack.c.l.b16 %v3368
    %v3406 = vunpack.c.l.b16 %v3369
    %v3407 = vunpack.c.l.b16 %v3370
    %v3408 = vunpack.c.l.b16 %v3371
    %v3409 = vpack.c.b16 %v3394, %v3393
    %v3410 = vpack.c.b16 %v3396, %v3395
    %v3411 = vpack.c.b16 %v3398, %v3397
    %v3412 = vpack.c.b16 %v3400, %v3399
    %v3413 = vpack.c.b16 %v3402, %v3401
    %v3414 = vpack.c.b16 %v3404, %v3403
    %v3415 = vpack.c.b16 %v3406, %v3405
    %v3416 = vpack.c.b16 %v3408, %v3407
    %3425 = vmatpush.bf16.msra.mxu0 %v3416
    %3426 = vmatpush.bf16.msra.mxu0 %v3415
    %3427 = vmatpush.bf16.msra.mxu0 %v3414
    %3428 = vmatpush.bf16.msra.mxu0 %v3413
    %3429 = vmatpush.bf16.msra.mxu0 %v3412
    %3430 = vmatpush.bf16.msra.mxu0 %v3411
    %3431 = vmatpush.bf16.msra.mxu0 %v3410
    %3432 = vmatpush.bf16.msra.mxu0 %v3409
    %3433 = vmatmul.bf16.gmra.mxu0 %v3373
    %v3434 = vpop.f32.mrf.mxu0
    %v3435 = vadd.f32 %v3375, %v3434
    %v3436 = vpop.f32.mrf.mxu0
    %v3437 = vadd.f32 %v3375, %v3436
    %3438 = vdwg.mxu0
    %v3439 = vld [vmem:[%s21] sm:$0xff]
    %v3440 = vld [vmem:[%s21 + $0x8] sm:$0xff]
    %v3441 = vld [vmem:[%s21 + $0x10] sm:$0xff]
    %v3442 = vld [vmem:[%s21 + $0x18] sm:$0xff]
    %v3443 = vld [vmem:[%s21 + $0x20] sm:$0xff]
    %v3444 = vld [vmem:[%s21 + $0x28] sm:$0xff]
    %v3445 = vld [vmem:[%s21 + $0x30] sm:$0xff]
    %v3446 = vld [vmem:[%s21 + $0x38] sm:$0xff]
    %v3447 = vld [vmem:[%s21 + $0x40] sm:$0xff]
    %v3448 = vld [vmem:[%s21 + $0x48] sm:$0xff]
    %v3449 = vld [vmem:[%s21 + $0x50] sm:$0xff]
    %v3450 = vld [vmem:[%s21 + $0x58] sm:$0xff]
    %v3451 = vld [vmem:[%s21 + $0x60] sm:$0xff]
    %v3452 = vld [vmem:[%s21 + $0x68] sm:$0xff]
    %v3453 = vld [vmem:[%s21 + $0x70] sm:$0xff]
    %v3454 = vld [vmem:[%s21 + $0x78] sm:$0xff]
    %v3455 = vld [vmem:[%s15] sm:$0x3]
    %v3456 = vpack.c.bf16 %v2710, %v2710
    %v3458 = vperm.slane %v3455, 0
    %v3459 = vperm.slane %v3455, 1
    %v3478 = vunpack.c.l.b16 %v3439
    %v3479 = vunpack.c.h.b16 %v3439
    %v3480 = vunpack.c.l.b16 %v3440
    %v3481 = vunpack.c.h.b16 %v3440
    %v3482 = vunpack.c.l.b16 %v3441
    %v3483 = vunpack.c.h.b16 %v3441
    %v3484 = vunpack.c.l.b16 %v3442
    %v3485 = vunpack.c.h.b16 %v3442
    %v3486 = vunpack.c.l.b16 %v3443
    %v3487 = vunpack.c.h.b16 %v3443
    %v3488 = vunpack.c.l.b16 %v3444
    %v3489 = vunpack.c.h.b16 %v3444
    %v3490 = vunpack.c.l.b16 %v3445
    %v3491 = vunpack.c.h.b16 %v3445
    %v3492 = vunpack.c.l.b16 %v3446
    %v3493 = vunpack.c.h.b16 %v3446
    %v3494 = vunpack.c.l.b16 %v3447
    %v3495 = vunpack.c.h.b16 %v3447
    %v3496 = vunpack.c.l.b16 %v3448
    %v3497 = vunpack.c.h.b16 %v3448
    %v3498 = vunpack.c.l.b16 %v3449
    %v3499 = vunpack.c.h.b16 %v3449
    %v3500 = vunpack.c.l.b16 %v3450
    %v3501 = vunpack.c.h.b16 %v3450
    %v3502 = vunpack.c.l.b16 %v3451
    %v3503 = vunpack.c.h.b16 %v3451
    %v3504 = vunpack.c.l.b16 %v3452
    %v3505 = vunpack.c.h.b16 %v3452
    %v3506 = vunpack.c.l.b16 %v3453
    %v3507 = vunpack.c.h.b16 %v3453
    %v3508 = vunpack.c.l.b16 %v3454
    %v3509 = vunpack.c.h.b16 %v3454
    %v3510 = vpack.c.b16 %v3480, %v3478
    %v3511 = vpack.c.b16 %v3481, %v3479
    %v3512 = vpack.c.b16 %v3484, %v3482
    %v3513 = vpack.c.b16 %v3485, %v3483
    %v3514 = vpack.c.b16 %v3488, %v3486
    %v3515 = vpack.c.b16 %v3489, %v3487
    %v3516 = vpack.c.b16 %v3492, %v3490
    %v3517 = vpack.c.b16 %v3493, %v3491
    %v3518 = vpack.c.b16 %v3496, %v3494
    %v3519 = vpack.c.b16 %v3497, %v3495
    %v3520 = vpack.c.b16 %v3500, %v3498
    %v3521 = vpack.c.b16 %v3501, %v3499
    %v3522 = vpack.c.b16 %v3504, %v3502
    %v3523 = vpack.c.b16 %v3505, %v3503
    %v3524 = vpack.c.b16 %v3508, %v3506
    %v3525 = vpack.c.b16 %v3509, %v3507
    %3542 = vmatpush.bf16.msra.mxu0 %v3524
    %3543 = vmatpush.bf16.msra.mxu0 %v3522
    %3544 = vmatpush.bf16.msra.mxu0 %v3520
    %3545 = vmatpush.bf16.msra.mxu0 %v3518
    %3546 = vmatpush.bf16.msra.mxu0 %v3516
    %3547 = vmatpush.bf16.msra.mxu0 %v3514
    %3548 = vmatpush.bf16.msra.mxu0 %v3512
    %3549 = vmatpush.bf16.msra.mxu0 %v3510
    %3550 = vmatmul.bf16.gmra.mxu0 %v3456
    %v3551 = vpop.f32.mrf.mxu0
    %v3552 = vadd.f32 %v3458, %v3551
    %v3553 = vpop.f32.mrf.mxu0
    %3554 = vdwg.mxu0
    %3555 = vmatpush.bf16.msra.mxu0 %v3525
    %3556 = vmatpush.bf16.msra.mxu0 %v3523
    %3557 = vmatpush.bf16.msra.mxu0 %v3521
    %3558 = vmatpush.bf16.msra.mxu0 %v3519
    %3559 = vmatpush.bf16.msra.mxu0 %v3517
    %3560 = vmatpush.bf16.msra.mxu0 %v3515
    %3561 = vmatpush.bf16.msra.mxu0 %v3513
    %3562 = vmatpush.bf16.msra.mxu0 %v3511
    %3563 = vmatmul.bf16.gmra.mxu0 %v3456
    %v3564 = vpop.f32.mrf.mxu0
    %v3565 = vadd.f32 %v3459, %v3564
    %v3566 = vpop.f32.mrf.mxu0
    %3567 = vdwg.mxu0
    %v3568 = vld [vmem:[%s23] sm:$0xff]
    %v3569 = vld [vmem:[%s23 + $0x8] sm:$0xff]
    %v3570 = vld [vmem:[%s23 + $0x10] sm:$0xff]
    %v3571 = vld [vmem:[%s23 + $0x18] sm:$0xff]
    %v3572 = vld [vmem:[#allocation6] sm:$0x1]
    %v3573 = vpack.c.bf16 %v3437, %v3435
    %v3574 = vpack.c.bf16 %v3552, %v3552
    %v3576 = vsel %vm1409, %v3573, 0
    %v3579 = vsel %vm1409, %v3574, 0
    %3581 = vmatpush.bf16.xpose.msra.mxu0 0
    %3582 = vmatpush.bf16.xpose.msra.mxu0 0
    %3583 = vmatpush.bf16.xpose.msra.mxu0 0
    %3584 = vmatpush.bf16.xpose.msra.mxu0 0
    %3585 = vmatpush.bf16.xpose.msra.mxu0 0
    %3586 = vmatpush.bf16.xpose.msra.mxu0 0
    %3587 = vmatpush.bf16.xpose.msra.mxu0 0
    %3588 = vmatpush.bf16.xpose.msra.mxu0 %v3579
    %3589 = vmatmul.bf16.gmra.mxu0 %v3576
    %v3590 = vpop.f32.mrf.mxu0
    %v3591 = vadd.f32 %v2715, %v3590
    %v3592 = vpop.f32.mrf.mxu0
    %v3593 = vadd.f32 %v2716, %v3592
    %3594 = vdwg.mxu0
    %v3595 = vsel %vm1409, %v3591, -inf
    %3596 = vmax.xlane.f32.xlu0 %v3595
    %v3597 = vpop.xlane.xlu0 %3596
    %v3598 = vsel %vm1409, %v3593, -inf
    %3599 = vmax.xlane.f32.xlu0 %v3598
    %v3600 = vpop.xlane.xlu0 %3599
    %v3601 = vsub.f32 %v3591, %v3597
    %v3602 = vsub.f32 %v3593, %v3600
    %v3603 = vmul.f32 %v3601, 1.442695
    %v3604 = vpow.pop %v3603
    %v3605 = vmul.f32 %v3602, 1.442695
    %v3606 = vpow.pop %v3605
    %v3607 = vsel %vm1409, %v3604, 0.0
    %3608 = vadd.xlane.f32.xlu0 %v3607
    %v3609 = vpop.xlane.xlu0 %3608
    %v3610 = vsel %vm1409, %v3606, 0.0
    %3611 = vadd.xlane.f32.xlu0 %v3610
    %v3612 = vpop.xlane.xlu0 %3611
    %v3613 = vrcp.pop %v3609
    %v3614 = vrcp.pop %v3612
    %v3615 = vmul.f32 %v3604, %v3613
    %v3616 = vmul.f32 %v3606, %v3614
    %v3617 = vpack.c.bf16 %v3616, %v3615
    %v3618 = vpack.c.bf16 %v3565, %v3565
    %v3620 = vsel %vm1409, %v3617, 0
    %v3623 = vsel %vm1028, %v3618, 0
    %3625 = vmatpush.bf16.msra.mxu0 0
    %3626 = vmatpush.bf16.msra.mxu0 0
    %3627 = vmatpush.bf16.msra.mxu0 0
    %3628 = vmatpush.bf16.msra.mxu0 0
    %3629 = vmatpush.bf16.msra.mxu0 0
    %3630 = vmatpush.bf16.msra.mxu0 0
    %3631 = vmatpush.bf16.msra.mxu0 0
    %3632 = vmatpush.bf16.msra.mxu0 %v3623
    %3633 = vmatmul.bf16.gmra.mxu0 %v3620
    %v3634 = vpop.f32.mrf.mxu0
    %v3635 = vadd.f32 0.0, %v3634
    %v3636 = vpop.f32.mrf.mxu0
    %v3637 = vadd.f32 0.0, %v3636
    %3638 = vdwg.mxu0
    %v3639 = vpack.c.bf16 %v3637, %v3635
    %v3640 = vpack.c.bf16 %v3568, %v3568
    %3642 = vrot.lane.b32.xlu0 %v3573, 120
    %v3643 = vpop.permute.xlu0 %3642
    %3645 = vrot.lane.b32.xlu0 %v3574, 120
    %v3646 = vpop.permute.xlu0 %3645
    %v3648 = vsel %vm1409, %v3643, 0
    %v3651 = vsel %vm1409, %v3646, 0
    %3653 = vmatpush.bf16.xpose.msra.mxu0 0
    %3654 = vmatpush.bf16.xpose.msra.mxu0 0
    %3655 = vmatpush.bf16.xpose.msra.mxu0 0
    %3656 = vmatpush.bf16.xpose.msra.mxu0 0
    %3657 = vmatpush.bf16.xpose.msra.mxu0 0
    %3658 = vmatpush.bf16.xpose.msra.mxu0 0
    %3659 = vmatpush.bf16.xpose.msra.mxu0 0
    %3660 = vmatpush.bf16.xpose.msra.mxu0 %v3651
    %3661 = vmatmul.bf16.gmra.mxu0 %v3648
    %v3662 = vpop.f32.mrf.mxu0
    %v3663 = vadd.f32 %v2715, %v3662
    %v3664 = vpop.f32.mrf.mxu0
    %v3665 = vadd.f32 %v2716, %v3664
    %3666 = vdwg.mxu0
    %v3667 = vsel %vm1409, %v3663, -inf
    %3668 = vmax.xlane.f32.xlu0 %v3667
    %v3669 = vpop.xlane.xlu0 %3668
    %v3670 = vsel %vm1409, %v3665, -inf
    %3671 = vmax.xlane.f32.xlu0 %v3670
    %v3672 = vpop.xlane.xlu0 %3671
    %v3673 = vsub.f32 %v3663, %v3669
    %v3674 = vsub.f32 %v3665, %v3672
    %v3675 = vmul.f32 %v3673, 1.442695
    %v3676 = vpow.pop %v3675
    %v3677 = vmul.f32 %v3674, 1.442695
    %v3678 = vpow.pop %v3677
    %v3679 = vsel %vm1409, %v3676, 0.0
    %3680 = vadd.xlane.f32.xlu0 %v3679
    %v3681 = vpop.xlane.xlu0 %3680
    %v3682 = vsel %vm1409, %v3678, 0.0
    %3683 = vadd.xlane.f32.xlu0 %v3682
    %v3684 = vpop.xlane.xlu0 %3683
    %v3685 = vrcp.pop %v3681
    %v3686 = vrcp.pop %v3684
    %v3687 = vmul.f32 %v3676, %v3685
    %v3688 = vmul.f32 %v3678, %v3686
    %v3689 = vpack.c.bf16 %v3688, %v3687
    %3691 = vrot.lane.b32.xlu0 %v3618, 120
    %v3692 = vpop.permute.xlu0 %3691
    %v3694 = vsel %vm1409, %v3689, 0
    %v3697 = vsel %vm1028, %v3692, 0
    %3699 = vmatpush.bf16.msra.mxu0 0
    %3700 = vmatpush.bf16.msra.mxu0 0
    %3701 = vmatpush.bf16.msra.mxu0 0
    %3702 = vmatpush.bf16.msra.mxu0 0
    %3703 = vmatpush.bf16.msra.mxu0 0
    %3704 = vmatpush.bf16.msra.mxu0 0
    %3705 = vmatpush.bf16.msra.mxu0 0
    %3706 = vmatpush.bf16.msra.mxu0 %v3697
    %3707 = vmatmul.bf16.gmra.mxu0 %v3694
    %v3708 = vpop.f32.mrf.mxu0
    %v3709 = vadd.f32 0.0, %v3708
    %v3710 = vpop.f32.mrf.mxu0
    %v3711 = vadd.f32 0.0, %v3710
    %3712 = vdwg.mxu0
    %v3713 = vpack.c.bf16 %v3711, %v3709
    %v3714 = vpack.c.bf16 %v3569, %v3569
    %v3716 = vsel %vm1409, %v3713, 0
    %v3719 = vsel %vm1028, %v3714, 0
    %3721 = vmatpush.bf16.msra.mxu0 0
    %3722 = vmatpush.bf16.msra.mxu0 0
    %3723 = vmatpush.bf16.msra.mxu0 0
    %3724 = vmatpush.bf16.msra.mxu0 0
    %3725 = vmatpush.bf16.msra.mxu0 0
    %3726 = vmatpush.bf16.msra.mxu0 0
    %3727 = vmatpush.bf16.msra.mxu0 0
    %3728 = vmatpush.bf16.msra.mxu0 %v3719
    %3729 = vmatmul.bf16.gmra.mxu0 %v3716
    %v3730 = vpop.f32.mrf.mxu0
    %v3731 = vadd.f32 0.0, %v3730
    %v3732 = vpop.f32.mrf.mxu0
    %v3733 = vadd.f32 0.0, %v3732
    %3734 = vdwg.mxu0
    %v3736 = vsel %vm1409, %v3639, 0
    %v3739 = vsel %vm1028, %v3640, 0
    %3741 = vmatpush.bf16.msra.mxu0 0
    %3742 = vmatpush.bf16.msra.mxu0 0
    %3743 = vmatpush.bf16.msra.mxu0 0
    %3744 = vmatpush.bf16.msra.mxu0 0
    %3745 = vmatpush.bf16.msra.mxu0 0
    %3746 = vmatpush.bf16.msra.mxu0 0
    %3747 = vmatpush.bf16.msra.mxu0 0
    %3748 = vmatpush.bf16.msra.mxu0 %v3739
    %3749 = vmatmul.bf16.gmra.mxu0 %v3736
    %v3750 = vpop.f32.mrf.mxu0
    %v3751 = vadd.f32 %v3731, %v3750
    %v3752 = vpop.f32.mrf.mxu0
    %v3753 = vadd.f32 %v3733, %v3752
    %3754 = vdwg.mxu0
    %3755 = vrot.lane.b32.xlu0 %v3573, 112
    %v3756 = vpop.permute.xlu0 %3755
    %3757 = vrot.lane.b32.xlu0 %v3574, 112
    %v3758 = vpop.permute.xlu0 %3757
    %v3760 = vsel %vm1409, %v3756, 0
    %v3763 = vsel %vm1409, %v3758, 0
    %3765 = vmatpush.bf16.xpose.msra.mxu0 0
    %3766 = vmatpush.bf16.xpose.msra.mxu0 0
    %3767 = vmatpush.bf16.xpose.msra.mxu0 0
    %3768 = vmatpush.bf16.xpose.msra.mxu0 0
    %3769 = vmatpush.bf16.xpose.msra.mxu0 0
    %3770 = vmatpush.bf16.xpose.msra.mxu0 0
    %3771 = vmatpush.bf16.xpose.msra.mxu0 0
    %3772 = vmatpush.bf16.xpose.msra.mxu0 %v3763
    %3773 = vmatmul.bf16.gmra.mxu0 %v3760
    %v3774 = vpop.f32.mrf.mxu0
    %v3775 = vadd.f32 %v2715, %v3774
    %v3776 = vpop.f32.mrf.mxu0
    %v3777 = vadd.f32 %v2716, %v3776
    %3778 = vdwg.mxu0
    %v3779 = vsel %vm1409, %v3775, -inf
    %3780 = vmax.xlane.f32.xlu0 %v3779
    %v3781 = vpop.xlane.xlu0 %3780
    %v3782 = vsel %vm1409, %v3777, -inf
    %3783 = vmax.xlane.f32.xlu0 %v3782
    %v3784 = vpop.xlane.xlu0 %3783
    %v3785 = vsub.f32 %v3775, %v3781
    %v3786 = vsub.f32 %v3777, %v3784
    %v3787 = vmul.f32 %v3785, 1.442695
    %v3788 = vpow.pop %v3787
    %v3789 = vmul.f32 %v3786, 1.442695
    %v3790 = vpow.pop %v3789
    %v3791 = vsel %vm1409, %v3788, 0.0
    %3792 = vadd.xlane.f32.xlu0 %v3791
    %v3793 = vpop.xlane.xlu0 %3792
    %v3794 = vsel %vm1409, %v3790, 0.0
    %3795 = vadd.xlane.f32.xlu0 %v3794
    %v3796 = vpop.xlane.xlu0 %3795
    %v3797 = vrcp.pop %v3793
    %v3798 = vrcp.pop %v3796
    %v3799 = vmul.f32 %v3788, %v3797
    %v3800 = vmul.f32 %v3790, %v3798
    %v3801 = vpack.c.bf16 %v3800, %v3799
    %3802 = vrot.lane.b32.xlu0 %v3618, 112
    %v3803 = vpop.permute.xlu0 %3802
    %v3805 = vsel %vm1409, %v3801, 0
    %v3808 = vsel %vm1028, %v3803, 0
    %3810 = vmatpush.bf16.msra.mxu0 0
    %3811 = vmatpush.bf16.msra.mxu0 0
    %3812 = vmatpush.bf16.msra.mxu0 0
    %3813 = vmatpush.bf16.msra.mxu0 0
    %3814 = vmatpush.bf16.msra.mxu0 0
    %3815 = vmatpush.bf16.msra.mxu0 0
    %3816 = vmatpush.bf16.msra.mxu0 0
    %3817 = vmatpush.bf16.msra.mxu0 %v3808
    %3818 = vmatmul.bf16.gmra.mxu0 %v3805
    %v3819 = vpop.f32.mrf.mxu0
    %v3820 = vadd.f32 0.0, %v3819
    %v3821 = vpop.f32.mrf.mxu0
    %v3822 = vadd.f32 0.0, %v3821
    %3823 = vdwg.mxu0
    %v3824 = vpack.c.bf16 %v3822, %v3820
    %v3825 = vpack.c.bf16 %v3570, %v3570
    %v3827 = vsel %vm1409, %v3824, 0
    %v3830 = vsel %vm1028, %v3825, 0
    %3832 = vmatpush.bf16.msra.mxu0 0
    %3833 = vmatpush.bf16.msra.mxu0 0
    %3834 = vmatpush.bf16.msra.mxu0 0
    %3835 = vmatpush.bf16.msra.mxu0 0
    %3836 = vmatpush.bf16.msra.mxu0 0
    %3837 = vmatpush.bf16.msra.mxu0 0
    %3838 = vmatpush.bf16.msra.mxu0 0
    %3839 = vmatpush.bf16.msra.mxu0 %v3830
    %3840 = vmatmul.bf16.gmra.mxu0 %v3827
    %v3841 = vpop.f32.mrf.mxu0
    %v3842 = vadd.f32 0.0, %v3841
    %v3843 = vpop.f32.mrf.mxu0
    %v3844 = vadd.f32 0.0, %v3843
    %3845 = vdwg.mxu0
    %v3846 = vadd.f32 %v3751, %v3842
    %v3847 = vadd.f32 %v3753, %v3844
    %3848 = vrot.lane.b32.xlu0 %v3573, 104
    %v3849 = vpop.permute.xlu0 %3848
    %3850 = vrot.lane.b32.xlu0 %v3574, 104
    %v3851 = vpop.permute.xlu0 %3850
    %v3853 = vsel %vm1409, %v3849, 0
    %v3856 = vsel %vm1409, %v3851, 0
    %3858 = vmatpush.bf16.xpose.msra.mxu0 0
    %3859 = vmatpush.bf16.xpose.msra.mxu0 0
    %3860 = vmatpush.bf16.xpose.msra.mxu0 0
    %3861 = vmatpush.bf16.xpose.msra.mxu0 0
    %3862 = vmatpush.bf16.xpose.msra.mxu0 0
    %3863 = vmatpush.bf16.xpose.msra.mxu0 0
    %3864 = vmatpush.bf16.xpose.msra.mxu0 0
    %3865 = vmatpush.bf16.xpose.msra.mxu0 %v3856
    %3866 = vmatmul.bf16.gmra.mxu0 %v3853
    %v3867 = vpop.f32.mrf.mxu0
    %v3868 = vadd.f32 %v2715, %v3867
    %v3869 = vpop.f32.mrf.mxu0
    %v3870 = vadd.f32 %v2716, %v3869
    %3871 = vdwg.mxu0
    %v3872 = vsel %vm1409, %v3868, -inf
    %3873 = vmax.xlane.f32.xlu0 %v3872
    %v3874 = vpop.xlane.xlu0 %3873
    %v3875 = vsel %vm1409, %v3870, -inf
    %3876 = vmax.xlane.f32.xlu0 %v3875
    %v3877 = vpop.xlane.xlu0 %3876
    %v3878 = vsub.f32 %v3868, %v3874
    %v3879 = vsub.f32 %v3870, %v3877
    %v3880 = vmul.f32 %v3878, 1.442695
    %v3881 = vpow.pop %v3880
    %v3882 = vmul.f32 %v3879, 1.442695
    %v3883 = vpow.pop %v3882
    %v3884 = vsel %vm1409, %v3881, 0.0
    %3885 = vadd.xlane.f32.xlu0 %v3884
    %v3886 = vpop.xlane.xlu0 %3885
    %v3887 = vsel %vm1409, %v3883, 0.0
    %3888 = vadd.xlane.f32.xlu0 %v3887
    %v3889 = vpop.xlane.xlu0 %3888
    %v3890 = vrcp.pop %v3886
    %v3891 = vrcp.pop %v3889
    %v3892 = vmul.f32 %v3881, %v3890
    %v3893 = vmul.f32 %v3883, %v3891
    %v3894 = vpack.c.bf16 %v3893, %v3892
    %3895 = vrot.lane.b32.xlu0 %v3618, 104
    %v3896 = vpop.permute.xlu0 %3895
    %v3898 = vsel %vm1409, %v3894, 0
    %v3901 = vsel %vm1028, %v3896, 0
    %3903 = vmatpush.bf16.msra.mxu0 0
    %3904 = vmatpush.bf16.msra.mxu0 0
    %3905 = vmatpush.bf16.msra.mxu0 0
    %3906 = vmatpush.bf16.msra.mxu0 0
    %3907 = vmatpush.bf16.msra.mxu0 0
    %3908 = vmatpush.bf16.msra.mxu0 0
    %3909 = vmatpush.bf16.msra.mxu0 0
    %3910 = vmatpush.bf16.msra.mxu0 %v3901
    %3911 = vmatmul.bf16.gmra.mxu0 %v3898
    %v3912 = vpop.f32.mrf.mxu0
    %v3913 = vadd.f32 0.0, %v3912
    %v3914 = vpop.f32.mrf.mxu0
    %v3915 = vadd.f32 0.0, %v3914
    %3916 = vdwg.mxu0
    %v3917 = vpack.c.bf16 %v3915, %v3913
    %v3918 = vpack.c.bf16 %v3571, %v3571
    %v3920 = vsel %vm1409, %v3917, 0
    %v3923 = vsel %vm1028, %v3918, 0
    %3925 = vmatpush.bf16.msra.mxu0 0
    %3926 = vmatpush.bf16.msra.mxu0 0
    %3927 = vmatpush.bf16.msra.mxu0 0
    %3928 = vmatpush.bf16.msra.mxu0 0
    %3929 = vmatpush.bf16.msra.mxu0 0
    %3930 = vmatpush.bf16.msra.mxu0 0
    %3931 = vmatpush.bf16.msra.mxu0 0
    %3932 = vmatpush.bf16.msra.mxu0 %v3923
    %3933 = vmatmul.bf16.gmra.mxu0 %v3920
    %v3934 = vpop.f32.mrf.mxu0
    %v3935 = vadd.f32 0.0, %v3934
    %v3936 = vpop.f32.mrf.mxu0
    %v3937 = vadd.f32 0.0, %v3936
    %3938 = vdwg.mxu0
    %v3939 = vadd.f32 %v3846, %v3935
    %v3940 = vadd.f32 %v3847, %v3937
    %v3942 = vperm.slane %v3572, 0
    %v3944 = vadd.f32 %v3939, %v3942
    %v3945 = vadd.f32 %v3940, %v3942
    %v3946 = vadd.f32 %v3354, %v3944
    %v3947 = vadd.f32 %v3355, %v3945
    %v3948 = vld [vmem:[#allocation13] sm:$0x1]
    %v3949 = vld [vmem:[#allocation12] sm:$0x1]
    %3950 = vadd.xlane.f32.xlu0 %v3946
    %v3951 = vpop.xlane.xlu0 %3950
    %3952 = vadd.xlane.f32.xlu0 %v3947
    %v3953 = vpop.xlane.xlu0 %3952
    %v3954 = vmul.f32 %v3951, 0.03125
    %v3955 = vmul.f32 %v3953, 0.03125
    %v3956 = vmul.f32 %v3946, %v3946
    %v3957 = vmul.f32 %v3947, %v3947
    %3958 = vadd.xlane.f32.xlu0 %v3956
    %v3959 = vpop.xlane.xlu0 %3958
    %3960 = vadd.xlane.f32.xlu0 %v3957
    %v3961 = vpop.xlane.xlu0 %3960
    %v3962 = vmul.f32 %v3959, 0.03125
    %v3963 = vmul.f32 %v3961, 0.03125
    %v3964 = vmul.f32 %v3954, %v3954
    %v3965 = vmul.f32 %v3955, %v3955
    %v3966 = vsub.f32 %v3962, %v3964
    %v3967 = vsub.f32 %v3963, %v3965
    %v3968 = vsub.f32 %v3946, %v3954
    %v3969 = vsub.f32 %v3947, %v3955
    %v3970 = vadd.f32 %v3966, 1e-05
    %v3971 = vadd.f32 %v3967, 1e-05
    %v3972 = vrsqrt.pop %v3970
    %v3973 = vmul.f32 %v3972, %v3970
    %v3974 = vmul.f32 %v3973, %v3972
    %v3975 = vmul.f32 0.5, %v3974
    %v3976 = vsub.f32 1.5, %v3975
    %v3977 = vmul.f32 %v3972, %v3976
    %vm3978 = vweird.f32 %v3970
    %vm3979 = vweird.f32 %v3972
    %vm3980 = vmor %vm3978, %vm3979
    %v3981 = vsel %vm3980, %v3972, %v3977
    %v3982 = vrsqrt.pop %v3971
    %v3983 = vmul.f32 %v3982, %v3971
    %v3984 = vmul.f32 %v3983, %v3982
    %v3985 = vmul.f32 0.5, %v3984
    %v3986 = vsub.f32 1.5, %v3985
    %v3987 = vmul.f32 %v3982, %v3986
    %vm3988 = vweird.f32 %v3971
    %vm3989 = vweird.f32 %v3982
    %vm3990 = vmor %vm3988, %vm3989
    %v3991 = vsel %vm3990, %v3982, %v3987
    %v3992 = vmul.f32 %v3968, %v3981
    %v3993 = vmul.f32 %v3969, %v3991
    %v3995 = vperm.slane %v3948, 0
    %v3997 = vmul.f32 %v3992, %v3995
    %v3998 = vmul.f32 %v3993, %v3995
    %v4000 = vperm.slane %v3949, 0
    %v4002 = vadd.f32 %v3997, %v4000
    %v4003 = vadd.f32 %v3998, %v4000
    %v4004 = vld [vmem:[%s47] sm:$0xf]
    %v4005 = vld [vmem:[%s47 + $0x4] sm:$0xf]
    %v4006 = vld [vmem:[%s47 + $0x8] sm:$0xf]
    %v4007 = vld [vmem:[%s47 + $0xc] sm:$0xf]
    %v4008 = vld [vmem:[%s47 + $0x10] sm:$0xf]
    %v4009 = vld [vmem:[%s47 + $0x14] sm:$0xf]
    %v4010 = vld [vmem:[%s47 + $0x18] sm:$0xf]
    %v4011 = vld [vmem:[%s47 + $0x1c] sm:$0xf]
    %v4012 = vld [vmem:[%s47 + $0x20] sm:$0xf]
    %v4013 = vld [vmem:[%s47 + $0x24] sm:$0xf]
    %v4014 = vld [vmem:[%s47 + $0x28] sm:$0xf]
    %v4015 = vld [vmem:[%s47 + $0x2c] sm:$0xf]
    %v4016 = vld [vmem:[%s47 + $0x30] sm:$0xf]
    %v4017 = vld [vmem:[%s47 + $0x34] sm:$0xf]
    %v4018 = vld [vmem:[%s47 + $0x38] sm:$0xf]
    %v4019 = vld [vmem:[%s47 + $0x3c] sm:$0xf]
    %v4020 = vld [vmem:[#allocation2] sm:$0x1]
    %v4021 = vld [vmem:[%s49] sm:$0xf]
    %v4022 = vld [vmem:[%s49 + $0x4] sm:$0xf]
    %v4023 = vld [vmem:[%s49 + $0x8] sm:$0xf]
    %v4024 = vld [vmem:[%s49 + $0xc] sm:$0xf]
    %v4025 = vld [vmem:[%s49 + $0x10] sm:$0xf]
    %v4026 = vld [vmem:[%s49 + $0x14] sm:$0xf]
    %v4027 = vld [vmem:[%s49 + $0x18] sm:$0xf]
    %v4028 = vld [vmem:[%s49 + $0x1c] sm:$0xf]
    %v4029 = vld [vmem:[%s49 + $0x20] sm:$0xf]
    %v4030 = vld [vmem:[%s49 + $0x24] sm:$0xf]
    %v4031 = vld [vmem:[%s49 + $0x28] sm:$0xf]
    %v4032 = vld [vmem:[%s49 + $0x2c] sm:$0xf]
    %v4033 = vld [vmem:[%s49 + $0x30] sm:$0xf]
    %v4034 = vld [vmem:[%s49 + $0x34] sm:$0xf]
    %v4035 = vld [vmem:[%s49 + $0x38] sm:$0xf]
    %v4036 = vld [vmem:[%s49 + $0x3c] sm:$0xf]
    %v4037 = vld [vmem:[#allocation4] sm:$0x1]
    %v4038 = vpack.c.bf16 %v4003, %v4002
    %v4040 = vperm.slane %v4020, 0
    %v4058 = vunpack.c.l.b16 %v4004
    %v4059 = vunpack.c.l.b16 %v4005
    %v4060 = vunpack.c.l.b16 %v4006
    %v4061 = vunpack.c.l.b16 %v4007
    %v4062 = vunpack.c.l.b16 %v4008
    %v4063 = vunpack.c.l.b16 %v4009
    %v4064 = vunpack.c.l.b16 %v4010
    %v4065 = vunpack.c.l.b16 %v4011
    %v4066 = vunpack.c.l.b16 %v4012
    %v4067 = vunpack.c.l.b16 %v4013
    %v4068 = vunpack.c.l.b16 %v4014
    %v4069 = vunpack.c.l.b16 %v4015
    %v4070 = vunpack.c.l.b16 %v4016
    %v4071 = vunpack.c.l.b16 %v4017
    %v4072 = vunpack.c.l.b16 %v4018
    %v4073 = vunpack.c.l.b16 %v4019
    %v4074 = vpack.c.b16 %v4059, %v4058
    %v4075 = vpack.c.b16 %v4061, %v4060
    %v4076 = vpack.c.b16 %v4063, %v4062
    %v4077 = vpack.c.b16 %v4065, %v4064
    %v4078 = vpack.c.b16 %v4067, %v4066
    %v4079 = vpack.c.b16 %v4069, %v4068
    %v4080 = vpack.c.b16 %v4071, %v4070
    %v4081 = vpack.c.b16 %v4073, %v4072
    %4090 = vmatpush.bf16.msra.mxu0 %v4081
    %4091 = vmatpush.bf16.msra.mxu0 %v4080
    %4092 = vmatpush.bf16.msra.mxu0 %v4079
    %4093 = vmatpush.bf16.msra.mxu0 %v4078
    %4094 = vmatpush.bf16.msra.mxu0 %v4077
    %4095 = vmatpush.bf16.msra.mxu0 %v4076
    %4096 = vmatpush.bf16.msra.mxu0 %v4075
    %4097 = vmatpush.bf16.msra.mxu0 %v4074
    %4098 = vmatmul.bf16.gmra.mxu0 %v4038
    %v4099 = vpop.f32.mrf.mxu0
    %v4100 = vadd.f32 %v4040, %v4099
    %v4101 = vpop.f32.mrf.mxu0
    %v4102 = vadd.f32 %v4040, %v4101
    %4103 = vdwg.mxu0
    %v4104 = vmax.f32 %v4100, 0.0
    %v4105 = vmax.f32 %v4102, 0.0
    %v4106 = vpack.c.bf16 %v4105, %v4104
    %v4108 = vperm.slane %v4037, 0
    %v4126 = vunpack.c.l.b16 %v4021
    %v4127 = vunpack.c.l.b16 %v4022
    %v4128 = vunpack.c.l.b16 %v4023
    %v4129 = vunpack.c.l.b16 %v4024
    %v4130 = vunpack.c.l.b16 %v4025
    %v4131 = vunpack.c.l.b16 %v4026
    %v4132 = vunpack.c.l.b16 %v4027
    %v4133 = vunpack.c.l.b16 %v4028
    %v4134 = vunpack.c.l.b16 %v4029
    %v4135 = vunpack.c.l.b16 %v4030
    %v4136 = vunpack.c.l.b16 %v4031
    %v4137 = vunpack.c.l.b16 %v4032
    %v4138 = vunpack.c.l.b16 %v4033
    %v4139 = vunpack.c.l.b16 %v4034
    %v4140 = vunpack.c.l.b16 %v4035
    %v4141 = vunpack.c.l.b16 %v4036
    %v4142 = vpack.c.b16 %v4127, %v4126
    %v4143 = vpack.c.b16 %v4129, %v4128
    %v4144 = vpack.c.b16 %v4131, %v4130
    %v4145 = vpack.c.b16 %v4133, %v4132
    %v4146 = vpack.c.b16 %v4135, %v4134
    %v4147 = vpack.c.b16 %v4137, %v4136
    %v4148 = vpack.c.b16 %v4139, %v4138
    %v4149 = vpack.c.b16 %v4141, %v4140
    %4158 = vmatpush.bf16.msra.mxu0 %v4149
    %4159 = vmatpush.bf16.msra.mxu0 %v4148
    %4160 = vmatpush.bf16.msra.mxu0 %v4147
    %4161 = vmatpush.bf16.msra.mxu0 %v4146
    %4162 = vmatpush.bf16.msra.mxu0 %v4145
    %4163 = vmatpush.bf16.msra.mxu0 %v4144
    %4164 = vmatpush.bf16.msra.mxu0 %v4143
    %4165 = vmatpush.bf16.msra.mxu0 %v4142
    %4166 = vmatmul.bf16.gmra.mxu0 %v4106
    %v4167 = vpop.f32.mrf.mxu0
    %v4168 = vadd.f32 %v4108, %v4167
    %v4169 = vpop.f32.mrf.mxu0
    %v4170 = vadd.f32 %v4108, %v4169
    %4171 = vdwg.mxu0
    %v4172 = vadd.f32 %v4002, %v4168
    %v4173 = vadd.f32 %v4003, %v4170
    %v4174 = vld [vmem:[#allocation16] sm:$0x1]
    %v4175 = vld [vmem:[#allocation15] sm:$0x1]
    %4176 = vadd.xlane.f32.xlu0 %v4172
    %v4177 = vpop.xlane.xlu0 %4176
    %4178 = vadd.xlane.f32.xlu0 %v4173
    %v4179 = vpop.xlane.xlu0 %4178
    %v4180 = vmul.f32 %v4177, 0.03125
    %v4181 = vmul.f32 %v4179, 0.03125
    %v4182 = vmul.f32 %v4172, %v4172
    %v4183 = vmul.f32 %v4173, %v4173
    %4184 = vadd.xlane.f32.xlu0 %v4182
    %v4185 = vpop.xlane.xlu0 %4184
    %4186 = vadd.xlane.f32.xlu0 %v4183
    %v4187 = vpop.xlane.xlu0 %4186
    %v4188 = vmul.f32 %v4185, 0.03125
    %v4189 = vmul.f32 %v4187, 0.03125
    %v4190 = vmul.f32 %v4180, %v4180
    %v4191 = vmul.f32 %v4181, %v4181
    %v4192 = vsub.f32 %v4188, %v4190
    %v4193 = vsub.f32 %v4189, %v4191
    %v4194 = vsub.f32 %v4172, %v4180
    %v4195 = vsub.f32 %v4173, %v4181
    %v4196 = vadd.f32 %v4192, 1e-05
    %v4197 = vadd.f32 %v4193, 1e-05
    %v4198 = vrsqrt.pop %v4196
    %v4199 = vmul.f32 %v4198, %v4196
    %v4200 = vmul.f32 %v4199, %v4198
    %v4201 = vmul.f32 0.5, %v4200
    %v4202 = vsub.f32 1.5, %v4201
    %v4203 = vmul.f32 %v4198, %v4202
    %vm4204 = vweird.f32 %v4196
    %vm4205 = vweird.f32 %v4198
    %vm4206 = vmor %vm4204, %vm4205
    %v4207 = vsel %vm4206, %v4198, %v4203
    %v4208 = vrsqrt.pop %v4197
    %v4209 = vmul.f32 %v4208, %v4197
    %v4210 = vmul.f32 %v4209, %v4208
    %v4211 = vmul.f32 0.5, %v4210
    %v4212 = vsub.f32 1.5, %v4211
    %v4213 = vmul.f32 %v4208, %v4212
    %vm4214 = vweird.f32 %v4197
    %vm4215 = vweird.f32 %v4208
    %vm4216 = vmor %vm4214, %vm4215
    %v4217 = vsel %vm4216, %v4208, %v4213
    %v4218 = vmul.f32 %v4194, %v4207
    %v4219 = vmul.f32 %v4195, %v4217
    %v4221 = vperm.slane %v4174, 0
    %v4223 = vmul.f32 %v4218, %v4221
    %v4224 = vmul.f32 %v4219, %v4221
    %v4226 = vperm.slane %v4175, 0
    %v4228 = vadd.f32 %v4223, %v4226
    %v4229 = vadd.f32 %v4224, %v4226
    %v4230 = vld [vmem:[%s85] sm:$0xff]
    %v4231 = vld [vmem:[%s85 + $0x8] sm:$0xf]
    %v4232 = vld [vmem:[%s85 + $0xc] sm:$0xff]
    %v4233 = vld [vmem:[%s85 + $0x14] sm:$0xf]
    %v4234 = vld [vmem:[%s85 + $0x18] sm:$0xff]
    %v4235 = vld [vmem:[%s85 + $0x20] sm:$0xf]
    %v4236 = vld [vmem:[%s85 + $0x24] sm:$0xff]
    %v4237 = vld [vmem:[%s85 + $0x2c] sm:$0xf]
    %v4238 = vld [vmem:[%s85 + $0x30] sm:$0xff]
    %v4239 = vld [vmem:[%s85 + $0x38] sm:$0xf]
    %v4240 = vld [vmem:[%s85 + $0x3c] sm:$0xff]
    %v4241 = vld [vmem:[%s85 + $0x44] sm:$0xf]
    %v4242 = vld [vmem:[%s85 + $0x48] sm:$0xff]
    %v4243 = vld [vmem:[%s85 + $0x50] sm:$0xf]
    %v4244 = vld [vmem:[%s85 + $0x54] sm:$0xff]
    %v4245 = vld [vmem:[%s85 + $0x5c] sm:$0xf]
    %v4246 = vld [vmem:[%s85 + $0x60] sm:$0xff]
    %v4247 = vld [vmem:[%s85 + $0x68] sm:$0xf]
    %v4248 = vld [vmem:[%s85 + $0x6c] sm:$0xff]
    %v4249 = vld [vmem:[%s85 + $0x74] sm:$0xf]
    %v4250 = vld [vmem:[%s85 + $0x78] sm:$0xff]
    %v4251 = vld [vmem:[%s85 + $0x80] sm:$0xf]
    %v4252 = vld [vmem:[%s85 + $0x84] sm:$0xff]
    %v4253 = vld [vmem:[%s85 + $0x8c] sm:$0xf]
    %v4254 = vld [vmem:[%s85 + $0x90] sm:$0xff]
    %v4255 = vld [vmem:[%s85 + $0x98] sm:$0xf]
    %v4256 = vld [vmem:[%s85 + $0x9c] sm:$0xff]
    %v4257 = vld [vmem:[%s85 + $0xa4] sm:$0xf]
    %v4258 = vld [vmem:[%s85 + $0xa8] sm:$0xff]
    %v4259 = vld [vmem:[%s85 + $0xb0] sm:$0xf]
    %v4260 = vld [vmem:[%s85 + $0xb4] sm:$0xff]
    %v4261 = vld [vmem:[%s85 + $0xbc] sm:$0xf]
    %v4262 = vld [vmem:[#allocation40] sm:$0x7]
    %v4263 = vpack.c.bf16 %v4229, %v4228
    %v4265 = vperm.slane %v4262, 0
    %v4266 = vperm.slane %v4262, 1
    %v4267 = vperm.slane %v4262, 2
    %v4303 = vunpack.c.l.b16 %v4230
    %v4304 = vunpack.c.h.b16 %v4230
    %v4305 = vunpack.c.l.b16 %v4231
    %v4306 = vunpack.c.l.b16 %v4232
    %v4307 = vunpack.c.h.b16 %v4232
    %v4308 = vunpack.c.l.b16 %v4233
    %v4309 = vunpack.c.l.b16 %v4234
    %v4310 = vunpack.c.h.b16 %v4234
    %v4311 = vunpack.c.l.b16 %v4235
    %v4312 = vunpack.c.l.b16 %v4236
    %v4313 = vunpack.c.h.b16 %v4236
    %v4314 = vunpack.c.l.b16 %v4237
    %v4315 = vunpack.c.l.b16 %v4238
    %v4316 = vunpack.c.h.b16 %v4238
    %v4317 = vunpack.c.l.b16 %v4239
    %v4318 = vunpack.c.l.b16 %v4240
    %v4319 = vunpack.c.h.b16 %v4240
    %v4320 = vunpack.c.l.b16 %v4241
    %v4321 = vunpack.c.l.b16 %v4242
    %v4322 = vunpack.c.h.b16 %v4242
    %v4323 = vunpack.c.l.b16 %v4243
    %v4324 = vunpack.c.l.b16 %v4244
    %v4325 = vunpack.c.h.b16 %v4244
    %v4326 = vunpack.c.l.b16 %v4245
    %v4327 = vunpack.c.l.b16 %v4246
    %v4328 = vunpack.c.h.b16 %v4246
    %v4329 = vunpack.c.l.b16 %v4247
    %v4330 = vunpack.c.l.b16 %v4248
    %v4331 = vunpack.c.h.b16 %v4248
    %v4332 = vunpack.c.l.b16 %v4249
    %v4333 = vunpack.c.l.b16 %v4250
    %v4334 = vunpack.c.h.b16 %v4250
    %v4335 = vunpack.c.l.b16 %v4251
    %v4336 = vunpack.c.l.b16 %v4252
    %v4337 = vunpack.c.h.b16 %v4252
    %v4338 = vunpack.c.l.b16 %v4253
    %v4339 = vunpack.c.l.b16 %v4254
    %v4340 = vunpack.c.h.b16 %v4254
    %v4341 = vunpack.c.l.b16 %v4255
    %v4342 = vunpack.c.l.b16 %v4256
    %v4343 = vunpack.c.h.b16 %v4256
    %v4344 = vunpack.c.l.b16 %v4257
    %v4345 = vunpack.c.l.b16 %v4258
    %v4346 = vunpack.c.h.b16 %v4258
    %v4347 = vunpack.c.l.b16 %v4259
    %v4348 = vunpack.c.l.b16 %v4260
    %v4349 = vunpack.c.h.b16 %v4260
    %v4350 = vunpack.c.l.b16 %v4261
    %v4351 = vpack.c.b16 %v4306, %v4303
    %v4352 = vpack.c.b16 %v4307, %v4304
    %v4353 = vpack.c.b16 %v4308, %v4305
    %v4354 = vpack.c.b16 %v4312, %v4309
    %v4355 = vpack.c.b16 %v4313, %v4310
    %v4356 = vpack.c.b16 %v4314, %v4311
    %v4357 = vpack.c.b16 %v4318, %v4315
    %v4358 = vpack.c.b16 %v4319, %v4316
    %v4359 = vpack.c.b16 %v4320, %v4317
    %v4360 = vpack.c.b16 %v4324, %v4321
    %v4361 = vpack.c.b16 %v4325, %v4322
    %v4362 = vpack.c.b16 %v4326, %v4323
    %v4363 = vpack.c.b16 %v4330, %v4327
    %v4364 = vpack.c.b16 %v4331, %v4328
    %v4365 = vpack.c.b16 %v4332, %v4329
    %v4366 = vpack.c.b16 %v4336, %v4333
    %v4367 = vpack.c.b16 %v4337, %v4334
    %v4368 = vpack.c.b16 %v4338, %v4335
    %v4369 = vpack.c.b16 %v4342, %v4339
    %v4370 = vpack.c.b16 %v4343, %v4340
    %v4371 = vpack.c.b16 %v4344, %v4341
    %v4372 = vpack.c.b16 %v4348, %v4345
    %v4373 = vpack.c.b16 %v4349, %v4346
    %v4374 = vpack.c.b16 %v4350, %v4347
    %4399 = vmatpush.bf16.msra.mxu0 %v4372
    %4400 = vmatpush.bf16.msra.mxu0 %v4369
    %4401 = vmatpush.bf16.msra.mxu0 %v4366
    %4402 = vmatpush.bf16.msra.mxu0 %v4363
    %4403 = vmatpush.bf16.msra.mxu0 %v4360
    %4404 = vmatpush.bf16.msra.mxu0 %v4357
    %4405 = vmatpush.bf16.msra.mxu0 %v4354
    %4406 = vmatpush.bf16.msra.mxu0 %v4351
    %4407 = vmatmul.bf16.gmra.mxu0 %v4263
    %v4408 = vpop.f32.mrf.mxu0
    %v4409 = vadd.f32 %v4265, %v4408
    %v4410 = vpop.f32.mrf.mxu0
    %v4411 = vadd.f32 %v4265, %v4410
    %4412 = vdwg.mxu0
    %4413 = vmatpush.bf16.msra.mxu0 %v4373
    %4414 = vmatpush.bf16.msra.mxu0 %v4370
    %4415 = vmatpush.bf16.msra.mxu0 %v4367
    %4416 = vmatpush.bf16.msra.mxu0 %v4364
    %4417 = vmatpush.bf16.msra.mxu0 %v4361
    %4418 = vmatpush.bf16.msra.mxu0 %v4358
    %4419 = vmatpush.bf16.msra.mxu0 %v4355
    %4420 = vmatpush.bf16.msra.mxu0 %v4352
    %4421 = vmatmul.bf16.gmra.mxu0 %v4263
    %v4422 = vpop.f32.mrf.mxu0
    %v4423 = vadd.f32 %v4266, %v4422
    %v4424 = vpop.f32.mrf.mxu0
    %v4425 = vadd.f32 %v4266, %v4424
    %4426 = vdwg.mxu0
    %4427 = vmatpush.bf16.msra.mxu0 %v4374
    %4428 = vmatpush.bf16.msra.mxu0 %v4371
    %4429 = vmatpush.bf16.msra.mxu0 %v4368
    %4430 = vmatpush.bf16.msra.mxu0 %v4365
    %4431 = vmatpush.bf16.msra.mxu0 %v4362
    %4432 = vmatpush.bf16.msra.mxu0 %v4359
    %4433 = vmatpush.bf16.msra.mxu0 %v4356
    %4434 = vmatpush.bf16.msra.mxu0 %v4353
    %4435 = vmatmul.bf16.gmra.mxu0 %v4263
    %v4436 = vpop.f32.mrf.mxu0
    %v4437 = vadd.f32 %v4267, %v4436
    %v4438 = vpop.f32.mrf.mxu0
    %v4439 = vadd.f32 %v4267, %v4438
    %4440 = vdwg.mxu0
    %v4441 = vld [vmem:[#allocation42] sm:$0xff]
    %v4442 = vld [vmem:[#allocation42 + $0x8] sm:$0xff]
    %v4443 = vld [vmem:[#allocation42 + $0x10] sm:$0xff]
    %v4444 = vld [vmem:[#allocation42 + $0x18] sm:$0xff]
    %v4445 = vld [vmem:[#allocation39] sm:$0x1]
    %v4446 = vpack.c.bf16 %v4411, %v4409
    %v4447 = vpack.c.bf16 %v4425, %v4423
    %v4449 = vsel %vm1409, %v4446, 0
    %v4452 = vsel %vm1409, %v4447, 0
    %4454 = vmatpush.bf16.xpose.msra.mxu0 0
    %4455 = vmatpush.bf16.xpose.msra.mxu0 0
    %4456 = vmatpush.bf16.xpose.msra.mxu0 0
    %4457 = vmatpush.bf16.xpose.msra.mxu0 0
    %4458 = vmatpush.bf16.xpose.msra.mxu0 0
    %4459 = vmatpush.bf16.xpose.msra.mxu0 0
    %4460 = vmatpush.bf16.xpose.msra.mxu0 0
    %4461 = vmatpush.bf16.xpose.msra.mxu0 %v4452
    %4462 = vmatmul.bf16.gmra.mxu0 %v4449
    %v4463 = vpop.f32.mrf.mxu0
    %v4464 = vadd.f32 %v2713, %v4463
    %v4465 = vpop.f32.mrf.mxu0
    %v4466 = vadd.f32 %v2714, %v4465
    %4467 = vdwg.mxu0
    %v4468 = vsel %vm2955, %v4464, -inf
    %4469 = vmax.xlane.f32.xlu0 %v4468
    %v4470 = vpop.xlane.xlu0 %4469
    %v4471 = vsel %vm2955, %v4466, -inf
    %4472 = vmax.xlane.f32.xlu0 %v4471
    %v4473 = vpop.xlane.xlu0 %4472
    %v4474 = vsub.f32 %v4464, %v4470
    %v4475 = vsub.f32 %v4466, %v4473
    %v4476 = vmul.f32 %v4474, 1.442695
    %v4477 = vpow.pop %v4476
    %v4478 = vmul.f32 %v4475, 1.442695
    %v4479 = vpow.pop %v4478
    %v4480 = vsel %vm2955, %v4477, 0.0
    %4481 = vadd.xlane.f32.xlu0 %v4480
    %v4482 = vpop.xlane.xlu0 %4481
    %v4483 = vsel %vm2955, %v4479, 0.0
    %4484 = vadd.xlane.f32.xlu0 %v4483
    %v4485 = vpop.xlane.xlu0 %4484
    %v4486 = vrcp.pop %v4482
    %v4487 = vrcp.pop %v4485
    %v4488 = vmul.f32 %v4477, %v4486
    %v4489 = vmul.f32 %v4479, %v4487
    %v4490 = vpack.c.bf16 %v4489, %v4488
    %v4491 = vpack.c.bf16 %v4439, %v4437
    %v4493 = vsel %vm2955, %v4490, 0
    %4495 = vmatpush.bf16.msra.mxu0 0
    %4496 = vmatpush.bf16.msra.mxu0 0
    %4497 = vmatpush.bf16.msra.mxu0 0
    %4498 = vmatpush.bf16.msra.mxu0 0
    %4499 = vmatpush.bf16.msra.mxu0 0
    %4500 = vmatpush.bf16.msra.mxu0 0
    %4501 = vmatpush.bf16.msra.mxu0 0
    %4502 = vmatpush.bf16.msra.mxu0 %v4491
    %4503 = vmatmul.bf16.gmra.mxu0 %v4493
    %v4504 = vpop.f32.mrf.mxu0
    %v4505 = vadd.f32 0.0, %v4504
    %v4506 = vpop.f32.mrf.mxu0
    %v4507 = vadd.f32 0.0, %v4506
    %4508 = vdwg.mxu0
    %v4509 = vpack.c.bf16 %v4507, %v4505
    %v4510 = vpack.c.bf16 %v4441, %v4441
    %4512 = vrot.lane.b32.xlu0 %v4446, 120
    %v4513 = vpop.permute.xlu0 %4512
    %4515 = vrot.lane.b32.xlu0 %v4447, 120
    %v4516 = vpop.permute.xlu0 %4515
    %v4518 = vsel %vm1409, %v4513, 0
    %v4521 = vsel %vm1409, %v4516, 0
    %4523 = vmatpush.bf16.xpose.msra.mxu0 0
    %4524 = vmatpush.bf16.xpose.msra.mxu0 0
    %4525 = vmatpush.bf16.xpose.msra.mxu0 0
    %4526 = vmatpush.bf16.xpose.msra.mxu0 0
    %4527 = vmatpush.bf16.xpose.msra.mxu0 0
    %4528 = vmatpush.bf16.xpose.msra.mxu0 0
    %4529 = vmatpush.bf16.xpose.msra.mxu0 0
    %4530 = vmatpush.bf16.xpose.msra.mxu0 %v4521
    %4531 = vmatmul.bf16.gmra.mxu0 %v4518
    %v4532 = vpop.f32.mrf.mxu0
    %v4533 = vadd.f32 %v2713, %v4532
    %v4534 = vpop.f32.mrf.mxu0
    %v4535 = vadd.f32 %v2714, %v4534
    %4536 = vdwg.mxu0
    %v4537 = vsel %vm2955, %v4533, -inf
    %4538 = vmax.xlane.f32.xlu0 %v4537
    %v4539 = vpop.xlane.xlu0 %4538
    %v4540 = vsel %vm2955, %v4535, -inf
    %4541 = vmax.xlane.f32.xlu0 %v4540
    %v4542 = vpop.xlane.xlu0 %4541
    %v4543 = vsub.f32 %v4533, %v4539
    %v4544 = vsub.f32 %v4535, %v4542
    %v4545 = vmul.f32 %v4543, 1.442695
    %v4546 = vpow.pop %v4545
    %v4547 = vmul.f32 %v4544, 1.442695
    %v4548 = vpow.pop %v4547
    %v4549 = vsel %vm2955, %v4546, 0.0
    %4550 = vadd.xlane.f32.xlu0 %v4549
    %v4551 = vpop.xlane.xlu0 %4550
    %v4552 = vsel %vm2955, %v4548, 0.0
    %4553 = vadd.xlane.f32.xlu0 %v4552
    %v4554 = vpop.xlane.xlu0 %4553
    %v4555 = vrcp.pop %v4551
    %v4556 = vrcp.pop %v4554
    %v4557 = vmul.f32 %v4546, %v4555
    %v4558 = vmul.f32 %v4548, %v4556
    %v4559 = vpack.c.bf16 %v4558, %v4557
    %4561 = vrot.lane.b32.xlu0 %v4491, 120
    %v4562 = vpop.permute.xlu0 %4561
    %v4565 = vsel %vm2955, %v4559, 0
    %4567 = vmatpush.bf16.msra.mxu0 0
    %4568 = vmatpush.bf16.msra.mxu0 0
    %4569 = vmatpush.bf16.msra.mxu0 0
    %4570 = vmatpush.bf16.msra.mxu0 0
    %4571 = vmatpush.bf16.msra.mxu0 0
    %4572 = vmatpush.bf16.msra.mxu0 0
    %4573 = vmatpush.bf16.msra.mxu0 0
    %4574 = vmatpush.bf16.msra.mxu0 %v4562
    %4575 = vmatmul.bf16.gmra.mxu0 %v4565
    %v4576 = vpop.f32.mrf.mxu0
    %v4577 = vadd.f32 0.0, %v4576
    %v4578 = vpop.f32.mrf.mxu0
    %v4579 = vadd.f32 0.0, %v4578
    %4580 = vdwg.mxu0
    %v4581 = vpack.c.bf16 %v4579, %v4577
    %v4582 = vpack.c.bf16 %v4442, %v4442
    %v4584 = vsel %vm1409, %v4581, 0
    %v4587 = vsel %vm1028, %v4582, 0
    %4589 = vmatpush.bf16.msra.mxu0 0
    %4590 = vmatpush.bf16.msra.mxu0 0
    %4591 = vmatpush.bf16.msra.mxu0 0
    %4592 = vmatpush.bf16.msra.mxu0 0
    %4593 = vmatpush.bf16.msra.mxu0 0
    %4594 = vmatpush.bf16.msra.mxu0 0
    %4595 = vmatpush.bf16.msra.mxu0 0
    %4596 = vmatpush.bf16.msra.mxu0 %v4587
    %4597 = vmatmul.bf16.gmra.mxu0 %v4584
    %v4598 = vpop.f32.mrf.mxu0
    %v4599 = vadd.f32 0.0, %v4598
    %v4600 = vpop.f32.mrf.mxu0
    %v4601 = vadd.f32 0.0, %v4600
    %4602 = vdwg.mxu0
    %v4604 = vsel %vm1409, %v4509, 0
    %v4607 = vsel %vm1028, %v4510, 0
    %4609 = vmatpush.bf16.msra.mxu0 0
    %4610 = vmatpush.bf16.msra.mxu0 0
    %4611 = vmatpush.bf16.msra.mxu0 0
    %4612 = vmatpush.bf16.msra.mxu0 0
    %4613 = vmatpush.bf16.msra.mxu0 0
    %4614 = vmatpush.bf16.msra.mxu0 0
    %4615 = vmatpush.bf16.msra.mxu0 0
    %4616 = vmatpush.bf16.msra.mxu0 %v4607
    %4617 = vmatmul.bf16.gmra.mxu0 %v4604
    %v4618 = vpop.f32.mrf.mxu0
    %v4619 = vadd.f32 %v4599, %v4618
    %v4620 = vpop.f32.mrf.mxu0
    %v4621 = vadd.f32 %v4601, %v4620
    %4622 = vdwg.mxu0
    %4623 = vrot.lane.b32.xlu0 %v4446, 112
    %v4624 = vpop.permute.xlu0 %4623
    %4625 = vrot.lane.b32.xlu0 %v4447, 112
    %v4626 = vpop.permute.xlu0 %4625
    %v4628 = vsel %vm1409, %v4624, 0
    %v4631 = vsel %vm1409, %v4626, 0
    %4633 = vmatpush.bf16.xpose.msra.mxu0 0
    %4634 = vmatpush.bf16.xpose.msra.mxu0 0
    %4635 = vmatpush.bf16.xpose.msra.mxu0 0
    %4636 = vmatpush.bf16.xpose.msra.mxu0 0
    %4637 = vmatpush.bf16.xpose.msra.mxu0 0
    %4638 = vmatpush.bf16.xpose.msra.mxu0 0
    %4639 = vmatpush.bf16.xpose.msra.mxu0 0
    %4640 = vmatpush.bf16.xpose.msra.mxu0 %v4631
    %4641 = vmatmul.bf16.gmra.mxu0 %v4628
    %v4642 = vpop.f32.mrf.mxu0
    %v4643 = vadd.f32 %v2713, %v4642
    %v4644 = vpop.f32.mrf.mxu0
    %v4645 = vadd.f32 %v2714, %v4644
    %4646 = vdwg.mxu0
    %v4647 = vsel %vm2955, %v4643, -inf
    %4648 = vmax.xlane.f32.xlu0 %v4647
    %v4649 = vpop.xlane.xlu0 %4648
    %v4650 = vsel %vm2955, %v4645, -inf
    %4651 = vmax.xlane.f32.xlu0 %v4650
    %v4652 = vpop.xlane.xlu0 %4651
    %v4653 = vsub.f32 %v4643, %v4649
    %v4654 = vsub.f32 %v4645, %v4652
    %v4655 = vmul.f32 %v4653, 1.442695
    %v4656 = vpow.pop %v4655
    %v4657 = vmul.f32 %v4654, 1.442695
    %v4658 = vpow.pop %v4657
    %v4659 = vsel %vm2955, %v4656, 0.0
    %4660 = vadd.xlane.f32.xlu0 %v4659
    %v4661 = vpop.xlane.xlu0 %4660
    %v4662 = vsel %vm2955, %v4658, 0.0
    %4663 = vadd.xlane.f32.xlu0 %v4662
    %v4664 = vpop.xlane.xlu0 %4663
    %v4665 = vrcp.pop %v4661
    %v4666 = vrcp.pop %v4664
    %v4667 = vmul.f32 %v4656, %v4665
    %v4668 = vmul.f32 %v4658, %v4666
    %v4669 = vpack.c.bf16 %v4668, %v4667
    %4670 = vrot.lane.b32.xlu0 %v4491, 112
    %v4671 = vpop.permute.xlu0 %4670
    %v4674 = vsel %vm2955, %v4669, 0
    %4676 = vmatpush.bf16.msra.mxu0 0
    %4677 = vmatpush.bf16.msra.mxu0 0
    %4678 = vmatpush.bf16.msra.mxu0 0
    %4679 = vmatpush.bf16.msra.mxu0 0
    %4680 = vmatpush.bf16.msra.mxu0 0
    %4681 = vmatpush.bf16.msra.mxu0 0
    %4682 = vmatpush.bf16.msra.mxu0 0
    %4683 = vmatpush.bf16.msra.mxu0 %v4671
    %4684 = vmatmul.bf16.gmra.mxu0 %v4674
    %v4685 = vpop.f32.mrf.mxu0
    %v4686 = vadd.f32 0.0, %v4685
    %v4687 = vpop.f32.mrf.mxu0
    %v4688 = vadd.f32 0.0, %v4687
    %4689 = vdwg.mxu0
    %v4690 = vpack.c.bf16 %v4688, %v4686
    %v4691 = vpack.c.bf16 %v4443, %v4443
    %v4693 = vsel %vm1409, %v4690, 0
    %v4696 = vsel %vm1028, %v4691, 0
    %4698 = vmatpush.bf16.msra.mxu0 0
    %4699 = vmatpush.bf16.msra.mxu0 0
    %4700 = vmatpush.bf16.msra.mxu0 0
    %4701 = vmatpush.bf16.msra.mxu0 0
    %4702 = vmatpush.bf16.msra.mxu0 0
    %4703 = vmatpush.bf16.msra.mxu0 0
    %4704 = vmatpush.bf16.msra.mxu0 0
    %4705 = vmatpush.bf16.msra.mxu0 %v4696
    %4706 = vmatmul.bf16.gmra.mxu0 %v4693
    %v4707 = vpop.f32.mrf.mxu0
    %v4708 = vadd.f32 0.0, %v4707
    %v4709 = vpop.f32.mrf.mxu0
    %v4710 = vadd.f32 0.0, %v4709
    %4711 = vdwg.mxu0
    %v4712 = vadd.f32 %v4619, %v4708
    %v4713 = vadd.f32 %v4621, %v4710
    %4714 = vrot.lane.b32.xlu0 %v4446, 104
    %v4715 = vpop.permute.xlu0 %4714
    %4716 = vrot.lane.b32.xlu0 %v4447, 104
    %v4717 = vpop.permute.xlu0 %4716
    %v4719 = vsel %vm1409, %v4715, 0
    %v4722 = vsel %vm1409, %v4717, 0
    %4724 = vmatpush.bf16.xpose.msra.mxu0 0
    %4725 = vmatpush.bf16.xpose.msra.mxu0 0
    %4726 = vmatpush.bf16.xpose.msra.mxu0 0
    %4727 = vmatpush.bf16.xpose.msra.mxu0 0
    %4728 = vmatpush.bf16.xpose.msra.mxu0 0
    %4729 = vmatpush.bf16.xpose.msra.mxu0 0
    %4730 = vmatpush.bf16.xpose.msra.mxu0 0
    %4731 = vmatpush.bf16.xpose.msra.mxu0 %v4722
    %4732 = vmatmul.bf16.gmra.mxu0 %v4719
    %v4733 = vpop.f32.mrf.mxu0
    %v4734 = vadd.f32 %v2713, %v4733
    %v4735 = vpop.f32.mrf.mxu0
    %v4736 = vadd.f32 %v2714, %v4735
    %4737 = vdwg.mxu0
    %v4738 = vsel %vm2955, %v4734, -inf
    %4739 = vmax.xlane.f32.xlu0 %v4738
    %v4740 = vpop.xlane.xlu0 %4739
    %v4741 = vsel %vm2955, %v4736, -inf
    %4742 = vmax.xlane.f32.xlu0 %v4741
    %v4743 = vpop.xlane.xlu0 %4742
    %v4744 = vsub.f32 %v4734, %v4740
    %v4745 = vsub.f32 %v4736, %v4743
    %v4746 = vmul.f32 %v4744, 1.442695
    %v4747 = vpow.pop %v4746
    %v4748 = vmul.f32 %v4745, 1.442695
    %v4749 = vpow.pop %v4748
    %v4750 = vsel %vm2955, %v4747, 0.0
    %4751 = vadd.xlane.f32.xlu0 %v4750
    %v4752 = vpop.xlane.xlu0 %4751
    %v4753 = vsel %vm2955, %v4749, 0.0
    %4754 = vadd.xlane.f32.xlu0 %v4753
    %v4755 = vpop.xlane.xlu0 %4754
    %v4756 = vrcp.pop %v4752
    %v4757 = vrcp.pop %v4755
    %v4758 = vmul.f32 %v4747, %v4756
    %v4759 = vmul.f32 %v4749, %v4757
    %v4760 = vpack.c.bf16 %v4759, %v4758
    %4761 = vrot.lane.b32.xlu0 %v4491, 104
    %v4762 = vpop.permute.xlu0 %4761
    %v4765 = vsel %vm2955, %v4760, 0
    %4767 = vmatpush.bf16.msra.mxu0 0
    %4768 = vmatpush.bf16.msra.mxu0 0
    %4769 = vmatpush.bf16.msra.mxu0 0
    %4770 = vmatpush.bf16.msra.mxu0 0
    %4771 = vmatpush.bf16.msra.mxu0 0
    %4772 = vmatpush.bf16.msra.mxu0 0
    %4773 = vmatpush.bf16.msra.mxu0 0
    %4774 = vmatpush.bf16.msra.mxu0 %v4762
    %4775 = vmatmul.bf16.gmra.mxu0 %v4765
    %v4776 = vpop.f32.mrf.mxu0
    %v4777 = vadd.f32 0.0, %v4776
    %v4778 = vpop.f32.mrf.mxu0
    %v4779 = vadd.f32 0.0, %v4778
    %4780 = vdwg.mxu0
    %v4781 = vpack.c.bf16 %v4779, %v4777
    %v4782 = vpack.c.bf16 %v4444, %v4444
    %v4784 = vsel %vm1409, %v4781, 0
    %v4787 = vsel %vm1028, %v4782, 0
    %4789 = vmatpush.bf16.msra.mxu0 0
    %4790 = vmatpush.bf16.msra.mxu0 0
    %4791 = vmatpush.bf16.msra.mxu0 0
    %4792 = vmatpush.bf16.msra.mxu0 0
    %4793 = vmatpush.bf16.msra.mxu0 0
    %4794 = vmatpush.bf16.msra.mxu0 0
    %4795 = vmatpush.bf16.msra.mxu0 0
    %4796 = vmatpush.bf16.msra.mxu0 %v4787
    %4797 = vmatmul.bf16.gmra.mxu0 %v4784
    %v4798 = vpop.f32.mrf.mxu0
    %v4799 = vadd.f32 0.0, %v4798
    %v4800 = vpop.f32.mrf.mxu0
    %v4801 = vadd.f32 0.0, %v4800
    %4802 = vdwg.mxu0
    %v4803 = vadd.f32 %v4712, %v4799
    %v4804 = vadd.f32 %v4713, %v4801
    %v4806 = vperm.slane %v4445, 0
    %v4808 = vadd.f32 %v4803, %v4806
    %v4809 = vadd.f32 %v4804, %v4806
    %v4810 = vadd.f32 %v4228, %v4808
    %v4811 = vadd.f32 %v4229, %v4809
    %v4812 = vld [vmem:[#allocation31] sm:$0x1]
    %v4813 = vld [vmem:[#allocation30] sm:$0x1]
    %4814 = vadd.xlane.f32.xlu0 %v4810
    %v4815 = vpop.xlane.xlu0 %4814
    %4816 = vadd.xlane.f32.xlu0 %v4811
    %v4817 = vpop.xlane.xlu0 %4816
    %v4818 = vmul.f32 %v4815, 0.03125
    %v4819 = vmul.f32 %v4817, 0.03125
    %v4820 = vmul.f32 %v4810, %v4810
    %v4821 = vmul.f32 %v4811, %v4811
    %4822 = vadd.xlane.f32.xlu0 %v4820
    %v4823 = vpop.xlane.xlu0 %4822
    %4824 = vadd.xlane.f32.xlu0 %v4821
    %v4825 = vpop.xlane.xlu0 %4824
    %v4826 = vmul.f32 %v4823, 0.03125
    %v4827 = vmul.f32 %v4825, 0.03125
    %v4828 = vmul.f32 %v4818, %v4818
    %v4829 = vmul.f32 %v4819, %v4819
    %v4830 = vsub.f32 %v4826, %v4828
    %v4831 = vsub.f32 %v4827, %v4829
    %v4832 = vsub.f32 %v4810, %v4818
    %v4833 = vsub.f32 %v4811, %v4819
    %v4834 = vadd.f32 %v4830, 1e-05
    %v4835 = vadd.f32 %v4831, 1e-05
    %v4836 = vrsqrt.pop %v4834
    %v4837 = vmul.f32 %v4836, %v4834
    %v4838 = vmul.f32 %v4837, %v4836
    %v4839 = vmul.f32 0.5, %v4838
    %v4840 = vsub.f32 1.5, %v4839
    %v4841 = vmul.f32 %v4836, %v4840
    %vm4842 = vweird.f32 %v4834
    %vm4843 = vweird.f32 %v4836
    %vm4844 = vmor %vm4842, %vm4843
    %v4845 = vsel %vm4844, %v4836, %v4841
    %v4846 = vrsqrt.pop %v4835
    %v4847 = vmul.f32 %v4846, %v4835
    %v4848 = vmul.f32 %v4847, %v4846
    %v4849 = vmul.f32 0.5, %v4848
    %v4850 = vsub.f32 1.5, %v4849
    %v4851 = vmul.f32 %v4846, %v4850
    %vm4852 = vweird.f32 %v4835
    %vm4853 = vweird.f32 %v4846
    %vm4854 = vmor %vm4852, %vm4853
    %v4855 = vsel %vm4854, %v4846, %v4851
    %v4856 = vmul.f32 %v4832, %v4845
    %v4857 = vmul.f32 %v4833, %v4855
    %v4859 = vperm.slane %v4812, 0
    %v4861 = vmul.f32 %v4856, %v4859
    %v4862 = vmul.f32 %v4857, %v4859
    %v4864 = vperm.slane %v4813, 0
    %v4866 = vadd.f32 %v4861, %v4864
    %v4867 = vadd.f32 %v4862, %v4864
    %v4868 = vld [vmem:[%s65] sm:$0xf]
    %v4869 = vld [vmem:[%s65 + $0x4] sm:$0xf]
    %v4870 = vld [vmem:[%s65 + $0x8] sm:$0xf]
    %v4871 = vld [vmem:[%s65 + $0xc] sm:$0xf]
    %v4872 = vld [vmem:[%s65 + $0x10] sm:$0xf]
    %v4873 = vld [vmem:[%s65 + $0x14] sm:$0xf]
    %v4874 = vld [vmem:[%s65 + $0x18] sm:$0xf]
    %v4875 = vld [vmem:[%s65 + $0x1c] sm:$0xf]
    %v4876 = vld [vmem:[%s65 + $0x20] sm:$0xf]
    %v4877 = vld [vmem:[%s65 + $0x24] sm:$0xf]
    %v4878 = vld [vmem:[%s65 + $0x28] sm:$0xf]
    %v4879 = vld [vmem:[%s65 + $0x2c] sm:$0xf]
    %v4880 = vld [vmem:[%s65 + $0x30] sm:$0xf]
    %v4881 = vld [vmem:[%s65 + $0x34] sm:$0xf]
    %v4882 = vld [vmem:[%s65 + $0x38] sm:$0xf]
    %v4883 = vld [vmem:[%s65 + $0x3c] sm:$0xf]
    %v4884 = vld [vmem:[#allocation27] sm:$0x1]
    %v4885 = vpack.c.bf16 %v4867, %v4866
    %v4887 = vperm.slane %v4884, 0
    %v4905 = vunpack.c.l.b16 %v4868
    %v4906 = vunpack.c.l.b16 %v4869
    %v4907 = vunpack.c.l.b16 %v4870
    %v4908 = vunpack.c.l.b16 %v4871
    %v4909 = vunpack.c.l.b16 %v4872
    %v4910 = vunpack.c.l.b16 %v4873
    %v4911 = vunpack.c.l.b16 %v4874
    %v4912 = vunpack.c.l.b16 %v4875
    %v4913 = vunpack.c.l.b16 %v4876
    %v4914 = vunpack.c.l.b16 %v4877
    %v4915 = vunpack.c.l.b16 %v4878
    %v4916 = vunpack.c.l.b16 %v4879
    %v4917 = vunpack.c.l.b16 %v4880
    %v4918 = vunpack.c.l.b16 %v4881
    %v4919 = vunpack.c.l.b16 %v4882
    %v4920 = vunpack.c.l.b16 %v4883
    %v4921 = vpack.c.b16 %v4906, %v4905
    %v4922 = vpack.c.b16 %v4908, %v4907
    %v4923 = vpack.c.b16 %v4910, %v4909
    %v4924 = vpack.c.b16 %v4912, %v4911
    %v4925 = vpack.c.b16 %v4914, %v4913
    %v4926 = vpack.c.b16 %v4916, %v4915
    %v4927 = vpack.c.b16 %v4918, %v4917
    %v4928 = vpack.c.b16 %v4920, %v4919
    %4937 = vmatpush.bf16.msra.mxu0 %v4928
    %4938 = vmatpush.bf16.msra.mxu0 %v4927
    %4939 = vmatpush.bf16.msra.mxu0 %v4926
    %4940 = vmatpush.bf16.msra.mxu0 %v4925
    %4941 = vmatpush.bf16.msra.mxu0 %v4924
    %4942 = vmatpush.bf16.msra.mxu0 %v4923
    %4943 = vmatpush.bf16.msra.mxu0 %v4922
    %4944 = vmatpush.bf16.msra.mxu0 %v4921
    %4945 = vmatmul.bf16.gmra.mxu0 %v4885
    %v4946 = vpop.f32.mrf.mxu0
    %v4947 = vadd.f32 %v4887, %v4946
    %v4948 = vpop.f32.mrf.mxu0
    %v4949 = vadd.f32 %v4887, %v4948
    %4950 = vdwg.mxu0
    %v4951 = vld [vmem:[%s61] sm:$0xff]
    %v4952 = vld [vmem:[%s61 + $0x8] sm:$0xff]
    %v4953 = vld [vmem:[%s61 + $0x10] sm:$0xff]
    %v4954 = vld [vmem:[%s61 + $0x18] sm:$0xff]
    %v4955 = vld [vmem:[%s61 + $0x20] sm:$0xff]
    %v4956 = vld [vmem:[%s61 + $0x28] sm:$0xff]
    %v4957 = vld [vmem:[%s61 + $0x30] sm:$0xff]
    %v4958 = vld [vmem:[%s61 + $0x38] sm:$0xff]
    %v4959 = vld [vmem:[%s61 + $0x40] sm:$0xff]
    %v4960 = vld [vmem:[%s61 + $0x48] sm:$0xff]
    %v4961 = vld [vmem:[%s61 + $0x50] sm:$0xff]
    %v4962 = vld [vmem:[%s61 + $0x58] sm:$0xff]
    %v4963 = vld [vmem:[%s61 + $0x60] sm:$0xff]
    %v4964 = vld [vmem:[%s61 + $0x68] sm:$0xff]
    %v4965 = vld [vmem:[%s61 + $0x70] sm:$0xff]
    %v4966 = vld [vmem:[%s61 + $0x78] sm:$0xff]
    %v4967 = vld [vmem:[#allocation24] sm:$0x3]
    %v4969 = vperm.slane %v4967, 0
    %v4970 = vperm.slane %v4967, 1
    %v4989 = vunpack.c.l.b16 %v4951
    %v4990 = vunpack.c.h.b16 %v4951
    %v4991 = vunpack.c.l.b16 %v4952
    %v4992 = vunpack.c.h.b16 %v4952
    %v4993 = vunpack.c.l.b16 %v4953
    %v4994 = vunpack.c.h.b16 %v4953
    %v4995 = vunpack.c.l.b16 %v4954
    %v4996 = vunpack.c.h.b16 %v4954
    %v4997 = vunpack.c.l.b16 %v4955
    %v4998 = vunpack.c.h.b16 %v4955
    %v4999 = vunpack.c.l.b16 %v4956
    %v5000 = vunpack.c.h.b16 %v4956
    %v5001 = vunpack.c.l.b16 %v4957
    %v5002 = vunpack.c.h.b16 %v4957
    %v5003 = vunpack.c.l.b16 %v4958
    %v5004 = vunpack.c.h.b16 %v4958
    %v5005 = vunpack.c.l.b16 %v4959
    %v5006 = vunpack.c.h.b16 %v4959
    %v5007 = vunpack.c.l.b16 %v4960
    %v5008 = vunpack.c.h.b16 %v4960
    %v5009 = vunpack.c.l.b16 %v4961
    %v5010 = vunpack.c.h.b16 %v4961
    %v5011 = vunpack.c.l.b16 %v4962
    %v5012 = vunpack.c.h.b16 %v4962
    %v5013 = vunpack.c.l.b16 %v4963
    %v5014 = vunpack.c.h.b16 %v4963
    %v5015 = vunpack.c.l.b16 %v4964
    %v5016 = vunpack.c.h.b16 %v4964
    %v5017 = vunpack.c.l.b16 %v4965
    %v5018 = vunpack.c.h.b16 %v4965
    %v5019 = vunpack.c.l.b16 %v4966
    %v5020 = vunpack.c.h.b16 %v4966
    %v5021 = vpack.c.b16 %v4991, %v4989
    %v5022 = vpack.c.b16 %v4992, %v4990
    %v5023 = vpack.c.b16 %v4995, %v4993
    %v5024 = vpack.c.b16 %v4996, %v4994
    %v5025 = vpack.c.b16 %v4999, %v4997
    %v5026 = vpack.c.b16 %v5000, %v4998
    %v5027 = vpack.c.b16 %v5003, %v5001
    %v5028 = vpack.c.b16 %v5004, %v5002
    %v5029 = vpack.c.b16 %v5007, %v5005
    %v5030 = vpack.c.b16 %v5008, %v5006
    %v5031 = vpack.c.b16 %v5011, %v5009
    %v5032 = vpack.c.b16 %v5012, %v5010
    %v5033 = vpack.c.b16 %v5015, %v5013
    %v5034 = vpack.c.b16 %v5016, %v5014
    %v5035 = vpack.c.b16 %v5019, %v5017
    %v5036 = vpack.c.b16 %v5020, %v5018
    %5053 = vmatpush.bf16.msra.mxu0 %v5035
    %5054 = vmatpush.bf16.msra.mxu0 %v5033
    %5055 = vmatpush.bf16.msra.mxu0 %v5031
    %5056 = vmatpush.bf16.msra.mxu0 %v5029
    %5057 = vmatpush.bf16.msra.mxu0 %v5027
    %5058 = vmatpush.bf16.msra.mxu0 %v5025
    %5059 = vmatpush.bf16.msra.mxu0 %v5023
    %5060 = vmatpush.bf16.msra.mxu0 %v5021
    %5061 = vmatmul.bf16.gmra.mxu0 %v3456
    %v5062 = vpop.f32.mrf.mxu0
    %v5063 = vadd.f32 %v4969, %v5062
    %v5064 = vpop.f32.mrf.mxu0
    %5065 = vdwg.mxu0
    %5066 = vmatpush.bf16.msra.mxu0 %v5036
    %5067 = vmatpush.bf16.msra.mxu0 %v5034
    %5068 = vmatpush.bf16.msra.mxu0 %v5032
    %5069 = vmatpush.bf16.msra.mxu0 %v5030
    %5070 = vmatpush.bf16.msra.mxu0 %v5028
    %5071 = vmatpush.bf16.msra.mxu0 %v5026
    %5072 = vmatpush.bf16.msra.mxu0 %v5024
    %5073 = vmatpush.bf16.msra.mxu0 %v5022
    %5074 = vmatmul.bf16.gmra.mxu0 %v3456
    %v5075 = vpop.f32.mrf.mxu0
    %v5076 = vadd.f32 %v4970, %v5075
    %v5077 = vpop.f32.mrf.mxu0
    %5078 = vdwg.mxu0
    %v5079 = vld [vmem:[#allocation28] sm:$0xff]
    %v5080 = vld [vmem:[#allocation28 + $0x8] sm:$0xff]
    %v5081 = vld [vmem:[#allocation28 + $0x10] sm:$0xff]
    %v5082 = vld [vmem:[#allocation28 + $0x18] sm:$0xff]
    %v5083 = vld [vmem:[#allocation25] sm:$0x1]
    %v5084 = vpack.c.bf16 %v4949, %v4947
    %v5085 = vpack.c.bf16 %v5063, %v5063
    %v5087 = vsel %vm1409, %v5084, 0
    %v5090 = vsel %vm1409, %v5085, 0
    %5092 = vmatpush.bf16.xpose.msra.mxu0 0
    %5093 = vmatpush.bf16.xpose.msra.mxu0 0
    %5094 = vmatpush.bf16.xpose.msra.mxu0 0
    %5095 = vmatpush.bf16.xpose.msra.mxu0 0
    %5096 = vmatpush.bf16.xpose.msra.mxu0 0
    %5097 = vmatpush.bf16.xpose.msra.mxu0 0
    %5098 = vmatpush.bf16.xpose.msra.mxu0 0
    %5099 = vmatpush.bf16.xpose.msra.mxu0 %v5090
    %5100 = vmatmul.bf16.gmra.mxu0 %v5087
    %v5101 = vpop.f32.mrf.mxu0
    %v5102 = vadd.f32 %v2715, %v5101
    %v5103 = vpop.f32.mrf.mxu0
    %v5104 = vadd.f32 %v2716, %v5103
    %5105 = vdwg.mxu0
    %v5106 = vsel %vm1409, %v5102, -inf
    %5107 = vmax.xlane.f32.xlu0 %v5106
    %v5108 = vpop.xlane.xlu0 %5107
    %v5109 = vsel %vm1409, %v5104, -inf
    %5110 = vmax.xlane.f32.xlu0 %v5109
    %v5111 = vpop.xlane.xlu0 %5110
    %v5112 = vsub.f32 %v5102, %v5108
    %v5113 = vsub.f32 %v5104, %v5111
    %v5114 = vmul.f32 %v5112, 1.442695
    %v5115 = vpow.pop %v5114
    %v5116 = vmul.f32 %v5113, 1.442695
    %v5117 = vpow.pop %v5116
    %v5118 = vsel %vm1409, %v5115, 0.0
    %5119 = vadd.xlane.f32.xlu0 %v5118
    %v5120 = vpop.xlane.xlu0 %5119
    %v5121 = vsel %vm1409, %v5117, 0.0
    %5122 = vadd.xlane.f32.xlu0 %v5121
    %v5123 = vpop.xlane.xlu0 %5122
    %v5124 = vrcp.pop %v5120
    %v5125 = vrcp.pop %v5123
    %v5126 = vmul.f32 %v5115, %v5124
    %v5127 = vmul.f32 %v5117, %v5125
    %v5128 = vpack.c.bf16 %v5127, %v5126
    %v5129 = vpack.c.bf16 %v5076, %v5076
    %v5131 = vsel %vm1409, %v5128, 0
    %v5134 = vsel %vm1028, %v5129, 0
    %5136 = vmatpush.bf16.msra.mxu0 0
    %5137 = vmatpush.bf16.msra.mxu0 0
    %5138 = vmatpush.bf16.msra.mxu0 0
    %5139 = vmatpush.bf16.msra.mxu0 0
    %5140 = vmatpush.bf16.msra.mxu0 0
    %5141 = vmatpush.bf16.msra.mxu0 0
    %5142 = vmatpush.bf16.msra.mxu0 0
    %5143 = vmatpush.bf16.msra.mxu0 %v5134
    %5144 = vmatmul.bf16.gmra.mxu0 %v5131
    %v5145 = vpop.f32.mrf.mxu0
    %v5146 = vadd.f32 0.0, %v5145
    %v5147 = vpop.f32.mrf.mxu0
    %v5148 = vadd.f32 0.0, %v5147
    %5149 = vdwg.mxu0
    %v5150 = vpack.c.bf16 %v5148, %v5146
    %v5151 = vpack.c.bf16 %v5079, %v5079
    %5153 = vrot.lane.b32.xlu0 %v5084, 120
    %v5154 = vpop.permute.xlu0 %5153
    %5156 = vrot.lane.b32.xlu0 %v5085, 120
    %v5157 = vpop.permute.xlu0 %5156
    %v5159 = vsel %vm1409, %v5154, 0
    %v5162 = vsel %vm1409, %v5157, 0
    %5164 = vmatpush.bf16.xpose.msra.mxu0 0
    %5165 = vmatpush.bf16.xpose.msra.mxu0 0
    %5166 = vmatpush.bf16.xpose.msra.mxu0 0
    %5167 = vmatpush.bf16.xpose.msra.mxu0 0
    %5168 = vmatpush.bf16.xpose.msra.mxu0 0
    %5169 = vmatpush.bf16.xpose.msra.mxu0 0
    %5170 = vmatpush.bf16.xpose.msra.mxu0 0
    %5171 = vmatpush.bf16.xpose.msra.mxu0 %v5162
    %5172 = vmatmul.bf16.gmra.mxu0 %v5159
    %v5173 = vpop.f32.mrf.mxu0
    %v5174 = vadd.f32 %v2715, %v5173
    %v5175 = vpop.f32.mrf.mxu0
    %v5176 = vadd.f32 %v2716, %v5175
    %5177 = vdwg.mxu0
    %v5178 = vsel %vm1409, %v5174, -inf
    %5179 = vmax.xlane.f32.xlu0 %v5178
    %v5180 = vpop.xlane.xlu0 %5179
    %v5181 = vsel %vm1409, %v5176, -inf
    %5182 = vmax.xlane.f32.xlu0 %v5181
    %v5183 = vpop.xlane.xlu0 %5182
    %v5184 = vsub.f32 %v5174, %v5180
    %v5185 = vsub.f32 %v5176, %v5183
    %v5186 = vmul.f32 %v5184, 1.442695
    %v5187 = vpow.pop %v5186
    %v5188 = vmul.f32 %v5185, 1.442695
    %v5189 = vpow.pop %v5188
    %v5190 = vsel %vm1409, %v5187, 0.0
    %5191 = vadd.xlane.f32.xlu0 %v5190
    %v5192 = vpop.xlane.xlu0 %5191
    %v5193 = vsel %vm1409, %v5189, 0.0
    %5194 = vadd.xlane.f32.xlu0 %v5193
    %v5195 = vpop.xlane.xlu0 %5194
    %v5196 = vrcp.pop %v5192
    %v5197 = vrcp.pop %v5195
    %v5198 = vmul.f32 %v5187, %v5196
    %v5199 = vmul.f32 %v5189, %v5197
    %v5200 = vpack.c.bf16 %v5199, %v5198
    %5202 = vrot.lane.b32.xlu0 %v5129, 120
    %v5203 = vpop.permute.xlu0 %5202
    %v5205 = vsel %vm1409, %v5200, 0
    %v5208 = vsel %vm1028, %v5203, 0
    %5210 = vmatpush.bf16.msra.mxu0 0
    %5211 = vmatpush.bf16.msra.mxu0 0
    %5212 = vmatpush.bf16.msra.mxu0 0
    %5213 = vmatpush.bf16.msra.mxu0 0
    %5214 = vmatpush.bf16.msra.mxu0 0
    %5215 = vmatpush.bf16.msra.mxu0 0
    %5216 = vmatpush.bf16.msra.mxu0 0
    %5217 = vmatpush.bf16.msra.mxu0 %v5208
    %5218 = vmatmul.bf16.gmra.mxu0 %v5205
    %v5219 = vpop.f32.mrf.mxu0
    %v5220 = vadd.f32 0.0, %v5219
    %v5221 = vpop.f32.mrf.mxu0
    %v5222 = vadd.f32 0.0, %v5221
    %5223 = vdwg.mxu0
    %v5224 = vpack.c.bf16 %v5222, %v5220
    %v5225 = vpack.c.bf16 %v5080, %v5080
    %v5227 = vsel %vm1409, %v5224, 0
    %v5230 = vsel %vm1028, %v5225, 0
    %5232 = vmatpush.bf16.msra.mxu0 0
    %5233 = vmatpush.bf16.msra.mxu0 0
    %5234 = vmatpush.bf16.msra.mxu0 0
    %5235 = vmatpush.bf16.msra.mxu0 0
    %5236 = vmatpush.bf16.msra.mxu0 0
    %5237 = vmatpush.bf16.msra.mxu0 0
    %5238 = vmatpush.bf16.msra.mxu0 0
    %5239 = vmatpush.bf16.msra.mxu0 %v5230
    %5240 = vmatmul.bf16.gmra.mxu0 %v5227
    %v5241 = vpop.f32.mrf.mxu0
    %v5242 = vadd.f32 0.0, %v5241
    %v5243 = vpop.f32.mrf.mxu0
    %v5244 = vadd.f32 0.0, %v5243
    %5245 = vdwg.mxu0
    %v5247 = vsel %vm1409, %v5150, 0
    %v5250 = vsel %vm1028, %v5151, 0
    %5252 = vmatpush.bf16.msra.mxu0 0
    %5253 = vmatpush.bf16.msra.mxu0 0
    %5254 = vmatpush.bf16.msra.mxu0 0
    %5255 = vmatpush.bf16.msra.mxu0 0
    %5256 = vmatpush.bf16.msra.mxu0 0
    %5257 = vmatpush.bf16.msra.mxu0 0
    %5258 = vmatpush.bf16.msra.mxu0 0
    %5259 = vmatpush.bf16.msra.mxu0 %v5250
    %5260 = vmatmul.bf16.gmra.mxu0 %v5247
    %v5261 = vpop.f32.mrf.mxu0
    %v5262 = vadd.f32 %v5242, %v5261
    %v5263 = vpop.f32.mrf.mxu0
    %v5264 = vadd.f32 %v5244, %v5263
    %5265 = vdwg.mxu0
    %5266 = vrot.lane.b32.xlu0 %v5084, 112
    %v5267 = vpop.permute.xlu0 %5266
    %5268 = vrot.lane.b32.xlu0 %v5085, 112
    %v5269 = vpop.permute.xlu0 %5268
    %v5271 = vsel %vm1409, %v5267, 0
    %v5274 = vsel %vm1409, %v5269, 0
    %5276 = vmatpush.bf16.xpose.msra.mxu0 0
    %5277 = vmatpush.bf16.xpose.msra.mxu0 0
    %5278 = vmatpush.bf16.xpose.msra.mxu0 0
    %5279 = vmatpush.bf16.xpose.msra.mxu0 0
    %5280 = vmatpush.bf16.xpose.msra.mxu0 0
    %5281 = vmatpush.bf16.xpose.msra.mxu0 0
    %5282 = vmatpush.bf16.xpose.msra.mxu0 0
    %5283 = vmatpush.bf16.xpose.msra.mxu0 %v5274
    %5284 = vmatmul.bf16.gmra.mxu0 %v5271
    %v5285 = vpop.f32.mrf.mxu0
    %v5286 = vadd.f32 %v2715, %v5285
    %v5287 = vpop.f32.mrf.mxu0
    %v5288 = vadd.f32 %v2716, %v5287
    %5289 = vdwg.mxu0
    %v5290 = vsel %vm1409, %v5286, -inf
    %5291 = vmax.xlane.f32.xlu0 %v5290
    %v5292 = vpop.xlane.xlu0 %5291
    %v5293 = vsel %vm1409, %v5288, -inf
    %5294 = vmax.xlane.f32.xlu0 %v5293
    %v5295 = vpop.xlane.xlu0 %5294
    %v5296 = vsub.f32 %v5286, %v5292
    %v5297 = vsub.f32 %v5288, %v5295
    %v5298 = vmul.f32 %v5296, 1.442695
    %v5299 = vpow.pop %v5298
    %v5300 = vmul.f32 %v5297, 1.442695
    %v5301 = vpow.pop %v5300
    %v5302 = vsel %vm1409, %v5299, 0.0
    %5303 = vadd.xlane.f32.xlu0 %v5302
    %v5304 = vpop.xlane.xlu0 %5303
    %v5305 = vsel %vm1409, %v5301, 0.0
    %5306 = vadd.xlane.f32.xlu0 %v5305
    %v5307 = vpop.xlane.xlu0 %5306
    %v5308 = vrcp.pop %v5304
    %v5309 = vrcp.pop %v5307
    %v5310 = vmul.f32 %v5299, %v5308
    %v5311 = vmul.f32 %v5301, %v5309
    %v5312 = vpack.c.bf16 %v5311, %v5310
    %5313 = vrot.lane.b32.xlu0 %v5129, 112
    %v5314 = vpop.permute.xlu0 %5313
    %v5316 = vsel %vm1409, %v5312, 0
    %v5319 = vsel %vm1028, %v5314, 0
    %5321 = vmatpush.bf16.msra.mxu0 0
    %5322 = vmatpush.bf16.msra.mxu0 0
    %5323 = vmatpush.bf16.msra.mxu0 0
    %5324 = vmatpush.bf16.msra.mxu0 0
    %5325 = vmatpush.bf16.msra.mxu0 0
    %5326 = vmatpush.bf16.msra.mxu0 0
    %5327 = vmatpush.bf16.msra.mxu0 0
    %5328 = vmatpush.bf16.msra.mxu0 %v5319
    %5329 = vmatmul.bf16.gmra.mxu0 %v5316
    %v5330 = vpop.f32.mrf.mxu0
    %v5331 = vadd.f32 0.0, %v5330
    %v5332 = vpop.f32.mrf.mxu0
    %v5333 = vadd.f32 0.0, %v5332
    %5334 = vdwg.mxu0
    %v5335 = vpack.c.bf16 %v5333, %v5331
    %v5336 = vpack.c.bf16 %v5081, %v5081
    %v5338 = vsel %vm1409, %v5335, 0
    %v5341 = vsel %vm1028, %v5336, 0
    %5343 = vmatpush.bf16.msra.mxu0 0
    %5344 = vmatpush.bf16.msra.mxu0 0
    %5345 = vmatpush.bf16.msra.mxu0 0
    %5346 = vmatpush.bf16.msra.mxu0 0
    %5347 = vmatpush.bf16.msra.mxu0 0
    %5348 = vmatpush.bf16.msra.mxu0 0
    %5349 = vmatpush.bf16.msra.mxu0 0
    %5350 = vmatpush.bf16.msra.mxu0 %v5341
    %5351 = vmatmul.bf16.gmra.mxu0 %v5338
    %v5352 = vpop.f32.mrf.mxu0
    %v5353 = vadd.f32 0.0, %v5352
    %v5354 = vpop.f32.mrf.mxu0
    %v5355 = vadd.f32 0.0, %v5354
    %5356 = vdwg.mxu0
    %v5357 = vadd.f32 %v5262, %v5353
    %v5358 = vadd.f32 %v5264, %v5355
    %5359 = vrot.lane.b32.xlu0 %v5084, 104
    %v5360 = vpop.permute.xlu0 %5359
    %5361 = vrot.lane.b32.xlu0 %v5085, 104
    %v5362 = vpop.permute.xlu0 %5361
    %v5364 = vsel %vm1409, %v5360, 0
    %v5367 = vsel %vm1409, %v5362, 0
    %5369 = vmatpush.bf16.xpose.msra.mxu0 0
    %5370 = vmatpush.bf16.xpose.msra.mxu0 0
    %5371 = vmatpush.bf16.xpose.msra.mxu0 0
    %5372 = vmatpush.bf16.xpose.msra.mxu0 0
    %5373 = vmatpush.bf16.xpose.msra.mxu0 0
    %5374 = vmatpush.bf16.xpose.msra.mxu0 0
    %5375 = vmatpush.bf16.xpose.msra.mxu0 0
    %5376 = vmatpush.bf16.xpose.msra.mxu0 %v5367
    %5377 = vmatmul.bf16.gmra.mxu0 %v5364
    %v5378 = vpop.f32.mrf.mxu0
    %v5379 = vadd.f32 %v2715, %v5378
    %v5380 = vpop.f32.mrf.mxu0
    %v5381 = vadd.f32 %v2716, %v5380
    %5382 = vdwg.mxu0
    %v5383 = vsel %vm1409, %v5379, -inf
    %5384 = vmax.xlane.f32.xlu0 %v5383
    %v5385 = vpop.xlane.xlu0 %5384
    %v5386 = vsel %vm1409, %v5381, -inf
    %5387 = vmax.xlane.f32.xlu0 %v5386
    %v5388 = vpop.xlane.xlu0 %5387
    %v5389 = vsub.f32 %v5379, %v5385
    %v5390 = vsub.f32 %v5381, %v5388
    %v5391 = vmul.f32 %v5389, 1.442695
    %v5392 = vpow.pop %v5391
    %v5393 = vmul.f32 %v5390, 1.442695
    %v5394 = vpow.pop %v5393
    %v5395 = vsel %vm1409, %v5392, 0.0
    %5396 = vadd.xlane.f32.xlu0 %v5395
    %v5397 = vpop.xlane.xlu0 %5396
    %v5398 = vsel %vm1409, %v5394, 0.0
    %5399 = vadd.xlane.f32.xlu0 %v5398
    %v5400 = vpop.xlane.xlu0 %5399
    %v5401 = vrcp.pop %v5397
    %v5402 = vrcp.pop %v5400
    %v5403 = vmul.f32 %v5392, %v5401
    %v5404 = vmul.f32 %v5394, %v5402
    %v5405 = vpack.c.bf16 %v5404, %v5403
    %5406 = vrot.lane.b32.xlu0 %v5129, 104
    %v5407 = vpop.permute.xlu0 %5406
    %v5409 = vsel %vm1409, %v5405, 0
    %v5412 = vsel %vm1028, %v5407, 0
    %5414 = vmatpush.bf16.msra.mxu0 0
    %5415 = vmatpush.bf16.msra.mxu0 0
    %5416 = vmatpush.bf16.msra.mxu0 0
    %5417 = vmatpush.bf16.msra.mxu0 0
    %5418 = vmatpush.bf16.msra.mxu0 0
    %5419 = vmatpush.bf16.msra.mxu0 0
    %5420 = vmatpush.bf16.msra.mxu0 0
    %5421 = vmatpush.bf16.msra.mxu0 %v5412
    %5422 = vmatmul.bf16.gmra.mxu0 %v5409
    %v5423 = vpop.f32.mrf.mxu0
    %v5424 = vadd.f32 0.0, %v5423
    %v5425 = vpop.f32.mrf.mxu0
    %v5426 = vadd.f32 0.0, %v5425
    %5427 = vdwg.mxu0
    %v5428 = vpack.c.bf16 %v5426, %v5424
    %v5429 = vpack.c.bf16 %v5082, %v5082
    %v5431 = vsel %vm1409, %v5428, 0
    %v5434 = vsel %vm1028, %v5429, 0
    %5436 = vmatpush.bf16.msra.mxu0 0
    %5437 = vmatpush.bf16.msra.mxu0 0
    %5438 = vmatpush.bf16.msra.mxu0 0
    %5439 = vmatpush.bf16.msra.mxu0 0
    %5440 = vmatpush.bf16.msra.mxu0 0
    %5441 = vmatpush.bf16.msra.mxu0 0
    %5442 = vmatpush.bf16.msra.mxu0 0
    %5443 = vmatpush.bf16.msra.mxu0 %v5434
    %5444 = vmatmul.bf16.gmra.mxu0 %v5431
    %v5445 = vpop.f32.mrf.mxu0
    %v5446 = vadd.f32 0.0, %v5445
    %v5447 = vpop.f32.mrf.mxu0
    %v5448 = vadd.f32 0.0, %v5447
    %5449 = vdwg.mxu0
    %v5450 = vadd.f32 %v5357, %v5446
    %v5451 = vadd.f32 %v5358, %v5448
    %v5453 = vperm.slane %v5083, 0
    %v5455 = vadd.f32 %v5450, %v5453
    %v5456 = vadd.f32 %v5451, %v5453
    %v5457 = vadd.f32 %v4866, %v5455
    %v5458 = vadd.f32 %v4867, %v5456
    %v5459 = vld [vmem:[#allocation34] sm:$0x1]
    %v5460 = vld [vmem:[#allocation33] sm:$0x1]
    %5461 = vadd.xlane.f32.xlu0 %v5457
    %v5462 = vpop.xlane.xlu0 %5461
    %5463 = vadd.xlane.f32.xlu0 %v5458
    %v5464 = vpop.xlane.xlu0 %5463
    %v5465 = vmul.f32 %v5462, 0.03125
    %v5466 = vmul.f32 %v5464, 0.03125
    %v5467 = vmul.f32 %v5457, %v5457
    %v5468 = vmul.f32 %v5458, %v5458
    %5469 = vadd.xlane.f32.xlu0 %v5467
    %v5470 = vpop.xlane.xlu0 %5469
    %5471 = vadd.xlane.f32.xlu0 %v5468
    %v5472 = vpop.xlane.xlu0 %5471
    %v5473 = vmul.f32 %v5470, 0.03125
    %v5474 = vmul.f32 %v5472, 0.03125
    %v5475 = vmul.f32 %v5465, %v5465
    %v5476 = vmul.f32 %v5466, %v5466
    %v5477 = vsub.f32 %v5473, %v5475
    %v5478 = vsub.f32 %v5474, %v5476
    %v5479 = vsub.f32 %v5457, %v5465
    %v5480 = vsub.f32 %v5458, %v5466
    %v5481 = vadd.f32 %v5477, 1e-05
    %v5482 = vadd.f32 %v5478, 1e-05
    %v5483 = vrsqrt.pop %v5481
    %v5484 = vmul.f32 %v5483, %v5481
    %v5485 = vmul.f32 %v5484, %v5483
    %v5486 = vmul.f32 0.5, %v5485
    %v5487 = vsub.f32 1.5, %v5486
    %v5488 = vmul.f32 %v5483, %v5487
    %vm5489 = vweird.f32 %v5481
    %vm5490 = vweird.f32 %v5483
    %vm5491 = vmor %vm5489, %vm5490
    %v5492 = vsel %vm5491, %v5483, %v5488
    %v5493 = vrsqrt.pop %v5482
    %v5494 = vmul.f32 %v5493, %v5482
    %v5495 = vmul.f32 %v5494, %v5493
    %v5496 = vmul.f32 0.5, %v5495
    %v5497 = vsub.f32 1.5, %v5496
    %v5498 = vmul.f32 %v5493, %v5497
    %vm5499 = vweird.f32 %v5482
    %vm5500 = vweird.f32 %v5493
    %vm5501 = vmor %vm5499, %vm5500
    %v5502 = vsel %vm5501, %v5493, %v5498
    %v5503 = vmul.f32 %v5479, %v5492
    %v5504 = vmul.f32 %v5480, %v5502
    %v5506 = vperm.slane %v5459, 0
    %v5508 = vmul.f32 %v5503, %v5506
    %v5509 = vmul.f32 %v5504, %v5506
    %v5511 = vperm.slane %v5460, 0
    %v5513 = vadd.f32 %v5508, %v5511
    %v5514 = vadd.f32 %v5509, %v5511
    %v5515 = vld [vmem:[%s87] sm:$0xf]
    %v5516 = vld [vmem:[%s87 + $0x4] sm:$0xf]
    %v5517 = vld [vmem:[%s87 + $0x8] sm:$0xf]
    %v5518 = vld [vmem:[%s87 + $0xc] sm:$0xf]
    %v5519 = vld [vmem:[%s87 + $0x10] sm:$0xf]
    %v5520 = vld [vmem:[%s87 + $0x14] sm:$0xf]
    %v5521 = vld [vmem:[%s87 + $0x18] sm:$0xf]
    %v5522 = vld [vmem:[%s87 + $0x1c] sm:$0xf]
    %v5523 = vld [vmem:[%s87 + $0x20] sm:$0xf]
    %v5524 = vld [vmem:[%s87 + $0x24] sm:$0xf]
    %v5525 = vld [vmem:[%s87 + $0x28] sm:$0xf]
    %v5526 = vld [vmem:[%s87 + $0x2c] sm:$0xf]
    %v5527 = vld [vmem:[%s87 + $0x30] sm:$0xf]
    %v5528 = vld [vmem:[%s87 + $0x34] sm:$0xf]
    %v5529 = vld [vmem:[%s87 + $0x38] sm:$0xf]
    %v5530 = vld [vmem:[%s87 + $0x3c] sm:$0xf]
    %v5531 = vld [vmem:[#allocation21] sm:$0x1]
    %v5532 = vld [vmem:[%s89] sm:$0xf]
    %v5533 = vld [vmem:[%s89 + $0x4] sm:$0xf]
    %v5534 = vld [vmem:[%s89 + $0x8] sm:$0xf]
    %v5535 = vld [vmem:[%s89 + $0xc] sm:$0xf]
    %v5536 = vld [vmem:[%s89 + $0x10] sm:$0xf]
    %v5537 = vld [vmem:[%s89 + $0x14] sm:$0xf]
    %v5538 = vld [vmem:[%s89 + $0x18] sm:$0xf]
    %v5539 = vld [vmem:[%s89 + $0x1c] sm:$0xf]
    %v5540 = vld [vmem:[%s89 + $0x20] sm:$0xf]
    %v5541 = vld [vmem:[%s89 + $0x24] sm:$0xf]
    %v5542 = vld [vmem:[%s89 + $0x28] sm:$0xf]
    %v5543 = vld [vmem:[%s89 + $0x2c] sm:$0xf]
    %v5544 = vld [vmem:[%s89 + $0x30] sm:$0xf]
    %v5545 = vld [vmem:[%s89 + $0x34] sm:$0xf]
    %v5546 = vld [vmem:[%s89 + $0x38] sm:$0xf]
    %v5547 = vld [vmem:[%s89 + $0x3c] sm:$0xf]
    %v5548 = vld [vmem:[#allocation22] sm:$0x1]
    %v5549 = vpack.c.bf16 %v5514, %v5513
    %v5551 = vperm.slane %v5531, 0
    %v5569 = vunpack.c.l.b16 %v5515
    %v5570 = vunpack.c.l.b16 %v5516
    %v5571 = vunpack.c.l.b16 %v5517
    %v5572 = vunpack.c.l.b16 %v5518
    %v5573 = vunpack.c.l.b16 %v5519
    %v5574 = vunpack.c.l.b16 %v5520
    %v5575 = vunpack.c.l.b16 %v5521
    %v5576 = vunpack.c.l.b16 %v5522
    %v5577 = vunpack.c.l.b16 %v5523
    %v5578 = vunpack.c.l.b16 %v5524
    %v5579 = vunpack.c.l.b16 %v5525
    %v5580 = vunpack.c.l.b16 %v5526
    %v5581 = vunpack.c.l.b16 %v5527
    %v5582 = vunpack.c.l.b16 %v5528
    %v5583 = vunpack.c.l.b16 %v5529
    %v5584 = vunpack.c.l.b16 %v5530
    %v5585 = vpack.c.b16 %v5570, %v5569
    %v5586 = vpack.c.b16 %v5572, %v5571
    %v5587 = vpack.c.b16 %v5574, %v5573
    %v5588 = vpack.c.b16 %v5576, %v5575
    %v5589 = vpack.c.b16 %v5578, %v5577
    %v5590 = vpack.c.b16 %v5580, %v5579
    %v5591 = vpack.c.b16 %v5582, %v5581
    %v5592 = vpack.c.b16 %v5584, %v5583
    %5601 = vmatpush.bf16.msra.mxu0 %v5592
    %5602 = vmatpush.bf16.msra.mxu0 %v5591
    %5603 = vmatpush.bf16.msra.mxu0 %v5590
    %5604 = vmatpush.bf16.msra.mxu0 %v5589
    %5605 = vmatpush.bf16.msra.mxu0 %v5588
    %5606 = vmatpush.bf16.msra.mxu0 %v5587
    %5607 = vmatpush.bf16.msra.mxu0 %v5586
    %5608 = vmatpush.bf16.msra.mxu0 %v5585
    %5609 = vmatmul.bf16.gmra.mxu0 %v5549
    %v5610 = vpop.f32.mrf.mxu0
    %v5611 = vadd.f32 %v5551, %v5610
    %v5612 = vpop.f32.mrf.mxu0
    %v5613 = vadd.f32 %v5551, %v5612
    %5614 = vdwg.mxu0
    %v5615 = vmax.f32 %v5611, 0.0
    %v5616 = vmax.f32 %v5613, 0.0
    %v5617 = vpack.c.bf16 %v5616, %v5615
    %v5619 = vperm.slane %v5548, 0
    %v5637 = vunpack.c.l.b16 %v5532
    %v5638 = vunpack.c.l.b16 %v5533
    %v5639 = vunpack.c.l.b16 %v5534
    %v5640 = vunpack.c.l.b16 %v5535
    %v5641 = vunpack.c.l.b16 %v5536
    %v5642 = vunpack.c.l.b16 %v5537
    %v5643 = vunpack.c.l.b16 %v5538
    %v5644 = vunpack.c.l.b16 %v5539
    %v5645 = vunpack.c.l.b16 %v5540
    %v5646 = vunpack.c.l.b16 %v5541
    %v5647 = vunpack.c.l.b16 %v5542
    %v5648 = vunpack.c.l.b16 %v5543
    %v5649 = vunpack.c.l.b16 %v5544
    %v5650 = vunpack.c.l.b16 %v5545
    %v5651 = vunpack.c.l.b16 %v5546
    %v5652 = vunpack.c.l.b16 %v5547
    %v5653 = vpack.c.b16 %v5638, %v5637
    %v5654 = vpack.c.b16 %v5640, %v5639
    %v5655 = vpack.c.b16 %v5642, %v5641
    %v5656 = vpack.c.b16 %v5644, %v5643
    %v5657 = vpack.c.b16 %v5646, %v5645
    %v5658 = vpack.c.b16 %v5648, %v5647
    %v5659 = vpack.c.b16 %v5650, %v5649
    %v5660 = vpack.c.b16 %v5652, %v5651
    %5669 = vmatpush.bf16.msra.mxu0 %v5660
    %5670 = vmatpush.bf16.msra.mxu0 %v5659
    %5671 = vmatpush.bf16.msra.mxu0 %v5658
    %5672 = vmatpush.bf16.msra.mxu0 %v5657
    %5673 = vmatpush.bf16.msra.mxu0 %v5656
    %5674 = vmatpush.bf16.msra.mxu0 %v5655
    %5675 = vmatpush.bf16.msra.mxu0 %v5654
    %5676 = vmatpush.bf16.msra.mxu0 %v5653
    %5677 = vmatmul.bf16.gmra.mxu0 %v5617
    %v5678 = vpop.f32.mrf.mxu0
    %v5679 = vadd.f32 %v5619, %v5678
    %v5680 = vpop.f32.mrf.mxu0
    %v5681 = vadd.f32 %v5619, %v5680
    %5682 = vdwg.mxu0
    %v5683 = vadd.f32 %v5513, %v5679
    %v5684 = vadd.f32 %v5514, %v5681
    %v5685 = vld [vmem:[#allocation37] sm:$0x1]
    %v5686 = vld [vmem:[#allocation36] sm:$0x1]
    %5687 = vadd.xlane.f32.xlu0 %v5683
    %v5688 = vpop.xlane.xlu0 %5687
    %5689 = vadd.xlane.f32.xlu0 %v5684
    %v5690 = vpop.xlane.xlu0 %5689
    %v5691 = vmul.f32 %v5688, 0.03125
    %v5692 = vmul.f32 %v5690, 0.03125
    %v5693 = vmul.f32 %v5683, %v5683
    %v5694 = vmul.f32 %v5684, %v5684
    %5695 = vadd.xlane.f32.xlu0 %v5693
    %v5696 = vpop.xlane.xlu0 %5695
    %5697 = vadd.xlane.f32.xlu0 %v5694
    %v5698 = vpop.xlane.xlu0 %5697
    %v5699 = vmul.f32 %v5696, 0.03125
    %v5700 = vmul.f32 %v5698, 0.03125
    %v5701 = vmul.f32 %v5691, %v5691
    %v5702 = vmul.f32 %v5692, %v5692
    %v5703 = vsub.f32 %v5699, %v5701
    %v5704 = vsub.f32 %v5700, %v5702
    %v5705 = vsub.f32 %v5683, %v5691
    %v5706 = vsub.f32 %v5684, %v5692
    %v5707 = vadd.f32 %v5703, 1e-05
    %v5708 = vadd.f32 %v5704, 1e-05
    %v5709 = vrsqrt.pop %v5707
    %v5710 = vmul.f32 %v5709, %v5707
    %v5711 = vmul.f32 %v5710, %v5709
    %v5712 = vmul.f32 0.5, %v5711
    %v5713 = vsub.f32 1.5, %v5712
    %v5714 = vmul.f32 %v5709, %v5713
    %vm5715 = vweird.f32 %v5707
    %vm5716 = vweird.f32 %v5709
    %vm5717 = vmor %vm5715, %vm5716
    %v5718 = vsel %vm5717, %v5709, %v5714
    %v5719 = vrsqrt.pop %v5708
    %v5720 = vmul.f32 %v5719, %v5708
    %v5721 = vmul.f32 %v5720, %v5719
    %v5722 = vmul.f32 0.5, %v5721
    %v5723 = vsub.f32 1.5, %v5722
    %v5724 = vmul.f32 %v5719, %v5723
    %vm5725 = vweird.f32 %v5708
    %vm5726 = vweird.f32 %v5719
    %vm5727 = vmor %vm5725, %vm5726
    %v5728 = vsel %vm5727, %v5719, %v5724
    %v5729 = vmul.f32 %v5705, %v5718
    %v5730 = vmul.f32 %v5706, %v5728
    %v5732 = vperm.slane %v5685, 0
    %v5734 = vmul.f32 %v5729, %v5732
    %v5735 = vmul.f32 %v5730, %v5732
    %v5737 = vperm.slane %v5686, 0
    %v5739 = vadd.f32 %v5734, %v5737
    %v5740 = vadd.f32 %v5735, %v5737
    %v5741 = vld [vmem:[#allocation78] sm:$0xf]
    %v5742 = vld [vmem:[#allocation78 + $0x4] sm:$0xf]
    %v5743 = vld [vmem:[#allocation78 + $0x8] sm:$0xf]
    %v5744 = vld [vmem:[#allocation78 + $0xc] sm:$0xf]
    %v5745 = vld [vmem:[#allocation78 + $0x10] sm:$0xf]
    %v5746 = vld [vmem:[#allocation78 + $0x14] sm:$0xf]
    %v5747 = vld [vmem:[#allocation78 + $0x18] sm:$0xf]
    %v5748 = vld [vmem:[#allocation78 + $0x1c] sm:$0xf]
    %v5749 = vld [vmem:[#allocation78 + $0x20] sm:$0xf]
    %v5750 = vld [vmem:[#allocation78 + $0x24] sm:$0xf]
    %v5751 = vld [vmem:[#allocation78 + $0x28] sm:$0xf]
    %v5752 = vld [vmem:[#allocation78 + $0x2c] sm:$0xf]
    %v5753 = vld [vmem:[#allocation78 + $0x30] sm:$0xf]
    %v5754 = vld [vmem:[#allocation78 + $0x34] sm:$0xf]
    %v5755 = vld [vmem:[#allocation78 + $0x38] sm:$0xf]
    %v5756 = vld [vmem:[#allocation78 + $0x3c] sm:$0xf]
    %v5757 = vld [vmem:[#allocation76] sm:$0x1]
    %v5758 = vpack.c.bf16 %v5740, %v5739
    %v5760 = vperm.slane %v5757, 0
    %v5778 = vunpack.c.l.b16 %v5741
    %v5779 = vunpack.c.l.b16 %v5742
    %v5780 = vunpack.c.l.b16 %v5743
    %v5781 = vunpack.c.l.b16 %v5744
    %v5782 = vunpack.c.l.b16 %v5745
    %v5783 = vunpack.c.l.b16 %v5746
    %v5784 = vunpack.c.l.b16 %v5747
    %v5785 = vunpack.c.l.b16 %v5748
    %v5786 = vunpack.c.l.b16 %v5749
    %v5787 = vunpack.c.l.b16 %v5750
    %v5788 = vunpack.c.l.b16 %v5751
    %v5789 = vunpack.c.l.b16 %v5752
    %v5790 = vunpack.c.l.b16 %v5753
    %v5791 = vunpack.c.l.b16 %v5754
    %v5792 = vunpack.c.l.b16 %v5755
    %v5793 = vunpack.c.l.b16 %v5756
    %v5794 = vpack.c.b16 %v5779, %v5778
    %v5795 = vpack.c.b16 %v5781, %v5780
    %v5796 = vpack.c.b16 %v5783, %v5782
    %v5797 = vpack.c.b16 %v5785, %v5784
    %v5798 = vpack.c.b16 %v5787, %v5786
    %v5799 = vpack.c.b16 %v5789, %v5788
    %v5800 = vpack.c.b16 %v5791, %v5790
    %v5801 = vpack.c.b16 %v5793, %v5792
    %5810 = vmatpush.bf16.msra.mxu0 %v5801
    %5811 = vmatpush.bf16.msra.mxu0 %v5800
    %5812 = vmatpush.bf16.msra.mxu0 %v5799
    %5813 = vmatpush.bf16.msra.mxu0 %v5798
    %5814 = vmatpush.bf16.msra.mxu0 %v5797
    %5815 = vmatpush.bf16.msra.mxu0 %v5796
    %5816 = vmatpush.bf16.msra.mxu0 %v5795
    %5817 = vmatpush.bf16.msra.mxu0 %v5794
    %5818 = vmatmul.bf16.gmra.mxu0 %v5758
    %v5819 = vpop.f32.mrf.mxu0
    %v5820 = vadd.f32 %v5760, %v5819
    %v5821 = vpop.f32.mrf.mxu0
    %v5822 = vadd.f32 %v5760, %v5821
    %5823 = vdwg.mxu0
    %5824 = vst [vmem:[%s149] sm:$0xff] %v5820
    %5825 = vst [vmem:[%s149 + $0x8] sm:$0xff] %v5822
    // Predicated region
    $region506: #{_lambda_.1} parent=1 // pred_check
      _
    $region507: #{_lambda_.1} parent=1 // pred_check_branch
      %5827 = sbr.rel (0) target = $region509
    $region508: #{_lambda_.1} parent=1 // pred_region
      _
    $region509: #{_lambda_.1} parent=1 // pred_fallthru
      _
    // Predicated region
    $region510: #{_lambda_.1} parent=1 // pred_check
      _
    $region511: #{_lambda_.1} parent=1 // pred_check_branch
      %5829 = sbr.rel (0) target = $region513
    $region512: #{_lambda_.1} parent=1 // pred_region
      _
    $region513: #{_lambda_.1} parent=1 // pred_fallthru
      _
    %5830 = vsyncpa [#allocation3], 1
    %5831 = vsyncpa [#allocation5], 1
    %5832 = vsyncpa [#allocation8], 1
    %5833 = vsyncpa [#allocation11], 1
    %5834 = vsyncpa [#allocation14], 1
    %5835 = vsyncpa [#allocation17], 1
    %5836 = vsyncpa [#allocation20], 1
    %5837 = vsyncpa [#allocation23], 1
    %5838 = vsyncpa [#allocation26], 1
    %5839 = vsyncpa [#allocation29], 1
    %5840 = vsyncpa [#allocation32], 1
    %5841 = vsyncpa [#allocation35], 1
    %5842 = vsyncpa [#allocation38], 1
    %5843 = vsyncpa [#allocation41], 1
    %5844 = vsyncpa [#allocation44], 1
    %5845 = vsyncpa [#allocation47], 1
    %5846 = vsyncpa [#allocation50], 1
    %5847 = vsyncpa [#allocation53], 1
    %5848 = vsyncpa [#allocation56], 1
    %5849 = vsyncpa [#allocation59], 1
    %5850 = vsyncpa [#allocation62], 1
    %5851 = vsyncpa [#allocation65], 1
    %5852 = vsyncpa [#allocation68], 1
    %5853 = vsyncpa [#allocation71], 1
    %5854 = vsyncpa [#allocation74], 1
    %5855 = vsyncpa [#allocation77], 1
    %5856 = vsyncpa [#allocation80], 1

</llo_original>
